<compile_context>
chip_gen: v7x
topology: tpu7x:2x2x1
jax: 0.10.0
libtpu: 0.0.40
codegen_flags: <defaults>
</compile_context>

<pallas_src>
import jax
import jax.numpy as jnp
from jax.experimental import pallas as pl
from jax.experimental.pallas import tpu as pltpu

N_GRAPHEME, N_VOWEL, N_CONSONANT = 168, 11, 7
N_CLS = N_GRAPHEME + N_VOWEL + N_CONSONANT     # 186
N_CLS_PAD = 256                                # lane-dense head output width
POOL = 32                                      # backbone stand-in spatial reduction factor
C_FEAT = 2048                                  # backbone output channels
B_BLK = 8                                      # images per kernel-1 grid step


def _round_up(x, m):
    return (x + m - 1) // m * m


# ----------------------------------------------------------------------------
# Kernel 1: fused  adapter conv (1->3, 3x3, pad 1)  +  32x32 mean pool
#           +  3->2048 projection  +  ReLU  +  per-image spatial max pool
# ----------------------------------------------------------------------------
def _make_feature_kernel(B, H, h, w, H_pad):
    w3 = 3 * w        # lanes per kh group in the fused pool/conv matrix, ordered (c, bj)
    w9 = 3 * w3

    def feature_kernel(xp_ref, m_ref, wp_ref, be_ref, o_ref):
        # xp_ref: (B*H_pad, W+2) f32  zero-padded input rows, image-major
        # m_ref : (W+2, 9*w)    f32   fused [column-block-pool x conv-weight] matrix
        # wp_ref: (3, 2048)     f32   3 -> 2048 projection rows
        # be_ref: (1, 2048)     f32   projection bias with adapter-conv bias folded in
        # o_ref : (B, 2048)     bf16  per-image spatial max of ReLU'd projected features

        # (1) adapter conv + mean pool, commuted: one MXU matmul does the column-direction
        #     32-block pooling and the (kw, channel) weight mixing for all kh offsets.
        cp = jnp.dot(xp_ref[...], m_ref[...],
                     preferred_element_type=jnp.float32)          # (B*H_pad, 9w)
        cp = cp.reshape(B, H_pad, w9)

        # (2) row-direction 32-block sums at the three kh offsets, summed over kh.
        #     Rows come out (image, block-row) -> sublane-dense pooled means.
        means = None                                              # (B*h, 3w), lanes = c*w+bj
        for kh in range(3):
            part = cp[:, kh:kh + H, kh * w3:(kh + 1) * w3]        # (B, H, 3w)
            part = part.reshape(B * h, POOL, w3).sum(axis=1)      # (B*h, 3w)
            means = part if means is None else means + part

        # (3) 3 -> 2048 projection + bias + ReLU + running max over pooled columns,
        #     vectorized over all B*h block-rows (sublane-dense slabs).
        bias = be_ref[...]                                        # (1, 2048)
        wrow = [wp_ref[c:c + 1, :] for c in range(3)]             # hoisted (1, 2048) rows
        runmax = None                                             # (B*h, 2048)
        for bj in range(w):
            r = bias
            for c in range(3):
                r = r + means[:, c * w + bj:c * w + bj + 1] * wrow[c]
            r = jnp.maximum(r, 0.0)                               # ReLU
            runmax = r if runmax is None else jnp.maximum(runmax, r)

        # (4) per-image max over the h block-rows; bf16, lane-dense store.
        rows = [jnp.max(runmax[b * h:(b + 1) * h, :], axis=0, keepdims=True)
                for b in range(B)]
        o_ref[...] = jnp.concatenate(rows, axis=0).astype(o_ref.dtype)

    return feature_kernel


def fused_features(params, x):
    # x: [N, 1, H, W] (NCHW) -> pooled backbone-stand-in features [N_pad, 2048] bf16
    N, _, H, W = x.shape
    assert H % POOL == 0 and W % POOL == 0, "spatial dims must be divisible by 32"
    h, w = H // POOL, W // POOL
    H_pad = _round_up(H + 2, 8)               # conv halo + rows padded to a sublane multiple
    N_pad = _round_up(N, B_BLK)

    xp = jnp.pad(x.reshape(N, H, W).astype(jnp.float32),
                 ((0, N_pad - N), (1, H_pad - H - 1), (1, 1)))    # (N_pad, H_pad, W+2)
    xp = xp.reshape(N_pad * H_pad, W + 2)

    # Fold the (mean-scaled) 3x3 conv weights and the column-direction block pooling into a
    # single matmul matrix; columns are ordered (kh, channel, pooled-column).
    wc = params["adapter_w"].reshape(3, 3, 3).astype(jnp.float32) / float(POOL * POOL)
    j = jnp.arange(W + 2)
    lo = jnp.arange(w)[None, None, :] * POOL + jnp.arange(3)[:, None, None]     # (kw, 1, bj)
    ind = ((j[None, :, None] >= lo) & (j[None, :, None] < lo + POOL)).astype(jnp.float32)
    m = jnp.einsum("kjv,chk->jhcv", ind, wc).reshape(W + 2, 9 * w)              # (W+2, 9w)

    # Fold the adapter conv bias into the projection bias.
    bias_eff = (params["adapter_b"].astype(jnp.float32) @ params["proj_w"]
                + params["proj_b"]).reshape(1, C_FEAT)

    out = pl.pallas_call(
        _make_feature_kernel(B_BLK, H, h, w, H_pad),
        out_shape=jax.ShapeDtypeStruct((N_pad, C_FEAT), jnp.bfloat16),
        grid=(N_pad // B_BLK,),
        in_specs=[
            pl.BlockSpec((B_BLK * H_pad, W + 2), lambda n: (n, 0)),   # padded image rows
            pl.BlockSpec((W + 2, 9 * w), lambda n: (0, 0)),           # fused pool/conv matrix
            pl.BlockSpec((3, C_FEAT), lambda n: (0, 0)),              # projection rows
            pl.BlockSpec((1, C_FEAT), lambda n: (0, 0)),              # folded bias
        ],
        out_specs=pl.BlockSpec((B_BLK, C_FEAT), lambda n: (n, 0)),
        compiler_params=pltpu.CompilerParams(
            dimension_semantics=("parallel",)),
    )(xp, m, params["proj_w"], bias_eff)
    return out                                                        # (N_pad, 2048) bf16


# ----------------------------------------------------------------------------
# Kernel 2: batched classifier head, classes padded 186 -> 256 for lane density
# ----------------------------------------------------------------------------
def head_kernel(p_ref, w1_ref, b1_ref, w2_ref, b2_ref, o_ref):
    h1 = jnp.dot(p_ref[...], w1_ref[...], preferred_element_type=jnp.float32)   # (bm, 512)
    h1 = (h1 + b1_ref[...]).astype(jnp.bfloat16)
    out = jnp.dot(h1, w2_ref[...], preferred_element_type=jnp.float32)          # (bm, 256)
    o_ref[...] = out + b2_ref[...]


def cls_head(pooled, w1, b1, w2, b2):
    # pooled: [Np, 2048] bf16 (Np % 8 == 0) -> [Np2, 256] f32 (classes zero-padded)
    Np, C = pooled.shape
    Dh = w1.shape[1]
    bm = min(128, Np)
    Np2 = _round_up(Np, bm)
    if Np2 != Np:
        pooled = jnp.pad(pooled, ((0, Np2 - Np), (0, 0)))
    w2p = jnp.pad(w2, ((0, 0), (0, N_CLS_PAD - w2.shape[1])))
    b2p = jnp.pad(b2, (0, N_CLS_PAD - b2.shape[0]))
    return pl.pallas_call(
        head_kernel,
        out_shape=jax.ShapeDtypeStruct((Np2, N_CLS_PAD), jnp.float32),
        grid=(Np2 // bm,),
        in_specs=[
            pl.BlockSpec((bm, C), lambda i: (i, 0)),
            pl.BlockSpec((C, Dh), lambda i: (0, 0)),
            pl.BlockSpec((1, Dh), lambda i: (0, 0)),
            pl.BlockSpec((Dh, N_CLS_PAD), lambda i: (0, 0)),
            pl.BlockSpec((1, N_CLS_PAD), lambda i: (0, 0)),
        ],
        out_specs=pl.BlockSpec((bm, N_CLS_PAD), lambda i: (i, 0)),
        compiler_params=pltpu.CompilerParams(dimension_semantics=("parallel",)),
    )(pooled, w1, b1.reshape(1, Dh), w2p, b2p.reshape(1, N_CLS_PAD))


# ----------------------------------------------------------------------------
# Parameters (deterministic, shapes taken from the module's __init__)
# ----------------------------------------------------------------------------
def _uniform(key, shape, fan_in):
    bound = float(fan_in) ** -0.5
    return jax.random.uniform(key, shape, jnp.float32, -bound, bound)


def init_params(key):
    ks = jax.random.split(key, 8)
    adapter_w = _uniform(ks[0], (3, 1, 3, 3), 9)             # adapter Conv2d(1,3,3,pad=1)
    adapter_b = _uniform(ks[1], (3,), 9)
    proj_w = _uniform(ks[2], (3, 2048), 3)                   # backbone stand-in projection
    proj_b = _uniform(ks[3], (2048,), 3)
    lin_w = _uniform(ks[4], (512, 2048), 2048)               # nn.Linear(2048, 512)
    lin_b = _uniform(ks[5], (512,), 2048)
    conv_w = _uniform(ks[6], (186, 1024, 3, 3), 1024 * 9)    # nn.Conv2d(1024, 186, 3)
    conv_b = _uniform(ks[7], (186,), 1024 * 9)
    w2 = jnp.transpose(conv_w[:, :512, 1, 1])                # center tap -> (512, 186)
    return dict(adapter_w=adapter_w, adapter_b=adapter_b,
                proj_w=proj_w, proj_b=proj_b,
                w1=jnp.transpose(lin_w).astype(jnp.bfloat16), b1=lin_b,   # (2048,512) bf16
                w2=w2.astype(jnp.bfloat16), b2=conv_b)


# ----------------------------------------------------------------------------
# Forward
# ----------------------------------------------------------------------------
def forward_splits(params, x):
    # x: NCHW [N, 1, H, W], H and W divisible by 32 -> (grapheme, vowel, consonant) logits
    N = x.shape[0]
    pooled = fused_features(params, x)                                      # [N_pad, 2048]
    logits = cls_head(pooled, params["w1"], params["b1"],
                      params["w2"], params["b2"])[:N, :N_CLS]               # [N, 186]
    return (logits[:, :N_GRAPHEME],
            logits[:, N_GRAPHEME:N_GRAPHEME + N_VOWEL],
            logits[:, N_GRAPHEME + N_VOWEL:])


def msk_n_cls_forward(params, x, category=0):
    """Mirrors MskNCls.forward: torch.split(y, [168, 11, 7], dim=1)[cat:cat+1]."""
    return forward_splits(params, x)[category:category + 1]


if __name__ == "__main__":
    x = jax.random.normal(jax.random.PRNGKey(0), (2, 1, 64, 64), dtype=jnp.float32)
    params = init_params(jax.random.PRNGKey(1))
    g, v, c = jax.jit(forward_splits)(params, x)
    jax.block_until_ready((g, v, c))
    assert g.shape == (2, N_GRAPHEME)
    assert v.shape == (2, N_VOWEL)
    assert c.shape == (2, N_CONSONANT)
    assert all(bool(jnp.all(jnp.isfinite(t))) for t in (g, v, c))
    (sel,) = msk_n_cls_forward(params, x, category=0)   # 1-tuple, like the torch module
    assert sel.shape == (2, N_GRAPHEME)
    print("KERNEL_OK")
</pallas_src>

<mosaic_0001>
module attributes {stable_mosaic.version = 11 : i64} {
  func.func @feature_kernel(%arg0: i32, %arg1: memref<576x66xf32, #tpu.memory_space<vmem>>, %arg2: memref<66x18xf32, #tpu.memory_space<vmem>>, %arg3: memref<3x2048xf32, #tpu.memory_space<vmem>>, %arg4: memref<1x2048xf32, #tpu.memory_space<vmem>>, %arg5: memref<8x2048xbf16, #tpu.memory_space<vmem>>) attributes {dimension_semantics = [#tpu.dimension_semantics<parallel>], iteration_bounds = array<i64: 1>, scalar_prefetch = 0 : i64, scratch_operands = 0 : i64, tpu.core_type = #tpu.core_type<tc>, window_params = [{transform_indices = @transform_0, window_bounds = array<i64: 576, 66>}, {pipeline_mode = #tpu.pipeline_mode<synchronous>, transform_indices = @transform_1, window_bounds = array<i64: 66, 18>}, {pipeline_mode = #tpu.pipeline_mode<synchronous>, transform_indices = @transform_2, window_bounds = array<i64: 3, 2048>}, {pipeline_mode = #tpu.pipeline_mode<synchronous>, transform_indices = @transform_3, window_bounds = array<i64: 1, 2048>}, {transform_indices = @transform_4, window_bounds = array<i64: 8, 2048>}]} {
    %c0 = arith.constant 0 : index
    %c0_0 = arith.constant 0 : index
    %0 = vector.load %arg1[%c0, %c0_0] : memref<576x66xf32, #tpu.memory_space<vmem>>, vector<576x66xf32>
    %c0_1 = arith.constant 0 : index
    %c0_2 = arith.constant 0 : index
    %1 = vector.load %arg2[%c0_1, %c0_2] : memref<66x18xf32, #tpu.memory_space<vmem>>, vector<66x18xf32>
    %cst = arith.constant dense<0.000000e+00> : vector<576x18xf32>
    %2 = tpu.matmul %0, %1, %cst {dimension_numbers = #tpu.dot_dimension_numbers<[1], [0], [0], [1], [0, 0, 1, 1], [], []>} : vector<576x66xf32>, vector<66x18xf32>, vector<576x18xf32> -> vector<576x18xf32>
    %3 = vector.shape_cast %2 : vector<576x18xf32> to vector<8x72x18xf32>
    %4 = vector.extract_strided_slice %3 {offsets = [0, 0, 0], sizes = [8, 64, 6], strides = [1, 1, 1]} : vector<8x72x18xf32> to vector<8x64x6xf32>
    %5 = vector.shape_cast %4 : vector<8x64x6xf32> to vector<16x32x6xf32>
    %cst_3 = arith.constant dense<0.000000e+00> : vector<16x6xf32>
    %6 = vector.multi_reduction <add>, %5, %cst_3 [1] : vector<16x32x6xf32> to vector<16x6xf32>
    %7 = vector.extract_strided_slice %3 {offsets = [0, 1, 6], sizes = [8, 64, 6], strides = [1, 1, 1]} : vector<8x72x18xf32> to vector<8x64x6xf32>
    %8 = vector.shape_cast %7 : vector<8x64x6xf32> to vector<16x32x6xf32>
    %cst_4 = arith.constant dense<0.000000e+00> : vector<16x6xf32>
    %9 = vector.multi_reduction <add>, %8, %cst_4 [1] : vector<16x32x6xf32> to vector<16x6xf32>
    %10 = arith.addf %6, %9 : vector<16x6xf32>
    %11 = vector.extract_strided_slice %3 {offsets = [0, 2, 12], sizes = [8, 64, 6], strides = [1, 1, 1]} : vector<8x72x18xf32> to vector<8x64x6xf32>
    %12 = vector.shape_cast %11 : vector<8x64x6xf32> to vector<16x32x6xf32>
    %cst_5 = arith.constant dense<0.000000e+00> : vector<16x6xf32>
    %13 = vector.multi_reduction <add>, %12, %cst_5 [1] : vector<16x32x6xf32> to vector<16x6xf32>
    %14 = arith.addf %10, %13 : vector<16x6xf32>
    %c0_6 = arith.constant 0 : index
    %c0_7 = arith.constant 0 : index
    %15 = vector.load %arg4[%c0_6, %c0_7] : memref<1x2048xf32, #tpu.memory_space<vmem>>, vector<1x2048xf32>
    %c0_8 = arith.constant 0 : index
    %c0_9 = arith.constant 0 : index
    %16 = vector.load %arg3[%c0_8, %c0_9] : memref<3x2048xf32, #tpu.memory_space<vmem>>, vector<1x2048xf32>
    %c1 = arith.constant 1 : index
    %c0_10 = arith.constant 0 : index
    %17 = vector.load %arg3[%c1, %c0_10] : memref<3x2048xf32, #tpu.memory_space<vmem>>, vector<1x2048xf32>
    %c2 = arith.constant 2 : index
    %c0_11 = arith.constant 0 : index
    %18 = vector.load %arg3[%c2, %c0_11] : memref<3x2048xf32, #tpu.memory_space<vmem>>, vector<1x2048xf32>
    %19 = vector.extract_strided_slice %14 {offsets = [0, 0], sizes = [16, 1], strides = [1, 1]} : vector<16x6xf32> to vector<16x1xf32>
    %20 = vector.broadcast %19 : vector<16x1xf32> to vector<16x2048xf32>
    %21 = vector.broadcast %16 : vector<1x2048xf32> to vector<16x2048xf32>
    %22 = arith.mulf %20, %21 : vector<16x2048xf32>
    %23 = vector.broadcast %15 : vector<1x2048xf32> to vector<16x2048xf32>
    %24 = arith.addf %23, %22 : vector<16x2048xf32>
    %25 = vector.extract_strided_slice %14 {offsets = [0, 2], sizes = [16, 1], strides = [1, 1]} : vector<16x6xf32> to vector<16x1xf32>
    %26 = vector.broadcast %25 : vector<16x1xf32> to vector<16x2048xf32>
    %27 = vector.broadcast %17 : vector<1x2048xf32> to vector<16x2048xf32>
    %28 = arith.mulf %26, %27 : vector<16x2048xf32>
    %29 = arith.addf %24, %28 : vector<16x2048xf32>
    %30 = vector.extract_strided_slice %14 {offsets = [0, 4], sizes = [16, 1], strides = [1, 1]} : vector<16x6xf32> to vector<16x1xf32>
    %31 = vector.broadcast %30 : vector<16x1xf32> to vector<16x2048xf32>
    %32 = vector.broadcast %18 : vector<1x2048xf32> to vector<16x2048xf32>
    %33 = arith.mulf %31, %32 : vector<16x2048xf32>
    %34 = arith.addf %29, %33 : vector<16x2048xf32>
    %cst_12 = arith.constant 0.000000e+00 : f32
    %35 = vector.broadcast %cst_12 : f32 to vector<16x2048xf32>
    %36 = arith.maximumf %34, %35 : vector<16x2048xf32>
    %37 = vector.extract_strided_slice %14 {offsets = [0, 1], sizes = [16, 1], strides = [1, 1]} : vector<16x6xf32> to vector<16x1xf32>
    %38 = vector.broadcast %37 : vector<16x1xf32> to vector<16x2048xf32>
    %39 = vector.broadcast %16 : vector<1x2048xf32> to vector<16x2048xf32>
    %40 = arith.mulf %38, %39 : vector<16x2048xf32>
    %41 = vector.broadcast %15 : vector<1x2048xf32> to vector<16x2048xf32>
    %42 = arith.addf %41, %40 : vector<16x2048xf32>
    %43 = vector.extract_strided_slice %14 {offsets = [0, 3], sizes = [16, 1], strides = [1, 1]} : vector<16x6xf32> to vector<16x1xf32>
    %44 = vector.broadcast %43 : vector<16x1xf32> to vector<16x2048xf32>
    %45 = vector.broadcast %17 : vector<1x2048xf32> to vector<16x2048xf32>
    %46 = arith.mulf %44, %45 : vector<16x2048xf32>
    %47 = arith.addf %42, %46 : vector<16x2048xf32>
    %48 = vector.extract_strided_slice %14 {offsets = [0, 5], sizes = [16, 1], strides = [1, 1]} : vector<16x6xf32> to vector<16x1xf32>
    %49 = vector.broadcast %48 : vector<16x1xf32> to vector<16x2048xf32>
    %50 = vector.broadcast %18 : vector<1x2048xf32> to vector<16x2048xf32>
    %51 = arith.mulf %49, %50 : vector<16x2048xf32>
    %52 = arith.addf %47, %51 : vector<16x2048xf32>
    %cst_13 = arith.constant 0.000000e+00 : f32
    %53 = vector.broadcast %cst_13 : f32 to vector<16x2048xf32>
    %54 = arith.maximumf %52, %53 : vector<16x2048xf32>
    %55 = arith.maximumf %36, %54 : vector<16x2048xf32>
    %56 = vector.extract_strided_slice %55 {offsets = [0, 0], sizes = [2, 2048], strides = [1, 1]} : vector<16x2048xf32> to vector<2x2048xf32>
    %cst_14 = arith.constant dense<0xFF800000> : vector<2048xf32>
    %57 = vector.multi_reduction <maximumf>, %56, %cst_14 [0] : vector<2x2048xf32> to vector<2048xf32>
    %58 = vector.shape_cast %57 : vector<2048xf32> to vector<1x2048xf32>
    %59 = vector.extract_strided_slice %55 {offsets = [2, 0], sizes = [2, 2048], strides = [1, 1]} : vector<16x2048xf32> to vector<2x2048xf32>
    %cst_15 = arith.constant dense<0xFF800000> : vector<2048xf32>
    %60 = vector.multi_reduction <maximumf>, %59, %cst_15 [0] : vector<2x2048xf32> to vector<2048xf32>
    %61 = vector.shape_cast %60 : vector<2048xf32> to vector<1x2048xf32>
    %62 = vector.extract_strided_slice %55 {offsets = [4, 0], sizes = [2, 2048], strides = [1, 1]} : vector<16x2048xf32> to vector<2x2048xf32>
    %cst_16 = arith.constant dense<0xFF800000> : vector<2048xf32>
    %63 = vector.multi_reduction <maximumf>, %62, %cst_16 [0] : vector<2x2048xf32> to vector<2048xf32>
    %64 = vector.shape_cast %63 : vector<2048xf32> to vector<1x2048xf32>
    %65 = vector.extract_strided_slice %55 {offsets = [6, 0], sizes = [2, 2048], strides = [1, 1]} : vector<16x2048xf32> to vector<2x2048xf32>
    %cst_17 = arith.constant dense<0xFF800000> : vector<2048xf32>
    %66 = vector.multi_reduction <maximumf>, %65, %cst_17 [0] : vector<2x2048xf32> to vector<2048xf32>
    %67 = vector.shape_cast %66 : vector<2048xf32> to vector<1x2048xf32>
    %68 = vector.extract_strided_slice %55 {offsets = [8, 0], sizes = [2, 2048], strides = [1, 1]} : vector<16x2048xf32> to vector<2x2048xf32>
    %cst_18 = arith.constant dense<0xFF800000> : vector<2048xf32>
    %69 = vector.multi_reduction <maximumf>, %68, %cst_18 [0] : vector<2x2048xf32> to vector<2048xf32>
    %70 = vector.shape_cast %69 : vector<2048xf32> to vector<1x2048xf32>
    %71 = vector.extract_strided_slice %55 {offsets = [10, 0], sizes = [2, 2048], strides = [1, 1]} : vector<16x2048xf32> to vector<2x2048xf32>
    %cst_19 = arith.constant dense<0xFF800000> : vector<2048xf32>
    %72 = vector.multi_reduction <maximumf>, %71, %cst_19 [0] : vector<2x2048xf32> to vector<2048xf32>
    %73 = vector.shape_cast %72 : vector<2048xf32> to vector<1x2048xf32>
    %74 = vector.extract_strided_slice %55 {offsets = [12, 0], sizes = [2, 2048], strides = [1, 1]} : vector<16x2048xf32> to vector<2x2048xf32>
    %cst_20 = arith.constant dense<0xFF800000> : vector<2048xf32>
    %75 = vector.multi_reduction <maximumf>, %74, %cst_20 [0] : vector<2x2048xf32> to vector<2048xf32>
    %76 = vector.shape_cast %75 : vector<2048xf32> to vector<1x2048xf32>
    %77 = vector.extract_strided_slice %55 {offsets = [14, 0], sizes = [2, 2048], strides = [1, 1]} : vector<16x2048xf32> to vector<2x2048xf32>
    %cst_21 = arith.constant dense<0xFF800000> : vector<2048xf32>
    %78 = vector.multi_reduction <maximumf>, %77, %cst_21 [0] : vector<2x2048xf32> to vector<2048xf32>
    %79 = vector.shape_cast %78 : vector<2048xf32> to vector<1x2048xf32>
    %80 = tpu.concatenate %58, %61, %64, %67, %70, %73, %76, %79 in 0 : vector<1x2048xf32>, vector<1x2048xf32>, vector<1x2048xf32>, vector<1x2048xf32>, vector<1x2048xf32>, vector<1x2048xf32>, vector<1x2048xf32>, vector<1x2048xf32> -> vector<8x2048xf32>
    %81 = arith.truncf %80 : vector<8x2048xf32> to vector<8x2048xbf16>
    %c0_22 = arith.constant 0 : index
    %c0_23 = arith.constant 0 : index
    %82 = vector.load %arg5[%c0_22, %c0_23] : memref<8x2048xbf16, #tpu.memory_space<vmem>>, vector<8x2048xbf16>
    tpu.vector_store %arg5[%c0_22, %c0_23], %81 {strides = array<i32>} : memref<8x2048xbf16, #tpu.memory_space<vmem>>, vector<8x2048xbf16>,
    return
  }
  func.func @transform_0(%arg0: i32) -> (i32, i32) {
    %c0_i32 = arith.constant 0 : i32
    %c0_i32_0 = arith.constant 0 : i32
    return %arg0, %c0_i32 : i32, i32
  }
  func.func @transform_1(%arg0: i32) -> (i32, i32) {
    %c0_i32 = arith.constant 0 : i32
    %c0_i32_0 = arith.constant 0 : i32
    %c0_i32_1 = arith.constant 0 : i32
    return %c0_i32, %c0_i32_0 : i32, i32
  }
  func.func @transform_2(%arg0: i32) -> (i32, i32) {
    %c0_i32 = arith.constant 0 : i32
    %c0_i32_0 = arith.constant 0 : i32
    %c0_i32_1 = arith.constant 0 : i32
    return %c0_i32, %c0_i32_0 : i32, i32
  }
  func.func @transform_3(%arg0: i32) -> (i32, i32) {
    %c0_i32 = arith.constant 0 : i32
    %c0_i32_0 = arith.constant 0 : i32
    %c0_i32_1 = arith.constant 0 : i32
    return %c0_i32, %c0_i32_0 : i32, i32
  }
  func.func @transform_4(%arg0: i32) -> (i32, i32) {
    %c0_i32 = arith.constant 0 : i32
    %c0_i32_0 = arith.constant 0 : i32
    return %arg0, %c0_i32 : i32, i32
  }
}

module attributes {stable_mosaic.version = 11 : i64} {
  func.func @head_kernel(%arg0: i32, %arg1: memref<8x2048xbf16, #tpu.memory_space<vmem>>, %arg2: memref<2048x512xbf16, #tpu.memory_space<vmem>>, %arg3: memref<1x512xf32, #tpu.memory_space<vmem>>, %arg4: memref<512x256xbf16, #tpu.memory_space<vmem>>, %arg5: memref<1x256xf32, #tpu.memory_space<vmem>>, %arg6: memref<8x256xf32, #tpu.memory_space<vmem>>) attributes {dimension_semantics = [#tpu.dimension_semantics<parallel>], iteration_bounds = array<i64: 1>, scalar_prefetch = 0 : i64, scratch_operands = 0 : i64, tpu.core_type = #tpu.core_type<tc>, window_params = [{transform_indices = @transform_0, window_bounds = array<i64: 8, 2048>}, {pipeline_mode = #tpu.pipeline_mode<synchronous>, transform_indices = @transform_1, window_bounds = array<i64: 2048, 512>}, {pipeline_mode = #tpu.pipeline_mode<synchronous>, transform_indices = @transform_2, window_bounds = array<i64: 1, 512>}, {pipeline_mode = #tpu.pipeline_mode<synchronous>, transform_indices = @transform_3, window_bounds = array<i64: 512, 256>}, {pipeline_mode = #tpu.pipeline_mode<synchronous>, transform_indices = @transform_4, window_bounds = array<i64: 1, 256>}, {transform_indices = @transform_5, window_bounds = array<i64: 8, 256>}]} {
    %c0 = arith.constant 0 : index
    %c0_0 = arith.constant 0 : index
    %0 = vector.load %arg1[%c0, %c0_0] : memref<8x2048xbf16, #tpu.memory_space<vmem>>, vector<8x2048xbf16>
    %c0_1 = arith.constant 0 : index
    %c0_2 = arith.constant 0 : index
    %1 = vector.load %arg2[%c0_1, %c0_2] : memref<2048x512xbf16, #tpu.memory_space<vmem>>, vector<2048x512xbf16>
    %cst = arith.constant dense<0.000000e+00> : vector<8x512xf32>
    %2 = tpu.matmul %0, %1, %cst {dimension_numbers = #tpu.dot_dimension_numbers<[1], [0], [0], [1], [0, 0, 1, 1], [], []>} : vector<8x2048xbf16>, vector<2048x512xbf16>, vector<8x512xf32> -> vector<8x512xf32>
    %c0_3 = arith.constant 0 : index
    %c0_4 = arith.constant 0 : index
    %3 = vector.load %arg3[%c0_3, %c0_4] : memref<1x512xf32, #tpu.memory_space<vmem>>, vector<1x512xf32>
    %4 = vector.broadcast %3 : vector<1x512xf32> to vector<8x512xf32>
    %5 = arith.addf %2, %4 : vector<8x512xf32>
    %6 = arith.truncf %5 : vector<8x512xf32> to vector<8x512xbf16>
    %c0_5 = arith.constant 0 : index
    %c0_6 = arith.constant 0 : index
    %7 = vector.load %arg4[%c0_5, %c0_6] : memref<512x256xbf16, #tpu.memory_space<vmem>>, vector<512x256xbf16>
    %cst_7 = arith.constant dense<0.000000e+00> : vector<8x256xf32>
    %8 = tpu.matmul %6, %7, %cst_7 {dimension_numbers = #tpu.dot_dimension_numbers<[1], [0], [0], [1], [0, 0, 1, 1], [], []>} : vector<8x512xbf16>, vector<512x256xbf16>, vector<8x256xf32> -> vector<8x256xf32>
    %c0_8 = arith.constant 0 : index
    %c0_9 = arith.constant 0 : index
    %9 = vector.load %arg5[%c0_8, %c0_9] : memref<1x256xf32, #tpu.memory_space<vmem>>, vector<1x256xf32>
    %10 = vector.broadcast %9 : vector<1x256xf32> to vector<8x256xf32>
    %11 = arith.addf %8, %10 : vector<8x256xf32>
    %c0_10 = arith.constant 0 : index
    %c0_11 = arith.constant 0 : index
    %12 = vector.load %arg6[%c0_10, %c0_11] : memref<8x256xf32, #tpu.memory_space<vmem>>, vector<8x256xf32>
    tpu.vector_store %arg6[%c0_10, %c0_11], %11 {strides = array<i32>} : memref<8x256xf32, #tpu.memory_space<vmem>>, vector<8x256xf32>,
    return
  }
  func.func @transform_0(%arg0: i32) -> (i32, i32) {
    %c0_i32 = arith.constant 0 : i32
    %c0_i32_0 = arith.constant 0 : i32
    return %arg0, %c0_i32 : i32, i32
  }
  func.func @transform_1(%arg0: i32) -> (i32, i32) {
    %c0_i32 = arith.constant 0 : i32
    %c0_i32_0 = arith.constant 0 : i32
    %c0_i32_1 = arith.constant 0 : i32
    return %c0_i32, %c0_i32_0 : i32, i32
  }
  func.func @transform_2(%arg0: i32) -> (i32, i32) {
    %c0_i32 = arith.constant 0 : i32
    %c0_i32_0 = arith.constant 0 : i32
    %c0_i32_1 = arith.constant 0 : i32
    return %c0_i32, %c0_i32_0 : i32, i32
  }
  func.func @transform_3(%arg0: i32) -> (i32, i32) {
    %c0_i32 = arith.constant 0 : i32
    %c0_i32_0 = arith.constant 0 : i32
    %c0_i32_1 = arith.constant 0 : i32
    return %c0_i32, %c0_i32_0 : i32, i32
  }
  func.func @transform_4(%arg0: i32) -> (i32, i32) {
    %c0_i32 = arith.constant 0 : i32
    %c0_i32_0 = arith.constant 0 : i32
    %c0_i32_1 = arith.constant 0 : i32
    return %c0_i32, %c0_i32_0 : i32, i32
  }
  func.func @transform_5(%arg0: i32) -> (i32, i32) {
    %c0_i32 = arith.constant 0 : i32
    %c0_i32_0 = arith.constant 0 : i32
    return %arg0, %c0_i32 : i32, i32
  }
}

</mosaic_0001>

<llo_original>
// kernel: forward_splits.3
$region0: #{forward_splits.3}
  #allocation0 [shape = 'u32[]', space=smem, size = 0x4, offset = 0x4, fixed_abs, tag = 'smem constant byte address 0x4 - core index']
  #allocation1 [shape = 'u32[144,128]{1,0:T(1,128)}', space=vmem, size = 0x12000, scoped, tag = 'internal scratch']
  %s0 = inlined_call_operand.vmem [shape: bf16[8,2048], index: 0, kind: input, shape index: {}]
  %s1 = inlined_call_operand.hbm [shape: bf16[2048,512], index: 1, kind: input, shape index: {}]
  %s2 = inlined_call_operand.hbm [shape: f32[1,512], index: 2, kind: input, shape index: {}]
  %s3 = inlined_call_operand.vmem [shape: bf16[512,256], index: 3, kind: input, shape index: {}]
  %s4 = inlined_call_operand.vmem [shape: f32[1,256], index: 4, kind: input, shape index: {}]
  %s5 = inlined_call_operand.vmem [shape: f32[8,256], index: 5, kind: output, shape index: {}]
  %s6 = sld [smem:[#allocation0]]
  $region38: #{forward_splits.3} parent=0
    _
  %s8 = ssub.s32 1, %s6
  %s9 = scalar_select 0, %s8, %s6
  $region1: #{forward_splits.3} parent=0
    #allocation2 [shape = 'u8[2097152]{0}', space=vmem, size = 0x200000, scoped, tag = 'input window, operand 1, single buffered']
    #allocation3 [shape = 's32[1]{0}', space=sflag, size = 0x4, scoped, tag = 'scoped memory for forward_splits.3']
    #allocation4 [shape = 'u8[2048]{0}', space=vmem, size = 0x800, scoped, tag = 'input window, operand 2, single buffered']
    #allocation5 [shape = 's32[1]{0}', space=sflag, size = 0x4, scoped, tag = 'scoped memory for forward_splits.3']
    %10 = vsyncpa [#allocation3], 0
    %11 = vsyncpa [#allocation5], 0
    // Predicated region
    $region2: #{forward_splits.3} parent=1 // pred_check
      _
    $region3: #{forward_splits.3} parent=1 // pred_check_branch
      %13 = sbr.rel (0) target = $region5
    $region4: #{forward_splits.3} parent=1 // pred_region
      _
    $region5: #{forward_splits.3} parent=1 // pred_fallthru
      _
    // Predicated region
    $region6: #{forward_splits.3} parent=1 // pred_check
      _
    $region7: #{forward_splits.3} parent=1 // pred_check_branch
      %15 = sbr.rel (0) target = $region9
    $region8: #{forward_splits.3} parent=1 // pred_region
      %s17 = ssub.s32 65536, 65536
      %18 = vsyncadd [#allocation3], %s17
      %s19 = sshll.u32 [#allocation2], 4
      %s20 = int_to_ptr.vmem [resolvable:$true] %s19
      %25 = dma.hbm_to_vmem [thread:$0]  %s1, 65536, %s20, [#allocation3], 256, 256, 16
    $region9: #{forward_splits.3} parent=1 // pred_fallthru
      _
    // Predicated region
    $region10: #{forward_splits.3} parent=1 // pred_check
      _
    $region11: #{forward_splits.3} parent=1 // pred_check_branch
      %27 = sbr.rel (0) target = $region13
    $region12: #{forward_splits.3} parent=1 // pred_region
      %s29 = ssub.s32 64, 64
      %30 = vsyncadd [#allocation5], %s29
      %s32 = sshll.u32 [#allocation4], 4
      %s33 = int_to_ptr.vmem [resolvable:$true] %s32
      %35 = dma.hbm_to_vmem [thread:$0]  %s2, 64, %s33, [#allocation5]
    $region13: #{forward_splits.3} parent=1 // pred_fallthru
      _
    // Predicated region
    $region14: #{forward_splits.3} parent=1 // pred_check
      _
    $region15: #{forward_splits.3} parent=1 // pred_check_branch
      %37 = sbr.rel (0) target = $region17
    $region16: #{forward_splits.3} parent=1 // pred_region
      _
    $region17: #{forward_splits.3} parent=1 // pred_fallthru
      _
    // Predicated region
    $region18: #{forward_splits.3} parent=1 // pred_check
      _
    $region19: #{forward_splits.3} parent=1 // pred_check_branch
      %39 = sbr.rel (0) target = $region21
    $region20: #{forward_splits.3} parent=1 // pred_region
      _
    $region21: #{forward_splits.3} parent=1 // pred_fallthru
      _
    // Predicated region
    $region22: #{forward_splits.3} parent=1 // pred_check
      _
    $region23: #{forward_splits.3} parent=1 // pred_check_branch
      %41 = sbr.rel (0) target = $region25
    $region24: #{forward_splits.3} parent=1 // pred_region
      %42 = dma.done [#allocation3], 65536
    $region25: #{forward_splits.3} parent=1 // pred_fallthru
      _
    // Predicated region
    $region26: #{forward_splits.3} parent=1 // pred_check
      _
    $region27: #{forward_splits.3} parent=1 // pred_check_branch
      %44 = sbr.rel (0) target = $region29
    $region28: #{forward_splits.3} parent=1 // pred_region
      %45 = dma.done [#allocation5], 64
    $region29: #{forward_splits.3} parent=1 // pred_fallthru
      _
    %v46 = vld [vmem:[%s0] sm:$0xff]
    %v47 = vld [vmem:[%s0 + $0x8] sm:$0xff]
    %v48 = vld [vmem:[%s0 + $0x10] sm:$0xff]
    %v49 = vld [vmem:[%s0 + $0x18] sm:$0xff]
    %v50 = vld [vmem:[%s0 + $0x20] sm:$0xff]
    %v51 = vld [vmem:[%s0 + $0x28] sm:$0xff]
    %v52 = vld [vmem:[%s0 + $0x30] sm:$0xff]
    %v53 = vld [vmem:[%s0 + $0x38] sm:$0xff]
    %v54 = vld [vmem:[#allocation2] sm:$0xff]
    %v55 = vld [vmem:[#allocation2 + $0x8] sm:$0xff]
    %v56 = vld [vmem:[#allocation2 + $0x10] sm:$0xff]
    %v57 = vld [vmem:[#allocation2 + $0x18] sm:$0xff]
    %v58 = vld [vmem:[#allocation2 + $0x20] sm:$0xff]
    %v59 = vld [vmem:[#allocation2 + $0x28] sm:$0xff]
    %v60 = vld [vmem:[#allocation2 + $0x30] sm:$0xff]
    %v61 = vld [vmem:[#allocation2 + $0x38] sm:$0xff]
    %v62 = vld [vmem:[#allocation2 + $0x40] sm:$0xff]
    %v63 = vld [vmem:[#allocation2 + $0x48] sm:$0xff]
    %v64 = vld [vmem:[#allocation2 + $0x50] sm:$0xff]
    %v65 = vld [vmem:[#allocation2 + $0x58] sm:$0xff]
    %v66 = vld [vmem:[#allocation2 + $0x60] sm:$0xff]
    %v67 = vld [vmem:[#allocation2 + $0x68] sm:$0xff]
    %v68 = vld [vmem:[#allocation2 + $0x70] sm:$0xff]
    %v69 = vld [vmem:[#allocation2 + $0x78] sm:$0xff]
    %v70 = vld [vmem:[#allocation2 + $0x80] sm:$0xff]
    %v71 = vld [vmem:[#allocation2 + $0x88] sm:$0xff]
    %v72 = vld [vmem:[#allocation2 + $0x90] sm:$0xff]
    %v73 = vld [vmem:[#allocation2 + $0x98] sm:$0xff]
    %v74 = vld [vmem:[#allocation2 + $0xa0] sm:$0xff]
    %v75 = vld [vmem:[#allocation2 + $0xa8] sm:$0xff]
    %v76 = vld [vmem:[#allocation2 + $0xb0] sm:$0xff]
    %v77 = vld [vmem:[#allocation2 + $0xb8] sm:$0xff]
    %v78 = vld [vmem:[#allocation2 + $0xc0] sm:$0xff]
    %v79 = vld [vmem:[#allocation2 + $0xc8] sm:$0xff]
    %v80 = vld [vmem:[#allocation2 + $0xd0] sm:$0xff]
    %v81 = vld [vmem:[#allocation2 + $0xd8] sm:$0xff]
    %v82 = vld [vmem:[#allocation2 + $0xe0] sm:$0xff]
    %v83 = vld [vmem:[#allocation2 + $0xe8] sm:$0xff]
    %v84 = vld [vmem:[#allocation2 + $0xf0] sm:$0xff]
    %v85 = vld [vmem:[#allocation2 + $0xf8] sm:$0xff]
    %v86 = vld [vmem:[#allocation2 + $0x100] sm:$0xff]
    %v87 = vld [vmem:[#allocation2 + $0x108] sm:$0xff]
    %v88 = vld [vmem:[#allocation2 + $0x110] sm:$0xff]
    %v89 = vld [vmem:[#allocation2 + $0x118] sm:$0xff]
    %v90 = vld [vmem:[#allocation2 + $0x120] sm:$0xff]
    %v91 = vld [vmem:[#allocation2 + $0x128] sm:$0xff]
    %v92 = vld [vmem:[#allocation2 + $0x130] sm:$0xff]
    %v93 = vld [vmem:[#allocation2 + $0x138] sm:$0xff]
    %v94 = vld [vmem:[#allocation2 + $0x140] sm:$0xff]
    %v95 = vld [vmem:[#allocation2 + $0x148] sm:$0xff]
    %v96 = vld [vmem:[#allocation2 + $0x150] sm:$0xff]
    %v97 = vld [vmem:[#allocation2 + $0x158] sm:$0xff]
    %v98 = vld [vmem:[#allocation2 + $0x160] sm:$0xff]
    %v99 = vld [vmem:[#allocation2 + $0x168] sm:$0xff]
    %v100 = vld [vmem:[#allocation2 + $0x170] sm:$0xff]
    %v101 = vld [vmem:[#allocation2 + $0x178] sm:$0xff]
    %v102 = vld [vmem:[#allocation2 + $0x180] sm:$0xff]
    %v103 = vld [vmem:[#allocation2 + $0x188] sm:$0xff]
    %v104 = vld [vmem:[#allocation2 + $0x190] sm:$0xff]
    %v105 = vld [vmem:[#allocation2 + $0x198] sm:$0xff]
    %v106 = vld [vmem:[#allocation2 + $0x1a0] sm:$0xff]
    %v107 = vld [vmem:[#allocation2 + $0x1a8] sm:$0xff]
    %v108 = vld [vmem:[#allocation2 + $0x1b0] sm:$0xff]
    %v109 = vld [vmem:[#allocation2 + $0x1b8] sm:$0xff]
    %v110 = vld [vmem:[#allocation2 + $0x1c0] sm:$0xff]
    %v111 = vld [vmem:[#allocation2 + $0x1c8] sm:$0xff]
    %v112 = vld [vmem:[#allocation2 + $0x1d0] sm:$0xff]
    %v113 = vld [vmem:[#allocation2 + $0x1d8] sm:$0xff]
    %v114 = vld [vmem:[#allocation2 + $0x1e0] sm:$0xff]
    %v115 = vld [vmem:[#allocation2 + $0x1e8] sm:$0xff]
    %v116 = vld [vmem:[#allocation2 + $0x1f0] sm:$0xff]
    %v117 = vld [vmem:[#allocation2 + $0x1f8] sm:$0xff]
    %v118 = vld [vmem:[#allocation2 + $0x200] sm:$0xff]
    %v119 = vld [vmem:[#allocation2 + $0x208] sm:$0xff]
    %v120 = vld [vmem:[#allocation2 + $0x210] sm:$0xff]
    %v121 = vld [vmem:[#allocation2 + $0x218] sm:$0xff]
    %v122 = vld [vmem:[#allocation2 + $0x220] sm:$0xff]
    %v123 = vld [vmem:[#allocation2 + $0x228] sm:$0xff]
    %v124 = vld [vmem:[#allocation2 + $0x230] sm:$0xff]
    %v125 = vld [vmem:[#allocation2 + $0x238] sm:$0xff]
    %v126 = vld [vmem:[#allocation2 + $0x240] sm:$0xff]
    %v127 = vld [vmem:[#allocation2 + $0x248] sm:$0xff]
    %v128 = vld [vmem:[#allocation2 + $0x250] sm:$0xff]
    %v129 = vld [vmem:[#allocation2 + $0x258] sm:$0xff]
    %v130 = vld [vmem:[#allocation2 + $0x260] sm:$0xff]
    %v131 = vld [vmem:[#allocation2 + $0x268] sm:$0xff]
    %v132 = vld [vmem:[#allocation2 + $0x270] sm:$0xff]
    %v133 = vld [vmem:[#allocation2 + $0x278] sm:$0xff]
    %v134 = vld [vmem:[#allocation2 + $0x280] sm:$0xff]
    %v135 = vld [vmem:[#allocation2 + $0x288] sm:$0xff]
    %v136 = vld [vmem:[#allocation2 + $0x290] sm:$0xff]
    %v137 = vld [vmem:[#allocation2 + $0x298] sm:$0xff]
    %v138 = vld [vmem:[#allocation2 + $0x2a0] sm:$0xff]
    %v139 = vld [vmem:[#allocation2 + $0x2a8] sm:$0xff]
    %v140 = vld [vmem:[#allocation2 + $0x2b0] sm:$0xff]
    %v141 = vld [vmem:[#allocation2 + $0x2b8] sm:$0xff]
    %v142 = vld [vmem:[#allocation2 + $0x2c0] sm:$0xff]
    %v143 = vld [vmem:[#allocation2 + $0x2c8] sm:$0xff]
    %v144 = vld [vmem:[#allocation2 + $0x2d0] sm:$0xff]
    %v145 = vld [vmem:[#allocation2 + $0x2d8] sm:$0xff]
    %v146 = vld [vmem:[#allocation2 + $0x2e0] sm:$0xff]
    %v147 = vld [vmem:[#allocation2 + $0x2e8] sm:$0xff]
    %v148 = vld [vmem:[#allocation2 + $0x2f0] sm:$0xff]
    %v149 = vld [vmem:[#allocation2 + $0x2f8] sm:$0xff]
    %v150 = vld [vmem:[#allocation2 + $0x300] sm:$0xff]
    %v151 = vld [vmem:[#allocation2 + $0x308] sm:$0xff]
    %v152 = vld [vmem:[#allocation2 + $0x310] sm:$0xff]
    %v153 = vld [vmem:[#allocation2 + $0x318] sm:$0xff]
    %v154 = vld [vmem:[#allocation2 + $0x320] sm:$0xff]
    %v155 = vld [vmem:[#allocation2 + $0x328] sm:$0xff]
    %v156 = vld [vmem:[#allocation2 + $0x330] sm:$0xff]
    %v157 = vld [vmem:[#allocation2 + $0x338] sm:$0xff]
    %v158 = vld [vmem:[#allocation2 + $0x340] sm:$0xff]
    %v159 = vld [vmem:[#allocation2 + $0x348] sm:$0xff]
    %v160 = vld [vmem:[#allocation2 + $0x350] sm:$0xff]
    %v161 = vld [vmem:[#allocation2 + $0x358] sm:$0xff]
    %v162 = vld [vmem:[#allocation2 + $0x360] sm:$0xff]
    %v163 = vld [vmem:[#allocation2 + $0x368] sm:$0xff]
    %v164 = vld [vmem:[#allocation2 + $0x370] sm:$0xff]
    %v165 = vld [vmem:[#allocation2 + $0x378] sm:$0xff]
    %v166 = vld [vmem:[#allocation2 + $0x380] sm:$0xff]
    %v167 = vld [vmem:[#allocation2 + $0x388] sm:$0xff]
    %v168 = vld [vmem:[#allocation2 + $0x390] sm:$0xff]
    %v169 = vld [vmem:[#allocation2 + $0x398] sm:$0xff]
    %v170 = vld [vmem:[#allocation2 + $0x3a0] sm:$0xff]
    %v171 = vld [vmem:[#allocation2 + $0x3a8] sm:$0xff]
    %v172 = vld [vmem:[#allocation2 + $0x3b0] sm:$0xff]
    %v173 = vld [vmem:[#allocation2 + $0x3b8] sm:$0xff]
    %v174 = vld [vmem:[#allocation2 + $0x3c0] sm:$0xff]
    %v175 = vld [vmem:[#allocation2 + $0x3c8] sm:$0xff]
    %v176 = vld [vmem:[#allocation2 + $0x3d0] sm:$0xff]
    %v177 = vld [vmem:[#allocation2 + $0x3d8] sm:$0xff]
    %v178 = vld [vmem:[#allocation2 + $0x3e0] sm:$0xff]
    %v179 = vld [vmem:[#allocation2 + $0x3e8] sm:$0xff]
    %v180 = vld [vmem:[#allocation2 + $0x3f0] sm:$0xff]
    %v181 = vld [vmem:[#allocation2 + $0x3f8] sm:$0xff]
    %v182 = vld [vmem:[#allocation2 + $0x400] sm:$0xff]
    %v183 = vld [vmem:[#allocation2 + $0x408] sm:$0xff]
    %v184 = vld [vmem:[#allocation2 + $0x410] sm:$0xff]
    %v185 = vld [vmem:[#allocation2 + $0x418] sm:$0xff]
    %v186 = vld [vmem:[#allocation2 + $0x420] sm:$0xff]
    %v187 = vld [vmem:[#allocation2 + $0x428] sm:$0xff]
    %v188 = vld [vmem:[#allocation2 + $0x430] sm:$0xff]
    %v189 = vld [vmem:[#allocation2 + $0x438] sm:$0xff]
    %v190 = vld [vmem:[#allocation2 + $0x440] sm:$0xff]
    %v191 = vld [vmem:[#allocation2 + $0x448] sm:$0xff]
    %v192 = vld [vmem:[#allocation2 + $0x450] sm:$0xff]
    %v193 = vld [vmem:[#allocation2 + $0x458] sm:$0xff]
    %v194 = vld [vmem:[#allocation2 + $0x460] sm:$0xff]
    %v195 = vld [vmem:[#allocation2 + $0x468] sm:$0xff]
    %v196 = vld [vmem:[#allocation2 + $0x470] sm:$0xff]
    %v197 = vld [vmem:[#allocation2 + $0x478] sm:$0xff]
    %v198 = vld [vmem:[#allocation2 + $0x480] sm:$0xff]
    %v199 = vld [vmem:[#allocation2 + $0x488] sm:$0xff]
    %v200 = vld [vmem:[#allocation2 + $0x490] sm:$0xff]
    %v201 = vld [vmem:[#allocation2 + $0x498] sm:$0xff]
    %v202 = vld [vmem:[#allocation2 + $0x4a0] sm:$0xff]
    %v203 = vld [vmem:[#allocation2 + $0x4a8] sm:$0xff]
    %v204 = vld [vmem:[#allocation2 + $0x4b0] sm:$0xff]
    %v205 = vld [vmem:[#allocation2 + $0x4b8] sm:$0xff]
    %v206 = vld [vmem:[#allocation2 + $0x4c0] sm:$0xff]
    %v207 = vld [vmem:[#allocation2 + $0x4c8] sm:$0xff]
    %v208 = vld [vmem:[#allocation2 + $0x4d0] sm:$0xff]
    %v209 = vld [vmem:[#allocation2 + $0x4d8] sm:$0xff]
    %v210 = vld [vmem:[#allocation2 + $0x4e0] sm:$0xff]
    %v211 = vld [vmem:[#allocation2 + $0x4e8] sm:$0xff]
    %v212 = vld [vmem:[#allocation2 + $0x4f0] sm:$0xff]
    %v213 = vld [vmem:[#allocation2 + $0x4f8] sm:$0xff]
    %v214 = vld [vmem:[#allocation2 + $0x500] sm:$0xff]
    %v215 = vld [vmem:[#allocation2 + $0x508] sm:$0xff]
    %v216 = vld [vmem:[#allocation2 + $0x510] sm:$0xff]
    %v217 = vld [vmem:[#allocation2 + $0x518] sm:$0xff]
    %v218 = vld [vmem:[#allocation2 + $0x520] sm:$0xff]
    %v219 = vld [vmem:[#allocation2 + $0x528] sm:$0xff]
    %v220 = vld [vmem:[#allocation2 + $0x530] sm:$0xff]
    %v221 = vld [vmem:[#allocation2 + $0x538] sm:$0xff]
    %v222 = vld [vmem:[#allocation2 + $0x540] sm:$0xff]
    %v223 = vld [vmem:[#allocation2 + $0x548] sm:$0xff]
    %v224 = vld [vmem:[#allocation2 + $0x550] sm:$0xff]
    %v225 = vld [vmem:[#allocation2 + $0x558] sm:$0xff]
    %v226 = vld [vmem:[#allocation2 + $0x560] sm:$0xff]
    %v227 = vld [vmem:[#allocation2 + $0x568] sm:$0xff]
    %v228 = vld [vmem:[#allocation2 + $0x570] sm:$0xff]
    %v229 = vld [vmem:[#allocation2 + $0x578] sm:$0xff]
    %v230 = vld [vmem:[#allocation2 + $0x580] sm:$0xff]
    %v231 = vld [vmem:[#allocation2 + $0x588] sm:$0xff]
    %v232 = vld [vmem:[#allocation2 + $0x590] sm:$0xff]
    %v233 = vld [vmem:[#allocation2 + $0x598] sm:$0xff]
    %v234 = vld [vmem:[#allocation2 + $0x5a0] sm:$0xff]
    %v235 = vld [vmem:[#allocation2 + $0x5a8] sm:$0xff]
    %v236 = vld [vmem:[#allocation2 + $0x5b0] sm:$0xff]
    %v237 = vld [vmem:[#allocation2 + $0x5b8] sm:$0xff]
    %v238 = vld [vmem:[#allocation2 + $0x5c0] sm:$0xff]
    %v239 = vld [vmem:[#allocation2 + $0x5c8] sm:$0xff]
    %v240 = vld [vmem:[#allocation2 + $0x5d0] sm:$0xff]
    %v241 = vld [vmem:[#allocation2 + $0x5d8] sm:$0xff]
    %v242 = vld [vmem:[#allocation2 + $0x5e0] sm:$0xff]
    %v243 = vld [vmem:[#allocation2 + $0x5e8] sm:$0xff]
    %v244 = vld [vmem:[#allocation2 + $0x5f0] sm:$0xff]
    %v245 = vld [vmem:[#allocation2 + $0x5f8] sm:$0xff]
    %v246 = vld [vmem:[#allocation2 + $0x600] sm:$0xff]
    %v247 = vld [vmem:[#allocation2 + $0x608] sm:$0xff]
    %v248 = vld [vmem:[#allocation2 + $0x610] sm:$0xff]
    %v249 = vld [vmem:[#allocation2 + $0x618] sm:$0xff]
    %v250 = vld [vmem:[#allocation2 + $0x620] sm:$0xff]
    %v251 = vld [vmem:[#allocation2 + $0x628] sm:$0xff]
    %v252 = vld [vmem:[#allocation2 + $0x630] sm:$0xff]
    %v253 = vld [vmem:[#allocation2 + $0x638] sm:$0xff]
    %v254 = vld [vmem:[#allocation2 + $0x640] sm:$0xff]
    %v255 = vld [vmem:[#allocation2 + $0x648] sm:$0xff]
    %v256 = vld [vmem:[#allocation2 + $0x650] sm:$0xff]
    %v257 = vld [vmem:[#allocation2 + $0x658] sm:$0xff]
    %v258 = vld [vmem:[#allocation2 + $0x660] sm:$0xff]
    %v259 = vld [vmem:[#allocation2 + $0x668] sm:$0xff]
    %v260 = vld [vmem:[#allocation2 + $0x670] sm:$0xff]
    %v261 = vld [vmem:[#allocation2 + $0x678] sm:$0xff]
    %v262 = vld [vmem:[#allocation2 + $0x680] sm:$0xff]
    %v263 = vld [vmem:[#allocation2 + $0x688] sm:$0xff]
    %v264 = vld [vmem:[#allocation2 + $0x690] sm:$0xff]
    %v265 = vld [vmem:[#allocation2 + $0x698] sm:$0xff]
    %v266 = vld [vmem:[#allocation2 + $0x6a0] sm:$0xff]
    %v267 = vld [vmem:[#allocation2 + $0x6a8] sm:$0xff]
    %v268 = vld [vmem:[#allocation2 + $0x6b0] sm:$0xff]
    %v269 = vld [vmem:[#allocation2 + $0x6b8] sm:$0xff]
    %v270 = vld [vmem:[#allocation2 + $0x6c0] sm:$0xff]
    %v271 = vld [vmem:[#allocation2 + $0x6c8] sm:$0xff]
    %v272 = vld [vmem:[#allocation2 + $0x6d0] sm:$0xff]
    %v273 = vld [vmem:[#allocation2 + $0x6d8] sm:$0xff]
    %v274 = vld [vmem:[#allocation2 + $0x6e0] sm:$0xff]
    %v275 = vld [vmem:[#allocation2 + $0x6e8] sm:$0xff]
    %v276 = vld [vmem:[#allocation2 + $0x6f0] sm:$0xff]
    %v277 = vld [vmem:[#allocation2 + $0x6f8] sm:$0xff]
    %v278 = vld [vmem:[#allocation2 + $0x700] sm:$0xff]
    %v279 = vld [vmem:[#allocation2 + $0x708] sm:$0xff]
    %v280 = vld [vmem:[#allocation2 + $0x710] sm:$0xff]
    %v281 = vld [vmem:[#allocation2 + $0x718] sm:$0xff]
    %v282 = vld [vmem:[#allocation2 + $0x720] sm:$0xff]
    %v283 = vld [vmem:[#allocation2 + $0x728] sm:$0xff]
    %v284 = vld [vmem:[#allocation2 + $0x730] sm:$0xff]
    %v285 = vld [vmem:[#allocation2 + $0x738] sm:$0xff]
    %v286 = vld [vmem:[#allocation2 + $0x740] sm:$0xff]
    %v287 = vld [vmem:[#allocation2 + $0x748] sm:$0xff]
    %v288 = vld [vmem:[#allocation2 + $0x750] sm:$0xff]
    %v289 = vld [vmem:[#allocation2 + $0x758] sm:$0xff]
    %v290 = vld [vmem:[#allocation2 + $0x760] sm:$0xff]
    %v291 = vld [vmem:[#allocation2 + $0x768] sm:$0xff]
    %v292 = vld [vmem:[#allocation2 + $0x770] sm:$0xff]
    %v293 = vld [vmem:[#allocation2 + $0x778] sm:$0xff]
    %v294 = vld [vmem:[#allocation2 + $0x780] sm:$0xff]
    %v295 = vld [vmem:[#allocation2 + $0x788] sm:$0xff]
    %v296 = vld [vmem:[#allocation2 + $0x790] sm:$0xff]
    %v297 = vld [vmem:[#allocation2 + $0x798] sm:$0xff]
    %v298 = vld [vmem:[#allocation2 + $0x7a0] sm:$0xff]
    %v299 = vld [vmem:[#allocation2 + $0x7a8] sm:$0xff]
    %v300 = vld [vmem:[#allocation2 + $0x7b0] sm:$0xff]
    %v301 = vld [vmem:[#allocation2 + $0x7b8] sm:$0xff]
    %v302 = vld [vmem:[#allocation2 + $0x7c0] sm:$0xff]
    %v303 = vld [vmem:[#allocation2 + $0x7c8] sm:$0xff]
    %v304 = vld [vmem:[#allocation2 + $0x7d0] sm:$0xff]
    %v305 = vld [vmem:[#allocation2 + $0x7d8] sm:$0xff]
    %v306 = vld [vmem:[#allocation2 + $0x7e0] sm:$0xff]
    %v307 = vld [vmem:[#allocation2 + $0x7e8] sm:$0xff]
    %v308 = vld [vmem:[#allocation2 + $0x7f0] sm:$0xff]
    %v309 = vld [vmem:[#allocation2 + $0x7f8] sm:$0xff]
    %v310 = vld [vmem:[#allocation2 + $0x800] sm:$0xff]
    %v311 = vld [vmem:[#allocation2 + $0x808] sm:$0xff]
    %v312 = vld [vmem:[#allocation2 + $0x810] sm:$0xff]
    %v313 = vld [vmem:[#allocation2 + $0x818] sm:$0xff]
    %v314 = vld [vmem:[#allocation2 + $0x820] sm:$0xff]
    %v315 = vld [vmem:[#allocation2 + $0x828] sm:$0xff]
    %v316 = vld [vmem:[#allocation2 + $0x830] sm:$0xff]
    %v317 = vld [vmem:[#allocation2 + $0x838] sm:$0xff]
    %v318 = vld [vmem:[#allocation2 + $0x840] sm:$0xff]
    %v319 = vld [vmem:[#allocation2 + $0x848] sm:$0xff]
    %v320 = vld [vmem:[#allocation2 + $0x850] sm:$0xff]
    %v321 = vld [vmem:[#allocation2 + $0x858] sm:$0xff]
    %v322 = vld [vmem:[#allocation2 + $0x860] sm:$0xff]
    %v323 = vld [vmem:[#allocation2 + $0x868] sm:$0xff]
    %v324 = vld [vmem:[#allocation2 + $0x870] sm:$0xff]
    %v325 = vld [vmem:[#allocation2 + $0x878] sm:$0xff]
    %v326 = vld [vmem:[#allocation2 + $0x880] sm:$0xff]
    %v327 = vld [vmem:[#allocation2 + $0x888] sm:$0xff]
    %v328 = vld [vmem:[#allocation2 + $0x890] sm:$0xff]
    %v329 = vld [vmem:[#allocation2 + $0x898] sm:$0xff]
    %v330 = vld [vmem:[#allocation2 + $0x8a0] sm:$0xff]
    %v331 = vld [vmem:[#allocation2 + $0x8a8] sm:$0xff]
    %v332 = vld [vmem:[#allocation2 + $0x8b0] sm:$0xff]
    %v333 = vld [vmem:[#allocation2 + $0x8b8] sm:$0xff]
    %v334 = vld [vmem:[#allocation2 + $0x8c0] sm:$0xff]
    %v335 = vld [vmem:[#allocation2 + $0x8c8] sm:$0xff]
    %v336 = vld [vmem:[#allocation2 + $0x8d0] sm:$0xff]
    %v337 = vld [vmem:[#allocation2 + $0x8d8] sm:$0xff]
    %v338 = vld [vmem:[#allocation2 + $0x8e0] sm:$0xff]
    %v339 = vld [vmem:[#allocation2 + $0x8e8] sm:$0xff]
    %v340 = vld [vmem:[#allocation2 + $0x8f0] sm:$0xff]
    %v341 = vld [vmem:[#allocation2 + $0x8f8] sm:$0xff]
    %v342 = vld [vmem:[#allocation2 + $0x900] sm:$0xff]
    %v343 = vld [vmem:[#allocation2 + $0x908] sm:$0xff]
    %v344 = vld [vmem:[#allocation2 + $0x910] sm:$0xff]
    %v345 = vld [vmem:[#allocation2 + $0x918] sm:$0xff]
    %v346 = vld [vmem:[#allocation2 + $0x920] sm:$0xff]
    %v347 = vld [vmem:[#allocation2 + $0x928] sm:$0xff]
    %v348 = vld [vmem:[#allocation2 + $0x930] sm:$0xff]
    %v349 = vld [vmem:[#allocation2 + $0x938] sm:$0xff]
    %v350 = vld [vmem:[#allocation2 + $0x940] sm:$0xff]
    %v351 = vld [vmem:[#allocation2 + $0x948] sm:$0xff]
    %v352 = vld [vmem:[#allocation2 + $0x950] sm:$0xff]
    %v353 = vld [vmem:[#allocation2 + $0x958] sm:$0xff]
    %v354 = vld [vmem:[#allocation2 + $0x960] sm:$0xff]
    %v355 = vld [vmem:[#allocation2 + $0x968] sm:$0xff]
    %v356 = vld [vmem:[#allocation2 + $0x970] sm:$0xff]
    %v357 = vld [vmem:[#allocation2 + $0x978] sm:$0xff]
    %v358 = vld [vmem:[#allocation2 + $0x980] sm:$0xff]
    %v359 = vld [vmem:[#allocation2 + $0x988] sm:$0xff]
    %v360 = vld [vmem:[#allocation2 + $0x990] sm:$0xff]
    %v361 = vld [vmem:[#allocation2 + $0x998] sm:$0xff]
    %v362 = vld [vmem:[#allocation2 + $0x9a0] sm:$0xff]
    %v363 = vld [vmem:[#allocation2 + $0x9a8] sm:$0xff]
    %v364 = vld [vmem:[#allocation2 + $0x9b0] sm:$0xff]
    %v365 = vld [vmem:[#allocation2 + $0x9b8] sm:$0xff]
    %v366 = vld [vmem:[#allocation2 + $0x9c0] sm:$0xff]
    %v367 = vld [vmem:[#allocation2 + $0x9c8] sm:$0xff]
    %v368 = vld [vmem:[#allocation2 + $0x9d0] sm:$0xff]
    %v369 = vld [vmem:[#allocation2 + $0x9d8] sm:$0xff]
    %v370 = vld [vmem:[#allocation2 + $0x9e0] sm:$0xff]
    %v371 = vld [vmem:[#allocation2 + $0x9e8] sm:$0xff]
    %v372 = vld [vmem:[#allocation2 + $0x9f0] sm:$0xff]
    %v373 = vld [vmem:[#allocation2 + $0x9f8] sm:$0xff]
    %v374 = vld [vmem:[#allocation2 + $0xa00] sm:$0xff]
    %v375 = vld [vmem:[#allocation2 + $0xa08] sm:$0xff]
    %v376 = vld [vmem:[#allocation2 + $0xa10] sm:$0xff]
    %v377 = vld [vmem:[#allocation2 + $0xa18] sm:$0xff]
    %v378 = vld [vmem:[#allocation2 + $0xa20] sm:$0xff]
    %v379 = vld [vmem:[#allocation2 + $0xa28] sm:$0xff]
    %v380 = vld [vmem:[#allocation2 + $0xa30] sm:$0xff]
    %v381 = vld [vmem:[#allocation2 + $0xa38] sm:$0xff]
    %v382 = vld [vmem:[#allocation2 + $0xa40] sm:$0xff]
    %v383 = vld [vmem:[#allocation2 + $0xa48] sm:$0xff]
    %v384 = vld [vmem:[#allocation2 + $0xa50] sm:$0xff]
    %v385 = vld [vmem:[#allocation2 + $0xa58] sm:$0xff]
    %v386 = vld [vmem:[#allocation2 + $0xa60] sm:$0xff]
    %v387 = vld [vmem:[#allocation2 + $0xa68] sm:$0xff]
    %v388 = vld [vmem:[#allocation2 + $0xa70] sm:$0xff]
    %v389 = vld [vmem:[#allocation2 + $0xa78] sm:$0xff]
    %v390 = vld [vmem:[#allocation2 + $0xa80] sm:$0xff]
    %v391 = vld [vmem:[#allocation2 + $0xa88] sm:$0xff]
    %v392 = vld [vmem:[#allocation2 + $0xa90] sm:$0xff]
    %v393 = vld [vmem:[#allocation2 + $0xa98] sm:$0xff]
    %v394 = vld [vmem:[#allocation2 + $0xaa0] sm:$0xff]
    %v395 = vld [vmem:[#allocation2 + $0xaa8] sm:$0xff]
    %v396 = vld [vmem:[#allocation2 + $0xab0] sm:$0xff]
    %v397 = vld [vmem:[#allocation2 + $0xab8] sm:$0xff]
    %v398 = vld [vmem:[#allocation2 + $0xac0] sm:$0xff]
    %v399 = vld [vmem:[#allocation2 + $0xac8] sm:$0xff]
    %v400 = vld [vmem:[#allocation2 + $0xad0] sm:$0xff]
    %v401 = vld [vmem:[#allocation2 + $0xad8] sm:$0xff]
    %v402 = vld [vmem:[#allocation2 + $0xae0] sm:$0xff]
    %v403 = vld [vmem:[#allocation2 + $0xae8] sm:$0xff]
    %v404 = vld [vmem:[#allocation2 + $0xaf0] sm:$0xff]
    %v405 = vld [vmem:[#allocation2 + $0xaf8] sm:$0xff]
    %v406 = vld [vmem:[#allocation2 + $0xb00] sm:$0xff]
    %v407 = vld [vmem:[#allocation2 + $0xb08] sm:$0xff]
    %v408 = vld [vmem:[#allocation2 + $0xb10] sm:$0xff]
    %v409 = vld [vmem:[#allocation2 + $0xb18] sm:$0xff]
    %v410 = vld [vmem:[#allocation2 + $0xb20] sm:$0xff]
    %v411 = vld [vmem:[#allocation2 + $0xb28] sm:$0xff]
    %v412 = vld [vmem:[#allocation2 + $0xb30] sm:$0xff]
    %v413 = vld [vmem:[#allocation2 + $0xb38] sm:$0xff]
    %v414 = vld [vmem:[#allocation2 + $0xb40] sm:$0xff]
    %v415 = vld [vmem:[#allocation2 + $0xb48] sm:$0xff]
    %v416 = vld [vmem:[#allocation2 + $0xb50] sm:$0xff]
    %v417 = vld [vmem:[#allocation2 + $0xb58] sm:$0xff]
    %v418 = vld [vmem:[#allocation2 + $0xb60] sm:$0xff]
    %v419 = vld [vmem:[#allocation2 + $0xb68] sm:$0xff]
    %v420 = vld [vmem:[#allocation2 + $0xb70] sm:$0xff]
    %v421 = vld [vmem:[#allocation2 + $0xb78] sm:$0xff]
    %v422 = vld [vmem:[#allocation2 + $0xb80] sm:$0xff]
    %v423 = vld [vmem:[#allocation2 + $0xb88] sm:$0xff]
    %v424 = vld [vmem:[#allocation2 + $0xb90] sm:$0xff]
    %v425 = vld [vmem:[#allocation2 + $0xb98] sm:$0xff]
    %v426 = vld [vmem:[#allocation2 + $0xba0] sm:$0xff]
    %v427 = vld [vmem:[#allocation2 + $0xba8] sm:$0xff]
    %v428 = vld [vmem:[#allocation2 + $0xbb0] sm:$0xff]
    %v429 = vld [vmem:[#allocation2 + $0xbb8] sm:$0xff]
    %v430 = vld [vmem:[#allocation2 + $0xbc0] sm:$0xff]
    %v431 = vld [vmem:[#allocation2 + $0xbc8] sm:$0xff]
    %v432 = vld [vmem:[#allocation2 + $0xbd0] sm:$0xff]
    %v433 = vld [vmem:[#allocation2 + $0xbd8] sm:$0xff]
    %v434 = vld [vmem:[#allocation2 + $0xbe0] sm:$0xff]
    %v435 = vld [vmem:[#allocation2 + $0xbe8] sm:$0xff]
    %v436 = vld [vmem:[#allocation2 + $0xbf0] sm:$0xff]
    %v437 = vld [vmem:[#allocation2 + $0xbf8] sm:$0xff]
    %v438 = vld [vmem:[#allocation2 + $0xc00] sm:$0xff]
    %v439 = vld [vmem:[#allocation2 + $0xc08] sm:$0xff]
    %v440 = vld [vmem:[#allocation2 + $0xc10] sm:$0xff]
    %v441 = vld [vmem:[#allocation2 + $0xc18] sm:$0xff]
    %v442 = vld [vmem:[#allocation2 + $0xc20] sm:$0xff]
    %v443 = vld [vmem:[#allocation2 + $0xc28] sm:$0xff]
    %v444 = vld [vmem:[#allocation2 + $0xc30] sm:$0xff]
    %v445 = vld [vmem:[#allocation2 + $0xc38] sm:$0xff]
    %v446 = vld [vmem:[#allocation2 + $0xc40] sm:$0xff]
    %v447 = vld [vmem:[#allocation2 + $0xc48] sm:$0xff]
    %v448 = vld [vmem:[#allocation2 + $0xc50] sm:$0xff]
    %v449 = vld [vmem:[#allocation2 + $0xc58] sm:$0xff]
    %v450 = vld [vmem:[#allocation2 + $0xc60] sm:$0xff]
    %v451 = vld [vmem:[#allocation2 + $0xc68] sm:$0xff]
    %v452 = vld [vmem:[#allocation2 + $0xc70] sm:$0xff]
    %v453 = vld [vmem:[#allocation2 + $0xc78] sm:$0xff]
    %v454 = vld [vmem:[#allocation2 + $0xc80] sm:$0xff]
    %v455 = vld [vmem:[#allocation2 + $0xc88] sm:$0xff]
    %v456 = vld [vmem:[#allocation2 + $0xc90] sm:$0xff]
    %v457 = vld [vmem:[#allocation2 + $0xc98] sm:$0xff]
    %v458 = vld [vmem:[#allocation2 + $0xca0] sm:$0xff]
    %v459 = vld [vmem:[#allocation2 + $0xca8] sm:$0xff]
    %v460 = vld [vmem:[#allocation2 + $0xcb0] sm:$0xff]
    %v461 = vld [vmem:[#allocation2 + $0xcb8] sm:$0xff]
    %v462 = vld [vmem:[#allocation2 + $0xcc0] sm:$0xff]
    %v463 = vld [vmem:[#allocation2 + $0xcc8] sm:$0xff]
    %v464 = vld [vmem:[#allocation2 + $0xcd0] sm:$0xff]
    %v465 = vld [vmem:[#allocation2 + $0xcd8] sm:$0xff]
    %v466 = vld [vmem:[#allocation2 + $0xce0] sm:$0xff]
    %v467 = vld [vmem:[#allocation2 + $0xce8] sm:$0xff]
    %v468 = vld [vmem:[#allocation2 + $0xcf0] sm:$0xff]
    %v469 = vld [vmem:[#allocation2 + $0xcf8] sm:$0xff]
    %v470 = vld [vmem:[#allocation2 + $0xd00] sm:$0xff]
    %v471 = vld [vmem:[#allocation2 + $0xd08] sm:$0xff]
    %v472 = vld [vmem:[#allocation2 + $0xd10] sm:$0xff]
    %v473 = vld [vmem:[#allocation2 + $0xd18] sm:$0xff]
    %v474 = vld [vmem:[#allocation2 + $0xd20] sm:$0xff]
    %v475 = vld [vmem:[#allocation2 + $0xd28] sm:$0xff]
    %v476 = vld [vmem:[#allocation2 + $0xd30] sm:$0xff]
    %v477 = vld [vmem:[#allocation2 + $0xd38] sm:$0xff]
    %v478 = vld [vmem:[#allocation2 + $0xd40] sm:$0xff]
    %v479 = vld [vmem:[#allocation2 + $0xd48] sm:$0xff]
    %v480 = vld [vmem:[#allocation2 + $0xd50] sm:$0xff]
    %v481 = vld [vmem:[#allocation2 + $0xd58] sm:$0xff]
    %v482 = vld [vmem:[#allocation2 + $0xd60] sm:$0xff]
    %v483 = vld [vmem:[#allocation2 + $0xd68] sm:$0xff]
    %v484 = vld [vmem:[#allocation2 + $0xd70] sm:$0xff]
    %v485 = vld [vmem:[#allocation2 + $0xd78] sm:$0xff]
    %v486 = vld [vmem:[#allocation2 + $0xd80] sm:$0xff]
    %v487 = vld [vmem:[#allocation2 + $0xd88] sm:$0xff]
    %v488 = vld [vmem:[#allocation2 + $0xd90] sm:$0xff]
    %v489 = vld [vmem:[#allocation2 + $0xd98] sm:$0xff]
    %v490 = vld [vmem:[#allocation2 + $0xda0] sm:$0xff]
    %v491 = vld [vmem:[#allocation2 + $0xda8] sm:$0xff]
    %v492 = vld [vmem:[#allocation2 + $0xdb0] sm:$0xff]
    %v493 = vld [vmem:[#allocation2 + $0xdb8] sm:$0xff]
    %v494 = vld [vmem:[#allocation2 + $0xdc0] sm:$0xff]
    %v495 = vld [vmem:[#allocation2 + $0xdc8] sm:$0xff]
    %v496 = vld [vmem:[#allocation2 + $0xdd0] sm:$0xff]
    %v497 = vld [vmem:[#allocation2 + $0xdd8] sm:$0xff]
    %v498 = vld [vmem:[#allocation2 + $0xde0] sm:$0xff]
    %v499 = vld [vmem:[#allocation2 + $0xde8] sm:$0xff]
    %v500 = vld [vmem:[#allocation2 + $0xdf0] sm:$0xff]
    %v501 = vld [vmem:[#allocation2 + $0xdf8] sm:$0xff]
    %v502 = vld [vmem:[#allocation2 + $0xe00] sm:$0xff]
    %v503 = vld [vmem:[#allocation2 + $0xe08] sm:$0xff]
    %v504 = vld [vmem:[#allocation2 + $0xe10] sm:$0xff]
    %v505 = vld [vmem:[#allocation2 + $0xe18] sm:$0xff]
    %v506 = vld [vmem:[#allocation2 + $0xe20] sm:$0xff]
    %v507 = vld [vmem:[#allocation2 + $0xe28] sm:$0xff]
    %v508 = vld [vmem:[#allocation2 + $0xe30] sm:$0xff]
    %v509 = vld [vmem:[#allocation2 + $0xe38] sm:$0xff]
    %v510 = vld [vmem:[#allocation2 + $0xe40] sm:$0xff]
    %v511 = vld [vmem:[#allocation2 + $0xe48] sm:$0xff]
    %v512 = vld [vmem:[#allocation2 + $0xe50] sm:$0xff]
    %v513 = vld [vmem:[#allocation2 + $0xe58] sm:$0xff]
    %v514 = vld [vmem:[#allocation2 + $0xe60] sm:$0xff]
    %v515 = vld [vmem:[#allocation2 + $0xe68] sm:$0xff]
    %v516 = vld [vmem:[#allocation2 + $0xe70] sm:$0xff]
    %v517 = vld [vmem:[#allocation2 + $0xe78] sm:$0xff]
    %v518 = vld [vmem:[#allocation2 + $0xe80] sm:$0xff]
    %v519 = vld [vmem:[#allocation2 + $0xe88] sm:$0xff]
    %v520 = vld [vmem:[#allocation2 + $0xe90] sm:$0xff]
    %v521 = vld [vmem:[#allocation2 + $0xe98] sm:$0xff]
    %v522 = vld [vmem:[#allocation2 + $0xea0] sm:$0xff]
    %v523 = vld [vmem:[#allocation2 + $0xea8] sm:$0xff]
    %v524 = vld [vmem:[#allocation2 + $0xeb0] sm:$0xff]
    %v525 = vld [vmem:[#allocation2 + $0xeb8] sm:$0xff]
    %v526 = vld [vmem:[#allocation2 + $0xec0] sm:$0xff]
    %v527 = vld [vmem:[#allocation2 + $0xec8] sm:$0xff]
    %v528 = vld [vmem:[#allocation2 + $0xed0] sm:$0xff]
    %v529 = vld [vmem:[#allocation2 + $0xed8] sm:$0xff]
    %v530 = vld [vmem:[#allocation2 + $0xee0] sm:$0xff]
    %v531 = vld [vmem:[#allocation2 + $0xee8] sm:$0xff]
    %v532 = vld [vmem:[#allocation2 + $0xef0] sm:$0xff]
    %v533 = vld [vmem:[#allocation2 + $0xef8] sm:$0xff]
    %v534 = vld [vmem:[#allocation2 + $0xf00] sm:$0xff]
    %v535 = vld [vmem:[#allocation2 + $0xf08] sm:$0xff]
    %v536 = vld [vmem:[#allocation2 + $0xf10] sm:$0xff]
    %v537 = vld [vmem:[#allocation2 + $0xf18] sm:$0xff]
    %v538 = vld [vmem:[#allocation2 + $0xf20] sm:$0xff]
    %v539 = vld [vmem:[#allocation2 + $0xf28] sm:$0xff]
    %v540 = vld [vmem:[#allocation2 + $0xf30] sm:$0xff]
    %v541 = vld [vmem:[#allocation2 + $0xf38] sm:$0xff]
    %v542 = vld [vmem:[#allocation2 + $0xf40] sm:$0xff]
    %v543 = vld [vmem:[#allocation2 + $0xf48] sm:$0xff]
    %v544 = vld [vmem:[#allocation2 + $0xf50] sm:$0xff]
    %v545 = vld [vmem:[#allocation2 + $0xf58] sm:$0xff]
    %v546 = vld [vmem:[#allocation2 + $0xf60] sm:$0xff]
    %v547 = vld [vmem:[#allocation2 + $0xf68] sm:$0xff]
    %v548 = vld [vmem:[#allocation2 + $0xf70] sm:$0xff]
    %v549 = vld [vmem:[#allocation2 + $0xf78] sm:$0xff]
    %v550 = vld [vmem:[#allocation2 + $0xf80] sm:$0xff]
    %v551 = vld [vmem:[#allocation2 + $0xf88] sm:$0xff]
    %v552 = vld [vmem:[#allocation2 + $0xf90] sm:$0xff]
    %v553 = vld [vmem:[#allocation2 + $0xf98] sm:$0xff]
    %v554 = vld [vmem:[#allocation2 + $0xfa0] sm:$0xff]
    %v555 = vld [vmem:[#allocation2 + $0xfa8] sm:$0xff]
    %v556 = vld [vmem:[#allocation2 + $0xfb0] sm:$0xff]
    %v557 = vld [vmem:[#allocation2 + $0xfb8] sm:$0xff]
    %v558 = vld [vmem:[#allocation2 + $0xfc0] sm:$0xff]
    %v559 = vld [vmem:[#allocation2 + $0xfc8] sm:$0xff]
    %v560 = vld [vmem:[#allocation2 + $0xfd0] sm:$0xff]
    %v561 = vld [vmem:[#allocation2 + $0xfd8] sm:$0xff]
    %v562 = vld [vmem:[#allocation2 + $0xfe0] sm:$0xff]
    %v563 = vld [vmem:[#allocation2 + $0xfe8] sm:$0xff]
    %v564 = vld [vmem:[#allocation2 + $0xff0] sm:$0xff]
    %v565 = vld [vmem:[#allocation2 + $0xff8] sm:$0xff]
    %v566 = vld [vmem:[#allocation4] sm:$0xf]
    %v568 = vlaneseq
    %v569 = vshrl.u32 %v568, 7
    %v570 = vsub.s32 0, %v569
    %v571 = vrot.slane %v566, %v570
    %v572 = vlaneseq
    %v573 = vshrl.u32 %v572, 7
    %v574 = vsub.s32 1, %v573
    %v575 = vrot.slane %v566, %v574
    %v576 = vlaneseq
    %v577 = vshrl.u32 %v576, 7
    %v578 = vsub.s32 2, %v577
    %v579 = vrot.slane %v566, %v578
    %v580 = vlaneseq
    %v581 = vshrl.u32 %v580, 7
    %v582 = vsub.s32 3, %v581
    %v583 = vrot.slane %v566, %v582
    %v596 = vunpack.c.l.b16 %v46
    %v597 = vunpack.c.h.b16 %v46
    %v598 = vunpack.c.l.b16 %v47
    %v599 = vunpack.c.h.b16 %v47
    %v600 = vunpack.c.l.b16 %v48
    %v601 = vunpack.c.h.b16 %v48
    %v602 = vunpack.c.l.b16 %v49
    %v603 = vunpack.c.h.b16 %v49
    %v604 = vunpack.c.l.b16 %v50
    %v605 = vunpack.c.h.b16 %v50
    %v606 = vunpack.c.l.b16 %v51
    %v607 = vunpack.c.h.b16 %v51
    %v608 = vunpack.c.l.b16 %v52
    %v609 = vunpack.c.h.b16 %v52
    %v610 = vunpack.c.l.b16 %v53
    %v611 = vunpack.c.h.b16 %v53
    %v612 = vpack.c.b16 %v596, %v596
    %v613 = vpack.c.b16 %v597, %v597
    %v614 = vpack.c.b16 %v598, %v598
    %v615 = vpack.c.b16 %v599, %v599
    %v616 = vpack.c.b16 %v600, %v600
    %v617 = vpack.c.b16 %v601, %v601
    %v618 = vpack.c.b16 %v602, %v602
    %v619 = vpack.c.b16 %v603, %v603
    %v620 = vpack.c.b16 %v604, %v604
    %v621 = vpack.c.b16 %v605, %v605
    %v622 = vpack.c.b16 %v606, %v606
    %v623 = vpack.c.b16 %v607, %v607
    %v624 = vpack.c.b16 %v608, %v608
    %v625 = vpack.c.b16 %v609, %v609
    %v626 = vpack.c.b16 %v610, %v610
    %v627 = vpack.c.b16 %v611, %v611
    %v1156 = vunpack.c.l.b16 %v54
    %v1157 = vunpack.c.h.b16 %v54
    %v1158 = vunpack.c.l.b16 %v55
    %v1159 = vunpack.c.h.b16 %v55
    %v1160 = vunpack.c.l.b16 %v56
    %v1161 = vunpack.c.h.b16 %v56
    %v1162 = vunpack.c.l.b16 %v57
    %v1163 = vunpack.c.h.b16 %v57
    %v1164 = vunpack.c.l.b16 %v58
    %v1165 = vunpack.c.h.b16 %v58
    %v1166 = vunpack.c.l.b16 %v59
    %v1167 = vunpack.c.h.b16 %v59
    %v1168 = vunpack.c.l.b16 %v60
    %v1169 = vunpack.c.h.b16 %v60
    %v1170 = vunpack.c.l.b16 %v61
    %v1171 = vunpack.c.h.b16 %v61
    %v1172 = vunpack.c.l.b16 %v62
    %v1173 = vunpack.c.h.b16 %v62
    %v1174 = vunpack.c.l.b16 %v63
    %v1175 = vunpack.c.h.b16 %v63
    %v1176 = vunpack.c.l.b16 %v64
    %v1177 = vunpack.c.h.b16 %v64
    %v1178 = vunpack.c.l.b16 %v65
    %v1179 = vunpack.c.h.b16 %v65
    %v1180 = vunpack.c.l.b16 %v66
    %v1181 = vunpack.c.h.b16 %v66
    %v1182 = vunpack.c.l.b16 %v67
    %v1183 = vunpack.c.h.b16 %v67
    %v1184 = vunpack.c.l.b16 %v68
    %v1185 = vunpack.c.h.b16 %v68
    %v1186 = vunpack.c.l.b16 %v69
    %v1187 = vunpack.c.h.b16 %v69
    %v1188 = vunpack.c.l.b16 %v70
    %v1189 = vunpack.c.h.b16 %v70
    %v1190 = vunpack.c.l.b16 %v71
    %v1191 = vunpack.c.h.b16 %v71
    %v1192 = vunpack.c.l.b16 %v72
    %v1193 = vunpack.c.h.b16 %v72
    %v1194 = vunpack.c.l.b16 %v73
    %v1195 = vunpack.c.h.b16 %v73
    %v1196 = vunpack.c.l.b16 %v74
    %v1197 = vunpack.c.h.b16 %v74
    %v1198 = vunpack.c.l.b16 %v75
    %v1199 = vunpack.c.h.b16 %v75
    %v1200 = vunpack.c.l.b16 %v76
    %v1201 = vunpack.c.h.b16 %v76
    %v1202 = vunpack.c.l.b16 %v77
    %v1203 = vunpack.c.h.b16 %v77
    %v1204 = vunpack.c.l.b16 %v78
    %v1205 = vunpack.c.h.b16 %v78
    %v1206 = vunpack.c.l.b16 %v79
    %v1207 = vunpack.c.h.b16 %v79
    %v1208 = vunpack.c.l.b16 %v80
    %v1209 = vunpack.c.h.b16 %v80
    %v1210 = vunpack.c.l.b16 %v81
    %v1211 = vunpack.c.h.b16 %v81
    %v1212 = vunpack.c.l.b16 %v82
    %v1213 = vunpack.c.h.b16 %v82
    %v1214 = vunpack.c.l.b16 %v83
    %v1215 = vunpack.c.h.b16 %v83
    %v1216 = vunpack.c.l.b16 %v84
    %v1217 = vunpack.c.h.b16 %v84
    %v1218 = vunpack.c.l.b16 %v85
    %v1219 = vunpack.c.h.b16 %v85
    %v1220 = vunpack.c.l.b16 %v86
    %v1221 = vunpack.c.h.b16 %v86
    %v1222 = vunpack.c.l.b16 %v87
    %v1223 = vunpack.c.h.b16 %v87
    %v1224 = vunpack.c.l.b16 %v88
    %v1225 = vunpack.c.h.b16 %v88
    %v1226 = vunpack.c.l.b16 %v89
    %v1227 = vunpack.c.h.b16 %v89
    %v1228 = vunpack.c.l.b16 %v90
    %v1229 = vunpack.c.h.b16 %v90
    %v1230 = vunpack.c.l.b16 %v91
    %v1231 = vunpack.c.h.b16 %v91
    %v1232 = vunpack.c.l.b16 %v92
    %v1233 = vunpack.c.h.b16 %v92
    %v1234 = vunpack.c.l.b16 %v93
    %v1235 = vunpack.c.h.b16 %v93
    %v1236 = vunpack.c.l.b16 %v94
    %v1237 = vunpack.c.h.b16 %v94
    %v1238 = vunpack.c.l.b16 %v95
    %v1239 = vunpack.c.h.b16 %v95
    %v1240 = vunpack.c.l.b16 %v96
    %v1241 = vunpack.c.h.b16 %v96
    %v1242 = vunpack.c.l.b16 %v97
    %v1243 = vunpack.c.h.b16 %v97
    %v1244 = vunpack.c.l.b16 %v98
    %v1245 = vunpack.c.h.b16 %v98
    %v1246 = vunpack.c.l.b16 %v99
    %v1247 = vunpack.c.h.b16 %v99
    %v1248 = vunpack.c.l.b16 %v100
    %v1249 = vunpack.c.h.b16 %v100
    %v1250 = vunpack.c.l.b16 %v101
    %v1251 = vunpack.c.h.b16 %v101
    %v1252 = vunpack.c.l.b16 %v102
    %v1253 = vunpack.c.h.b16 %v102
    %v1254 = vunpack.c.l.b16 %v103
    %v1255 = vunpack.c.h.b16 %v103
    %v1256 = vunpack.c.l.b16 %v104
    %v1257 = vunpack.c.h.b16 %v104
    %v1258 = vunpack.c.l.b16 %v105
    %v1259 = vunpack.c.h.b16 %v105
    %v1260 = vunpack.c.l.b16 %v106
    %v1261 = vunpack.c.h.b16 %v106
    %v1262 = vunpack.c.l.b16 %v107
    %v1263 = vunpack.c.h.b16 %v107
    %v1264 = vunpack.c.l.b16 %v108
    %v1265 = vunpack.c.h.b16 %v108
    %v1266 = vunpack.c.l.b16 %v109
    %v1267 = vunpack.c.h.b16 %v109
    %v1268 = vunpack.c.l.b16 %v110
    %v1269 = vunpack.c.h.b16 %v110
    %v1270 = vunpack.c.l.b16 %v111
    %v1271 = vunpack.c.h.b16 %v111
    %v1272 = vunpack.c.l.b16 %v112
    %v1273 = vunpack.c.h.b16 %v112
    %v1274 = vunpack.c.l.b16 %v113
    %v1275 = vunpack.c.h.b16 %v113
    %v1276 = vunpack.c.l.b16 %v114
    %v1277 = vunpack.c.h.b16 %v114
    %v1278 = vunpack.c.l.b16 %v115
    %v1279 = vunpack.c.h.b16 %v115
    %v1280 = vunpack.c.l.b16 %v116
    %v1281 = vunpack.c.h.b16 %v116
    %v1282 = vunpack.c.l.b16 %v117
    %v1283 = vunpack.c.h.b16 %v117
    %v1284 = vunpack.c.l.b16 %v118
    %v1285 = vunpack.c.h.b16 %v118
    %v1286 = vunpack.c.l.b16 %v119
    %v1287 = vunpack.c.h.b16 %v119
    %v1288 = vunpack.c.l.b16 %v120
    %v1289 = vunpack.c.h.b16 %v120
    %v1290 = vunpack.c.l.b16 %v121
    %v1291 = vunpack.c.h.b16 %v121
    %v1292 = vunpack.c.l.b16 %v122
    %v1293 = vunpack.c.h.b16 %v122
    %v1294 = vunpack.c.l.b16 %v123
    %v1295 = vunpack.c.h.b16 %v123
    %v1296 = vunpack.c.l.b16 %v124
    %v1297 = vunpack.c.h.b16 %v124
    %v1298 = vunpack.c.l.b16 %v125
    %v1299 = vunpack.c.h.b16 %v125
    %v1300 = vunpack.c.l.b16 %v126
    %v1301 = vunpack.c.h.b16 %v126
    %v1302 = vunpack.c.l.b16 %v127
    %v1303 = vunpack.c.h.b16 %v127
    %v1304 = vunpack.c.l.b16 %v128
    %v1305 = vunpack.c.h.b16 %v128
    %v1306 = vunpack.c.l.b16 %v129
    %v1307 = vunpack.c.h.b16 %v129
    %v1308 = vunpack.c.l.b16 %v130
    %v1309 = vunpack.c.h.b16 %v130
    %v1310 = vunpack.c.l.b16 %v131
    %v1311 = vunpack.c.h.b16 %v131
    %v1312 = vunpack.c.l.b16 %v132
    %v1313 = vunpack.c.h.b16 %v132
    %v1314 = vunpack.c.l.b16 %v133
    %v1315 = vunpack.c.h.b16 %v133
    %v1316 = vunpack.c.l.b16 %v134
    %v1317 = vunpack.c.h.b16 %v134
    %v1318 = vunpack.c.l.b16 %v135
    %v1319 = vunpack.c.h.b16 %v135
    %v1320 = vunpack.c.l.b16 %v136
    %v1321 = vunpack.c.h.b16 %v136
    %v1322 = vunpack.c.l.b16 %v137
    %v1323 = vunpack.c.h.b16 %v137
    %v1324 = vunpack.c.l.b16 %v138
    %v1325 = vunpack.c.h.b16 %v138
    %v1326 = vunpack.c.l.b16 %v139
    %v1327 = vunpack.c.h.b16 %v139
    %v1328 = vunpack.c.l.b16 %v140
    %v1329 = vunpack.c.h.b16 %v140
    %v1330 = vunpack.c.l.b16 %v141
    %v1331 = vunpack.c.h.b16 %v141
    %v1332 = vunpack.c.l.b16 %v142
    %v1333 = vunpack.c.h.b16 %v142
    %v1334 = vunpack.c.l.b16 %v143
    %v1335 = vunpack.c.h.b16 %v143
    %v1336 = vunpack.c.l.b16 %v144
    %v1337 = vunpack.c.h.b16 %v144
    %v1338 = vunpack.c.l.b16 %v145
    %v1339 = vunpack.c.h.b16 %v145
    %v1340 = vunpack.c.l.b16 %v146
    %v1341 = vunpack.c.h.b16 %v146
    %v1342 = vunpack.c.l.b16 %v147
    %v1343 = vunpack.c.h.b16 %v147
    %v1344 = vunpack.c.l.b16 %v148
    %v1345 = vunpack.c.h.b16 %v148
    %v1346 = vunpack.c.l.b16 %v149
    %v1347 = vunpack.c.h.b16 %v149
    %v1348 = vunpack.c.l.b16 %v150
    %v1349 = vunpack.c.h.b16 %v150
    %v1350 = vunpack.c.l.b16 %v151
    %v1351 = vunpack.c.h.b16 %v151
    %v1352 = vunpack.c.l.b16 %v152
    %v1353 = vunpack.c.h.b16 %v152
    %v1354 = vunpack.c.l.b16 %v153
    %v1355 = vunpack.c.h.b16 %v153
    %v1356 = vunpack.c.l.b16 %v154
    %v1357 = vunpack.c.h.b16 %v154
    %v1358 = vunpack.c.l.b16 %v155
    %v1359 = vunpack.c.h.b16 %v155
    %v1360 = vunpack.c.l.b16 %v156
    %v1361 = vunpack.c.h.b16 %v156
    %v1362 = vunpack.c.l.b16 %v157
    %v1363 = vunpack.c.h.b16 %v157
    %v1364 = vunpack.c.l.b16 %v158
    %v1365 = vunpack.c.h.b16 %v158
    %v1366 = vunpack.c.l.b16 %v159
    %v1367 = vunpack.c.h.b16 %v159
    %v1368 = vunpack.c.l.b16 %v160
    %v1369 = vunpack.c.h.b16 %v160
    %v1370 = vunpack.c.l.b16 %v161
    %v1371 = vunpack.c.h.b16 %v161
    %v1372 = vunpack.c.l.b16 %v162
    %v1373 = vunpack.c.h.b16 %v162
    %v1374 = vunpack.c.l.b16 %v163
    %v1375 = vunpack.c.h.b16 %v163
    %v1376 = vunpack.c.l.b16 %v164
    %v1377 = vunpack.c.h.b16 %v164
    %v1378 = vunpack.c.l.b16 %v165
    %v1379 = vunpack.c.h.b16 %v165
    %v1380 = vunpack.c.l.b16 %v166
    %v1381 = vunpack.c.h.b16 %v166
    %v1382 = vunpack.c.l.b16 %v167
    %v1383 = vunpack.c.h.b16 %v167
    %v1384 = vunpack.c.l.b16 %v168
    %v1385 = vunpack.c.h.b16 %v168
    %v1386 = vunpack.c.l.b16 %v169
    %v1387 = vunpack.c.h.b16 %v169
    %v1388 = vunpack.c.l.b16 %v170
    %v1389 = vunpack.c.h.b16 %v170
    %v1390 = vunpack.c.l.b16 %v171
    %v1391 = vunpack.c.h.b16 %v171
    %v1392 = vunpack.c.l.b16 %v172
    %v1393 = vunpack.c.h.b16 %v172
    %v1394 = vunpack.c.l.b16 %v173
    %v1395 = vunpack.c.h.b16 %v173
    %v1396 = vunpack.c.l.b16 %v174
    %v1397 = vunpack.c.h.b16 %v174
    %v1398 = vunpack.c.l.b16 %v175
    %v1399 = vunpack.c.h.b16 %v175
    %v1400 = vunpack.c.l.b16 %v176
    %v1401 = vunpack.c.h.b16 %v176
    %v1402 = vunpack.c.l.b16 %v177
    %v1403 = vunpack.c.h.b16 %v177
    %v1404 = vunpack.c.l.b16 %v178
    %v1405 = vunpack.c.h.b16 %v178
    %v1406 = vunpack.c.l.b16 %v179
    %v1407 = vunpack.c.h.b16 %v179
    %v1408 = vunpack.c.l.b16 %v180
    %v1409 = vunpack.c.h.b16 %v180
    %v1410 = vunpack.c.l.b16 %v181
    %v1411 = vunpack.c.h.b16 %v181
    %v1412 = vunpack.c.l.b16 %v182
    %v1413 = vunpack.c.h.b16 %v182
    %v1414 = vunpack.c.l.b16 %v183
    %v1415 = vunpack.c.h.b16 %v183
    %v1416 = vunpack.c.l.b16 %v184
    %v1417 = vunpack.c.h.b16 %v184
    %v1418 = vunpack.c.l.b16 %v185
    %v1419 = vunpack.c.h.b16 %v185
    %v1420 = vunpack.c.l.b16 %v186
    %v1421 = vunpack.c.h.b16 %v186
    %v1422 = vunpack.c.l.b16 %v187
    %v1423 = vunpack.c.h.b16 %v187
    %v1424 = vunpack.c.l.b16 %v188
    %v1425 = vunpack.c.h.b16 %v188
    %v1426 = vunpack.c.l.b16 %v189
    %v1427 = vunpack.c.h.b16 %v189
    %v1428 = vunpack.c.l.b16 %v190
    %v1429 = vunpack.c.h.b16 %v190
    %v1430 = vunpack.c.l.b16 %v191
    %v1431 = vunpack.c.h.b16 %v191
    %v1432 = vunpack.c.l.b16 %v192
    %v1433 = vunpack.c.h.b16 %v192
    %v1434 = vunpack.c.l.b16 %v193
    %v1435 = vunpack.c.h.b16 %v193
    %v1436 = vunpack.c.l.b16 %v194
    %v1437 = vunpack.c.h.b16 %v194
    %v1438 = vunpack.c.l.b16 %v195
    %v1439 = vunpack.c.h.b16 %v195
    %v1440 = vunpack.c.l.b16 %v196
    %v1441 = vunpack.c.h.b16 %v196
    %v1442 = vunpack.c.l.b16 %v197
    %v1443 = vunpack.c.h.b16 %v197
    %v1444 = vunpack.c.l.b16 %v198
    %v1445 = vunpack.c.h.b16 %v198
    %v1446 = vunpack.c.l.b16 %v199
    %v1447 = vunpack.c.h.b16 %v199
    %v1448 = vunpack.c.l.b16 %v200
    %v1449 = vunpack.c.h.b16 %v200
    %v1450 = vunpack.c.l.b16 %v201
    %v1451 = vunpack.c.h.b16 %v201
    %v1452 = vunpack.c.l.b16 %v202
    %v1453 = vunpack.c.h.b16 %v202
    %v1454 = vunpack.c.l.b16 %v203
    %v1455 = vunpack.c.h.b16 %v203
    %v1456 = vunpack.c.l.b16 %v204
    %v1457 = vunpack.c.h.b16 %v204
    %v1458 = vunpack.c.l.b16 %v205
    %v1459 = vunpack.c.h.b16 %v205
    %v1460 = vunpack.c.l.b16 %v206
    %v1461 = vunpack.c.h.b16 %v206
    %v1462 = vunpack.c.l.b16 %v207
    %v1463 = vunpack.c.h.b16 %v207
    %v1464 = vunpack.c.l.b16 %v208
    %v1465 = vunpack.c.h.b16 %v208
    %v1466 = vunpack.c.l.b16 %v209
    %v1467 = vunpack.c.h.b16 %v209
    %v1468 = vunpack.c.l.b16 %v210
    %v1469 = vunpack.c.h.b16 %v210
    %v1470 = vunpack.c.l.b16 %v211
    %v1471 = vunpack.c.h.b16 %v211
    %v1472 = vunpack.c.l.b16 %v212
    %v1473 = vunpack.c.h.b16 %v212
    %v1474 = vunpack.c.l.b16 %v213
    %v1475 = vunpack.c.h.b16 %v213
    %v1476 = vunpack.c.l.b16 %v214
    %v1477 = vunpack.c.h.b16 %v214
    %v1478 = vunpack.c.l.b16 %v215
    %v1479 = vunpack.c.h.b16 %v215
    %v1480 = vunpack.c.l.b16 %v216
    %v1481 = vunpack.c.h.b16 %v216
    %v1482 = vunpack.c.l.b16 %v217
    %v1483 = vunpack.c.h.b16 %v217
    %v1484 = vunpack.c.l.b16 %v218
    %v1485 = vunpack.c.h.b16 %v218
    %v1486 = vunpack.c.l.b16 %v219
    %v1487 = vunpack.c.h.b16 %v219
    %v1488 = vunpack.c.l.b16 %v220
    %v1489 = vunpack.c.h.b16 %v220
    %v1490 = vunpack.c.l.b16 %v221
    %v1491 = vunpack.c.h.b16 %v221
    %v1492 = vunpack.c.l.b16 %v222
    %v1493 = vunpack.c.h.b16 %v222
    %v1494 = vunpack.c.l.b16 %v223
    %v1495 = vunpack.c.h.b16 %v223
    %v1496 = vunpack.c.l.b16 %v224
    %v1497 = vunpack.c.h.b16 %v224
    %v1498 = vunpack.c.l.b16 %v225
    %v1499 = vunpack.c.h.b16 %v225
    %v1500 = vunpack.c.l.b16 %v226
    %v1501 = vunpack.c.h.b16 %v226
    %v1502 = vunpack.c.l.b16 %v227
    %v1503 = vunpack.c.h.b16 %v227
    %v1504 = vunpack.c.l.b16 %v228
    %v1505 = vunpack.c.h.b16 %v228
    %v1506 = vunpack.c.l.b16 %v229
    %v1507 = vunpack.c.h.b16 %v229
    %v1508 = vunpack.c.l.b16 %v230
    %v1509 = vunpack.c.h.b16 %v230
    %v1510 = vunpack.c.l.b16 %v231
    %v1511 = vunpack.c.h.b16 %v231
    %v1512 = vunpack.c.l.b16 %v232
    %v1513 = vunpack.c.h.b16 %v232
    %v1514 = vunpack.c.l.b16 %v233
    %v1515 = vunpack.c.h.b16 %v233
    %v1516 = vunpack.c.l.b16 %v234
    %v1517 = vunpack.c.h.b16 %v234
    %v1518 = vunpack.c.l.b16 %v235
    %v1519 = vunpack.c.h.b16 %v235
    %v1520 = vunpack.c.l.b16 %v236
    %v1521 = vunpack.c.h.b16 %v236
    %v1522 = vunpack.c.l.b16 %v237
    %v1523 = vunpack.c.h.b16 %v237
    %v1524 = vunpack.c.l.b16 %v238
    %v1525 = vunpack.c.h.b16 %v238
    %v1526 = vunpack.c.l.b16 %v239
    %v1527 = vunpack.c.h.b16 %v239
    %v1528 = vunpack.c.l.b16 %v240
    %v1529 = vunpack.c.h.b16 %v240
    %v1530 = vunpack.c.l.b16 %v241
    %v1531 = vunpack.c.h.b16 %v241
    %v1532 = vunpack.c.l.b16 %v242
    %v1533 = vunpack.c.h.b16 %v242
    %v1534 = vunpack.c.l.b16 %v243
    %v1535 = vunpack.c.h.b16 %v243
    %v1536 = vunpack.c.l.b16 %v244
    %v1537 = vunpack.c.h.b16 %v244
    %v1538 = vunpack.c.l.b16 %v245
    %v1539 = vunpack.c.h.b16 %v245
    %v1540 = vunpack.c.l.b16 %v246
    %v1541 = vunpack.c.h.b16 %v246
    %v1542 = vunpack.c.l.b16 %v247
    %v1543 = vunpack.c.h.b16 %v247
    %v1544 = vunpack.c.l.b16 %v248
    %v1545 = vunpack.c.h.b16 %v248
    %v1546 = vunpack.c.l.b16 %v249
    %v1547 = vunpack.c.h.b16 %v249
    %v1548 = vunpack.c.l.b16 %v250
    %v1549 = vunpack.c.h.b16 %v250
    %v1550 = vunpack.c.l.b16 %v251
    %v1551 = vunpack.c.h.b16 %v251
    %v1552 = vunpack.c.l.b16 %v252
    %v1553 = vunpack.c.h.b16 %v252
    %v1554 = vunpack.c.l.b16 %v253
    %v1555 = vunpack.c.h.b16 %v253
    %v1556 = vunpack.c.l.b16 %v254
    %v1557 = vunpack.c.h.b16 %v254
    %v1558 = vunpack.c.l.b16 %v255
    %v1559 = vunpack.c.h.b16 %v255
    %v1560 = vunpack.c.l.b16 %v256
    %v1561 = vunpack.c.h.b16 %v256
    %v1562 = vunpack.c.l.b16 %v257
    %v1563 = vunpack.c.h.b16 %v257
    %v1564 = vunpack.c.l.b16 %v258
    %v1565 = vunpack.c.h.b16 %v258
    %v1566 = vunpack.c.l.b16 %v259
    %v1567 = vunpack.c.h.b16 %v259
    %v1568 = vunpack.c.l.b16 %v260
    %v1569 = vunpack.c.h.b16 %v260
    %v1570 = vunpack.c.l.b16 %v261
    %v1571 = vunpack.c.h.b16 %v261
    %v1572 = vunpack.c.l.b16 %v262
    %v1573 = vunpack.c.h.b16 %v262
    %v1574 = vunpack.c.l.b16 %v263
    %v1575 = vunpack.c.h.b16 %v263
    %v1576 = vunpack.c.l.b16 %v264
    %v1577 = vunpack.c.h.b16 %v264
    %v1578 = vunpack.c.l.b16 %v265
    %v1579 = vunpack.c.h.b16 %v265
    %v1580 = vunpack.c.l.b16 %v266
    %v1581 = vunpack.c.h.b16 %v266
    %v1582 = vunpack.c.l.b16 %v267
    %v1583 = vunpack.c.h.b16 %v267
    %v1584 = vunpack.c.l.b16 %v268
    %v1585 = vunpack.c.h.b16 %v268
    %v1586 = vunpack.c.l.b16 %v269
    %v1587 = vunpack.c.h.b16 %v269
    %v1588 = vunpack.c.l.b16 %v270
    %v1589 = vunpack.c.h.b16 %v270
    %v1590 = vunpack.c.l.b16 %v271
    %v1591 = vunpack.c.h.b16 %v271
    %v1592 = vunpack.c.l.b16 %v272
    %v1593 = vunpack.c.h.b16 %v272
    %v1594 = vunpack.c.l.b16 %v273
    %v1595 = vunpack.c.h.b16 %v273
    %v1596 = vunpack.c.l.b16 %v274
    %v1597 = vunpack.c.h.b16 %v274
    %v1598 = vunpack.c.l.b16 %v275
    %v1599 = vunpack.c.h.b16 %v275
    %v1600 = vunpack.c.l.b16 %v276
    %v1601 = vunpack.c.h.b16 %v276
    %v1602 = vunpack.c.l.b16 %v277
    %v1603 = vunpack.c.h.b16 %v277
    %v1604 = vunpack.c.l.b16 %v278
    %v1605 = vunpack.c.h.b16 %v278
    %v1606 = vunpack.c.l.b16 %v279
    %v1607 = vunpack.c.h.b16 %v279
    %v1608 = vunpack.c.l.b16 %v280
    %v1609 = vunpack.c.h.b16 %v280
    %v1610 = vunpack.c.l.b16 %v281
    %v1611 = vunpack.c.h.b16 %v281
    %v1612 = vunpack.c.l.b16 %v282
    %v1613 = vunpack.c.h.b16 %v282
    %v1614 = vunpack.c.l.b16 %v283
    %v1615 = vunpack.c.h.b16 %v283
    %v1616 = vunpack.c.l.b16 %v284
    %v1617 = vunpack.c.h.b16 %v284
    %v1618 = vunpack.c.l.b16 %v285
    %v1619 = vunpack.c.h.b16 %v285
    %v1620 = vunpack.c.l.b16 %v286
    %v1621 = vunpack.c.h.b16 %v286
    %v1622 = vunpack.c.l.b16 %v287
    %v1623 = vunpack.c.h.b16 %v287
    %v1624 = vunpack.c.l.b16 %v288
    %v1625 = vunpack.c.h.b16 %v288
    %v1626 = vunpack.c.l.b16 %v289
    %v1627 = vunpack.c.h.b16 %v289
    %v1628 = vunpack.c.l.b16 %v290
    %v1629 = vunpack.c.h.b16 %v290
    %v1630 = vunpack.c.l.b16 %v291
    %v1631 = vunpack.c.h.b16 %v291
    %v1632 = vunpack.c.l.b16 %v292
    %v1633 = vunpack.c.h.b16 %v292
    %v1634 = vunpack.c.l.b16 %v293
    %v1635 = vunpack.c.h.b16 %v293
    %v1636 = vunpack.c.l.b16 %v294
    %v1637 = vunpack.c.h.b16 %v294
    %v1638 = vunpack.c.l.b16 %v295
    %v1639 = vunpack.c.h.b16 %v295
    %v1640 = vunpack.c.l.b16 %v296
    %v1641 = vunpack.c.h.b16 %v296
    %v1642 = vunpack.c.l.b16 %v297
    %v1643 = vunpack.c.h.b16 %v297
    %v1644 = vunpack.c.l.b16 %v298
    %v1645 = vunpack.c.h.b16 %v298
    %v1646 = vunpack.c.l.b16 %v299
    %v1647 = vunpack.c.h.b16 %v299
    %v1648 = vunpack.c.l.b16 %v300
    %v1649 = vunpack.c.h.b16 %v300
    %v1650 = vunpack.c.l.b16 %v301
    %v1651 = vunpack.c.h.b16 %v301
    %v1652 = vunpack.c.l.b16 %v302
    %v1653 = vunpack.c.h.b16 %v302
    %v1654 = vunpack.c.l.b16 %v303
    %v1655 = vunpack.c.h.b16 %v303
    %v1656 = vunpack.c.l.b16 %v304
    %v1657 = vunpack.c.h.b16 %v304
    %v1658 = vunpack.c.l.b16 %v305
    %v1659 = vunpack.c.h.b16 %v305
    %v1660 = vunpack.c.l.b16 %v306
    %v1661 = vunpack.c.h.b16 %v306
    %v1662 = vunpack.c.l.b16 %v307
    %v1663 = vunpack.c.h.b16 %v307
    %v1664 = vunpack.c.l.b16 %v308
    %v1665 = vunpack.c.h.b16 %v308
    %v1666 = vunpack.c.l.b16 %v309
    %v1667 = vunpack.c.h.b16 %v309
    %v1668 = vunpack.c.l.b16 %v310
    %v1669 = vunpack.c.h.b16 %v310
    %v1670 = vunpack.c.l.b16 %v311
    %v1671 = vunpack.c.h.b16 %v311
    %v1672 = vunpack.c.l.b16 %v312
    %v1673 = vunpack.c.h.b16 %v312
    %v1674 = vunpack.c.l.b16 %v313
    %v1675 = vunpack.c.h.b16 %v313
    %v1676 = vunpack.c.l.b16 %v314
    %v1677 = vunpack.c.h.b16 %v314
    %v1678 = vunpack.c.l.b16 %v315
    %v1679 = vunpack.c.h.b16 %v315
    %v1680 = vunpack.c.l.b16 %v316
    %v1681 = vunpack.c.h.b16 %v316
    %v1682 = vunpack.c.l.b16 %v317
    %v1683 = vunpack.c.h.b16 %v317
    %v1684 = vunpack.c.l.b16 %v318
    %v1685 = vunpack.c.h.b16 %v318
    %v1686 = vunpack.c.l.b16 %v319
    %v1687 = vunpack.c.h.b16 %v319
    %v1688 = vunpack.c.l.b16 %v320
    %v1689 = vunpack.c.h.b16 %v320
    %v1690 = vunpack.c.l.b16 %v321
    %v1691 = vunpack.c.h.b16 %v321
    %v1692 = vunpack.c.l.b16 %v322
    %v1693 = vunpack.c.h.b16 %v322
    %v1694 = vunpack.c.l.b16 %v323
    %v1695 = vunpack.c.h.b16 %v323
    %v1696 = vunpack.c.l.b16 %v324
    %v1697 = vunpack.c.h.b16 %v324
    %v1698 = vunpack.c.l.b16 %v325
    %v1699 = vunpack.c.h.b16 %v325
    %v1700 = vunpack.c.l.b16 %v326
    %v1701 = vunpack.c.h.b16 %v326
    %v1702 = vunpack.c.l.b16 %v327
    %v1703 = vunpack.c.h.b16 %v327
    %v1704 = vunpack.c.l.b16 %v328
    %v1705 = vunpack.c.h.b16 %v328
    %v1706 = vunpack.c.l.b16 %v329
    %v1707 = vunpack.c.h.b16 %v329
    %v1708 = vunpack.c.l.b16 %v330
    %v1709 = vunpack.c.h.b16 %v330
    %v1710 = vunpack.c.l.b16 %v331
    %v1711 = vunpack.c.h.b16 %v331
    %v1712 = vunpack.c.l.b16 %v332
    %v1713 = vunpack.c.h.b16 %v332
    %v1714 = vunpack.c.l.b16 %v333
    %v1715 = vunpack.c.h.b16 %v333
    %v1716 = vunpack.c.l.b16 %v334
    %v1717 = vunpack.c.h.b16 %v334
    %v1718 = vunpack.c.l.b16 %v335
    %v1719 = vunpack.c.h.b16 %v335
    %v1720 = vunpack.c.l.b16 %v336
    %v1721 = vunpack.c.h.b16 %v336
    %v1722 = vunpack.c.l.b16 %v337
    %v1723 = vunpack.c.h.b16 %v337
    %v1724 = vunpack.c.l.b16 %v338
    %v1725 = vunpack.c.h.b16 %v338
    %v1726 = vunpack.c.l.b16 %v339
    %v1727 = vunpack.c.h.b16 %v339
    %v1728 = vunpack.c.l.b16 %v340
    %v1729 = vunpack.c.h.b16 %v340
    %v1730 = vunpack.c.l.b16 %v341
    %v1731 = vunpack.c.h.b16 %v341
    %v1732 = vunpack.c.l.b16 %v342
    %v1733 = vunpack.c.h.b16 %v342
    %v1734 = vunpack.c.l.b16 %v343
    %v1735 = vunpack.c.h.b16 %v343
    %v1736 = vunpack.c.l.b16 %v344
    %v1737 = vunpack.c.h.b16 %v344
    %v1738 = vunpack.c.l.b16 %v345
    %v1739 = vunpack.c.h.b16 %v345
    %v1740 = vunpack.c.l.b16 %v346
    %v1741 = vunpack.c.h.b16 %v346
    %v1742 = vunpack.c.l.b16 %v347
    %v1743 = vunpack.c.h.b16 %v347
    %v1744 = vunpack.c.l.b16 %v348
    %v1745 = vunpack.c.h.b16 %v348
    %v1746 = vunpack.c.l.b16 %v349
    %v1747 = vunpack.c.h.b16 %v349
    %v1748 = vunpack.c.l.b16 %v350
    %v1749 = vunpack.c.h.b16 %v350
    %v1750 = vunpack.c.l.b16 %v351
    %v1751 = vunpack.c.h.b16 %v351
    %v1752 = vunpack.c.l.b16 %v352
    %v1753 = vunpack.c.h.b16 %v352
    %v1754 = vunpack.c.l.b16 %v353
    %v1755 = vunpack.c.h.b16 %v353
    %v1756 = vunpack.c.l.b16 %v354
    %v1757 = vunpack.c.h.b16 %v354
    %v1758 = vunpack.c.l.b16 %v355
    %v1759 = vunpack.c.h.b16 %v355
    %v1760 = vunpack.c.l.b16 %v356
    %v1761 = vunpack.c.h.b16 %v356
    %v1762 = vunpack.c.l.b16 %v357
    %v1763 = vunpack.c.h.b16 %v357
    %v1764 = vunpack.c.l.b16 %v358
    %v1765 = vunpack.c.h.b16 %v358
    %v1766 = vunpack.c.l.b16 %v359
    %v1767 = vunpack.c.h.b16 %v359
    %v1768 = vunpack.c.l.b16 %v360
    %v1769 = vunpack.c.h.b16 %v360
    %v1770 = vunpack.c.l.b16 %v361
    %v1771 = vunpack.c.h.b16 %v361
    %v1772 = vunpack.c.l.b16 %v362
    %v1773 = vunpack.c.h.b16 %v362
    %v1774 = vunpack.c.l.b16 %v363
    %v1775 = vunpack.c.h.b16 %v363
    %v1776 = vunpack.c.l.b16 %v364
    %v1777 = vunpack.c.h.b16 %v364
    %v1778 = vunpack.c.l.b16 %v365
    %v1779 = vunpack.c.h.b16 %v365
    %v1780 = vunpack.c.l.b16 %v366
    %v1781 = vunpack.c.h.b16 %v366
    %v1782 = vunpack.c.l.b16 %v367
    %v1783 = vunpack.c.h.b16 %v367
    %v1784 = vunpack.c.l.b16 %v368
    %v1785 = vunpack.c.h.b16 %v368
    %v1786 = vunpack.c.l.b16 %v369
    %v1787 = vunpack.c.h.b16 %v369
    %v1788 = vunpack.c.l.b16 %v370
    %v1789 = vunpack.c.h.b16 %v370
    %v1790 = vunpack.c.l.b16 %v371
    %v1791 = vunpack.c.h.b16 %v371
    %v1792 = vunpack.c.l.b16 %v372
    %v1793 = vunpack.c.h.b16 %v372
    %v1794 = vunpack.c.l.b16 %v373
    %v1795 = vunpack.c.h.b16 %v373
    %v1796 = vunpack.c.l.b16 %v374
    %v1797 = vunpack.c.h.b16 %v374
    %v1798 = vunpack.c.l.b16 %v375
    %v1799 = vunpack.c.h.b16 %v375
    %v1800 = vunpack.c.l.b16 %v376
    %v1801 = vunpack.c.h.b16 %v376
    %v1802 = vunpack.c.l.b16 %v377
    %v1803 = vunpack.c.h.b16 %v377
    %v1804 = vunpack.c.l.b16 %v378
    %v1805 = vunpack.c.h.b16 %v378
    %v1806 = vunpack.c.l.b16 %v379
    %v1807 = vunpack.c.h.b16 %v379
    %v1808 = vunpack.c.l.b16 %v380
    %v1809 = vunpack.c.h.b16 %v380
    %v1810 = vunpack.c.l.b16 %v381
    %v1811 = vunpack.c.h.b16 %v381
    %v1812 = vunpack.c.l.b16 %v382
    %v1813 = vunpack.c.h.b16 %v382
    %v1814 = vunpack.c.l.b16 %v383
    %v1815 = vunpack.c.h.b16 %v383
    %v1816 = vunpack.c.l.b16 %v384
    %v1817 = vunpack.c.h.b16 %v384
    %v1818 = vunpack.c.l.b16 %v385
    %v1819 = vunpack.c.h.b16 %v385
    %v1820 = vunpack.c.l.b16 %v386
    %v1821 = vunpack.c.h.b16 %v386
    %v1822 = vunpack.c.l.b16 %v387
    %v1823 = vunpack.c.h.b16 %v387
    %v1824 = vunpack.c.l.b16 %v388
    %v1825 = vunpack.c.h.b16 %v388
    %v1826 = vunpack.c.l.b16 %v389
    %v1827 = vunpack.c.h.b16 %v389
    %v1828 = vunpack.c.l.b16 %v390
    %v1829 = vunpack.c.h.b16 %v390
    %v1830 = vunpack.c.l.b16 %v391
    %v1831 = vunpack.c.h.b16 %v391
    %v1832 = vunpack.c.l.b16 %v392
    %v1833 = vunpack.c.h.b16 %v392
    %v1834 = vunpack.c.l.b16 %v393
    %v1835 = vunpack.c.h.b16 %v393
    %v1836 = vunpack.c.l.b16 %v394
    %v1837 = vunpack.c.h.b16 %v394
    %v1838 = vunpack.c.l.b16 %v395
    %v1839 = vunpack.c.h.b16 %v395
    %v1840 = vunpack.c.l.b16 %v396
    %v1841 = vunpack.c.h.b16 %v396
    %v1842 = vunpack.c.l.b16 %v397
    %v1843 = vunpack.c.h.b16 %v397
    %v1844 = vunpack.c.l.b16 %v398
    %v1845 = vunpack.c.h.b16 %v398
    %v1846 = vunpack.c.l.b16 %v399
    %v1847 = vunpack.c.h.b16 %v399
    %v1848 = vunpack.c.l.b16 %v400
    %v1849 = vunpack.c.h.b16 %v400
    %v1850 = vunpack.c.l.b16 %v401
    %v1851 = vunpack.c.h.b16 %v401
    %v1852 = vunpack.c.l.b16 %v402
    %v1853 = vunpack.c.h.b16 %v402
    %v1854 = vunpack.c.l.b16 %v403
    %v1855 = vunpack.c.h.b16 %v403
    %v1856 = vunpack.c.l.b16 %v404
    %v1857 = vunpack.c.h.b16 %v404
    %v1858 = vunpack.c.l.b16 %v405
    %v1859 = vunpack.c.h.b16 %v405
    %v1860 = vunpack.c.l.b16 %v406
    %v1861 = vunpack.c.h.b16 %v406
    %v1862 = vunpack.c.l.b16 %v407
    %v1863 = vunpack.c.h.b16 %v407
    %v1864 = vunpack.c.l.b16 %v408
    %v1865 = vunpack.c.h.b16 %v408
    %v1866 = vunpack.c.l.b16 %v409
    %v1867 = vunpack.c.h.b16 %v409
    %v1868 = vunpack.c.l.b16 %v410
    %v1869 = vunpack.c.h.b16 %v410
    %v1870 = vunpack.c.l.b16 %v411
    %v1871 = vunpack.c.h.b16 %v411
    %v1872 = vunpack.c.l.b16 %v412
    %v1873 = vunpack.c.h.b16 %v412
    %v1874 = vunpack.c.l.b16 %v413
    %v1875 = vunpack.c.h.b16 %v413
    %v1876 = vunpack.c.l.b16 %v414
    %v1877 = vunpack.c.h.b16 %v414
    %v1878 = vunpack.c.l.b16 %v415
    %v1879 = vunpack.c.h.b16 %v415
    %v1880 = vunpack.c.l.b16 %v416
    %v1881 = vunpack.c.h.b16 %v416
    %v1882 = vunpack.c.l.b16 %v417
    %v1883 = vunpack.c.h.b16 %v417
    %v1884 = vunpack.c.l.b16 %v418
    %v1885 = vunpack.c.h.b16 %v418
    %v1886 = vunpack.c.l.b16 %v419
    %v1887 = vunpack.c.h.b16 %v419
    %v1888 = vunpack.c.l.b16 %v420
    %v1889 = vunpack.c.h.b16 %v420
    %v1890 = vunpack.c.l.b16 %v421
    %v1891 = vunpack.c.h.b16 %v421
    %v1892 = vunpack.c.l.b16 %v422
    %v1893 = vunpack.c.h.b16 %v422
    %v1894 = vunpack.c.l.b16 %v423
    %v1895 = vunpack.c.h.b16 %v423
    %v1896 = vunpack.c.l.b16 %v424
    %v1897 = vunpack.c.h.b16 %v424
    %v1898 = vunpack.c.l.b16 %v425
    %v1899 = vunpack.c.h.b16 %v425
    %v1900 = vunpack.c.l.b16 %v426
    %v1901 = vunpack.c.h.b16 %v426
    %v1902 = vunpack.c.l.b16 %v427
    %v1903 = vunpack.c.h.b16 %v427
    %v1904 = vunpack.c.l.b16 %v428
    %v1905 = vunpack.c.h.b16 %v428
    %v1906 = vunpack.c.l.b16 %v429
    %v1907 = vunpack.c.h.b16 %v429
    %v1908 = vunpack.c.l.b16 %v430
    %v1909 = vunpack.c.h.b16 %v430
    %v1910 = vunpack.c.l.b16 %v431
    %v1911 = vunpack.c.h.b16 %v431
    %v1912 = vunpack.c.l.b16 %v432
    %v1913 = vunpack.c.h.b16 %v432
    %v1914 = vunpack.c.l.b16 %v433
    %v1915 = vunpack.c.h.b16 %v433
    %v1916 = vunpack.c.l.b16 %v434
    %v1917 = vunpack.c.h.b16 %v434
    %v1918 = vunpack.c.l.b16 %v435
    %v1919 = vunpack.c.h.b16 %v435
    %v1920 = vunpack.c.l.b16 %v436
    %v1921 = vunpack.c.h.b16 %v436
    %v1922 = vunpack.c.l.b16 %v437
    %v1923 = vunpack.c.h.b16 %v437
    %v1924 = vunpack.c.l.b16 %v438
    %v1925 = vunpack.c.h.b16 %v438
    %v1926 = vunpack.c.l.b16 %v439
    %v1927 = vunpack.c.h.b16 %v439
    %v1928 = vunpack.c.l.b16 %v440
    %v1929 = vunpack.c.h.b16 %v440
    %v1930 = vunpack.c.l.b16 %v441
    %v1931 = vunpack.c.h.b16 %v441
    %v1932 = vunpack.c.l.b16 %v442
    %v1933 = vunpack.c.h.b16 %v442
    %v1934 = vunpack.c.l.b16 %v443
    %v1935 = vunpack.c.h.b16 %v443
    %v1936 = vunpack.c.l.b16 %v444
    %v1937 = vunpack.c.h.b16 %v444
    %v1938 = vunpack.c.l.b16 %v445
    %v1939 = vunpack.c.h.b16 %v445
    %v1940 = vunpack.c.l.b16 %v446
    %v1941 = vunpack.c.h.b16 %v446
    %v1942 = vunpack.c.l.b16 %v447
    %v1943 = vunpack.c.h.b16 %v447
    %v1944 = vunpack.c.l.b16 %v448
    %v1945 = vunpack.c.h.b16 %v448
    %v1946 = vunpack.c.l.b16 %v449
    %v1947 = vunpack.c.h.b16 %v449
    %v1948 = vunpack.c.l.b16 %v450
    %v1949 = vunpack.c.h.b16 %v450
    %v1950 = vunpack.c.l.b16 %v451
    %v1951 = vunpack.c.h.b16 %v451
    %v1952 = vunpack.c.l.b16 %v452
    %v1953 = vunpack.c.h.b16 %v452
    %v1954 = vunpack.c.l.b16 %v453
    %v1955 = vunpack.c.h.b16 %v453
    %v1956 = vunpack.c.l.b16 %v454
    %v1957 = vunpack.c.h.b16 %v454
    %v1958 = vunpack.c.l.b16 %v455
    %v1959 = vunpack.c.h.b16 %v455
    %v1960 = vunpack.c.l.b16 %v456
    %v1961 = vunpack.c.h.b16 %v456
    %v1962 = vunpack.c.l.b16 %v457
    %v1963 = vunpack.c.h.b16 %v457
    %v1964 = vunpack.c.l.b16 %v458
    %v1965 = vunpack.c.h.b16 %v458
    %v1966 = vunpack.c.l.b16 %v459
    %v1967 = vunpack.c.h.b16 %v459
    %v1968 = vunpack.c.l.b16 %v460
    %v1969 = vunpack.c.h.b16 %v460
    %v1970 = vunpack.c.l.b16 %v461
    %v1971 = vunpack.c.h.b16 %v461
    %v1972 = vunpack.c.l.b16 %v462
    %v1973 = vunpack.c.h.b16 %v462
    %v1974 = vunpack.c.l.b16 %v463
    %v1975 = vunpack.c.h.b16 %v463
    %v1976 = vunpack.c.l.b16 %v464
    %v1977 = vunpack.c.h.b16 %v464
    %v1978 = vunpack.c.l.b16 %v465
    %v1979 = vunpack.c.h.b16 %v465
    %v1980 = vunpack.c.l.b16 %v466
    %v1981 = vunpack.c.h.b16 %v466
    %v1982 = vunpack.c.l.b16 %v467
    %v1983 = vunpack.c.h.b16 %v467
    %v1984 = vunpack.c.l.b16 %v468
    %v1985 = vunpack.c.h.b16 %v468
    %v1986 = vunpack.c.l.b16 %v469
    %v1987 = vunpack.c.h.b16 %v469
    %v1988 = vunpack.c.l.b16 %v470
    %v1989 = vunpack.c.h.b16 %v470
    %v1990 = vunpack.c.l.b16 %v471
    %v1991 = vunpack.c.h.b16 %v471
    %v1992 = vunpack.c.l.b16 %v472
    %v1993 = vunpack.c.h.b16 %v472
    %v1994 = vunpack.c.l.b16 %v473
    %v1995 = vunpack.c.h.b16 %v473
    %v1996 = vunpack.c.l.b16 %v474
    %v1997 = vunpack.c.h.b16 %v474
    %v1998 = vunpack.c.l.b16 %v475
    %v1999 = vunpack.c.h.b16 %v475
    %v2000 = vunpack.c.l.b16 %v476
    %v2001 = vunpack.c.h.b16 %v476
    %v2002 = vunpack.c.l.b16 %v477
    %v2003 = vunpack.c.h.b16 %v477
    %v2004 = vunpack.c.l.b16 %v478
    %v2005 = vunpack.c.h.b16 %v478
    %v2006 = vunpack.c.l.b16 %v479
    %v2007 = vunpack.c.h.b16 %v479
    %v2008 = vunpack.c.l.b16 %v480
    %v2009 = vunpack.c.h.b16 %v480
    %v2010 = vunpack.c.l.b16 %v481
    %v2011 = vunpack.c.h.b16 %v481
    %v2012 = vunpack.c.l.b16 %v482
    %v2013 = vunpack.c.h.b16 %v482
    %v2014 = vunpack.c.l.b16 %v483
    %v2015 = vunpack.c.h.b16 %v483
    %v2016 = vunpack.c.l.b16 %v484
    %v2017 = vunpack.c.h.b16 %v484
    %v2018 = vunpack.c.l.b16 %v485
    %v2019 = vunpack.c.h.b16 %v485
    %v2020 = vunpack.c.l.b16 %v486
    %v2021 = vunpack.c.h.b16 %v486
    %v2022 = vunpack.c.l.b16 %v487
    %v2023 = vunpack.c.h.b16 %v487
    %v2024 = vunpack.c.l.b16 %v488
    %v2025 = vunpack.c.h.b16 %v488
    %v2026 = vunpack.c.l.b16 %v489
    %v2027 = vunpack.c.h.b16 %v489
    %v2028 = vunpack.c.l.b16 %v490
    %v2029 = vunpack.c.h.b16 %v490
    %v2030 = vunpack.c.l.b16 %v491
    %v2031 = vunpack.c.h.b16 %v491
    %v2032 = vunpack.c.l.b16 %v492
    %v2033 = vunpack.c.h.b16 %v492
    %v2034 = vunpack.c.l.b16 %v493
    %v2035 = vunpack.c.h.b16 %v493
    %v2036 = vunpack.c.l.b16 %v494
    %v2037 = vunpack.c.h.b16 %v494
    %v2038 = vunpack.c.l.b16 %v495
    %v2039 = vunpack.c.h.b16 %v495
    %v2040 = vunpack.c.l.b16 %v496
    %v2041 = vunpack.c.h.b16 %v496
    %v2042 = vunpack.c.l.b16 %v497
    %v2043 = vunpack.c.h.b16 %v497
    %v2044 = vunpack.c.l.b16 %v498
    %v2045 = vunpack.c.h.b16 %v498
    %v2046 = vunpack.c.l.b16 %v499
    %v2047 = vunpack.c.h.b16 %v499
    %v2048 = vunpack.c.l.b16 %v500
    %v2049 = vunpack.c.h.b16 %v500
    %v2050 = vunpack.c.l.b16 %v501
    %v2051 = vunpack.c.h.b16 %v501
    %v2052 = vunpack.c.l.b16 %v502
    %v2053 = vunpack.c.h.b16 %v502
    %v2054 = vunpack.c.l.b16 %v503
    %v2055 = vunpack.c.h.b16 %v503
    %v2056 = vunpack.c.l.b16 %v504
    %v2057 = vunpack.c.h.b16 %v504
    %v2058 = vunpack.c.l.b16 %v505
    %v2059 = vunpack.c.h.b16 %v505
    %v2060 = vunpack.c.l.b16 %v506
    %v2061 = vunpack.c.h.b16 %v506
    %v2062 = vunpack.c.l.b16 %v507
    %v2063 = vunpack.c.h.b16 %v507
    %v2064 = vunpack.c.l.b16 %v508
    %v2065 = vunpack.c.h.b16 %v508
    %v2066 = vunpack.c.l.b16 %v509
    %v2067 = vunpack.c.h.b16 %v509
    %v2068 = vunpack.c.l.b16 %v510
    %v2069 = vunpack.c.h.b16 %v510
    %v2070 = vunpack.c.l.b16 %v511
    %v2071 = vunpack.c.h.b16 %v511
    %v2072 = vunpack.c.l.b16 %v512
    %v2073 = vunpack.c.h.b16 %v512
    %v2074 = vunpack.c.l.b16 %v513
    %v2075 = vunpack.c.h.b16 %v513
    %v2076 = vunpack.c.l.b16 %v514
    %v2077 = vunpack.c.h.b16 %v514
    %v2078 = vunpack.c.l.b16 %v515
    %v2079 = vunpack.c.h.b16 %v515
    %v2080 = vunpack.c.l.b16 %v516
    %v2081 = vunpack.c.h.b16 %v516
    %v2082 = vunpack.c.l.b16 %v517
    %v2083 = vunpack.c.h.b16 %v517
    %v2084 = vunpack.c.l.b16 %v518
    %v2085 = vunpack.c.h.b16 %v518
    %v2086 = vunpack.c.l.b16 %v519
    %v2087 = vunpack.c.h.b16 %v519
    %v2088 = vunpack.c.l.b16 %v520
    %v2089 = vunpack.c.h.b16 %v520
    %v2090 = vunpack.c.l.b16 %v521
    %v2091 = vunpack.c.h.b16 %v521
    %v2092 = vunpack.c.l.b16 %v522
    %v2093 = vunpack.c.h.b16 %v522
    %v2094 = vunpack.c.l.b16 %v523
    %v2095 = vunpack.c.h.b16 %v523
    %v2096 = vunpack.c.l.b16 %v524
    %v2097 = vunpack.c.h.b16 %v524
    %v2098 = vunpack.c.l.b16 %v525
    %v2099 = vunpack.c.h.b16 %v525
    %v2100 = vunpack.c.l.b16 %v526
    %v2101 = vunpack.c.h.b16 %v526
    %v2102 = vunpack.c.l.b16 %v527
    %v2103 = vunpack.c.h.b16 %v527
    %v2104 = vunpack.c.l.b16 %v528
    %v2105 = vunpack.c.h.b16 %v528
    %v2106 = vunpack.c.l.b16 %v529
    %v2107 = vunpack.c.h.b16 %v529
    %v2108 = vunpack.c.l.b16 %v530
    %v2109 = vunpack.c.h.b16 %v530
    %v2110 = vunpack.c.l.b16 %v531
    %v2111 = vunpack.c.h.b16 %v531
    %v2112 = vunpack.c.l.b16 %v532
    %v2113 = vunpack.c.h.b16 %v532
    %v2114 = vunpack.c.l.b16 %v533
    %v2115 = vunpack.c.h.b16 %v533
    %v2116 = vunpack.c.l.b16 %v534
    %v2117 = vunpack.c.h.b16 %v534
    %v2118 = vunpack.c.l.b16 %v535
    %v2119 = vunpack.c.h.b16 %v535
    %v2120 = vunpack.c.l.b16 %v536
    %v2121 = vunpack.c.h.b16 %v536
    %v2122 = vunpack.c.l.b16 %v537
    %v2123 = vunpack.c.h.b16 %v537
    %v2124 = vunpack.c.l.b16 %v538
    %v2125 = vunpack.c.h.b16 %v538
    %v2126 = vunpack.c.l.b16 %v539
    %v2127 = vunpack.c.h.b16 %v539
    %v2128 = vunpack.c.l.b16 %v540
    %v2129 = vunpack.c.h.b16 %v540
    %v2130 = vunpack.c.l.b16 %v541
    %v2131 = vunpack.c.h.b16 %v541
    %v2132 = vunpack.c.l.b16 %v542
    %v2133 = vunpack.c.h.b16 %v542
    %v2134 = vunpack.c.l.b16 %v543
    %v2135 = vunpack.c.h.b16 %v543
    %v2136 = vunpack.c.l.b16 %v544
    %v2137 = vunpack.c.h.b16 %v544
    %v2138 = vunpack.c.l.b16 %v545
    %v2139 = vunpack.c.h.b16 %v545
    %v2140 = vunpack.c.l.b16 %v546
    %v2141 = vunpack.c.h.b16 %v546
    %v2142 = vunpack.c.l.b16 %v547
    %v2143 = vunpack.c.h.b16 %v547
    %v2144 = vunpack.c.l.b16 %v548
    %v2145 = vunpack.c.h.b16 %v548
    %v2146 = vunpack.c.l.b16 %v549
    %v2147 = vunpack.c.h.b16 %v549
    %v2148 = vunpack.c.l.b16 %v550
    %v2149 = vunpack.c.h.b16 %v550
    %v2150 = vunpack.c.l.b16 %v551
    %v2151 = vunpack.c.h.b16 %v551
    %v2152 = vunpack.c.l.b16 %v552
    %v2153 = vunpack.c.h.b16 %v552
    %v2154 = vunpack.c.l.b16 %v553
    %v2155 = vunpack.c.h.b16 %v553
    %v2156 = vunpack.c.l.b16 %v554
    %v2157 = vunpack.c.h.b16 %v554
    %v2158 = vunpack.c.l.b16 %v555
    %v2159 = vunpack.c.h.b16 %v555
    %v2160 = vunpack.c.l.b16 %v556
    %v2161 = vunpack.c.h.b16 %v556
    %v2162 = vunpack.c.l.b16 %v557
    %v2163 = vunpack.c.h.b16 %v557
    %v2164 = vunpack.c.l.b16 %v558
    %v2165 = vunpack.c.h.b16 %v558
    %v2166 = vunpack.c.l.b16 %v559
    %v2167 = vunpack.c.h.b16 %v559
    %v2168 = vunpack.c.l.b16 %v560
    %v2169 = vunpack.c.h.b16 %v560
    %v2170 = vunpack.c.l.b16 %v561
    %v2171 = vunpack.c.h.b16 %v561
    %v2172 = vunpack.c.l.b16 %v562
    %v2173 = vunpack.c.h.b16 %v562
    %v2174 = vunpack.c.l.b16 %v563
    %v2175 = vunpack.c.h.b16 %v563
    %v2176 = vunpack.c.l.b16 %v564
    %v2177 = vunpack.c.h.b16 %v564
    %v2178 = vunpack.c.l.b16 %v565
    %v2179 = vunpack.c.h.b16 %v565
    %v2180 = vpack.c.b16 %v1160, %v1156
    %v2181 = vpack.c.b16 %v1161, %v1157
    %v2182 = vpack.c.b16 %v1162, %v1158
    %v2183 = vpack.c.b16 %v1163, %v1159
    %v2184 = vpack.c.b16 %v1168, %v1164
    %v2185 = vpack.c.b16 %v1169, %v1165
    %v2186 = vpack.c.b16 %v1170, %v1166
    %v2187 = vpack.c.b16 %v1171, %v1167
    %v2188 = vpack.c.b16 %v1176, %v1172
    %v2189 = vpack.c.b16 %v1177, %v1173
    %v2190 = vpack.c.b16 %v1178, %v1174
    %v2191 = vpack.c.b16 %v1179, %v1175
    %v2192 = vpack.c.b16 %v1184, %v1180
    %v2193 = vpack.c.b16 %v1185, %v1181
    %v2194 = vpack.c.b16 %v1186, %v1182
    %v2195 = vpack.c.b16 %v1187, %v1183
    %v2196 = vpack.c.b16 %v1192, %v1188
    %v2197 = vpack.c.b16 %v1193, %v1189
    %v2198 = vpack.c.b16 %v1194, %v1190
    %v2199 = vpack.c.b16 %v1195, %v1191
    %v2200 = vpack.c.b16 %v1200, %v1196
    %v2201 = vpack.c.b16 %v1201, %v1197
    %v2202 = vpack.c.b16 %v1202, %v1198
    %v2203 = vpack.c.b16 %v1203, %v1199
    %v2204 = vpack.c.b16 %v1208, %v1204
    %v2205 = vpack.c.b16 %v1209, %v1205
    %v2206 = vpack.c.b16 %v1210, %v1206
    %v2207 = vpack.c.b16 %v1211, %v1207
    %v2208 = vpack.c.b16 %v1216, %v1212
    %v2209 = vpack.c.b16 %v1217, %v1213
    %v2210 = vpack.c.b16 %v1218, %v1214
    %v2211 = vpack.c.b16 %v1219, %v1215
    %v2212 = vpack.c.b16 %v1224, %v1220
    %v2213 = vpack.c.b16 %v1225, %v1221
    %v2214 = vpack.c.b16 %v1226, %v1222
    %v2215 = vpack.c.b16 %v1227, %v1223
    %v2216 = vpack.c.b16 %v1232, %v1228
    %v2217 = vpack.c.b16 %v1233, %v1229
    %v2218 = vpack.c.b16 %v1234, %v1230
    %v2219 = vpack.c.b16 %v1235, %v1231
    %v2220 = vpack.c.b16 %v1240, %v1236
    %v2221 = vpack.c.b16 %v1241, %v1237
    %v2222 = vpack.c.b16 %v1242, %v1238
    %v2223 = vpack.c.b16 %v1243, %v1239
    %v2224 = vpack.c.b16 %v1248, %v1244
    %v2225 = vpack.c.b16 %v1249, %v1245
    %v2226 = vpack.c.b16 %v1250, %v1246
    %v2227 = vpack.c.b16 %v1251, %v1247
    %v2228 = vpack.c.b16 %v1256, %v1252
    %v2229 = vpack.c.b16 %v1257, %v1253
    %v2230 = vpack.c.b16 %v1258, %v1254
    %v2231 = vpack.c.b16 %v1259, %v1255
    %v2232 = vpack.c.b16 %v1264, %v1260
    %v2233 = vpack.c.b16 %v1265, %v1261
    %v2234 = vpack.c.b16 %v1266, %v1262
    %v2235 = vpack.c.b16 %v1267, %v1263
    %v2236 = vpack.c.b16 %v1272, %v1268
    %v2237 = vpack.c.b16 %v1273, %v1269
    %v2238 = vpack.c.b16 %v1274, %v1270
    %v2239 = vpack.c.b16 %v1275, %v1271
    %v2240 = vpack.c.b16 %v1280, %v1276
    %v2241 = vpack.c.b16 %v1281, %v1277
    %v2242 = vpack.c.b16 %v1282, %v1278
    %v2243 = vpack.c.b16 %v1283, %v1279
    %v2244 = vpack.c.b16 %v1288, %v1284
    %v2245 = vpack.c.b16 %v1289, %v1285
    %v2246 = vpack.c.b16 %v1290, %v1286
    %v2247 = vpack.c.b16 %v1291, %v1287
    %v2248 = vpack.c.b16 %v1296, %v1292
    %v2249 = vpack.c.b16 %v1297, %v1293
    %v2250 = vpack.c.b16 %v1298, %v1294
    %v2251 = vpack.c.b16 %v1299, %v1295
    %v2252 = vpack.c.b16 %v1304, %v1300
    %v2253 = vpack.c.b16 %v1305, %v1301
    %v2254 = vpack.c.b16 %v1306, %v1302
    %v2255 = vpack.c.b16 %v1307, %v1303
    %v2256 = vpack.c.b16 %v1312, %v1308
    %v2257 = vpack.c.b16 %v1313, %v1309
    %v2258 = vpack.c.b16 %v1314, %v1310
    %v2259 = vpack.c.b16 %v1315, %v1311
    %v2260 = vpack.c.b16 %v1320, %v1316
    %v2261 = vpack.c.b16 %v1321, %v1317
    %v2262 = vpack.c.b16 %v1322, %v1318
    %v2263 = vpack.c.b16 %v1323, %v1319
    %v2264 = vpack.c.b16 %v1328, %v1324
    %v2265 = vpack.c.b16 %v1329, %v1325
    %v2266 = vpack.c.b16 %v1330, %v1326
    %v2267 = vpack.c.b16 %v1331, %v1327
    %v2268 = vpack.c.b16 %v1336, %v1332
    %v2269 = vpack.c.b16 %v1337, %v1333
    %v2270 = vpack.c.b16 %v1338, %v1334
    %v2271 = vpack.c.b16 %v1339, %v1335
    %v2272 = vpack.c.b16 %v1344, %v1340
    %v2273 = vpack.c.b16 %v1345, %v1341
    %v2274 = vpack.c.b16 %v1346, %v1342
    %v2275 = vpack.c.b16 %v1347, %v1343
    %v2276 = vpack.c.b16 %v1352, %v1348
    %v2277 = vpack.c.b16 %v1353, %v1349
    %v2278 = vpack.c.b16 %v1354, %v1350
    %v2279 = vpack.c.b16 %v1355, %v1351
    %v2280 = vpack.c.b16 %v1360, %v1356
    %v2281 = vpack.c.b16 %v1361, %v1357
    %v2282 = vpack.c.b16 %v1362, %v1358
    %v2283 = vpack.c.b16 %v1363, %v1359
    %v2284 = vpack.c.b16 %v1368, %v1364
    %v2285 = vpack.c.b16 %v1369, %v1365
    %v2286 = vpack.c.b16 %v1370, %v1366
    %v2287 = vpack.c.b16 %v1371, %v1367
    %v2288 = vpack.c.b16 %v1376, %v1372
    %v2289 = vpack.c.b16 %v1377, %v1373
    %v2290 = vpack.c.b16 %v1378, %v1374
    %v2291 = vpack.c.b16 %v1379, %v1375
    %v2292 = vpack.c.b16 %v1384, %v1380
    %v2293 = vpack.c.b16 %v1385, %v1381
    %v2294 = vpack.c.b16 %v1386, %v1382
    %v2295 = vpack.c.b16 %v1387, %v1383
    %v2296 = vpack.c.b16 %v1392, %v1388
    %v2297 = vpack.c.b16 %v1393, %v1389
    %v2298 = vpack.c.b16 %v1394, %v1390
    %v2299 = vpack.c.b16 %v1395, %v1391
    %v2300 = vpack.c.b16 %v1400, %v1396
    %v2301 = vpack.c.b16 %v1401, %v1397
    %v2302 = vpack.c.b16 %v1402, %v1398
    %v2303 = vpack.c.b16 %v1403, %v1399
    %v2304 = vpack.c.b16 %v1408, %v1404
    %v2305 = vpack.c.b16 %v1409, %v1405
    %v2306 = vpack.c.b16 %v1410, %v1406
    %v2307 = vpack.c.b16 %v1411, %v1407
    %v2308 = vpack.c.b16 %v1416, %v1412
    %v2309 = vpack.c.b16 %v1417, %v1413
    %v2310 = vpack.c.b16 %v1418, %v1414
    %v2311 = vpack.c.b16 %v1419, %v1415
    %v2312 = vpack.c.b16 %v1424, %v1420
    %v2313 = vpack.c.b16 %v1425, %v1421
    %v2314 = vpack.c.b16 %v1426, %v1422
    %v2315 = vpack.c.b16 %v1427, %v1423
    %v2316 = vpack.c.b16 %v1432, %v1428
    %v2317 = vpack.c.b16 %v1433, %v1429
    %v2318 = vpack.c.b16 %v1434, %v1430
    %v2319 = vpack.c.b16 %v1435, %v1431
    %v2320 = vpack.c.b16 %v1440, %v1436
    %v2321 = vpack.c.b16 %v1441, %v1437
    %v2322 = vpack.c.b16 %v1442, %v1438
    %v2323 = vpack.c.b16 %v1443, %v1439
    %v2324 = vpack.c.b16 %v1448, %v1444
    %v2325 = vpack.c.b16 %v1449, %v1445
    %v2326 = vpack.c.b16 %v1450, %v1446
    %v2327 = vpack.c.b16 %v1451, %v1447
    %v2328 = vpack.c.b16 %v1456, %v1452
    %v2329 = vpack.c.b16 %v1457, %v1453
    %v2330 = vpack.c.b16 %v1458, %v1454
    %v2331 = vpack.c.b16 %v1459, %v1455
    %v2332 = vpack.c.b16 %v1464, %v1460
    %v2333 = vpack.c.b16 %v1465, %v1461
    %v2334 = vpack.c.b16 %v1466, %v1462
    %v2335 = vpack.c.b16 %v1467, %v1463
    %v2336 = vpack.c.b16 %v1472, %v1468
    %v2337 = vpack.c.b16 %v1473, %v1469
    %v2338 = vpack.c.b16 %v1474, %v1470
    %v2339 = vpack.c.b16 %v1475, %v1471
    %v2340 = vpack.c.b16 %v1480, %v1476
    %v2341 = vpack.c.b16 %v1481, %v1477
    %v2342 = vpack.c.b16 %v1482, %v1478
    %v2343 = vpack.c.b16 %v1483, %v1479
    %v2344 = vpack.c.b16 %v1488, %v1484
    %v2345 = vpack.c.b16 %v1489, %v1485
    %v2346 = vpack.c.b16 %v1490, %v1486
    %v2347 = vpack.c.b16 %v1491, %v1487
    %v2348 = vpack.c.b16 %v1496, %v1492
    %v2349 = vpack.c.b16 %v1497, %v1493
    %v2350 = vpack.c.b16 %v1498, %v1494
    %v2351 = vpack.c.b16 %v1499, %v1495
    %v2352 = vpack.c.b16 %v1504, %v1500
    %v2353 = vpack.c.b16 %v1505, %v1501
    %v2354 = vpack.c.b16 %v1506, %v1502
    %v2355 = vpack.c.b16 %v1507, %v1503
    %v2356 = vpack.c.b16 %v1512, %v1508
    %v2357 = vpack.c.b16 %v1513, %v1509
    %v2358 = vpack.c.b16 %v1514, %v1510
    %v2359 = vpack.c.b16 %v1515, %v1511
    %v2360 = vpack.c.b16 %v1520, %v1516
    %v2361 = vpack.c.b16 %v1521, %v1517
    %v2362 = vpack.c.b16 %v1522, %v1518
    %v2363 = vpack.c.b16 %v1523, %v1519
    %v2364 = vpack.c.b16 %v1528, %v1524
    %v2365 = vpack.c.b16 %v1529, %v1525
    %v2366 = vpack.c.b16 %v1530, %v1526
    %v2367 = vpack.c.b16 %v1531, %v1527
    %v2368 = vpack.c.b16 %v1536, %v1532
    %v2369 = vpack.c.b16 %v1537, %v1533
    %v2370 = vpack.c.b16 %v1538, %v1534
    %v2371 = vpack.c.b16 %v1539, %v1535
    %v2372 = vpack.c.b16 %v1544, %v1540
    %v2373 = vpack.c.b16 %v1545, %v1541
    %v2374 = vpack.c.b16 %v1546, %v1542
    %v2375 = vpack.c.b16 %v1547, %v1543
    %v2376 = vpack.c.b16 %v1552, %v1548
    %v2377 = vpack.c.b16 %v1553, %v1549
    %v2378 = vpack.c.b16 %v1554, %v1550
    %v2379 = vpack.c.b16 %v1555, %v1551
    %v2380 = vpack.c.b16 %v1560, %v1556
    %v2381 = vpack.c.b16 %v1561, %v1557
    %v2382 = vpack.c.b16 %v1562, %v1558
    %v2383 = vpack.c.b16 %v1563, %v1559
    %v2384 = vpack.c.b16 %v1568, %v1564
    %v2385 = vpack.c.b16 %v1569, %v1565
    %v2386 = vpack.c.b16 %v1570, %v1566
    %v2387 = vpack.c.b16 %v1571, %v1567
    %v2388 = vpack.c.b16 %v1576, %v1572
    %v2389 = vpack.c.b16 %v1577, %v1573
    %v2390 = vpack.c.b16 %v1578, %v1574
    %v2391 = vpack.c.b16 %v1579, %v1575
    %v2392 = vpack.c.b16 %v1584, %v1580
    %v2393 = vpack.c.b16 %v1585, %v1581
    %v2394 = vpack.c.b16 %v1586, %v1582
    %v2395 = vpack.c.b16 %v1587, %v1583
    %v2396 = vpack.c.b16 %v1592, %v1588
    %v2397 = vpack.c.b16 %v1593, %v1589
    %v2398 = vpack.c.b16 %v1594, %v1590
    %v2399 = vpack.c.b16 %v1595, %v1591
    %v2400 = vpack.c.b16 %v1600, %v1596
    %v2401 = vpack.c.b16 %v1601, %v1597
    %v2402 = vpack.c.b16 %v1602, %v1598
    %v2403 = vpack.c.b16 %v1603, %v1599
    %v2404 = vpack.c.b16 %v1608, %v1604
    %v2405 = vpack.c.b16 %v1609, %v1605
    %v2406 = vpack.c.b16 %v1610, %v1606
    %v2407 = vpack.c.b16 %v1611, %v1607
    %v2408 = vpack.c.b16 %v1616, %v1612
    %v2409 = vpack.c.b16 %v1617, %v1613
    %v2410 = vpack.c.b16 %v1618, %v1614
    %v2411 = vpack.c.b16 %v1619, %v1615
    %v2412 = vpack.c.b16 %v1624, %v1620
    %v2413 = vpack.c.b16 %v1625, %v1621
    %v2414 = vpack.c.b16 %v1626, %v1622
    %v2415 = vpack.c.b16 %v1627, %v1623
    %v2416 = vpack.c.b16 %v1632, %v1628
    %v2417 = vpack.c.b16 %v1633, %v1629
    %v2418 = vpack.c.b16 %v1634, %v1630
    %v2419 = vpack.c.b16 %v1635, %v1631
    %v2420 = vpack.c.b16 %v1640, %v1636
    %v2421 = vpack.c.b16 %v1641, %v1637
    %v2422 = vpack.c.b16 %v1642, %v1638
    %v2423 = vpack.c.b16 %v1643, %v1639
    %v2424 = vpack.c.b16 %v1648, %v1644
    %v2425 = vpack.c.b16 %v1649, %v1645
    %v2426 = vpack.c.b16 %v1650, %v1646
    %v2427 = vpack.c.b16 %v1651, %v1647
    %v2428 = vpack.c.b16 %v1656, %v1652
    %v2429 = vpack.c.b16 %v1657, %v1653
    %v2430 = vpack.c.b16 %v1658, %v1654
    %v2431 = vpack.c.b16 %v1659, %v1655
    %v2432 = vpack.c.b16 %v1664, %v1660
    %v2433 = vpack.c.b16 %v1665, %v1661
    %v2434 = vpack.c.b16 %v1666, %v1662
    %v2435 = vpack.c.b16 %v1667, %v1663
    %v2436 = vpack.c.b16 %v1672, %v1668
    %v2437 = vpack.c.b16 %v1673, %v1669
    %v2438 = vpack.c.b16 %v1674, %v1670
    %v2439 = vpack.c.b16 %v1675, %v1671
    %v2440 = vpack.c.b16 %v1680, %v1676
    %v2441 = vpack.c.b16 %v1681, %v1677
    %v2442 = vpack.c.b16 %v1682, %v1678
    %v2443 = vpack.c.b16 %v1683, %v1679
    %v2444 = vpack.c.b16 %v1688, %v1684
    %v2445 = vpack.c.b16 %v1689, %v1685
    %v2446 = vpack.c.b16 %v1690, %v1686
    %v2447 = vpack.c.b16 %v1691, %v1687
    %v2448 = vpack.c.b16 %v1696, %v1692
    %v2449 = vpack.c.b16 %v1697, %v1693
    %v2450 = vpack.c.b16 %v1698, %v1694
    %v2451 = vpack.c.b16 %v1699, %v1695
    %v2452 = vpack.c.b16 %v1704, %v1700
    %v2453 = vpack.c.b16 %v1705, %v1701
    %v2454 = vpack.c.b16 %v1706, %v1702
    %v2455 = vpack.c.b16 %v1707, %v1703
    %v2456 = vpack.c.b16 %v1712, %v1708
    %v2457 = vpack.c.b16 %v1713, %v1709
    %v2458 = vpack.c.b16 %v1714, %v1710
    %v2459 = vpack.c.b16 %v1715, %v1711
    %v2460 = vpack.c.b16 %v1720, %v1716
    %v2461 = vpack.c.b16 %v1721, %v1717
    %v2462 = vpack.c.b16 %v1722, %v1718
    %v2463 = vpack.c.b16 %v1723, %v1719
    %v2464 = vpack.c.b16 %v1728, %v1724
    %v2465 = vpack.c.b16 %v1729, %v1725
    %v2466 = vpack.c.b16 %v1730, %v1726
    %v2467 = vpack.c.b16 %v1731, %v1727
    %v2468 = vpack.c.b16 %v1736, %v1732
    %v2469 = vpack.c.b16 %v1737, %v1733
    %v2470 = vpack.c.b16 %v1738, %v1734
    %v2471 = vpack.c.b16 %v1739, %v1735
    %v2472 = vpack.c.b16 %v1744, %v1740
    %v2473 = vpack.c.b16 %v1745, %v1741
    %v2474 = vpack.c.b16 %v1746, %v1742
    %v2475 = vpack.c.b16 %v1747, %v1743
    %v2476 = vpack.c.b16 %v1752, %v1748
    %v2477 = vpack.c.b16 %v1753, %v1749
    %v2478 = vpack.c.b16 %v1754, %v1750
    %v2479 = vpack.c.b16 %v1755, %v1751
    %v2480 = vpack.c.b16 %v1760, %v1756
    %v2481 = vpack.c.b16 %v1761, %v1757
    %v2482 = vpack.c.b16 %v1762, %v1758
    %v2483 = vpack.c.b16 %v1763, %v1759
    %v2484 = vpack.c.b16 %v1768, %v1764
    %v2485 = vpack.c.b16 %v1769, %v1765
    %v2486 = vpack.c.b16 %v1770, %v1766
    %v2487 = vpack.c.b16 %v1771, %v1767
    %v2488 = vpack.c.b16 %v1776, %v1772
    %v2489 = vpack.c.b16 %v1777, %v1773
    %v2490 = vpack.c.b16 %v1778, %v1774
    %v2491 = vpack.c.b16 %v1779, %v1775
    %v2492 = vpack.c.b16 %v1784, %v1780
    %v2493 = vpack.c.b16 %v1785, %v1781
    %v2494 = vpack.c.b16 %v1786, %v1782
    %v2495 = vpack.c.b16 %v1787, %v1783
    %v2496 = vpack.c.b16 %v1792, %v1788
    %v2497 = vpack.c.b16 %v1793, %v1789
    %v2498 = vpack.c.b16 %v1794, %v1790
    %v2499 = vpack.c.b16 %v1795, %v1791
    %v2500 = vpack.c.b16 %v1800, %v1796
    %v2501 = vpack.c.b16 %v1801, %v1797
    %v2502 = vpack.c.b16 %v1802, %v1798
    %v2503 = vpack.c.b16 %v1803, %v1799
    %v2504 = vpack.c.b16 %v1808, %v1804
    %v2505 = vpack.c.b16 %v1809, %v1805
    %v2506 = vpack.c.b16 %v1810, %v1806
    %v2507 = vpack.c.b16 %v1811, %v1807
    %v2508 = vpack.c.b16 %v1816, %v1812
    %v2509 = vpack.c.b16 %v1817, %v1813
    %v2510 = vpack.c.b16 %v1818, %v1814
    %v2511 = vpack.c.b16 %v1819, %v1815
    %v2512 = vpack.c.b16 %v1824, %v1820
    %v2513 = vpack.c.b16 %v1825, %v1821
    %v2514 = vpack.c.b16 %v1826, %v1822
    %v2515 = vpack.c.b16 %v1827, %v1823
    %v2516 = vpack.c.b16 %v1832, %v1828
    %v2517 = vpack.c.b16 %v1833, %v1829
    %v2518 = vpack.c.b16 %v1834, %v1830
    %v2519 = vpack.c.b16 %v1835, %v1831
    %v2520 = vpack.c.b16 %v1840, %v1836
    %v2521 = vpack.c.b16 %v1841, %v1837
    %v2522 = vpack.c.b16 %v1842, %v1838
    %v2523 = vpack.c.b16 %v1843, %v1839
    %v2524 = vpack.c.b16 %v1848, %v1844
    %v2525 = vpack.c.b16 %v1849, %v1845
    %v2526 = vpack.c.b16 %v1850, %v1846
    %v2527 = vpack.c.b16 %v1851, %v1847
    %v2528 = vpack.c.b16 %v1856, %v1852
    %v2529 = vpack.c.b16 %v1857, %v1853
    %v2530 = vpack.c.b16 %v1858, %v1854
    %v2531 = vpack.c.b16 %v1859, %v1855
    %v2532 = vpack.c.b16 %v1864, %v1860
    %v2533 = vpack.c.b16 %v1865, %v1861
    %v2534 = vpack.c.b16 %v1866, %v1862
    %v2535 = vpack.c.b16 %v1867, %v1863
    %v2536 = vpack.c.b16 %v1872, %v1868
    %v2537 = vpack.c.b16 %v1873, %v1869
    %v2538 = vpack.c.b16 %v1874, %v1870
    %v2539 = vpack.c.b16 %v1875, %v1871
    %v2540 = vpack.c.b16 %v1880, %v1876
    %v2541 = vpack.c.b16 %v1881, %v1877
    %v2542 = vpack.c.b16 %v1882, %v1878
    %v2543 = vpack.c.b16 %v1883, %v1879
    %v2544 = vpack.c.b16 %v1888, %v1884
    %v2545 = vpack.c.b16 %v1889, %v1885
    %v2546 = vpack.c.b16 %v1890, %v1886
    %v2547 = vpack.c.b16 %v1891, %v1887
    %v2548 = vpack.c.b16 %v1896, %v1892
    %v2549 = vpack.c.b16 %v1897, %v1893
    %v2550 = vpack.c.b16 %v1898, %v1894
    %v2551 = vpack.c.b16 %v1899, %v1895
    %v2552 = vpack.c.b16 %v1904, %v1900
    %v2553 = vpack.c.b16 %v1905, %v1901
    %v2554 = vpack.c.b16 %v1906, %v1902
    %v2555 = vpack.c.b16 %v1907, %v1903
    %v2556 = vpack.c.b16 %v1912, %v1908
    %v2557 = vpack.c.b16 %v1913, %v1909
    %v2558 = vpack.c.b16 %v1914, %v1910
    %v2559 = vpack.c.b16 %v1915, %v1911
    %v2560 = vpack.c.b16 %v1920, %v1916
    %v2561 = vpack.c.b16 %v1921, %v1917
    %v2562 = vpack.c.b16 %v1922, %v1918
    %v2563 = vpack.c.b16 %v1923, %v1919
    %v2564 = vpack.c.b16 %v1928, %v1924
    %v2565 = vpack.c.b16 %v1929, %v1925
    %v2566 = vpack.c.b16 %v1930, %v1926
    %v2567 = vpack.c.b16 %v1931, %v1927
    %v2568 = vpack.c.b16 %v1936, %v1932
    %v2569 = vpack.c.b16 %v1937, %v1933
    %v2570 = vpack.c.b16 %v1938, %v1934
    %v2571 = vpack.c.b16 %v1939, %v1935
    %v2572 = vpack.c.b16 %v1944, %v1940
    %v2573 = vpack.c.b16 %v1945, %v1941
    %v2574 = vpack.c.b16 %v1946, %v1942
    %v2575 = vpack.c.b16 %v1947, %v1943
    %v2576 = vpack.c.b16 %v1952, %v1948
    %v2577 = vpack.c.b16 %v1953, %v1949
    %v2578 = vpack.c.b16 %v1954, %v1950
    %v2579 = vpack.c.b16 %v1955, %v1951
    %v2580 = vpack.c.b16 %v1960, %v1956
    %v2581 = vpack.c.b16 %v1961, %v1957
    %v2582 = vpack.c.b16 %v1962, %v1958
    %v2583 = vpack.c.b16 %v1963, %v1959
    %v2584 = vpack.c.b16 %v1968, %v1964
    %v2585 = vpack.c.b16 %v1969, %v1965
    %v2586 = vpack.c.b16 %v1970, %v1966
    %v2587 = vpack.c.b16 %v1971, %v1967
    %v2588 = vpack.c.b16 %v1976, %v1972
    %v2589 = vpack.c.b16 %v1977, %v1973
    %v2590 = vpack.c.b16 %v1978, %v1974
    %v2591 = vpack.c.b16 %v1979, %v1975
    %v2592 = vpack.c.b16 %v1984, %v1980
    %v2593 = vpack.c.b16 %v1985, %v1981
    %v2594 = vpack.c.b16 %v1986, %v1982
    %v2595 = vpack.c.b16 %v1987, %v1983
    %v2596 = vpack.c.b16 %v1992, %v1988
    %v2597 = vpack.c.b16 %v1993, %v1989
    %v2598 = vpack.c.b16 %v1994, %v1990
    %v2599 = vpack.c.b16 %v1995, %v1991
    %v2600 = vpack.c.b16 %v2000, %v1996
    %v2601 = vpack.c.b16 %v2001, %v1997
    %v2602 = vpack.c.b16 %v2002, %v1998
    %v2603 = vpack.c.b16 %v2003, %v1999
    %v2604 = vpack.c.b16 %v2008, %v2004
    %v2605 = vpack.c.b16 %v2009, %v2005
    %v2606 = vpack.c.b16 %v2010, %v2006
    %v2607 = vpack.c.b16 %v2011, %v2007
    %v2608 = vpack.c.b16 %v2016, %v2012
    %v2609 = vpack.c.b16 %v2017, %v2013
    %v2610 = vpack.c.b16 %v2018, %v2014
    %v2611 = vpack.c.b16 %v2019, %v2015
    %v2612 = vpack.c.b16 %v2024, %v2020
    %v2613 = vpack.c.b16 %v2025, %v2021
    %v2614 = vpack.c.b16 %v2026, %v2022
    %v2615 = vpack.c.b16 %v2027, %v2023
    %v2616 = vpack.c.b16 %v2032, %v2028
    %v2617 = vpack.c.b16 %v2033, %v2029
    %v2618 = vpack.c.b16 %v2034, %v2030
    %v2619 = vpack.c.b16 %v2035, %v2031
    %v2620 = vpack.c.b16 %v2040, %v2036
    %v2621 = vpack.c.b16 %v2041, %v2037
    %v2622 = vpack.c.b16 %v2042, %v2038
    %v2623 = vpack.c.b16 %v2043, %v2039
    %v2624 = vpack.c.b16 %v2048, %v2044
    %v2625 = vpack.c.b16 %v2049, %v2045
    %v2626 = vpack.c.b16 %v2050, %v2046
    %v2627 = vpack.c.b16 %v2051, %v2047
    %v2628 = vpack.c.b16 %v2056, %v2052
    %v2629 = vpack.c.b16 %v2057, %v2053
    %v2630 = vpack.c.b16 %v2058, %v2054
    %v2631 = vpack.c.b16 %v2059, %v2055
    %v2632 = vpack.c.b16 %v2064, %v2060
    %v2633 = vpack.c.b16 %v2065, %v2061
    %v2634 = vpack.c.b16 %v2066, %v2062
    %v2635 = vpack.c.b16 %v2067, %v2063
    %v2636 = vpack.c.b16 %v2072, %v2068
    %v2637 = vpack.c.b16 %v2073, %v2069
    %v2638 = vpack.c.b16 %v2074, %v2070
    %v2639 = vpack.c.b16 %v2075, %v2071
    %v2640 = vpack.c.b16 %v2080, %v2076
    %v2641 = vpack.c.b16 %v2081, %v2077
    %v2642 = vpack.c.b16 %v2082, %v2078
    %v2643 = vpack.c.b16 %v2083, %v2079
    %v2644 = vpack.c.b16 %v2088, %v2084
    %v2645 = vpack.c.b16 %v2089, %v2085
    %v2646 = vpack.c.b16 %v2090, %v2086
    %v2647 = vpack.c.b16 %v2091, %v2087
    %v2648 = vpack.c.b16 %v2096, %v2092
    %v2649 = vpack.c.b16 %v2097, %v2093
    %v2650 = vpack.c.b16 %v2098, %v2094
    %v2651 = vpack.c.b16 %v2099, %v2095
    %v2652 = vpack.c.b16 %v2104, %v2100
    %v2653 = vpack.c.b16 %v2105, %v2101
    %v2654 = vpack.c.b16 %v2106, %v2102
    %v2655 = vpack.c.b16 %v2107, %v2103
    %v2656 = vpack.c.b16 %v2112, %v2108
    %v2657 = vpack.c.b16 %v2113, %v2109
    %v2658 = vpack.c.b16 %v2114, %v2110
    %v2659 = vpack.c.b16 %v2115, %v2111
    %v2660 = vpack.c.b16 %v2120, %v2116
    %v2661 = vpack.c.b16 %v2121, %v2117
    %v2662 = vpack.c.b16 %v2122, %v2118
    %v2663 = vpack.c.b16 %v2123, %v2119
    %v2664 = vpack.c.b16 %v2128, %v2124
    %v2665 = vpack.c.b16 %v2129, %v2125
    %v2666 = vpack.c.b16 %v2130, %v2126
    %v2667 = vpack.c.b16 %v2131, %v2127
    %v2668 = vpack.c.b16 %v2136, %v2132
    %v2669 = vpack.c.b16 %v2137, %v2133
    %v2670 = vpack.c.b16 %v2138, %v2134
    %v2671 = vpack.c.b16 %v2139, %v2135
    %v2672 = vpack.c.b16 %v2144, %v2140
    %v2673 = vpack.c.b16 %v2145, %v2141
    %v2674 = vpack.c.b16 %v2146, %v2142
    %v2675 = vpack.c.b16 %v2147, %v2143
    %v2676 = vpack.c.b16 %v2152, %v2148
    %v2677 = vpack.c.b16 %v2153, %v2149
    %v2678 = vpack.c.b16 %v2154, %v2150
    %v2679 = vpack.c.b16 %v2155, %v2151
    %v2680 = vpack.c.b16 %v2160, %v2156
    %v2681 = vpack.c.b16 %v2161, %v2157
    %v2682 = vpack.c.b16 %v2162, %v2158
    %v2683 = vpack.c.b16 %v2163, %v2159
    %v2684 = vpack.c.b16 %v2168, %v2164
    %v2685 = vpack.c.b16 %v2169, %v2165
    %v2686 = vpack.c.b16 %v2170, %v2166
    %v2687 = vpack.c.b16 %v2171, %v2167
    %v2688 = vpack.c.b16 %v2176, %v2172
    %v2689 = vpack.c.b16 %v2177, %v2173
    %v2690 = vpack.c.b16 %v2178, %v2174
    %v2691 = vpack.c.b16 %v2179, %v2175
    %3204 = vmatprep.subr.bf16.mxu0 %v2181
    %3205 = vmatpush1.bf16.msra.mxu0 %v2180
    %3206 = vmatprep.subr.bf16.mxu0 %v2185
    %3207 = vmatpush1.bf16.msra.mxu0 %v2184
    %3208 = vmatprep.subr.bf16.mxu0 %v2189
    %3209 = vmatpush1.bf16.msra.mxu0 %v2188
    %3210 = vmatprep.subr.bf16.mxu0 %v2193
    %3211 = vmatpush1.bf16.msra.mxu0 %v2192
    %3212 = vmatprep.subr.bf16.mxu0 %v2197
    %3213 = vmatpush1.bf16.msra.mxu0 %v2196
    %3214 = vmatprep.subr.bf16.mxu0 %v2201
    %3215 = vmatpush1.bf16.msra.mxu0 %v2200
    %3216 = vmatprep.subr.bf16.mxu0 %v2205
    %3217 = vmatpush1.bf16.msra.mxu0 %v2204
    %3218 = vmatprep.subr.bf16.mxu0 %v2209
    %3219 = vmatpush1.bf16.msra.mxu0 %v2208
    %3220 = vmatprep.subr.bf16.mxu0 %v2213
    %3221 = vmatpush1.bf16.msra.mxu0 %v2212
    %3222 = vmatprep.subr.bf16.mxu0 %v2217
    %3223 = vmatpush1.bf16.msra.mxu0 %v2216
    %3224 = vmatprep.subr.bf16.mxu0 %v2221
    %3225 = vmatpush1.bf16.msra.mxu0 %v2220
    %3226 = vmatprep.subr.bf16.mxu0 %v2225
    %3227 = vmatpush1.bf16.msra.mxu0 %v2224
    %3228 = vmatprep.subr.bf16.mxu0 %v2229
    %3229 = vmatpush1.bf16.msra.mxu0 %v2228
    %3230 = vmatprep.subr.bf16.mxu0 %v2233
    %3231 = vmatpush1.bf16.msra.mxu0 %v2232
    %3232 = vmatprep.subr.bf16.mxu0 %v2237
    %3233 = vmatpush1.bf16.msra.mxu0 %v2236
    %3234 = vmatprep.subr.bf16.mxu0 %v2241
    %3235 = vmatpush1.bf16.msra.mxu0 %v2240
    %3236 = vmatprep.mubr.bf16.mxu0 %v613
    %3237 = vmatmul.mubr.bf16.gmra.mrb[0].mxu0 %v612
    %v3238 = vpop.f32.mrb[0].mxu0
    %v3239 = vadd.f32 %v571, %v3238
    %v3240 = vpop.f32.mrb[0].mxu0
    %v3241 = vadd.f32 %v575, %v3240
    %v3242 = vpop.f32.mrb[0].mxu0
    %v3243 = vpop.f32.mrb[0].mxu0
    %3244 = vdwg.mxu0
    %3245 = vmatprep.subr.bf16.mxu0 %v2245
    %3246 = vmatpush1.bf16.msra.mxu0 %v2244
    %3247 = vmatprep.subr.bf16.mxu0 %v2249
    %3248 = vmatpush1.bf16.msra.mxu0 %v2248
    %3249 = vmatprep.subr.bf16.mxu0 %v2253
    %3250 = vmatpush1.bf16.msra.mxu0 %v2252
    %3251 = vmatprep.subr.bf16.mxu0 %v2257
    %3252 = vmatpush1.bf16.msra.mxu0 %v2256
    %3253 = vmatprep.subr.bf16.mxu0 %v2261
    %3254 = vmatpush1.bf16.msra.mxu0 %v2260
    %3255 = vmatprep.subr.bf16.mxu0 %v2265
    %3256 = vmatpush1.bf16.msra.mxu0 %v2264
    %3257 = vmatprep.subr.bf16.mxu0 %v2269
    %3258 = vmatpush1.bf16.msra.mxu0 %v2268
    %3259 = vmatprep.subr.bf16.mxu0 %v2273
    %3260 = vmatpush1.bf16.msra.mxu0 %v2272
    %3261 = vmatprep.subr.bf16.mxu0 %v2277
    %3262 = vmatpush1.bf16.msra.mxu0 %v2276
    %3263 = vmatprep.subr.bf16.mxu0 %v2281
    %3264 = vmatpush1.bf16.msra.mxu0 %v2280
    %3265 = vmatprep.subr.bf16.mxu0 %v2285
    %3266 = vmatpush1.bf16.msra.mxu0 %v2284
    %3267 = vmatprep.subr.bf16.mxu0 %v2289
    %3268 = vmatpush1.bf16.msra.mxu0 %v2288
    %3269 = vmatprep.subr.bf16.mxu0 %v2293
    %3270 = vmatpush1.bf16.msra.mxu0 %v2292
    %3271 = vmatprep.subr.bf16.mxu0 %v2297
    %3272 = vmatpush1.bf16.msra.mxu0 %v2296
    %3273 = vmatprep.subr.bf16.mxu0 %v2301
    %3274 = vmatpush1.bf16.msra.mxu0 %v2300
    %3275 = vmatprep.subr.bf16.mxu0 %v2305
    %3276 = vmatpush1.bf16.msra.mxu0 %v2304
    %3277 = vmatprep.mubr.bf16.mxu0 %v615
    %3278 = vmatmul.mubr.bf16.gmra.mrb[0].mxu0 %v614
    %v3279 = vpop.f32.mrb[0].mxu0
    %v3280 = vadd.f32 %v3239, %v3279
    %v3281 = vpop.f32.mrb[0].mxu0
    %v3282 = vadd.f32 %v3241, %v3281
    %v3283 = vpop.f32.mrb[0].mxu0
    %v3284 = vpop.f32.mrb[0].mxu0
    %3285 = vdwg.mxu0
    %3286 = vmatprep.subr.bf16.mxu0 %v2309
    %3287 = vmatpush1.bf16.msra.mxu0 %v2308
    %3288 = vmatprep.subr.bf16.mxu0 %v2313
    %3289 = vmatpush1.bf16.msra.mxu0 %v2312
    %3290 = vmatprep.subr.bf16.mxu0 %v2317
    %3291 = vmatpush1.bf16.msra.mxu0 %v2316
    %3292 = vmatprep.subr.bf16.mxu0 %v2321
    %3293 = vmatpush1.bf16.msra.mxu0 %v2320
    %3294 = vmatprep.subr.bf16.mxu0 %v2325
    %3295 = vmatpush1.bf16.msra.mxu0 %v2324
    %3296 = vmatprep.subr.bf16.mxu0 %v2329
    %3297 = vmatpush1.bf16.msra.mxu0 %v2328
    %3298 = vmatprep.subr.bf16.mxu0 %v2333
    %3299 = vmatpush1.bf16.msra.mxu0 %v2332
    %3300 = vmatprep.subr.bf16.mxu0 %v2337
    %3301 = vmatpush1.bf16.msra.mxu0 %v2336
    %3302 = vmatprep.subr.bf16.mxu0 %v2341
    %3303 = vmatpush1.bf16.msra.mxu0 %v2340
    %3304 = vmatprep.subr.bf16.mxu0 %v2345
    %3305 = vmatpush1.bf16.msra.mxu0 %v2344
    %3306 = vmatprep.subr.bf16.mxu0 %v2349
    %3307 = vmatpush1.bf16.msra.mxu0 %v2348
    %3308 = vmatprep.subr.bf16.mxu0 %v2353
    %3309 = vmatpush1.bf16.msra.mxu0 %v2352
    %3310 = vmatprep.subr.bf16.mxu0 %v2357
    %3311 = vmatpush1.bf16.msra.mxu0 %v2356
    %3312 = vmatprep.subr.bf16.mxu0 %v2361
    %3313 = vmatpush1.bf16.msra.mxu0 %v2360
    %3314 = vmatprep.subr.bf16.mxu0 %v2365
    %3315 = vmatpush1.bf16.msra.mxu0 %v2364
    %3316 = vmatprep.subr.bf16.mxu0 %v2369
    %3317 = vmatpush1.bf16.msra.mxu0 %v2368
    %3318 = vmatprep.mubr.bf16.mxu0 %v617
    %3319 = vmatmul.mubr.bf16.gmra.mrb[0].mxu0 %v616
    %v3320 = vpop.f32.mrb[0].mxu0
    %v3321 = vadd.f32 %v3280, %v3320
    %v3322 = vpop.f32.mrb[0].mxu0
    %v3323 = vadd.f32 %v3282, %v3322
    %v3324 = vpop.f32.mrb[0].mxu0
    %v3325 = vpop.f32.mrb[0].mxu0
    %3326 = vdwg.mxu0
    %3327 = vmatprep.subr.bf16.mxu0 %v2373
    %3328 = vmatpush1.bf16.msra.mxu0 %v2372
    %3329 = vmatprep.subr.bf16.mxu0 %v2377
    %3330 = vmatpush1.bf16.msra.mxu0 %v2376
    %3331 = vmatprep.subr.bf16.mxu0 %v2381
    %3332 = vmatpush1.bf16.msra.mxu0 %v2380
    %3333 = vmatprep.subr.bf16.mxu0 %v2385
    %3334 = vmatpush1.bf16.msra.mxu0 %v2384
    %3335 = vmatprep.subr.bf16.mxu0 %v2389
    %3336 = vmatpush1.bf16.msra.mxu0 %v2388
    %3337 = vmatprep.subr.bf16.mxu0 %v2393
    %3338 = vmatpush1.bf16.msra.mxu0 %v2392
    %3339 = vmatprep.subr.bf16.mxu0 %v2397
    %3340 = vmatpush1.bf16.msra.mxu0 %v2396
    %3341 = vmatprep.subr.bf16.mxu0 %v2401
    %3342 = vmatpush1.bf16.msra.mxu0 %v2400
    %3343 = vmatprep.subr.bf16.mxu0 %v2405
    %3344 = vmatpush1.bf16.msra.mxu0 %v2404
    %3345 = vmatprep.subr.bf16.mxu0 %v2409
    %3346 = vmatpush1.bf16.msra.mxu0 %v2408
    %3347 = vmatprep.subr.bf16.mxu0 %v2413
    %3348 = vmatpush1.bf16.msra.mxu0 %v2412
    %3349 = vmatprep.subr.bf16.mxu0 %v2417
    %3350 = vmatpush1.bf16.msra.mxu0 %v2416
    %3351 = vmatprep.subr.bf16.mxu0 %v2421
    %3352 = vmatpush1.bf16.msra.mxu0 %v2420
    %3353 = vmatprep.subr.bf16.mxu0 %v2425
    %3354 = vmatpush1.bf16.msra.mxu0 %v2424
    %3355 = vmatprep.subr.bf16.mxu0 %v2429
    %3356 = vmatpush1.bf16.msra.mxu0 %v2428
    %3357 = vmatprep.subr.bf16.mxu0 %v2433
    %3358 = vmatpush1.bf16.msra.mxu0 %v2432
    %3359 = vmatprep.mubr.bf16.mxu0 %v619
    %3360 = vmatmul.mubr.bf16.gmra.mrb[0].mxu0 %v618
    %v3361 = vpop.f32.mrb[0].mxu0
    %v3362 = vadd.f32 %v3321, %v3361
    %v3363 = vpop.f32.mrb[0].mxu0
    %v3364 = vadd.f32 %v3323, %v3363
    %v3365 = vpop.f32.mrb[0].mxu0
    %v3366 = vpop.f32.mrb[0].mxu0
    %3367 = vdwg.mxu0
    %3368 = vmatprep.subr.bf16.mxu0 %v2437
    %3369 = vmatpush1.bf16.msra.mxu0 %v2436
    %3370 = vmatprep.subr.bf16.mxu0 %v2441
    %3371 = vmatpush1.bf16.msra.mxu0 %v2440
    %3372 = vmatprep.subr.bf16.mxu0 %v2445
    %3373 = vmatpush1.bf16.msra.mxu0 %v2444
    %3374 = vmatprep.subr.bf16.mxu0 %v2449
    %3375 = vmatpush1.bf16.msra.mxu0 %v2448
    %3376 = vmatprep.subr.bf16.mxu0 %v2453
    %3377 = vmatpush1.bf16.msra.mxu0 %v2452
    %3378 = vmatprep.subr.bf16.mxu0 %v2457
    %3379 = vmatpush1.bf16.msra.mxu0 %v2456
    %3380 = vmatprep.subr.bf16.mxu0 %v2461
    %3381 = vmatpush1.bf16.msra.mxu0 %v2460
    %3382 = vmatprep.subr.bf16.mxu0 %v2465
    %3383 = vmatpush1.bf16.msra.mxu0 %v2464
    %3384 = vmatprep.subr.bf16.mxu0 %v2469
    %3385 = vmatpush1.bf16.msra.mxu0 %v2468
    %3386 = vmatprep.subr.bf16.mxu0 %v2473
    %3387 = vmatpush1.bf16.msra.mxu0 %v2472
    %3388 = vmatprep.subr.bf16.mxu0 %v2477
    %3389 = vmatpush1.bf16.msra.mxu0 %v2476
    %3390 = vmatprep.subr.bf16.mxu0 %v2481
    %3391 = vmatpush1.bf16.msra.mxu0 %v2480
    %3392 = vmatprep.subr.bf16.mxu0 %v2485
    %3393 = vmatpush1.bf16.msra.mxu0 %v2484
    %3394 = vmatprep.subr.bf16.mxu0 %v2489
    %3395 = vmatpush1.bf16.msra.mxu0 %v2488
    %3396 = vmatprep.subr.bf16.mxu0 %v2493
    %3397 = vmatpush1.bf16.msra.mxu0 %v2492
    %3398 = vmatprep.subr.bf16.mxu0 %v2497
    %3399 = vmatpush1.bf16.msra.mxu0 %v2496
    %3400 = vmatprep.mubr.bf16.mxu0 %v621
    %3401 = vmatmul.mubr.bf16.gmra.mrb[0].mxu0 %v620
    %v3402 = vpop.f32.mrb[0].mxu0
    %v3403 = vadd.f32 %v3362, %v3402
    %v3404 = vpop.f32.mrb[0].mxu0
    %v3405 = vadd.f32 %v3364, %v3404
    %v3406 = vpop.f32.mrb[0].mxu0
    %v3407 = vpop.f32.mrb[0].mxu0
    %3408 = vdwg.mxu0
    %3409 = vmatprep.subr.bf16.mxu0 %v2501
    %3410 = vmatpush1.bf16.msra.mxu0 %v2500
    %3411 = vmatprep.subr.bf16.mxu0 %v2505
    %3412 = vmatpush1.bf16.msra.mxu0 %v2504
    %3413 = vmatprep.subr.bf16.mxu0 %v2509
    %3414 = vmatpush1.bf16.msra.mxu0 %v2508
    %3415 = vmatprep.subr.bf16.mxu0 %v2513
    %3416 = vmatpush1.bf16.msra.mxu0 %v2512
    %3417 = vmatprep.subr.bf16.mxu0 %v2517
    %3418 = vmatpush1.bf16.msra.mxu0 %v2516
    %3419 = vmatprep.subr.bf16.mxu0 %v2521
    %3420 = vmatpush1.bf16.msra.mxu0 %v2520
    %3421 = vmatprep.subr.bf16.mxu0 %v2525
    %3422 = vmatpush1.bf16.msra.mxu0 %v2524
    %3423 = vmatprep.subr.bf16.mxu0 %v2529
    %3424 = vmatpush1.bf16.msra.mxu0 %v2528
    %3425 = vmatprep.subr.bf16.mxu0 %v2533
    %3426 = vmatpush1.bf16.msra.mxu0 %v2532
    %3427 = vmatprep.subr.bf16.mxu0 %v2537
    %3428 = vmatpush1.bf16.msra.mxu0 %v2536
    %3429 = vmatprep.subr.bf16.mxu0 %v2541
    %3430 = vmatpush1.bf16.msra.mxu0 %v2540
    %3431 = vmatprep.subr.bf16.mxu0 %v2545
    %3432 = vmatpush1.bf16.msra.mxu0 %v2544
    %3433 = vmatprep.subr.bf16.mxu0 %v2549
    %3434 = vmatpush1.bf16.msra.mxu0 %v2548
    %3435 = vmatprep.subr.bf16.mxu0 %v2553
    %3436 = vmatpush1.bf16.msra.mxu0 %v2552
    %3437 = vmatprep.subr.bf16.mxu0 %v2557
    %3438 = vmatpush1.bf16.msra.mxu0 %v2556
    %3439 = vmatprep.subr.bf16.mxu0 %v2561
    %3440 = vmatpush1.bf16.msra.mxu0 %v2560
    %3441 = vmatprep.mubr.bf16.mxu0 %v623
    %3442 = vmatmul.mubr.bf16.gmra.mrb[0].mxu0 %v622
    %v3443 = vpop.f32.mrb[0].mxu0
    %v3444 = vadd.f32 %v3403, %v3443
    %v3445 = vpop.f32.mrb[0].mxu0
    %v3446 = vadd.f32 %v3405, %v3445
    %v3447 = vpop.f32.mrb[0].mxu0
    %v3448 = vpop.f32.mrb[0].mxu0
    %3449 = vdwg.mxu0
    %3450 = vmatprep.subr.bf16.mxu0 %v2565
    %3451 = vmatpush1.bf16.msra.mxu0 %v2564
    %3452 = vmatprep.subr.bf16.mxu0 %v2569
    %3453 = vmatpush1.bf16.msra.mxu0 %v2568
    %3454 = vmatprep.subr.bf16.mxu0 %v2573
    %3455 = vmatpush1.bf16.msra.mxu0 %v2572
    %3456 = vmatprep.subr.bf16.mxu0 %v2577
    %3457 = vmatpush1.bf16.msra.mxu0 %v2576
    %3458 = vmatprep.subr.bf16.mxu0 %v2581
    %3459 = vmatpush1.bf16.msra.mxu0 %v2580
    %3460 = vmatprep.subr.bf16.mxu0 %v2585
    %3461 = vmatpush1.bf16.msra.mxu0 %v2584
    %3462 = vmatprep.subr.bf16.mxu0 %v2589
    %3463 = vmatpush1.bf16.msra.mxu0 %v2588
    %3464 = vmatprep.subr.bf16.mxu0 %v2593
    %3465 = vmatpush1.bf16.msra.mxu0 %v2592
    %3466 = vmatprep.subr.bf16.mxu0 %v2597
    %3467 = vmatpush1.bf16.msra.mxu0 %v2596
    %3468 = vmatprep.subr.bf16.mxu0 %v2601
    %3469 = vmatpush1.bf16.msra.mxu0 %v2600
    %3470 = vmatprep.subr.bf16.mxu0 %v2605
    %3471 = vmatpush1.bf16.msra.mxu0 %v2604
    %3472 = vmatprep.subr.bf16.mxu0 %v2609
    %3473 = vmatpush1.bf16.msra.mxu0 %v2608
    %3474 = vmatprep.subr.bf16.mxu0 %v2613
    %3475 = vmatpush1.bf16.msra.mxu0 %v2612
    %3476 = vmatprep.subr.bf16.mxu0 %v2617
    %3477 = vmatpush1.bf16.msra.mxu0 %v2616
    %3478 = vmatprep.subr.bf16.mxu0 %v2621
    %3479 = vmatpush1.bf16.msra.mxu0 %v2620
    %3480 = vmatprep.subr.bf16.mxu0 %v2625
    %3481 = vmatpush1.bf16.msra.mxu0 %v2624
    %3482 = vmatprep.mubr.bf16.mxu0 %v625
    %3483 = vmatmul.mubr.bf16.gmra.mrb[0].mxu0 %v624
    %v3484 = vpop.f32.mrb[0].mxu0
    %v3485 = vadd.f32 %v3444, %v3484
    %v3486 = vpop.f32.mrb[0].mxu0
    %v3487 = vadd.f32 %v3446, %v3486
    %v3488 = vpop.f32.mrb[0].mxu0
    %v3489 = vpop.f32.mrb[0].mxu0
    %3490 = vdwg.mxu0
    %3491 = vmatprep.subr.bf16.mxu0 %v2629
    %3492 = vmatpush1.bf16.msra.mxu0 %v2628
    %3493 = vmatprep.subr.bf16.mxu0 %v2633
    %3494 = vmatpush1.bf16.msra.mxu0 %v2632
    %3495 = vmatprep.subr.bf16.mxu0 %v2637
    %3496 = vmatpush1.bf16.msra.mxu0 %v2636
    %3497 = vmatprep.subr.bf16.mxu0 %v2641
    %3498 = vmatpush1.bf16.msra.mxu0 %v2640
    %3499 = vmatprep.subr.bf16.mxu0 %v2645
    %3500 = vmatpush1.bf16.msra.mxu0 %v2644
    %3501 = vmatprep.subr.bf16.mxu0 %v2649
    %3502 = vmatpush1.bf16.msra.mxu0 %v2648
    %3503 = vmatprep.subr.bf16.mxu0 %v2653
    %3504 = vmatpush1.bf16.msra.mxu0 %v2652
    %3505 = vmatprep.subr.bf16.mxu0 %v2657
    %3506 = vmatpush1.bf16.msra.mxu0 %v2656
    %3507 = vmatprep.subr.bf16.mxu0 %v2661
    %3508 = vmatpush1.bf16.msra.mxu0 %v2660
    %3509 = vmatprep.subr.bf16.mxu0 %v2665
    %3510 = vmatpush1.bf16.msra.mxu0 %v2664
    %3511 = vmatprep.subr.bf16.mxu0 %v2669
    %3512 = vmatpush1.bf16.msra.mxu0 %v2668
    %3513 = vmatprep.subr.bf16.mxu0 %v2673
    %3514 = vmatpush1.bf16.msra.mxu0 %v2672
    %3515 = vmatprep.subr.bf16.mxu0 %v2677
    %3516 = vmatpush1.bf16.msra.mxu0 %v2676
    %3517 = vmatprep.subr.bf16.mxu0 %v2681
    %3518 = vmatpush1.bf16.msra.mxu0 %v2680
    %3519 = vmatprep.subr.bf16.mxu0 %v2685
    %3520 = vmatpush1.bf16.msra.mxu0 %v2684
    %3521 = vmatprep.subr.bf16.mxu0 %v2689
    %3522 = vmatpush1.bf16.msra.mxu0 %v2688
    %3523 = vmatprep.mubr.bf16.mxu0 %v627
    %3524 = vmatmul.mubr.bf16.gmra.mrb[0].mxu0 %v626
    %v3525 = vpop.f32.mrb[0].mxu0
    %v3526 = vadd.f32 %v3485, %v3525
    %v3527 = vpop.f32.mrb[0].mxu0
    %v3528 = vadd.f32 %v3487, %v3527
    %v3529 = vpop.f32.mrb[0].mxu0
    %v3530 = vpop.f32.mrb[0].mxu0
    %3531 = vdwg.mxu0
    %3532 = vmatprep.subr.bf16.mxu0 %v2183
    %3533 = vmatpush1.bf16.msra.mxu0 %v2182
    %3534 = vmatprep.subr.bf16.mxu0 %v2187
    %3535 = vmatpush1.bf16.msra.mxu0 %v2186
    %3536 = vmatprep.subr.bf16.mxu0 %v2191
    %3537 = vmatpush1.bf16.msra.mxu0 %v2190
    %3538 = vmatprep.subr.bf16.mxu0 %v2195
    %3539 = vmatpush1.bf16.msra.mxu0 %v2194
    %3540 = vmatprep.subr.bf16.mxu0 %v2199
    %3541 = vmatpush1.bf16.msra.mxu0 %v2198
    %3542 = vmatprep.subr.bf16.mxu0 %v2203
    %3543 = vmatpush1.bf16.msra.mxu0 %v2202
    %3544 = vmatprep.subr.bf16.mxu0 %v2207
    %3545 = vmatpush1.bf16.msra.mxu0 %v2206
    %3546 = vmatprep.subr.bf16.mxu0 %v2211
    %3547 = vmatpush1.bf16.msra.mxu0 %v2210
    %3548 = vmatprep.subr.bf16.mxu0 %v2215
    %3549 = vmatpush1.bf16.msra.mxu0 %v2214
    %3550 = vmatprep.subr.bf16.mxu0 %v2219
    %3551 = vmatpush1.bf16.msra.mxu0 %v2218
    %3552 = vmatprep.subr.bf16.mxu0 %v2223
    %3553 = vmatpush1.bf16.msra.mxu0 %v2222
    %3554 = vmatprep.subr.bf16.mxu0 %v2227
    %3555 = vmatpush1.bf16.msra.mxu0 %v2226
    %3556 = vmatprep.subr.bf16.mxu0 %v2231
    %3557 = vmatpush1.bf16.msra.mxu0 %v2230
    %3558 = vmatprep.subr.bf16.mxu0 %v2235
    %3559 = vmatpush1.bf16.msra.mxu0 %v2234
    %3560 = vmatprep.subr.bf16.mxu0 %v2239
    %3561 = vmatpush1.bf16.msra.mxu0 %v2238
    %3562 = vmatprep.subr.bf16.mxu0 %v2243
    %3563 = vmatpush1.bf16.msra.mxu0 %v2242
    %3564 = vmatprep.mubr.bf16.mxu0 %v613
    %3565 = vmatmul.mubr.bf16.gmra.mrb[0].mxu0 %v612
    %v3566 = vpop.f32.mrb[0].mxu0
    %v3567 = vadd.f32 %v579, %v3566
    %v3568 = vpop.f32.mrb[0].mxu0
    %v3569 = vadd.f32 %v583, %v3568
    %v3570 = vpop.f32.mrb[0].mxu0
    %v3571 = vpop.f32.mrb[0].mxu0
    %3572 = vdwg.mxu0
    %3573 = vmatprep.subr.bf16.mxu0 %v2247
    %3574 = vmatpush1.bf16.msra.mxu0 %v2246
    %3575 = vmatprep.subr.bf16.mxu0 %v2251
    %3576 = vmatpush1.bf16.msra.mxu0 %v2250
    %3577 = vmatprep.subr.bf16.mxu0 %v2255
    %3578 = vmatpush1.bf16.msra.mxu0 %v2254
    %3579 = vmatprep.subr.bf16.mxu0 %v2259
    %3580 = vmatpush1.bf16.msra.mxu0 %v2258
    %3581 = vmatprep.subr.bf16.mxu0 %v2263
    %3582 = vmatpush1.bf16.msra.mxu0 %v2262
    %3583 = vmatprep.subr.bf16.mxu0 %v2267
    %3584 = vmatpush1.bf16.msra.mxu0 %v2266
    %3585 = vmatprep.subr.bf16.mxu0 %v2271
    %3586 = vmatpush1.bf16.msra.mxu0 %v2270
    %3587 = vmatprep.subr.bf16.mxu0 %v2275
    %3588 = vmatpush1.bf16.msra.mxu0 %v2274
    %3589 = vmatprep.subr.bf16.mxu0 %v2279
    %3590 = vmatpush1.bf16.msra.mxu0 %v2278
    %3591 = vmatprep.subr.bf16.mxu0 %v2283
    %3592 = vmatpush1.bf16.msra.mxu0 %v2282
    %3593 = vmatprep.subr.bf16.mxu0 %v2287
    %3594 = vmatpush1.bf16.msra.mxu0 %v2286
    %3595 = vmatprep.subr.bf16.mxu0 %v2291
    %3596 = vmatpush1.bf16.msra.mxu0 %v2290
    %3597 = vmatprep.subr.bf16.mxu0 %v2295
    %3598 = vmatpush1.bf16.msra.mxu0 %v2294
    %3599 = vmatprep.subr.bf16.mxu0 %v2299
    %3600 = vmatpush1.bf16.msra.mxu0 %v2298
    %3601 = vmatprep.subr.bf16.mxu0 %v2303
    %3602 = vmatpush1.bf16.msra.mxu0 %v2302
    %3603 = vmatprep.subr.bf16.mxu0 %v2307
    %3604 = vmatpush1.bf16.msra.mxu0 %v2306
    %3605 = vmatprep.mubr.bf16.mxu0 %v615
    %3606 = vmatmul.mubr.bf16.gmra.mrb[0].mxu0 %v614
    %v3607 = vpop.f32.mrb[0].mxu0
    %v3608 = vadd.f32 %v3567, %v3607
    %v3609 = vpop.f32.mrb[0].mxu0
    %v3610 = vadd.f32 %v3569, %v3609
    %v3611 = vpop.f32.mrb[0].mxu0
    %v3612 = vpop.f32.mrb[0].mxu0
    %3613 = vdwg.mxu0
    %3614 = vmatprep.subr.bf16.mxu0 %v2311
    %3615 = vmatpush1.bf16.msra.mxu0 %v2310
    %3616 = vmatprep.subr.bf16.mxu0 %v2315
    %3617 = vmatpush1.bf16.msra.mxu0 %v2314
    %3618 = vmatprep.subr.bf16.mxu0 %v2319
    %3619 = vmatpush1.bf16.msra.mxu0 %v2318
    %3620 = vmatprep.subr.bf16.mxu0 %v2323
    %3621 = vmatpush1.bf16.msra.mxu0 %v2322
    %3622 = vmatprep.subr.bf16.mxu0 %v2327
    %3623 = vmatpush1.bf16.msra.mxu0 %v2326
    %3624 = vmatprep.subr.bf16.mxu0 %v2331
    %3625 = vmatpush1.bf16.msra.mxu0 %v2330
    %3626 = vmatprep.subr.bf16.mxu0 %v2335
    %3627 = vmatpush1.bf16.msra.mxu0 %v2334
    %3628 = vmatprep.subr.bf16.mxu0 %v2339
    %3629 = vmatpush1.bf16.msra.mxu0 %v2338
    %3630 = vmatprep.subr.bf16.mxu0 %v2343
    %3631 = vmatpush1.bf16.msra.mxu0 %v2342
    %3632 = vmatprep.subr.bf16.mxu0 %v2347
    %3633 = vmatpush1.bf16.msra.mxu0 %v2346
    %3634 = vmatprep.subr.bf16.mxu0 %v2351
    %3635 = vmatpush1.bf16.msra.mxu0 %v2350
    %3636 = vmatprep.subr.bf16.mxu0 %v2355
    %3637 = vmatpush1.bf16.msra.mxu0 %v2354
    %3638 = vmatprep.subr.bf16.mxu0 %v2359
    %3639 = vmatpush1.bf16.msra.mxu0 %v2358
    %3640 = vmatprep.subr.bf16.mxu0 %v2363
    %3641 = vmatpush1.bf16.msra.mxu0 %v2362
    %3642 = vmatprep.subr.bf16.mxu0 %v2367
    %3643 = vmatpush1.bf16.msra.mxu0 %v2366
    %3644 = vmatprep.subr.bf16.mxu0 %v2371
    %3645 = vmatpush1.bf16.msra.mxu0 %v2370
    %3646 = vmatprep.mubr.bf16.mxu0 %v617
    %3647 = vmatmul.mubr.bf16.gmra.mrb[0].mxu0 %v616
    %v3648 = vpop.f32.mrb[0].mxu0
    %v3649 = vadd.f32 %v3608, %v3648
    %v3650 = vpop.f32.mrb[0].mxu0
    %v3651 = vadd.f32 %v3610, %v3650
    %v3652 = vpop.f32.mrb[0].mxu0
    %v3653 = vpop.f32.mrb[0].mxu0
    %3654 = vdwg.mxu0
    %3655 = vmatprep.subr.bf16.mxu0 %v2375
    %3656 = vmatpush1.bf16.msra.mxu0 %v2374
    %3657 = vmatprep.subr.bf16.mxu0 %v2379
    %3658 = vmatpush1.bf16.msra.mxu0 %v2378
    %3659 = vmatprep.subr.bf16.mxu0 %v2383
    %3660 = vmatpush1.bf16.msra.mxu0 %v2382
    %3661 = vmatprep.subr.bf16.mxu0 %v2387
    %3662 = vmatpush1.bf16.msra.mxu0 %v2386
    %3663 = vmatprep.subr.bf16.mxu0 %v2391
    %3664 = vmatpush1.bf16.msra.mxu0 %v2390
    %3665 = vmatprep.subr.bf16.mxu0 %v2395
    %3666 = vmatpush1.bf16.msra.mxu0 %v2394
    %3667 = vmatprep.subr.bf16.mxu0 %v2399
    %3668 = vmatpush1.bf16.msra.mxu0 %v2398
    %3669 = vmatprep.subr.bf16.mxu0 %v2403
    %3670 = vmatpush1.bf16.msra.mxu0 %v2402
    %3671 = vmatprep.subr.bf16.mxu0 %v2407
    %3672 = vmatpush1.bf16.msra.mxu0 %v2406
    %3673 = vmatprep.subr.bf16.mxu0 %v2411
    %3674 = vmatpush1.bf16.msra.mxu0 %v2410
    %3675 = vmatprep.subr.bf16.mxu0 %v2415
    %3676 = vmatpush1.bf16.msra.mxu0 %v2414
    %3677 = vmatprep.subr.bf16.mxu0 %v2419
    %3678 = vmatpush1.bf16.msra.mxu0 %v2418
    %3679 = vmatprep.subr.bf16.mxu0 %v2423
    %3680 = vmatpush1.bf16.msra.mxu0 %v2422
    %3681 = vmatprep.subr.bf16.mxu0 %v2427
    %3682 = vmatpush1.bf16.msra.mxu0 %v2426
    %3683 = vmatprep.subr.bf16.mxu0 %v2431
    %3684 = vmatpush1.bf16.msra.mxu0 %v2430
    %3685 = vmatprep.subr.bf16.mxu0 %v2435
    %3686 = vmatpush1.bf16.msra.mxu0 %v2434
    %3687 = vmatprep.mubr.bf16.mxu0 %v619
    %3688 = vmatmul.mubr.bf16.gmra.mrb[0].mxu0 %v618
    %v3689 = vpop.f32.mrb[0].mxu0
    %v3690 = vadd.f32 %v3649, %v3689
    %v3691 = vpop.f32.mrb[0].mxu0
    %v3692 = vadd.f32 %v3651, %v3691
    %v3693 = vpop.f32.mrb[0].mxu0
    %v3694 = vpop.f32.mrb[0].mxu0
    %3695 = vdwg.mxu0
    %3696 = vmatprep.subr.bf16.mxu0 %v2439
    %3697 = vmatpush1.bf16.msra.mxu0 %v2438
    %3698 = vmatprep.subr.bf16.mxu0 %v2443
    %3699 = vmatpush1.bf16.msra.mxu0 %v2442
    %3700 = vmatprep.subr.bf16.mxu0 %v2447
    %3701 = vmatpush1.bf16.msra.mxu0 %v2446
    %3702 = vmatprep.subr.bf16.mxu0 %v2451
    %3703 = vmatpush1.bf16.msra.mxu0 %v2450
    %3704 = vmatprep.subr.bf16.mxu0 %v2455
    %3705 = vmatpush1.bf16.msra.mxu0 %v2454
    %3706 = vmatprep.subr.bf16.mxu0 %v2459
    %3707 = vmatpush1.bf16.msra.mxu0 %v2458
    %3708 = vmatprep.subr.bf16.mxu0 %v2463
    %3709 = vmatpush1.bf16.msra.mxu0 %v2462
    %3710 = vmatprep.subr.bf16.mxu0 %v2467
    %3711 = vmatpush1.bf16.msra.mxu0 %v2466
    %3712 = vmatprep.subr.bf16.mxu0 %v2471
    %3713 = vmatpush1.bf16.msra.mxu0 %v2470
    %3714 = vmatprep.subr.bf16.mxu0 %v2475
    %3715 = vmatpush1.bf16.msra.mxu0 %v2474
    %3716 = vmatprep.subr.bf16.mxu0 %v2479
    %3717 = vmatpush1.bf16.msra.mxu0 %v2478
    %3718 = vmatprep.subr.bf16.mxu0 %v2483
    %3719 = vmatpush1.bf16.msra.mxu0 %v2482
    %3720 = vmatprep.subr.bf16.mxu0 %v2487
    %3721 = vmatpush1.bf16.msra.mxu0 %v2486
    %3722 = vmatprep.subr.bf16.mxu0 %v2491
    %3723 = vmatpush1.bf16.msra.mxu0 %v2490
    %3724 = vmatprep.subr.bf16.mxu0 %v2495
    %3725 = vmatpush1.bf16.msra.mxu0 %v2494
    %3726 = vmatprep.subr.bf16.mxu0 %v2499
    %3727 = vmatpush1.bf16.msra.mxu0 %v2498
    %3728 = vmatprep.mubr.bf16.mxu0 %v621
    %3729 = vmatmul.mubr.bf16.gmra.mrb[0].mxu0 %v620
    %v3730 = vpop.f32.mrb[0].mxu0
    %v3731 = vadd.f32 %v3690, %v3730
    %v3732 = vpop.f32.mrb[0].mxu0
    %v3733 = vadd.f32 %v3692, %v3732
    %v3734 = vpop.f32.mrb[0].mxu0
    %v3735 = vpop.f32.mrb[0].mxu0
    %3736 = vdwg.mxu0
    %3737 = vmatprep.subr.bf16.mxu0 %v2503
    %3738 = vmatpush1.bf16.msra.mxu0 %v2502
    %3739 = vmatprep.subr.bf16.mxu0 %v2507
    %3740 = vmatpush1.bf16.msra.mxu0 %v2506
    %3741 = vmatprep.subr.bf16.mxu0 %v2511
    %3742 = vmatpush1.bf16.msra.mxu0 %v2510
    %3743 = vmatprep.subr.bf16.mxu0 %v2515
    %3744 = vmatpush1.bf16.msra.mxu0 %v2514
    %3745 = vmatprep.subr.bf16.mxu0 %v2519
    %3746 = vmatpush1.bf16.msra.mxu0 %v2518
    %3747 = vmatprep.subr.bf16.mxu0 %v2523
    %3748 = vmatpush1.bf16.msra.mxu0 %v2522
    %3749 = vmatprep.subr.bf16.mxu0 %v2527
    %3750 = vmatpush1.bf16.msra.mxu0 %v2526
    %3751 = vmatprep.subr.bf16.mxu0 %v2531
    %3752 = vmatpush1.bf16.msra.mxu0 %v2530
    %3753 = vmatprep.subr.bf16.mxu0 %v2535
    %3754 = vmatpush1.bf16.msra.mxu0 %v2534
    %3755 = vmatprep.subr.bf16.mxu0 %v2539
    %3756 = vmatpush1.bf16.msra.mxu0 %v2538
    %3757 = vmatprep.subr.bf16.mxu0 %v2543
    %3758 = vmatpush1.bf16.msra.mxu0 %v2542
    %3759 = vmatprep.subr.bf16.mxu0 %v2547
    %3760 = vmatpush1.bf16.msra.mxu0 %v2546
    %3761 = vmatprep.subr.bf16.mxu0 %v2551
    %3762 = vmatpush1.bf16.msra.mxu0 %v2550
    %3763 = vmatprep.subr.bf16.mxu0 %v2555
    %3764 = vmatpush1.bf16.msra.mxu0 %v2554
    %3765 = vmatprep.subr.bf16.mxu0 %v2559
    %3766 = vmatpush1.bf16.msra.mxu0 %v2558
    %3767 = vmatprep.subr.bf16.mxu0 %v2563
    %3768 = vmatpush1.bf16.msra.mxu0 %v2562
    %3769 = vmatprep.mubr.bf16.mxu0 %v623
    %3770 = vmatmul.mubr.bf16.gmra.mrb[0].mxu0 %v622
    %v3771 = vpop.f32.mrb[0].mxu0
    %v3772 = vadd.f32 %v3731, %v3771
    %v3773 = vpop.f32.mrb[0].mxu0
    %v3774 = vadd.f32 %v3733, %v3773
    %v3775 = vpop.f32.mrb[0].mxu0
    %v3776 = vpop.f32.mrb[0].mxu0
    %3777 = vdwg.mxu0
    %3778 = vmatprep.subr.bf16.mxu0 %v2567
    %3779 = vmatpush1.bf16.msra.mxu0 %v2566
    %3780 = vmatprep.subr.bf16.mxu0 %v2571
    %3781 = vmatpush1.bf16.msra.mxu0 %v2570
    %3782 = vmatprep.subr.bf16.mxu0 %v2575
    %3783 = vmatpush1.bf16.msra.mxu0 %v2574
    %3784 = vmatprep.subr.bf16.mxu0 %v2579
    %3785 = vmatpush1.bf16.msra.mxu0 %v2578
    %3786 = vmatprep.subr.bf16.mxu0 %v2583
    %3787 = vmatpush1.bf16.msra.mxu0 %v2582
    %3788 = vmatprep.subr.bf16.mxu0 %v2587
    %3789 = vmatpush1.bf16.msra.mxu0 %v2586
    %3790 = vmatprep.subr.bf16.mxu0 %v2591
    %3791 = vmatpush1.bf16.msra.mxu0 %v2590
    %3792 = vmatprep.subr.bf16.mxu0 %v2595
    %3793 = vmatpush1.bf16.msra.mxu0 %v2594
    %3794 = vmatprep.subr.bf16.mxu0 %v2599
    %3795 = vmatpush1.bf16.msra.mxu0 %v2598
    %3796 = vmatprep.subr.bf16.mxu0 %v2603
    %3797 = vmatpush1.bf16.msra.mxu0 %v2602
    %3798 = vmatprep.subr.bf16.mxu0 %v2607
    %3799 = vmatpush1.bf16.msra.mxu0 %v2606
    %3800 = vmatprep.subr.bf16.mxu0 %v2611
    %3801 = vmatpush1.bf16.msra.mxu0 %v2610
    %3802 = vmatprep.subr.bf16.mxu0 %v2615
    %3803 = vmatpush1.bf16.msra.mxu0 %v2614
    %3804 = vmatprep.subr.bf16.mxu0 %v2619
    %3805 = vmatpush1.bf16.msra.mxu0 %v2618
    %3806 = vmatprep.subr.bf16.mxu0 %v2623
    %3807 = vmatpush1.bf16.msra.mxu0 %v2622
    %3808 = vmatprep.subr.bf16.mxu0 %v2627
    %3809 = vmatpush1.bf16.msra.mxu0 %v2626
    %3810 = vmatprep.mubr.bf16.mxu0 %v625
    %3811 = vmatmul.mubr.bf16.gmra.mrb[0].mxu0 %v624
    %v3812 = vpop.f32.mrb[0].mxu0
    %v3813 = vadd.f32 %v3772, %v3812
    %v3814 = vpop.f32.mrb[0].mxu0
    %v3815 = vadd.f32 %v3774, %v3814
    %v3816 = vpop.f32.mrb[0].mxu0
    %v3817 = vpop.f32.mrb[0].mxu0
    %3818 = vdwg.mxu0
    %3819 = vmatprep.subr.bf16.mxu0 %v2631
    %3820 = vmatpush1.bf16.msra.mxu0 %v2630
    %3821 = vmatprep.subr.bf16.mxu0 %v2635
    %3822 = vmatpush1.bf16.msra.mxu0 %v2634
    %3823 = vmatprep.subr.bf16.mxu0 %v2639
    %3824 = vmatpush1.bf16.msra.mxu0 %v2638
    %3825 = vmatprep.subr.bf16.mxu0 %v2643
    %3826 = vmatpush1.bf16.msra.mxu0 %v2642
    %3827 = vmatprep.subr.bf16.mxu0 %v2647
    %3828 = vmatpush1.bf16.msra.mxu0 %v2646
    %3829 = vmatprep.subr.bf16.mxu0 %v2651
    %3830 = vmatpush1.bf16.msra.mxu0 %v2650
    %3831 = vmatprep.subr.bf16.mxu0 %v2655
    %3832 = vmatpush1.bf16.msra.mxu0 %v2654
    %3833 = vmatprep.subr.bf16.mxu0 %v2659
    %3834 = vmatpush1.bf16.msra.mxu0 %v2658
    %3835 = vmatprep.subr.bf16.mxu0 %v2663
    %3836 = vmatpush1.bf16.msra.mxu0 %v2662
    %3837 = vmatprep.subr.bf16.mxu0 %v2667
    %3838 = vmatpush1.bf16.msra.mxu0 %v2666
    %3839 = vmatprep.subr.bf16.mxu0 %v2671
    %3840 = vmatpush1.bf16.msra.mxu0 %v2670
    %3841 = vmatprep.subr.bf16.mxu0 %v2675
    %3842 = vmatpush1.bf16.msra.mxu0 %v2674
    %3843 = vmatprep.subr.bf16.mxu0 %v2679
    %3844 = vmatpush1.bf16.msra.mxu0 %v2678
    %3845 = vmatprep.subr.bf16.mxu0 %v2683
    %3846 = vmatpush1.bf16.msra.mxu0 %v2682
    %3847 = vmatprep.subr.bf16.mxu0 %v2687
    %3848 = vmatpush1.bf16.msra.mxu0 %v2686
    %3849 = vmatprep.subr.bf16.mxu0 %v2691
    %3850 = vmatpush1.bf16.msra.mxu0 %v2690
    %3851 = vmatprep.mubr.bf16.mxu0 %v627
    %3852 = vmatmul.mubr.bf16.gmra.mrb[0].mxu0 %v626
    %v3853 = vpop.f32.mrb[0].mxu0
    %v3854 = vadd.f32 %v3813, %v3853
    %v3855 = vpop.f32.mrb[0].mxu0
    %v3856 = vadd.f32 %v3815, %v3855
    %v3857 = vpop.f32.mrb[0].mxu0
    %v3858 = vpop.f32.mrb[0].mxu0
    %3859 = vdwg.mxu0
    %v3860 = vpack.c.bf16 %v3526, %v3526
    %v3861 = vpack.c.bf16 %v3528, %v3528
    %v3862 = vpack.c.bf16 %v3854, %v3854
    %v3863 = vpack.c.bf16 %v3856, %v3856
    %v3864 = vld [vmem:[%s3] sm:$0xff]
    %v3865 = vld [vmem:[%s3 + $0x8] sm:$0xff]
    %v3866 = vld [vmem:[%s3 + $0x10] sm:$0xff]
    %v3867 = vld [vmem:[%s3 + $0x18] sm:$0xff]
    %v3868 = vld [vmem:[%s3 + $0x20] sm:$0xff]
    %v3869 = vld [vmem:[%s3 + $0x28] sm:$0xff]
    %v3870 = vld [vmem:[%s3 + $0x30] sm:$0xff]
    %v3871 = vld [vmem:[%s3 + $0x38] sm:$0xff]
    %v3872 = vld [vmem:[%s3 + $0x40] sm:$0xff]
    %v3873 = vld [vmem:[%s3 + $0x48] sm:$0xff]
    %v3874 = vld [vmem:[%s3 + $0x50] sm:$0xff]
    %v3875 = vld [vmem:[%s3 + $0x58] sm:$0xff]
    %v3876 = vld [vmem:[%s3 + $0x60] sm:$0xff]
    %v3877 = vld [vmem:[%s3 + $0x68] sm:$0xff]
    %v3878 = vld [vmem:[%s3 + $0x70] sm:$0xff]
    %v3879 = vld [vmem:[%s3 + $0x78] sm:$0xff]
    %v3880 = vld [vmem:[%s3 + $0x80] sm:$0xff]
    %v3881 = vld [vmem:[%s3 + $0x88] sm:$0xff]
    %v3882 = vld [vmem:[%s3 + $0x90] sm:$0xff]
    %v3883 = vld [vmem:[%s3 + $0x98] sm:$0xff]
    %v3884 = vld [vmem:[%s3 + $0xa0] sm:$0xff]
    %v3885 = vld [vmem:[%s3 + $0xa8] sm:$0xff]
    %v3886 = vld [vmem:[%s3 + $0xb0] sm:$0xff]
    %v3887 = vld [vmem:[%s3 + $0xb8] sm:$0xff]
    %v3888 = vld [vmem:[%s3 + $0xc0] sm:$0xff]
    %v3889 = vld [vmem:[%s3 + $0xc8] sm:$0xff]
    %v3890 = vld [vmem:[%s3 + $0xd0] sm:$0xff]
    %v3891 = vld [vmem:[%s3 + $0xd8] sm:$0xff]
    %v3892 = vld [vmem:[%s3 + $0xe0] sm:$0xff]
    %v3893 = vld [vmem:[%s3 + $0xe8] sm:$0xff]
    %v3894 = vld [vmem:[%s3 + $0xf0] sm:$0xff]
    %v3895 = vld [vmem:[%s3 + $0xf8] sm:$0xff]
    %v3896 = vld [vmem:[%s3 + $0x100] sm:$0xff]
    %v3897 = vld [vmem:[%s3 + $0x108] sm:$0xff]
    %v3898 = vld [vmem:[%s3 + $0x110] sm:$0xff]
    %v3899 = vld [vmem:[%s3 + $0x118] sm:$0xff]
    %v3900 = vld [vmem:[%s3 + $0x120] sm:$0xff]
    %v3901 = vld [vmem:[%s3 + $0x128] sm:$0xff]
    %v3902 = vld [vmem:[%s3 + $0x130] sm:$0xff]
    %v3903 = vld [vmem:[%s3 + $0x138] sm:$0xff]
    %v3904 = vld [vmem:[%s3 + $0x140] sm:$0xff]
    %v3905 = vld [vmem:[%s3 + $0x148] sm:$0xff]
    %v3906 = vld [vmem:[%s3 + $0x150] sm:$0xff]
    %v3907 = vld [vmem:[%s3 + $0x158] sm:$0xff]
    %v3908 = vld [vmem:[%s3 + $0x160] sm:$0xff]
    %v3909 = vld [vmem:[%s3 + $0x168] sm:$0xff]
    %v3910 = vld [vmem:[%s3 + $0x170] sm:$0xff]
    %v3911 = vld [vmem:[%s3 + $0x178] sm:$0xff]
    %v3912 = vld [vmem:[%s3 + $0x180] sm:$0xff]
    %v3913 = vld [vmem:[%s3 + $0x188] sm:$0xff]
    %v3914 = vld [vmem:[%s3 + $0x190] sm:$0xff]
    %v3915 = vld [vmem:[%s3 + $0x198] sm:$0xff]
    %v3916 = vld [vmem:[%s3 + $0x1a0] sm:$0xff]
    %v3917 = vld [vmem:[%s3 + $0x1a8] sm:$0xff]
    %v3918 = vld [vmem:[%s3 + $0x1b0] sm:$0xff]
    %v3919 = vld [vmem:[%s3 + $0x1b8] sm:$0xff]
    %v3920 = vld [vmem:[%s3 + $0x1c0] sm:$0xff]
    %v3921 = vld [vmem:[%s3 + $0x1c8] sm:$0xff]
    %v3922 = vld [vmem:[%s3 + $0x1d0] sm:$0xff]
    %v3923 = vld [vmem:[%s3 + $0x1d8] sm:$0xff]
    %v3924 = vld [vmem:[%s3 + $0x1e0] sm:$0xff]
    %v3925 = vld [vmem:[%s3 + $0x1e8] sm:$0xff]
    %v3926 = vld [vmem:[%s3 + $0x1f0] sm:$0xff]
    %v3927 = vld [vmem:[%s3 + $0x1f8] sm:$0xff]
    %v3928 = vld [vmem:[%s4] sm:$0x3]
    %v3930 = vlaneseq
    %v3931 = vshrl.u32 %v3930, 7
    %v3932 = vsub.s32 0, %v3931
    %v3933 = vrot.slane %v3928, %v3932
    %v3934 = vlaneseq
    %v3935 = vshrl.u32 %v3934, 7
    %v3936 = vsub.s32 1, %v3935
    %v3937 = vrot.slane %v3928, %v3936
    %v4004 = vunpack.c.l.b16 %v3864
    %v4005 = vunpack.c.h.b16 %v3864
    %v4006 = vunpack.c.l.b16 %v3865
    %v4007 = vunpack.c.h.b16 %v3865
    %v4008 = vunpack.c.l.b16 %v3866
    %v4009 = vunpack.c.h.b16 %v3866
    %v4010 = vunpack.c.l.b16 %v3867
    %v4011 = vunpack.c.h.b16 %v3867
    %v4012 = vunpack.c.l.b16 %v3868
    %v4013 = vunpack.c.h.b16 %v3868
    %v4014 = vunpack.c.l.b16 %v3869
    %v4015 = vunpack.c.h.b16 %v3869
    %v4016 = vunpack.c.l.b16 %v3870
    %v4017 = vunpack.c.h.b16 %v3870
    %v4018 = vunpack.c.l.b16 %v3871
    %v4019 = vunpack.c.h.b16 %v3871
    %v4020 = vunpack.c.l.b16 %v3872
    %v4021 = vunpack.c.h.b16 %v3872
    %v4022 = vunpack.c.l.b16 %v3873
    %v4023 = vunpack.c.h.b16 %v3873
    %v4024 = vunpack.c.l.b16 %v3874
    %v4025 = vunpack.c.h.b16 %v3874
    %v4026 = vunpack.c.l.b16 %v3875
    %v4027 = vunpack.c.h.b16 %v3875
    %v4028 = vunpack.c.l.b16 %v3876
    %v4029 = vunpack.c.h.b16 %v3876
    %v4030 = vunpack.c.l.b16 %v3877
    %v4031 = vunpack.c.h.b16 %v3877
    %v4032 = vunpack.c.l.b16 %v3878
    %v4033 = vunpack.c.h.b16 %v3878
    %v4034 = vunpack.c.l.b16 %v3879
    %v4035 = vunpack.c.h.b16 %v3879
    %v4036 = vunpack.c.l.b16 %v3880
    %v4037 = vunpack.c.h.b16 %v3880
    %v4038 = vunpack.c.l.b16 %v3881
    %v4039 = vunpack.c.h.b16 %v3881
    %v4040 = vunpack.c.l.b16 %v3882
    %v4041 = vunpack.c.h.b16 %v3882
    %v4042 = vunpack.c.l.b16 %v3883
    %v4043 = vunpack.c.h.b16 %v3883
    %v4044 = vunpack.c.l.b16 %v3884
    %v4045 = vunpack.c.h.b16 %v3884
    %v4046 = vunpack.c.l.b16 %v3885
    %v4047 = vunpack.c.h.b16 %v3885
    %v4048 = vunpack.c.l.b16 %v3886
    %v4049 = vunpack.c.h.b16 %v3886
    %v4050 = vunpack.c.l.b16 %v3887
    %v4051 = vunpack.c.h.b16 %v3887
    %v4052 = vunpack.c.l.b16 %v3888
    %v4053 = vunpack.c.h.b16 %v3888
    %v4054 = vunpack.c.l.b16 %v3889
    %v4055 = vunpack.c.h.b16 %v3889
    %v4056 = vunpack.c.l.b16 %v3890
    %v4057 = vunpack.c.h.b16 %v3890
    %v4058 = vunpack.c.l.b16 %v3891
    %v4059 = vunpack.c.h.b16 %v3891
    %v4060 = vunpack.c.l.b16 %v3892
    %v4061 = vunpack.c.h.b16 %v3892
    %v4062 = vunpack.c.l.b16 %v3893
    %v4063 = vunpack.c.h.b16 %v3893
    %v4064 = vunpack.c.l.b16 %v3894
    %v4065 = vunpack.c.h.b16 %v3894
    %v4066 = vunpack.c.l.b16 %v3895
    %v4067 = vunpack.c.h.b16 %v3895
    %v4068 = vunpack.c.l.b16 %v3896
    %v4069 = vunpack.c.h.b16 %v3896
    %v4070 = vunpack.c.l.b16 %v3897
    %v4071 = vunpack.c.h.b16 %v3897
    %v4072 = vunpack.c.l.b16 %v3898
    %v4073 = vunpack.c.h.b16 %v3898
    %v4074 = vunpack.c.l.b16 %v3899
    %v4075 = vunpack.c.h.b16 %v3899
    %v4076 = vunpack.c.l.b16 %v3900
    %v4077 = vunpack.c.h.b16 %v3900
    %v4078 = vunpack.c.l.b16 %v3901
    %v4079 = vunpack.c.h.b16 %v3901
    %v4080 = vunpack.c.l.b16 %v3902
    %v4081 = vunpack.c.h.b16 %v3902
    %v4082 = vunpack.c.l.b16 %v3903
    %v4083 = vunpack.c.h.b16 %v3903
    %v4084 = vunpack.c.l.b16 %v3904
    %v4085 = vunpack.c.h.b16 %v3904
    %v4086 = vunpack.c.l.b16 %v3905
    %v4087 = vunpack.c.h.b16 %v3905
    %v4088 = vunpack.c.l.b16 %v3906
    %v4089 = vunpack.c.h.b16 %v3906
    %v4090 = vunpack.c.l.b16 %v3907
    %v4091 = vunpack.c.h.b16 %v3907
    %v4092 = vunpack.c.l.b16 %v3908
    %v4093 = vunpack.c.h.b16 %v3908
    %v4094 = vunpack.c.l.b16 %v3909
    %v4095 = vunpack.c.h.b16 %v3909
    %v4096 = vunpack.c.l.b16 %v3910
    %v4097 = vunpack.c.h.b16 %v3910
    %v4098 = vunpack.c.l.b16 %v3911
    %v4099 = vunpack.c.h.b16 %v3911
    %v4100 = vunpack.c.l.b16 %v3912
    %v4101 = vunpack.c.h.b16 %v3912
    %v4102 = vunpack.c.l.b16 %v3913
    %v4103 = vunpack.c.h.b16 %v3913
    %v4104 = vunpack.c.l.b16 %v3914
    %v4105 = vunpack.c.h.b16 %v3914
    %v4106 = vunpack.c.l.b16 %v3915
    %v4107 = vunpack.c.h.b16 %v3915
    %v4108 = vunpack.c.l.b16 %v3916
    %v4109 = vunpack.c.h.b16 %v3916
    %v4110 = vunpack.c.l.b16 %v3917
    %v4111 = vunpack.c.h.b16 %v3917
    %v4112 = vunpack.c.l.b16 %v3918
    %v4113 = vunpack.c.h.b16 %v3918
    %v4114 = vunpack.c.l.b16 %v3919
    %v4115 = vunpack.c.h.b16 %v3919
    %v4116 = vunpack.c.l.b16 %v3920
    %v4117 = vunpack.c.h.b16 %v3920
    %v4118 = vunpack.c.l.b16 %v3921
    %v4119 = vunpack.c.h.b16 %v3921
    %v4120 = vunpack.c.l.b16 %v3922
    %v4121 = vunpack.c.h.b16 %v3922
    %v4122 = vunpack.c.l.b16 %v3923
    %v4123 = vunpack.c.h.b16 %v3923
    %v4124 = vunpack.c.l.b16 %v3924
    %v4125 = vunpack.c.h.b16 %v3924
    %v4126 = vunpack.c.l.b16 %v3925
    %v4127 = vunpack.c.h.b16 %v3925
    %v4128 = vunpack.c.l.b16 %v3926
    %v4129 = vunpack.c.h.b16 %v3926
    %v4130 = vunpack.c.l.b16 %v3927
    %v4131 = vunpack.c.h.b16 %v3927
    %v4132 = vpack.c.b16 %v4006, %v4004
    %v4133 = vpack.c.b16 %v4007, %v4005
    %v4134 = vpack.c.b16 %v4010, %v4008
    %v4135 = vpack.c.b16 %v4011, %v4009
    %v4136 = vpack.c.b16 %v4014, %v4012
    %v4137 = vpack.c.b16 %v4015, %v4013
    %v4138 = vpack.c.b16 %v4018, %v4016
    %v4139 = vpack.c.b16 %v4019, %v4017
    %v4140 = vpack.c.b16 %v4022, %v4020
    %v4141 = vpack.c.b16 %v4023, %v4021
    %v4142 = vpack.c.b16 %v4026, %v4024
    %v4143 = vpack.c.b16 %v4027, %v4025
    %v4144 = vpack.c.b16 %v4030, %v4028
    %v4145 = vpack.c.b16 %v4031, %v4029
    %v4146 = vpack.c.b16 %v4034, %v4032
    %v4147 = vpack.c.b16 %v4035, %v4033
    %v4148 = vpack.c.b16 %v4038, %v4036
    %v4149 = vpack.c.b16 %v4039, %v4037
    %v4150 = vpack.c.b16 %v4042, %v4040
    %v4151 = vpack.c.b16 %v4043, %v4041
    %v4152 = vpack.c.b16 %v4046, %v4044
    %v4153 = vpack.c.b16 %v4047, %v4045
    %v4154 = vpack.c.b16 %v4050, %v4048
    %v4155 = vpack.c.b16 %v4051, %v4049
    %v4156 = vpack.c.b16 %v4054, %v4052
    %v4157 = vpack.c.b16 %v4055, %v4053
    %v4158 = vpack.c.b16 %v4058, %v4056
    %v4159 = vpack.c.b16 %v4059, %v4057
    %v4160 = vpack.c.b16 %v4062, %v4060
    %v4161 = vpack.c.b16 %v4063, %v4061
    %v4162 = vpack.c.b16 %v4066, %v4064
    %v4163 = vpack.c.b16 %v4067, %v4065
    %v4164 = vpack.c.b16 %v4070, %v4068
    %v4165 = vpack.c.b16 %v4071, %v4069
    %v4166 = vpack.c.b16 %v4074, %v4072
    %v4167 = vpack.c.b16 %v4075, %v4073
    %v4168 = vpack.c.b16 %v4078, %v4076
    %v4169 = vpack.c.b16 %v4079, %v4077
    %v4170 = vpack.c.b16 %v4082, %v4080
    %v4171 = vpack.c.b16 %v4083, %v4081
    %v4172 = vpack.c.b16 %v4086, %v4084
    %v4173 = vpack.c.b16 %v4087, %v4085
    %v4174 = vpack.c.b16 %v4090, %v4088
    %v4175 = vpack.c.b16 %v4091, %v4089
    %v4176 = vpack.c.b16 %v4094, %v4092
    %v4177 = vpack.c.b16 %v4095, %v4093
    %v4178 = vpack.c.b16 %v4098, %v4096
    %v4179 = vpack.c.b16 %v4099, %v4097
    %v4180 = vpack.c.b16 %v4102, %v4100
    %v4181 = vpack.c.b16 %v4103, %v4101
    %v4182 = vpack.c.b16 %v4106, %v4104
    %v4183 = vpack.c.b16 %v4107, %v4105
    %v4184 = vpack.c.b16 %v4110, %v4108
    %v4185 = vpack.c.b16 %v4111, %v4109
    %v4186 = vpack.c.b16 %v4114, %v4112
    %v4187 = vpack.c.b16 %v4115, %v4113
    %v4188 = vpack.c.b16 %v4118, %v4116
    %v4189 = vpack.c.b16 %v4119, %v4117
    %v4190 = vpack.c.b16 %v4122, %v4120
    %v4191 = vpack.c.b16 %v4123, %v4121
    %v4192 = vpack.c.b16 %v4126, %v4124
    %v4193 = vpack.c.b16 %v4127, %v4125
    %v4194 = vpack.c.b16 %v4130, %v4128
    %v4195 = vpack.c.b16 %v4131, %v4129
    %4260 = vmatprep.subr.bf16.mxu0 %v4133
    %4261 = vmatpush1.bf16.msra.mxu0 %v4132
    %4262 = vmatprep.subr.bf16.mxu0 %v4135
    %4263 = vmatpush1.bf16.msra.mxu0 %v4134
    %4264 = vmatprep.subr.bf16.mxu0 %v4137
    %4265 = vmatpush1.bf16.msra.mxu0 %v4136
    %4266 = vmatprep.subr.bf16.mxu0 %v4139
    %4267 = vmatpush1.bf16.msra.mxu0 %v4138
    %4268 = vmatprep.subr.bf16.mxu0 %v4141
    %4269 = vmatpush1.bf16.msra.mxu0 %v4140
    %4270 = vmatprep.subr.bf16.mxu0 %v4143
    %4271 = vmatpush1.bf16.msra.mxu0 %v4142
    %4272 = vmatprep.subr.bf16.mxu0 %v4145
    %4273 = vmatpush1.bf16.msra.mxu0 %v4144
    %4274 = vmatprep.subr.bf16.mxu0 %v4147
    %4275 = vmatpush1.bf16.msra.mxu0 %v4146
    %4276 = vmatprep.subr.bf16.mxu0 %v4149
    %4277 = vmatpush1.bf16.msra.mxu0 %v4148
    %4278 = vmatprep.subr.bf16.mxu0 %v4151
    %4279 = vmatpush1.bf16.msra.mxu0 %v4150
    %4280 = vmatprep.subr.bf16.mxu0 %v4153
    %4281 = vmatpush1.bf16.msra.mxu0 %v4152
    %4282 = vmatprep.subr.bf16.mxu0 %v4155
    %4283 = vmatpush1.bf16.msra.mxu0 %v4154
    %4284 = vmatprep.subr.bf16.mxu0 %v4157
    %4285 = vmatpush1.bf16.msra.mxu0 %v4156
    %4286 = vmatprep.subr.bf16.mxu0 %v4159
    %4287 = vmatpush1.bf16.msra.mxu0 %v4158
    %4288 = vmatprep.subr.bf16.mxu0 %v4161
    %4289 = vmatpush1.bf16.msra.mxu0 %v4160
    %4290 = vmatprep.subr.bf16.mxu0 %v4163
    %4291 = vmatpush1.bf16.msra.mxu0 %v4162
    %4292 = vmatprep.mubr.bf16.mxu0 %v3861
    %4293 = vmatmul.mubr.bf16.gmra.mrb[0].mxu0 %v3860
    %v4294 = vpop.f32.mrb[0].mxu0
    %v4295 = vadd.f32 %v3933, %v4294
    %v4296 = vpop.f32.mrb[0].mxu0
    %v4297 = vadd.f32 %v3937, %v4296
    %v4298 = vpop.f32.mrb[0].mxu0
    %v4299 = vpop.f32.mrb[0].mxu0
    %4300 = vdwg.mxu0
    %4301 = vmatprep.subr.bf16.mxu0 %v4165
    %4302 = vmatpush1.bf16.msra.mxu0 %v4164
    %4303 = vmatprep.subr.bf16.mxu0 %v4167
    %4304 = vmatpush1.bf16.msra.mxu0 %v4166
    %4305 = vmatprep.subr.bf16.mxu0 %v4169
    %4306 = vmatpush1.bf16.msra.mxu0 %v4168
    %4307 = vmatprep.subr.bf16.mxu0 %v4171
    %4308 = vmatpush1.bf16.msra.mxu0 %v4170
    %4309 = vmatprep.subr.bf16.mxu0 %v4173
    %4310 = vmatpush1.bf16.msra.mxu0 %v4172
    %4311 = vmatprep.subr.bf16.mxu0 %v4175
    %4312 = vmatpush1.bf16.msra.mxu0 %v4174
    %4313 = vmatprep.subr.bf16.mxu0 %v4177
    %4314 = vmatpush1.bf16.msra.mxu0 %v4176
    %4315 = vmatprep.subr.bf16.mxu0 %v4179
    %4316 = vmatpush1.bf16.msra.mxu0 %v4178
    %4317 = vmatprep.subr.bf16.mxu0 %v4181
    %4318 = vmatpush1.bf16.msra.mxu0 %v4180
    %4319 = vmatprep.subr.bf16.mxu0 %v4183
    %4320 = vmatpush1.bf16.msra.mxu0 %v4182
    %4321 = vmatprep.subr.bf16.mxu0 %v4185
    %4322 = vmatpush1.bf16.msra.mxu0 %v4184
    %4323 = vmatprep.subr.bf16.mxu0 %v4187
    %4324 = vmatpush1.bf16.msra.mxu0 %v4186
    %4325 = vmatprep.subr.bf16.mxu0 %v4189
    %4326 = vmatpush1.bf16.msra.mxu0 %v4188
    %4327 = vmatprep.subr.bf16.mxu0 %v4191
    %4328 = vmatpush1.bf16.msra.mxu0 %v4190
    %4329 = vmatprep.subr.bf16.mxu0 %v4193
    %4330 = vmatpush1.bf16.msra.mxu0 %v4192
    %4331 = vmatprep.subr.bf16.mxu0 %v4195
    %4332 = vmatpush1.bf16.msra.mxu0 %v4194
    %4333 = vmatprep.mubr.bf16.mxu0 %v3863
    %4334 = vmatmul.mubr.bf16.gmra.mrb[0].mxu0 %v3862
    %v4335 = vpop.f32.mrb[0].mxu0
    %v4336 = vadd.f32 %v4295, %v4335
    %v4337 = vpop.f32.mrb[0].mxu0
    %v4338 = vadd.f32 %v4297, %v4337
    %v4339 = vpop.f32.mrb[0].mxu0
    %v4340 = vpop.f32.mrb[0].mxu0
    %4341 = vdwg.mxu0
    %4342 = vst [vmem:[%s5] sm:$0xff] %v4336
    %4343 = vst [vmem:[%s5 + $0x8] sm:$0xff] %v4338
    // Predicated region
    $region30: #{forward_splits.3} parent=1 // pred_check
      _
    $region31: #{forward_splits.3} parent=1 // pred_check_branch
      %4345 = sbr.rel (0) target = $region33
    $region32: #{forward_splits.3} parent=1 // pred_region
      _
    $region33: #{forward_splits.3} parent=1 // pred_fallthru
      _
    // Predicated region
    $region34: #{forward_splits.3} parent=1 // pred_check
      _
    $region35: #{forward_splits.3} parent=1 // pred_check_branch
      %4347 = sbr.rel (0) target = $region37
    $region36: #{forward_splits.3} parent=1 // pred_region
      _
    $region37: #{forward_splits.3} parent=1 // pred_fallthru
      _
    %4348 = vsyncpa [#allocation3], 1
    %4349 = vsyncpa [#allocation5], 1

// kernel: forward_splits.2
$region0: #{forward_splits.2}
  #allocation0 [shape = 'u32[]', space=smem, size = 0x4, offset = 0x4, fixed_abs, tag = 'smem constant byte address 0x4 - core index']
  #allocation1 [shape = 'u32[144,128]{1,0:T(1,128)}', space=vmem, size = 0x12000, scoped, tag = 'internal scratch']
  %s0 = inlined_call_operand.vmem [shape: f32[576,66], index: 0, kind: input, shape index: {}]
  %s1 = inlined_call_operand.vmem [shape: f32[66,18], index: 1, kind: input, shape index: {}]
  %s2 = inlined_call_operand.hbm [shape: f32[3,2048], index: 2, kind: input, shape index: {}]
  %s3 = inlined_call_operand.vmem [shape: f32[1,2048], index: 3, kind: input, shape index: {}]
  %s4 = inlined_call_operand.vmem [shape: bf16[8,2048], index: 4, kind: output, shape index: {}]
  %s5 = sld [smem:[#allocation0]]
  $region30: #{forward_splits.2} parent=0
    _
  %s7 = ssub.s32 1, %s5
  %s8 = scalar_select 0, %s7, %s5
  $region1: #{forward_splits.2} parent=0
    #allocation2 [shape = 'u8[32768]{0}', space=vmem, size = 0x8000, scoped, tag = 'input window, operand 2, single buffered']
    #allocation3 [shape = 's32[1]{0}', space=sflag, size = 0x4, scoped, tag = 'scoped memory for forward_splits.2']
    %9 = vsyncpa [#allocation3], 0
    // Predicated region
    $region2: #{forward_splits.2} parent=1 // pred_check
      _
    $region3: #{forward_splits.2} parent=1 // pred_check_branch
      %11 = sbr.rel (0) target = $region5
    $region4: #{forward_splits.2} parent=1 // pred_region
      _
    $region5: #{forward_splits.2} parent=1 // pred_fallthru
      _
    // Predicated region
    $region6: #{forward_splits.2} parent=1 // pred_check
      _
    $region7: #{forward_splits.2} parent=1 // pred_check_branch
      %13 = sbr.rel (0) target = $region9
    $region8: #{forward_splits.2} parent=1 // pred_region
      _
    $region9: #{forward_splits.2} parent=1 // pred_fallthru
      _
    // Predicated region
    $region10: #{forward_splits.2} parent=1 // pred_check
      _
    $region11: #{forward_splits.2} parent=1 // pred_check_branch
      %15 = sbr.rel (0) target = $region13
    $region12: #{forward_splits.2} parent=1 // pred_region
      %s17 = ssub.s32 1024, 1024
      %18 = vsyncadd [#allocation3], %s17
      %s20 = sshll.u32 [#allocation2], 4
      %s21 = int_to_ptr.vmem [resolvable:$true] %s20
      %23 = dma.hbm_to_vmem [thread:$0]  %s2, 1024, %s21, [#allocation3]
    $region13: #{forward_splits.2} parent=1 // pred_fallthru
      _
    // Predicated region
    $region14: #{forward_splits.2} parent=1 // pred_check
      _
    $region15: #{forward_splits.2} parent=1 // pred_check_branch
      %25 = sbr.rel (0) target = $region17
    $region16: #{forward_splits.2} parent=1 // pred_region
      _
    $region17: #{forward_splits.2} parent=1 // pred_fallthru
      _
    // Predicated region
    $region18: #{forward_splits.2} parent=1 // pred_check
      _
    $region19: #{forward_splits.2} parent=1 // pred_check_branch
      %27 = sbr.rel (0) target = $region21
    $region20: #{forward_splits.2} parent=1 // pred_region
      %28 = dma.done [#allocation3], 1024
    $region21: #{forward_splits.2} parent=1 // pred_fallthru
      _
    %v29 = vld [vmem:[%s0] sm:$0xff]
    %v30 = vld [vmem:[%s0 + $0x8] sm:$0xff]
    %v31 = vld [vmem:[%s0 + $0x10] sm:$0xff]
    %v32 = vld [vmem:[%s0 + $0x18] sm:$0xff]
    %v33 = vld [vmem:[%s0 + $0x20] sm:$0xff]
    %v34 = vld [vmem:[%s0 + $0x28] sm:$0xff]
    %v35 = vld [vmem:[%s0 + $0x30] sm:$0xff]
    %v36 = vld [vmem:[%s0 + $0x38] sm:$0xff]
    %v37 = vld [vmem:[%s0 + $0x40] sm:$0xff]
    %v38 = vld [vmem:[%s0 + $0x48] sm:$0xff]
    %v39 = vld [vmem:[%s0 + $0x50] sm:$0xff]
    %v40 = vld [vmem:[%s0 + $0x58] sm:$0xff]
    %v41 = vld [vmem:[%s0 + $0x60] sm:$0xff]
    %v42 = vld [vmem:[%s0 + $0x68] sm:$0xff]
    %v43 = vld [vmem:[%s0 + $0x70] sm:$0xff]
    %v44 = vld [vmem:[%s0 + $0x78] sm:$0xff]
    %v45 = vld [vmem:[%s0 + $0x80] sm:$0xff]
    %v46 = vld [vmem:[%s0 + $0x88] sm:$0xff]
    %v47 = vld [vmem:[%s0 + $0x90] sm:$0xff]
    %v48 = vld [vmem:[%s0 + $0x98] sm:$0xff]
    %v49 = vld [vmem:[%s0 + $0xa0] sm:$0xff]
    %v50 = vld [vmem:[%s0 + $0xa8] sm:$0xff]
    %v51 = vld [vmem:[%s0 + $0xb0] sm:$0xff]
    %v52 = vld [vmem:[%s0 + $0xb8] sm:$0xff]
    %v53 = vld [vmem:[%s0 + $0xc0] sm:$0xff]
    %v54 = vld [vmem:[%s0 + $0xc8] sm:$0xff]
    %v55 = vld [vmem:[%s0 + $0xd0] sm:$0xff]
    %v56 = vld [vmem:[%s0 + $0xd8] sm:$0xff]
    %v57 = vld [vmem:[%s0 + $0xe0] sm:$0xff]
    %v58 = vld [vmem:[%s0 + $0xe8] sm:$0xff]
    %v59 = vld [vmem:[%s0 + $0xf0] sm:$0xff]
    %v60 = vld [vmem:[%s0 + $0xf8] sm:$0xff]
    %v61 = vld [vmem:[%s0 + $0x100] sm:$0xff]
    %v62 = vld [vmem:[%s0 + $0x108] sm:$0xff]
    %v63 = vld [vmem:[%s0 + $0x110] sm:$0xff]
    %v64 = vld [vmem:[%s0 + $0x118] sm:$0xff]
    %v65 = vld [vmem:[%s0 + $0x120] sm:$0xff]
    %v66 = vld [vmem:[%s0 + $0x128] sm:$0xff]
    %v67 = vld [vmem:[%s0 + $0x130] sm:$0xff]
    %v68 = vld [vmem:[%s0 + $0x138] sm:$0xff]
    %v69 = vld [vmem:[%s0 + $0x140] sm:$0xff]
    %v70 = vld [vmem:[%s0 + $0x148] sm:$0xff]
    %v71 = vld [vmem:[%s0 + $0x150] sm:$0xff]
    %v72 = vld [vmem:[%s0 + $0x158] sm:$0xff]
    %v73 = vld [vmem:[%s0 + $0x160] sm:$0xff]
    %v74 = vld [vmem:[%s0 + $0x168] sm:$0xff]
    %v75 = vld [vmem:[%s0 + $0x170] sm:$0xff]
    %v76 = vld [vmem:[%s0 + $0x178] sm:$0xff]
    %v77 = vld [vmem:[%s0 + $0x180] sm:$0xff]
    %v78 = vld [vmem:[%s0 + $0x188] sm:$0xff]
    %v79 = vld [vmem:[%s0 + $0x190] sm:$0xff]
    %v80 = vld [vmem:[%s0 + $0x198] sm:$0xff]
    %v81 = vld [vmem:[%s0 + $0x1a0] sm:$0xff]
    %v82 = vld [vmem:[%s0 + $0x1a8] sm:$0xff]
    %v83 = vld [vmem:[%s0 + $0x1b0] sm:$0xff]
    %v84 = vld [vmem:[%s0 + $0x1b8] sm:$0xff]
    %v85 = vld [vmem:[%s0 + $0x1c0] sm:$0xff]
    %v86 = vld [vmem:[%s0 + $0x1c8] sm:$0xff]
    %v87 = vld [vmem:[%s0 + $0x1d0] sm:$0xff]
    %v88 = vld [vmem:[%s0 + $0x1d8] sm:$0xff]
    %v89 = vld [vmem:[%s0 + $0x1e0] sm:$0xff]
    %v90 = vld [vmem:[%s0 + $0x1e8] sm:$0xff]
    %v91 = vld [vmem:[%s0 + $0x1f0] sm:$0xff]
    %v92 = vld [vmem:[%s0 + $0x1f8] sm:$0xff]
    %v93 = vld [vmem:[%s0 + $0x200] sm:$0xff]
    %v94 = vld [vmem:[%s0 + $0x208] sm:$0xff]
    %v95 = vld [vmem:[%s0 + $0x210] sm:$0xff]
    %v96 = vld [vmem:[%s0 + $0x218] sm:$0xff]
    %v97 = vld [vmem:[%s0 + $0x220] sm:$0xff]
    %v98 = vld [vmem:[%s0 + $0x228] sm:$0xff]
    %v99 = vld [vmem:[%s0 + $0x230] sm:$0xff]
    %v100 = vld [vmem:[%s0 + $0x238] sm:$0xff]
    %v101 = vld [vmem:[%s1] sm:$0xff]
    %v102 = vld [vmem:[%s1 + $0x8] sm:$0xff]
    %v103 = vld [vmem:[%s1 + $0x10] sm:$0xff]
    %v104 = vld [vmem:[%s1 + $0x18] sm:$0xff]
    %v105 = vld [vmem:[%s1 + $0x20] sm:$0xff]
    %v106 = vld [vmem:[%s1 + $0x28] sm:$0xff]
    %v107 = vld [vmem:[%s1 + $0x30] sm:$0xff]
    %v108 = vld [vmem:[%s1 + $0x38] sm:$0xff]
    %v109 = vld [vmem:[%s1 + $0x40] sm:$0x3]
    %vm110 = vcmask 539648
    %v112 = vsel %vm110, %v29, 0
    %v115 = vsel %vm110, %v30, 0
    %v118 = vsel %vm110, %v31, 0
    %v121 = vsel %vm110, %v32, 0
    %v124 = vsel %vm110, %v33, 0
    %v127 = vsel %vm110, %v34, 0
    %v130 = vsel %vm110, %v35, 0
    %v133 = vsel %vm110, %v36, 0
    %v136 = vsel %vm110, %v37, 0
    %v139 = vsel %vm110, %v38, 0
    %v142 = vsel %vm110, %v39, 0
    %v145 = vsel %vm110, %v40, 0
    %v148 = vsel %vm110, %v41, 0
    %v151 = vsel %vm110, %v42, 0
    %v154 = vsel %vm110, %v43, 0
    %v157 = vsel %vm110, %v44, 0
    %v160 = vsel %vm110, %v45, 0
    %v163 = vsel %vm110, %v46, 0
    %v166 = vsel %vm110, %v47, 0
    %v169 = vsel %vm110, %v48, 0
    %v172 = vsel %vm110, %v49, 0
    %v175 = vsel %vm110, %v50, 0
    %v178 = vsel %vm110, %v51, 0
    %v181 = vsel %vm110, %v52, 0
    %v184 = vsel %vm110, %v53, 0
    %v187 = vsel %vm110, %v54, 0
    %v190 = vsel %vm110, %v55, 0
    %v193 = vsel %vm110, %v56, 0
    %v196 = vsel %vm110, %v57, 0
    %v199 = vsel %vm110, %v58, 0
    %v202 = vsel %vm110, %v59, 0
    %v205 = vsel %vm110, %v60, 0
    %v208 = vsel %vm110, %v61, 0
    %v211 = vsel %vm110, %v62, 0
    %v214 = vsel %vm110, %v63, 0
    %v217 = vsel %vm110, %v64, 0
    %v220 = vsel %vm110, %v65, 0
    %v223 = vsel %vm110, %v66, 0
    %v226 = vsel %vm110, %v67, 0
    %v229 = vsel %vm110, %v68, 0
    %v232 = vsel %vm110, %v69, 0
    %v235 = vsel %vm110, %v70, 0
    %v238 = vsel %vm110, %v71, 0
    %v241 = vsel %vm110, %v72, 0
    %v244 = vsel %vm110, %v73, 0
    %v247 = vsel %vm110, %v74, 0
    %v250 = vsel %vm110, %v75, 0
    %v253 = vsel %vm110, %v76, 0
    %v256 = vsel %vm110, %v77, 0
    %v259 = vsel %vm110, %v78, 0
    %v262 = vsel %vm110, %v79, 0
    %v265 = vsel %vm110, %v80, 0
    %v268 = vsel %vm110, %v81, 0
    %v271 = vsel %vm110, %v82, 0
    %v274 = vsel %vm110, %v83, 0
    %v277 = vsel %vm110, %v84, 0
    %v280 = vsel %vm110, %v85, 0
    %v283 = vsel %vm110, %v86, 0
    %v286 = vsel %vm110, %v87, 0
    %v289 = vsel %vm110, %v88, 0
    %v292 = vsel %vm110, %v89, 0
    %v295 = vsel %vm110, %v90, 0
    %v298 = vsel %vm110, %v91, 0
    %v301 = vsel %vm110, %v92, 0
    %v304 = vsel %vm110, %v93, 0
    %v307 = vsel %vm110, %v94, 0
    %v310 = vsel %vm110, %v95, 0
    %v313 = vsel %vm110, %v96, 0
    %v316 = vsel %vm110, %v97, 0
    %v319 = vsel %vm110, %v98, 0
    %v322 = vsel %vm110, %v99, 0
    %v325 = vsel %vm110, %v100, 0
    %vm327 = vcmask 1041408
    %v329 = vsel %vm327, %v109, 0
    %331 = vmatprep.subr.mxu0 0.0
    %332 = vmatpush1.msra.mxu0 %v101
    %333 = vmatprep.subr.mxu0 0.0
    %334 = vmatpush1.msra.mxu0 %v102
    %335 = vmatprep.subr.mxu0 0.0
    %336 = vmatpush1.msra.mxu0 %v103
    %337 = vmatprep.subr.mxu0 0.0
    %338 = vmatpush1.msra.mxu0 %v104
    %339 = vmatprep.subr.mxu0 0.0
    %340 = vmatpush1.msra.mxu0 %v105
    %341 = vmatprep.subr.mxu0 0.0
    %342 = vmatpush1.msra.mxu0 %v106
    %343 = vmatprep.subr.mxu0 0.0
    %344 = vmatpush1.msra.mxu0 %v107
    %345 = vmatprep.subr.mxu0 0.0
    %346 = vmatpush1.msra.mxu0 %v108
    %347 = vmatprep.subr.mxu0 0.0
    %348 = vmatpush1.msra.mxu0 %v329
    %349 = vmatprep.subr.mxu0 0.0
    %350 = vmatpush1.msra.mxu0 0.0
    %351 = vmatprep.subr.mxu0 0.0
    %352 = vmatpush1.msra.mxu0 0.0
    %353 = vmatprep.subr.mxu0 0.0
    %354 = vmatpush1.msra.mxu0 0.0
    %355 = vmatprep.subr.mxu0 0.0
    %356 = vmatpush1.msra.mxu0 0.0
    %357 = vmatprep.subr.mxu0 0.0
    %358 = vmatpush1.msra.mxu0 0.0
    %359 = vmatprep.subr.mxu0 0.0
    %360 = vmatpush1.msra.mxu0 0.0
    %361 = vmatprep.subr.mxu0 0.0
    %362 = vmatpush1.msra.mxu0 0.0
    %363 = vmatprep.subr.mxu0 0.0
    %364 = vmatpush1.msra.mxu0 0.0
    %365 = vmatprep.subr.mxu0 0.0
    %366 = vmatpush1.msra.mxu0 0.0
    %367 = vmatprep.subr.mxu0 0.0
    %368 = vmatpush1.msra.mxu0 0.0
    %369 = vmatprep.subr.mxu0 0.0
    %370 = vmatpush1.msra.mxu0 0.0
    %371 = vmatprep.subr.mxu0 0.0
    %372 = vmatpush1.msra.mxu0 0.0
    %373 = vmatprep.subr.mxu0 0.0
    %374 = vmatpush1.msra.mxu0 0.0
    %375 = vmatprep.subr.mxu0 0.0
    %376 = vmatpush1.msra.mxu0 0.0
    %377 = vmatprep.subr.mxu0 0.0
    %378 = vmatpush1.msra.mxu0 0.0
    %379 = vmatprep.subr.mxu0 0.0
    %380 = vmatpush1.msra.mxu0 0.0
    %381 = vmatprep.subr.mxu0 0.0
    %382 = vmatpush1.msra.mxu0 0.0
    %383 = vmatprep.subr.mxu0 0.0
    %384 = vmatpush1.msra.mxu0 0.0
    %385 = vmatprep.subr.mxu0 0.0
    %386 = vmatpush1.msra.mxu0 0.0
    %387 = vmatprep.subr.mxu0 0.0
    %388 = vmatpush1.msra.mxu0 0.0
    %389 = vmatprep.subr.mxu0 0.0
    %390 = vmatpush1.msra.mxu0 0.0
    %391 = vmatprep.subr.mxu0 0.0
    %392 = vmatpush1.msra.mxu0 0.0
    %393 = vmatprep.subr.mxu0 0.0
    %394 = vmatpush1.msra.mxu0 0.0
    %395 = vmatprep.mubr.f32.mxu0 0.0
    %396 = vmatmul.mubr.f32.gmra.mrb[0].mxu0 %v112
    %v397 = vpop.f32.mrb[0].mxu0
    %v398 = vadd.f32 0.0, %v397
    %v399 = vpop.f32.mrb[0].mxu0
    %400 = vmatprep.mubr.f32.mxu0 0.0
    %401 = vmatmul.mubr.f32.gmra.mrb[0].mxu0 %v115
    %v402 = vpop.f32.mrb[0].mxu0
    %v403 = vadd.f32 0.0, %v402
    %v404 = vpop.f32.mrb[0].mxu0
    %405 = vmatprep.mubr.f32.mxu0 0.0
    %406 = vmatmul.mubr.f32.gmra.mrb[0].mxu0 %v118
    %v407 = vpop.f32.mrb[0].mxu0
    %v408 = vadd.f32 0.0, %v407
    %v409 = vpop.f32.mrb[0].mxu0
    %410 = vmatprep.mubr.f32.mxu0 0.0
    %411 = vmatmul.mubr.f32.gmra.mrb[0].mxu0 %v121
    %v412 = vpop.f32.mrb[0].mxu0
    %v413 = vadd.f32 0.0, %v412
    %v414 = vpop.f32.mrb[0].mxu0
    %415 = vmatprep.mubr.f32.mxu0 0.0
    %416 = vmatmul.mubr.f32.gmra.mrb[0].mxu0 %v124
    %v417 = vpop.f32.mrb[0].mxu0
    %v418 = vadd.f32 0.0, %v417
    %v419 = vpop.f32.mrb[0].mxu0
    %420 = vmatprep.mubr.f32.mxu0 0.0
    %421 = vmatmul.mubr.f32.gmra.mrb[0].mxu0 %v127
    %v422 = vpop.f32.mrb[0].mxu0
    %v423 = vadd.f32 0.0, %v422
    %v424 = vpop.f32.mrb[0].mxu0
    %425 = vmatprep.mubr.f32.mxu0 0.0
    %426 = vmatmul.mubr.f32.gmra.mrb[0].mxu0 %v130
    %v427 = vpop.f32.mrb[0].mxu0
    %v428 = vadd.f32 0.0, %v427
    %v429 = vpop.f32.mrb[0].mxu0
    %430 = vmatprep.mubr.f32.mxu0 0.0
    %431 = vmatmul.mubr.f32.gmra.mrb[0].mxu0 %v133
    %v432 = vpop.f32.mrb[0].mxu0
    %v433 = vadd.f32 0.0, %v432
    %v434 = vpop.f32.mrb[0].mxu0
    %435 = vmatprep.mubr.f32.mxu0 0.0
    %436 = vmatmul.mubr.f32.gmra.mrb[0].mxu0 %v136
    %v437 = vpop.f32.mrb[0].mxu0
    %v438 = vadd.f32 0.0, %v437
    %v439 = vpop.f32.mrb[0].mxu0
    %440 = vmatprep.mubr.f32.mxu0 0.0
    %441 = vmatmul.mubr.f32.gmra.mrb[0].mxu0 %v139
    %v442 = vpop.f32.mrb[0].mxu0
    %v443 = vadd.f32 0.0, %v442
    %v444 = vpop.f32.mrb[0].mxu0
    %445 = vmatprep.mubr.f32.mxu0 0.0
    %446 = vmatmul.mubr.f32.gmra.mrb[0].mxu0 %v142
    %v447 = vpop.f32.mrb[0].mxu0
    %v448 = vadd.f32 0.0, %v447
    %v449 = vpop.f32.mrb[0].mxu0
    %450 = vmatprep.mubr.f32.mxu0 0.0
    %451 = vmatmul.mubr.f32.gmra.mrb[0].mxu0 %v145
    %v452 = vpop.f32.mrb[0].mxu0
    %v453 = vadd.f32 0.0, %v452
    %v454 = vpop.f32.mrb[0].mxu0
    %455 = vmatprep.mubr.f32.mxu0 0.0
    %456 = vmatmul.mubr.f32.gmra.mrb[0].mxu0 %v148
    %v457 = vpop.f32.mrb[0].mxu0
    %v458 = vadd.f32 0.0, %v457
    %v459 = vpop.f32.mrb[0].mxu0
    %460 = vmatprep.mubr.f32.mxu0 0.0
    %461 = vmatmul.mubr.f32.gmra.mrb[0].mxu0 %v151
    %v462 = vpop.f32.mrb[0].mxu0
    %v463 = vadd.f32 0.0, %v462
    %v464 = vpop.f32.mrb[0].mxu0
    %465 = vmatprep.mubr.f32.mxu0 0.0
    %466 = vmatmul.mubr.f32.gmra.mrb[0].mxu0 %v154
    %v467 = vpop.f32.mrb[0].mxu0
    %v468 = vadd.f32 0.0, %v467
    %v469 = vpop.f32.mrb[0].mxu0
    %470 = vmatprep.mubr.f32.mxu0 0.0
    %471 = vmatmul.mubr.f32.gmra.mrb[0].mxu0 %v157
    %v472 = vpop.f32.mrb[0].mxu0
    %v473 = vadd.f32 0.0, %v472
    %v474 = vpop.f32.mrb[0].mxu0
    %475 = vmatprep.mubr.f32.mxu0 0.0
    %476 = vmatmul.mubr.f32.gmra.mrb[0].mxu0 %v160
    %v477 = vpop.f32.mrb[0].mxu0
    %v478 = vadd.f32 0.0, %v477
    %v479 = vpop.f32.mrb[0].mxu0
    %480 = vmatprep.mubr.f32.mxu0 0.0
    %481 = vmatmul.mubr.f32.gmra.mrb[0].mxu0 %v163
    %v482 = vpop.f32.mrb[0].mxu0
    %v483 = vadd.f32 0.0, %v482
    %v484 = vpop.f32.mrb[0].mxu0
    %485 = vmatprep.mubr.f32.mxu0 0.0
    %486 = vmatmul.mubr.f32.gmra.mrb[0].mxu0 %v166
    %v487 = vpop.f32.mrb[0].mxu0
    %v488 = vadd.f32 0.0, %v487
    %v489 = vpop.f32.mrb[0].mxu0
    %490 = vmatprep.mubr.f32.mxu0 0.0
    %491 = vmatmul.mubr.f32.gmra.mrb[0].mxu0 %v169
    %v492 = vpop.f32.mrb[0].mxu0
    %v493 = vadd.f32 0.0, %v492
    %v494 = vpop.f32.mrb[0].mxu0
    %495 = vmatprep.mubr.f32.mxu0 0.0
    %496 = vmatmul.mubr.f32.gmra.mrb[0].mxu0 %v172
    %v497 = vpop.f32.mrb[0].mxu0
    %v498 = vadd.f32 0.0, %v497
    %v499 = vpop.f32.mrb[0].mxu0
    %500 = vmatprep.mubr.f32.mxu0 0.0
    %501 = vmatmul.mubr.f32.gmra.mrb[0].mxu0 %v175
    %v502 = vpop.f32.mrb[0].mxu0
    %v503 = vadd.f32 0.0, %v502
    %v504 = vpop.f32.mrb[0].mxu0
    %505 = vmatprep.mubr.f32.mxu0 0.0
    %506 = vmatmul.mubr.f32.gmra.mrb[0].mxu0 %v178
    %v507 = vpop.f32.mrb[0].mxu0
    %v508 = vadd.f32 0.0, %v507
    %v509 = vpop.f32.mrb[0].mxu0
    %510 = vmatprep.mubr.f32.mxu0 0.0
    %511 = vmatmul.mubr.f32.gmra.mrb[0].mxu0 %v181
    %v512 = vpop.f32.mrb[0].mxu0
    %v513 = vadd.f32 0.0, %v512
    %v514 = vpop.f32.mrb[0].mxu0
    %515 = vmatprep.mubr.f32.mxu0 0.0
    %516 = vmatmul.mubr.f32.gmra.mrb[0].mxu0 %v184
    %v517 = vpop.f32.mrb[0].mxu0
    %v518 = vadd.f32 0.0, %v517
    %v519 = vpop.f32.mrb[0].mxu0
    %520 = vmatprep.mubr.f32.mxu0 0.0
    %521 = vmatmul.mubr.f32.gmra.mrb[0].mxu0 %v187
    %v522 = vpop.f32.mrb[0].mxu0
    %v523 = vadd.f32 0.0, %v522
    %v524 = vpop.f32.mrb[0].mxu0
    %525 = vmatprep.mubr.f32.mxu0 0.0
    %526 = vmatmul.mubr.f32.gmra.mrb[0].mxu0 %v190
    %v527 = vpop.f32.mrb[0].mxu0
    %v528 = vadd.f32 0.0, %v527
    %v529 = vpop.f32.mrb[0].mxu0
    %530 = vmatprep.mubr.f32.mxu0 0.0
    %531 = vmatmul.mubr.f32.gmra.mrb[0].mxu0 %v193
    %v532 = vpop.f32.mrb[0].mxu0
    %v533 = vadd.f32 0.0, %v532
    %v534 = vpop.f32.mrb[0].mxu0
    %535 = vmatprep.mubr.f32.mxu0 0.0
    %536 = vmatmul.mubr.f32.gmra.mrb[0].mxu0 %v196
    %v537 = vpop.f32.mrb[0].mxu0
    %v538 = vadd.f32 0.0, %v537
    %v539 = vpop.f32.mrb[0].mxu0
    %540 = vmatprep.mubr.f32.mxu0 0.0
    %541 = vmatmul.mubr.f32.gmra.mrb[0].mxu0 %v199
    %v542 = vpop.f32.mrb[0].mxu0
    %v543 = vadd.f32 0.0, %v542
    %v544 = vpop.f32.mrb[0].mxu0
    %545 = vmatprep.mubr.f32.mxu0 0.0
    %546 = vmatmul.mubr.f32.gmra.mrb[0].mxu0 %v202
    %v547 = vpop.f32.mrb[0].mxu0
    %v548 = vadd.f32 0.0, %v547
    %v549 = vpop.f32.mrb[0].mxu0
    %550 = vmatprep.mubr.f32.mxu0 0.0
    %551 = vmatmul.mubr.f32.gmra.mrb[0].mxu0 %v205
    %v552 = vpop.f32.mrb[0].mxu0
    %v553 = vadd.f32 0.0, %v552
    %v554 = vpop.f32.mrb[0].mxu0
    %555 = vmatprep.mubr.f32.mxu0 0.0
    %556 = vmatmul.mubr.f32.gmra.mrb[0].mxu0 %v208
    %v557 = vpop.f32.mrb[0].mxu0
    %v558 = vadd.f32 0.0, %v557
    %v559 = vpop.f32.mrb[0].mxu0
    %560 = vmatprep.mubr.f32.mxu0 0.0
    %561 = vmatmul.mubr.f32.gmra.mrb[0].mxu0 %v211
    %v562 = vpop.f32.mrb[0].mxu0
    %v563 = vadd.f32 0.0, %v562
    %v564 = vpop.f32.mrb[0].mxu0
    %565 = vmatprep.mubr.f32.mxu0 0.0
    %566 = vmatmul.mubr.f32.gmra.mrb[0].mxu0 %v214
    %v567 = vpop.f32.mrb[0].mxu0
    %v568 = vadd.f32 0.0, %v567
    %v569 = vpop.f32.mrb[0].mxu0
    %570 = vmatprep.mubr.f32.mxu0 0.0
    %571 = vmatmul.mubr.f32.gmra.mrb[0].mxu0 %v217
    %v572 = vpop.f32.mrb[0].mxu0
    %v573 = vadd.f32 0.0, %v572
    %v574 = vpop.f32.mrb[0].mxu0
    %575 = vmatprep.mubr.f32.mxu0 0.0
    %576 = vmatmul.mubr.f32.gmra.mrb[0].mxu0 %v220
    %v577 = vpop.f32.mrb[0].mxu0
    %v578 = vadd.f32 0.0, %v577
    %v579 = vpop.f32.mrb[0].mxu0
    %580 = vmatprep.mubr.f32.mxu0 0.0
    %581 = vmatmul.mubr.f32.gmra.mrb[0].mxu0 %v223
    %v582 = vpop.f32.mrb[0].mxu0
    %v583 = vadd.f32 0.0, %v582
    %v584 = vpop.f32.mrb[0].mxu0
    %585 = vmatprep.mubr.f32.mxu0 0.0
    %586 = vmatmul.mubr.f32.gmra.mrb[0].mxu0 %v226
    %v587 = vpop.f32.mrb[0].mxu0
    %v588 = vadd.f32 0.0, %v587
    %v589 = vpop.f32.mrb[0].mxu0
    %590 = vmatprep.mubr.f32.mxu0 0.0
    %591 = vmatmul.mubr.f32.gmra.mrb[0].mxu0 %v229
    %v592 = vpop.f32.mrb[0].mxu0
    %v593 = vadd.f32 0.0, %v592
    %v594 = vpop.f32.mrb[0].mxu0
    %595 = vmatprep.mubr.f32.mxu0 0.0
    %596 = vmatmul.mubr.f32.gmra.mrb[0].mxu0 %v232
    %v597 = vpop.f32.mrb[0].mxu0
    %v598 = vadd.f32 0.0, %v597
    %v599 = vpop.f32.mrb[0].mxu0
    %600 = vmatprep.mubr.f32.mxu0 0.0
    %601 = vmatmul.mubr.f32.gmra.mrb[0].mxu0 %v235
    %v602 = vpop.f32.mrb[0].mxu0
    %v603 = vadd.f32 0.0, %v602
    %v604 = vpop.f32.mrb[0].mxu0
    %605 = vmatprep.mubr.f32.mxu0 0.0
    %606 = vmatmul.mubr.f32.gmra.mrb[0].mxu0 %v238
    %v607 = vpop.f32.mrb[0].mxu0
    %v608 = vadd.f32 0.0, %v607
    %v609 = vpop.f32.mrb[0].mxu0
    %610 = vmatprep.mubr.f32.mxu0 0.0
    %611 = vmatmul.mubr.f32.gmra.mrb[0].mxu0 %v241
    %v612 = vpop.f32.mrb[0].mxu0
    %v613 = vadd.f32 0.0, %v612
    %v614 = vpop.f32.mrb[0].mxu0
    %615 = vmatprep.mubr.f32.mxu0 0.0
    %616 = vmatmul.mubr.f32.gmra.mrb[0].mxu0 %v244
    %v617 = vpop.f32.mrb[0].mxu0
    %v618 = vadd.f32 0.0, %v617
    %v619 = vpop.f32.mrb[0].mxu0
    %620 = vmatprep.mubr.f32.mxu0 0.0
    %621 = vmatmul.mubr.f32.gmra.mrb[0].mxu0 %v247
    %v622 = vpop.f32.mrb[0].mxu0
    %v623 = vadd.f32 0.0, %v622
    %v624 = vpop.f32.mrb[0].mxu0
    %625 = vmatprep.mubr.f32.mxu0 0.0
    %626 = vmatmul.mubr.f32.gmra.mrb[0].mxu0 %v250
    %v627 = vpop.f32.mrb[0].mxu0
    %v628 = vadd.f32 0.0, %v627
    %v629 = vpop.f32.mrb[0].mxu0
    %630 = vmatprep.mubr.f32.mxu0 0.0
    %631 = vmatmul.mubr.f32.gmra.mrb[0].mxu0 %v253
    %v632 = vpop.f32.mrb[0].mxu0
    %v633 = vadd.f32 0.0, %v632
    %v634 = vpop.f32.mrb[0].mxu0
    %635 = vmatprep.mubr.f32.mxu0 0.0
    %636 = vmatmul.mubr.f32.gmra.mrb[0].mxu0 %v256
    %v637 = vpop.f32.mrb[0].mxu0
    %v638 = vadd.f32 0.0, %v637
    %v639 = vpop.f32.mrb[0].mxu0
    %640 = vmatprep.mubr.f32.mxu0 0.0
    %641 = vmatmul.mubr.f32.gmra.mrb[0].mxu0 %v259
    %v642 = vpop.f32.mrb[0].mxu0
    %v643 = vadd.f32 0.0, %v642
    %v644 = vpop.f32.mrb[0].mxu0
    %645 = vmatprep.mubr.f32.mxu0 0.0
    %646 = vmatmul.mubr.f32.gmra.mrb[0].mxu0 %v262
    %v647 = vpop.f32.mrb[0].mxu0
    %v648 = vadd.f32 0.0, %v647
    %v649 = vpop.f32.mrb[0].mxu0
    %650 = vmatprep.mubr.f32.mxu0 0.0
    %651 = vmatmul.mubr.f32.gmra.mrb[0].mxu0 %v265
    %v652 = vpop.f32.mrb[0].mxu0
    %v653 = vadd.f32 0.0, %v652
    %v654 = vpop.f32.mrb[0].mxu0
    %655 = vmatprep.mubr.f32.mxu0 0.0
    %656 = vmatmul.mubr.f32.gmra.mrb[0].mxu0 %v268
    %v657 = vpop.f32.mrb[0].mxu0
    %v658 = vadd.f32 0.0, %v657
    %v659 = vpop.f32.mrb[0].mxu0
    %660 = vmatprep.mubr.f32.mxu0 0.0
    %661 = vmatmul.mubr.f32.gmra.mrb[0].mxu0 %v271
    %v662 = vpop.f32.mrb[0].mxu0
    %v663 = vadd.f32 0.0, %v662
    %v664 = vpop.f32.mrb[0].mxu0
    %665 = vmatprep.mubr.f32.mxu0 0.0
    %666 = vmatmul.mubr.f32.gmra.mrb[0].mxu0 %v274
    %v667 = vpop.f32.mrb[0].mxu0
    %v668 = vadd.f32 0.0, %v667
    %v669 = vpop.f32.mrb[0].mxu0
    %670 = vmatprep.mubr.f32.mxu0 0.0
    %671 = vmatmul.mubr.f32.gmra.mrb[0].mxu0 %v277
    %v672 = vpop.f32.mrb[0].mxu0
    %v673 = vadd.f32 0.0, %v672
    %v674 = vpop.f32.mrb[0].mxu0
    %675 = vmatprep.mubr.f32.mxu0 0.0
    %676 = vmatmul.mubr.f32.gmra.mrb[0].mxu0 %v280
    %v677 = vpop.f32.mrb[0].mxu0
    %v678 = vadd.f32 0.0, %v677
    %v679 = vpop.f32.mrb[0].mxu0
    %680 = vmatprep.mubr.f32.mxu0 0.0
    %681 = vmatmul.mubr.f32.gmra.mrb[0].mxu0 %v283
    %v682 = vpop.f32.mrb[0].mxu0
    %v683 = vadd.f32 0.0, %v682
    %v684 = vpop.f32.mrb[0].mxu0
    %685 = vmatprep.mubr.f32.mxu0 0.0
    %686 = vmatmul.mubr.f32.gmra.mrb[0].mxu0 %v286
    %v687 = vpop.f32.mrb[0].mxu0
    %v688 = vadd.f32 0.0, %v687
    %v689 = vpop.f32.mrb[0].mxu0
    %690 = vmatprep.mubr.f32.mxu0 0.0
    %691 = vmatmul.mubr.f32.gmra.mrb[0].mxu0 %v289
    %v692 = vpop.f32.mrb[0].mxu0
    %v693 = vadd.f32 0.0, %v692
    %v694 = vpop.f32.mrb[0].mxu0
    %695 = vmatprep.mubr.f32.mxu0 0.0
    %696 = vmatmul.mubr.f32.gmra.mrb[0].mxu0 %v292
    %v697 = vpop.f32.mrb[0].mxu0
    %v698 = vadd.f32 0.0, %v697
    %v699 = vpop.f32.mrb[0].mxu0
    %700 = vmatprep.mubr.f32.mxu0 0.0
    %701 = vmatmul.mubr.f32.gmra.mrb[0].mxu0 %v295
    %v702 = vpop.f32.mrb[0].mxu0
    %v703 = vadd.f32 0.0, %v702
    %v704 = vpop.f32.mrb[0].mxu0
    %705 = vmatprep.mubr.f32.mxu0 0.0
    %706 = vmatmul.mubr.f32.gmra.mrb[0].mxu0 %v298
    %v707 = vpop.f32.mrb[0].mxu0
    %v708 = vadd.f32 0.0, %v707
    %v709 = vpop.f32.mrb[0].mxu0
    %710 = vmatprep.mubr.f32.mxu0 0.0
    %711 = vmatmul.mubr.f32.gmra.mrb[0].mxu0 %v301
    %v712 = vpop.f32.mrb[0].mxu0
    %v713 = vadd.f32 0.0, %v712
    %v714 = vpop.f32.mrb[0].mxu0
    %715 = vmatprep.mubr.f32.mxu0 0.0
    %716 = vmatmul.mubr.f32.gmra.mrb[0].mxu0 %v304
    %v717 = vpop.f32.mrb[0].mxu0
    %v718 = vadd.f32 0.0, %v717
    %v719 = vpop.f32.mrb[0].mxu0
    %720 = vmatprep.mubr.f32.mxu0 0.0
    %721 = vmatmul.mubr.f32.gmra.mrb[0].mxu0 %v307
    %v722 = vpop.f32.mrb[0].mxu0
    %v723 = vadd.f32 0.0, %v722
    %v724 = vpop.f32.mrb[0].mxu0
    %725 = vmatprep.mubr.f32.mxu0 0.0
    %726 = vmatmul.mubr.f32.gmra.mrb[0].mxu0 %v310
    %v727 = vpop.f32.mrb[0].mxu0
    %v728 = vadd.f32 0.0, %v727
    %v729 = vpop.f32.mrb[0].mxu0
    %730 = vmatprep.mubr.f32.mxu0 0.0
    %731 = vmatmul.mubr.f32.gmra.mrb[0].mxu0 %v313
    %v732 = vpop.f32.mrb[0].mxu0
    %v733 = vadd.f32 0.0, %v732
    %v734 = vpop.f32.mrb[0].mxu0
    %735 = vmatprep.mubr.f32.mxu0 0.0
    %736 = vmatmul.mubr.f32.gmra.mrb[0].mxu0 %v316
    %v737 = vpop.f32.mrb[0].mxu0
    %v738 = vadd.f32 0.0, %v737
    %v739 = vpop.f32.mrb[0].mxu0
    %740 = vmatprep.mubr.f32.mxu0 0.0
    %741 = vmatmul.mubr.f32.gmra.mrb[0].mxu0 %v319
    %v742 = vpop.f32.mrb[0].mxu0
    %v743 = vadd.f32 0.0, %v742
    %v744 = vpop.f32.mrb[0].mxu0
    %745 = vmatprep.mubr.f32.mxu0 0.0
    %746 = vmatmul.mubr.f32.gmra.mrb[0].mxu0 %v322
    %v747 = vpop.f32.mrb[0].mxu0
    %v748 = vadd.f32 0.0, %v747
    %v749 = vpop.f32.mrb[0].mxu0
    %750 = vmatprep.mubr.f32.mxu0 0.0
    %751 = vmatmul.mubr.f32.gmra.mrb[0].mxu0 %v325
    %v752 = vpop.f32.mrb[0].mxu0
    %v753 = vadd.f32 0.0, %v752
    %v754 = vpop.f32.mrb[0].mxu0
    %755 = vdwg.mxu0
    %vm756 = vcmask 48128
    %v757 = vsel %vm756, %v398, 0.0
    %v758 = vsel %vm756, %v403, 0.0
    %v759 = vadd.f32 %v757, %v758
    %v760 = vsel %vm756, %v408, 0.0
    %v761 = vadd.f32 %v759, %v760
    %v762 = vsel %vm756, %v413, 0.0
    %v763 = vadd.f32 %v761, %v762
    %v764 = vrot.slane %v763, 4
    %v765 = vadd.f32 %v763, %v764
    %v766 = vrot.slane %v765, 2
    %v767 = vadd.f32 %v765, %v766
    %v768 = vrot.slane %v767, 1
    %v769 = vadd.f32 %v767, %v768
    %v770 = vsel %vm756, %v418, 0.0
    %v771 = vsel %vm756, %v423, 0.0
    %v772 = vadd.f32 %v770, %v771
    %v773 = vsel %vm756, %v428, 0.0
    %v774 = vadd.f32 %v772, %v773
    %v775 = vsel %vm756, %v433, 0.0
    %v776 = vadd.f32 %v774, %v775
    %v777 = vrot.slane %v776, 4
    %v778 = vadd.f32 %v776, %v777
    %v779 = vrot.slane %v778, 2
    %v780 = vadd.f32 %v778, %v779
    %v781 = vrot.slane %v780, 1
    %v782 = vadd.f32 %v780, %v781
    %v783 = vsel %vm756, %v443, 0.0
    %v784 = vsel %vm756, %v448, 0.0
    %v785 = vadd.f32 %v783, %v784
    %v786 = vsel %vm756, %v453, 0.0
    %v787 = vadd.f32 %v785, %v786
    %v788 = vsel %vm756, %v458, 0.0
    %v789 = vadd.f32 %v787, %v788
    %v790 = vrot.slane %v789, 4
    %v791 = vadd.f32 %v789, %v790
    %v792 = vrot.slane %v791, 2
    %v793 = vadd.f32 %v791, %v792
    %v794 = vrot.slane %v793, 1
    %v795 = vadd.f32 %v793, %v794
    %v796 = vsel %vm756, %v463, 0.0
    %v797 = vsel %vm756, %v468, 0.0
    %v798 = vadd.f32 %v796, %v797
    %v799 = vsel %vm756, %v473, 0.0
    %v800 = vadd.f32 %v798, %v799
    %v801 = vsel %vm756, %v478, 0.0
    %v802 = vadd.f32 %v800, %v801
    %v803 = vrot.slane %v802, 4
    %v804 = vadd.f32 %v802, %v803
    %v805 = vrot.slane %v804, 2
    %v806 = vadd.f32 %v804, %v805
    %v807 = vrot.slane %v806, 1
    %v808 = vadd.f32 %v806, %v807
    %v809 = vsel %vm756, %v488, 0.0
    %v810 = vsel %vm756, %v493, 0.0
    %v811 = vadd.f32 %v809, %v810
    %v812 = vsel %vm756, %v498, 0.0
    %v813 = vadd.f32 %v811, %v812
    %v814 = vsel %vm756, %v503, 0.0
    %v815 = vadd.f32 %v813, %v814
    %v816 = vrot.slane %v815, 4
    %v817 = vadd.f32 %v815, %v816
    %v818 = vrot.slane %v817, 2
    %v819 = vadd.f32 %v817, %v818
    %v820 = vrot.slane %v819, 1
    %v821 = vadd.f32 %v819, %v820
    %v822 = vsel %vm756, %v508, 0.0
    %v823 = vsel %vm756, %v513, 0.0
    %v824 = vadd.f32 %v822, %v823
    %v825 = vsel %vm756, %v518, 0.0
    %v826 = vadd.f32 %v824, %v825
    %v827 = vsel %vm756, %v523, 0.0
    %v828 = vadd.f32 %v826, %v827
    %v829 = vrot.slane %v828, 4
    %v830 = vadd.f32 %v828, %v829
    %v831 = vrot.slane %v830, 2
    %v832 = vadd.f32 %v830, %v831
    %v833 = vrot.slane %v832, 1
    %v834 = vadd.f32 %v832, %v833
    %v835 = vsel %vm756, %v533, 0.0
    %v836 = vsel %vm756, %v538, 0.0
    %v837 = vadd.f32 %v835, %v836
    %v838 = vsel %vm756, %v543, 0.0
    %v839 = vadd.f32 %v837, %v838
    %v840 = vsel %vm756, %v548, 0.0
    %v841 = vadd.f32 %v839, %v840
    %v842 = vrot.slane %v841, 4
    %v843 = vadd.f32 %v841, %v842
    %v844 = vrot.slane %v843, 2
    %v845 = vadd.f32 %v843, %v844
    %v846 = vrot.slane %v845, 1
    %v847 = vadd.f32 %v845, %v846
    %v848 = vsel %vm756, %v553, 0.0
    %v849 = vsel %vm756, %v558, 0.0
    %v850 = vadd.f32 %v848, %v849
    %v851 = vsel %vm756, %v563, 0.0
    %v852 = vadd.f32 %v850, %v851
    %v853 = vsel %vm756, %v568, 0.0
    %v854 = vadd.f32 %v852, %v853
    %v855 = vrot.slane %v854, 4
    %v856 = vadd.f32 %v854, %v855
    %v857 = vrot.slane %v856, 2
    %v858 = vadd.f32 %v856, %v857
    %v859 = vrot.slane %v858, 1
    %v860 = vadd.f32 %v858, %v859
    %v861 = vsel %vm756, %v578, 0.0
    %v862 = vsel %vm756, %v583, 0.0
    %v863 = vadd.f32 %v861, %v862
    %v864 = vsel %vm756, %v588, 0.0
    %v865 = vadd.f32 %v863, %v864
    %v866 = vsel %vm756, %v593, 0.0
    %v867 = vadd.f32 %v865, %v866
    %v868 = vrot.slane %v867, 4
    %v869 = vadd.f32 %v867, %v868
    %v870 = vrot.slane %v869, 2
    %v871 = vadd.f32 %v869, %v870
    %v872 = vrot.slane %v871, 1
    %v873 = vadd.f32 %v871, %v872
    %v874 = vsel %vm756, %v598, 0.0
    %v875 = vsel %vm756, %v603, 0.0
    %v876 = vadd.f32 %v874, %v875
    %v877 = vsel %vm756, %v608, 0.0
    %v878 = vadd.f32 %v876, %v877
    %v879 = vsel %vm756, %v613, 0.0
    %v880 = vadd.f32 %v878, %v879
    %v881 = vrot.slane %v880, 4
    %v882 = vadd.f32 %v880, %v881
    %v883 = vrot.slane %v882, 2
    %v884 = vadd.f32 %v882, %v883
    %v885 = vrot.slane %v884, 1
    %v886 = vadd.f32 %v884, %v885
    %v887 = vsel %vm756, %v623, 0.0
    %v888 = vsel %vm756, %v628, 0.0
    %v889 = vadd.f32 %v887, %v888
    %v890 = vsel %vm756, %v633, 0.0
    %v891 = vadd.f32 %v889, %v890
    %v892 = vsel %vm756, %v638, 0.0
    %v893 = vadd.f32 %v891, %v892
    %v894 = vrot.slane %v893, 4
    %v895 = vadd.f32 %v893, %v894
    %v896 = vrot.slane %v895, 2
    %v897 = vadd.f32 %v895, %v896
    %v898 = vrot.slane %v897, 1
    %v899 = vadd.f32 %v897, %v898
    %v900 = vsel %vm756, %v643, 0.0
    %v901 = vsel %vm756, %v648, 0.0
    %v902 = vadd.f32 %v900, %v901
    %v903 = vsel %vm756, %v653, 0.0
    %v904 = vadd.f32 %v902, %v903
    %v905 = vsel %vm756, %v658, 0.0
    %v906 = vadd.f32 %v904, %v905
    %v907 = vrot.slane %v906, 4
    %v908 = vadd.f32 %v906, %v907
    %v909 = vrot.slane %v908, 2
    %v910 = vadd.f32 %v908, %v909
    %v911 = vrot.slane %v910, 1
    %v912 = vadd.f32 %v910, %v911
    %v913 = vsel %vm756, %v668, 0.0
    %v914 = vsel %vm756, %v673, 0.0
    %v915 = vadd.f32 %v913, %v914
    %v916 = vsel %vm756, %v678, 0.0
    %v917 = vadd.f32 %v915, %v916
    %v918 = vsel %vm756, %v683, 0.0
    %v919 = vadd.f32 %v917, %v918
    %v920 = vrot.slane %v919, 4
    %v921 = vadd.f32 %v919, %v920
    %v922 = vrot.slane %v921, 2
    %v923 = vadd.f32 %v921, %v922
    %v924 = vrot.slane %v923, 1
    %v925 = vadd.f32 %v923, %v924
    %v926 = vsel %vm756, %v688, 0.0
    %v927 = vsel %vm756, %v693, 0.0
    %v928 = vadd.f32 %v926, %v927
    %v929 = vsel %vm756, %v698, 0.0
    %v930 = vadd.f32 %v928, %v929
    %v931 = vsel %vm756, %v703, 0.0
    %v932 = vadd.f32 %v930, %v931
    %v933 = vrot.slane %v932, 4
    %v934 = vadd.f32 %v932, %v933
    %v935 = vrot.slane %v934, 2
    %v936 = vadd.f32 %v934, %v935
    %v937 = vrot.slane %v936, 1
    %v938 = vadd.f32 %v936, %v937
    %v939 = vsel %vm756, %v713, 0.0
    %v940 = vsel %vm756, %v718, 0.0
    %v941 = vadd.f32 %v939, %v940
    %v942 = vsel %vm756, %v723, 0.0
    %v943 = vadd.f32 %v941, %v942
    %v944 = vsel %vm756, %v728, 0.0
    %v945 = vadd.f32 %v943, %v944
    %v946 = vrot.slane %v945, 4
    %v947 = vadd.f32 %v945, %v946
    %v948 = vrot.slane %v947, 2
    %v949 = vadd.f32 %v947, %v948
    %v950 = vrot.slane %v949, 1
    %v951 = vadd.f32 %v949, %v950
    %v952 = vsel %vm756, %v733, 0.0
    %v953 = vsel %vm756, %v738, 0.0
    %v954 = vadd.f32 %v952, %v953
    %v955 = vsel %vm756, %v743, 0.0
    %v956 = vadd.f32 %v954, %v955
    %v957 = vsel %vm756, %v748, 0.0
    %v958 = vadd.f32 %v956, %v957
    %v959 = vrot.slane %v958, 4
    %v960 = vadd.f32 %v958, %v959
    %v961 = vrot.slane %v960, 2
    %v962 = vadd.f32 %v960, %v961
    %v963 = vrot.slane %v962, 1
    %v964 = vadd.f32 %v962, %v963
    %vm1037 = vcmask 1046528
    %v1038 = vrot.slane %v398, 1
    %v1039 = vrot.slane %v403, 1
    %v1040 = vsel %vm1037, %v1038, %v1039
    %v1041 = vrot.slane %v408, 1
    %v1042 = vsel %vm1037, %v1039, %v1041
    %v1043 = vrot.slane %v413, 1
    %v1044 = vsel %vm1037, %v1041, %v1043
    %v1045 = vrot.slane %v418, 1
    %v1046 = vsel %vm1037, %v1043, %v1045
    %v1047 = vrot.slane %v423, 1
    %v1048 = vsel %vm1037, %v1045, %v1047
    %v1049 = vrot.slane %v428, 1
    %v1050 = vsel %vm1037, %v1047, %v1049
    %v1051 = vrot.slane %v433, 1
    %v1052 = vsel %vm1037, %v1049, %v1051
    %v1053 = vrot.slane %v438, 1
    %v1054 = vsel %vm1037, %v1051, %v1053
    %v1055 = vrot.slane %v443, 1
    %v1056 = vrot.slane %v448, 1
    %v1057 = vsel %vm1037, %v1055, %v1056
    %v1058 = vrot.slane %v453, 1
    %v1059 = vsel %vm1037, %v1056, %v1058
    %v1060 = vrot.slane %v458, 1
    %v1061 = vsel %vm1037, %v1058, %v1060
    %v1062 = vrot.slane %v463, 1
    %v1063 = vsel %vm1037, %v1060, %v1062
    %v1064 = vrot.slane %v468, 1
    %v1065 = vsel %vm1037, %v1062, %v1064
    %v1066 = vrot.slane %v473, 1
    %v1067 = vsel %vm1037, %v1064, %v1066
    %v1068 = vrot.slane %v478, 1
    %v1069 = vsel %vm1037, %v1066, %v1068
    %v1070 = vrot.slane %v483, 1
    %v1071 = vsel %vm1037, %v1068, %v1070
    %v1072 = vrot.slane %v488, 1
    %v1073 = vrot.slane %v493, 1
    %v1074 = vsel %vm1037, %v1072, %v1073
    %v1075 = vrot.slane %v498, 1
    %v1076 = vsel %vm1037, %v1073, %v1075
    %v1077 = vrot.slane %v503, 1
    %v1078 = vsel %vm1037, %v1075, %v1077
    %v1079 = vrot.slane %v508, 1
    %v1080 = vsel %vm1037, %v1077, %v1079
    %v1081 = vrot.slane %v513, 1
    %v1082 = vsel %vm1037, %v1079, %v1081
    %v1083 = vrot.slane %v518, 1
    %v1084 = vsel %vm1037, %v1081, %v1083
    %v1085 = vrot.slane %v523, 1
    %v1086 = vsel %vm1037, %v1083, %v1085
    %v1087 = vrot.slane %v528, 1
    %v1088 = vsel %vm1037, %v1085, %v1087
    %v1089 = vrot.slane %v533, 1
    %v1090 = vrot.slane %v538, 1
    %v1091 = vsel %vm1037, %v1089, %v1090
    %v1092 = vrot.slane %v543, 1
    %v1093 = vsel %vm1037, %v1090, %v1092
    %v1094 = vrot.slane %v548, 1
    %v1095 = vsel %vm1037, %v1092, %v1094
    %v1096 = vrot.slane %v553, 1
    %v1097 = vsel %vm1037, %v1094, %v1096
    %v1098 = vrot.slane %v558, 1
    %v1099 = vsel %vm1037, %v1096, %v1098
    %v1100 = vrot.slane %v563, 1
    %v1101 = vsel %vm1037, %v1098, %v1100
    %v1102 = vrot.slane %v568, 1
    %v1103 = vsel %vm1037, %v1100, %v1102
    %v1104 = vrot.slane %v573, 1
    %v1105 = vsel %vm1037, %v1102, %v1104
    %v1106 = vrot.slane %v578, 1
    %v1107 = vrot.slane %v583, 1
    %v1108 = vsel %vm1037, %v1106, %v1107
    %v1109 = vrot.slane %v588, 1
    %v1110 = vsel %vm1037, %v1107, %v1109
    %v1111 = vrot.slane %v593, 1
    %v1112 = vsel %vm1037, %v1109, %v1111
    %v1113 = vrot.slane %v598, 1
    %v1114 = vsel %vm1037, %v1111, %v1113
    %v1115 = vrot.slane %v603, 1
    %v1116 = vsel %vm1037, %v1113, %v1115
    %v1117 = vrot.slane %v608, 1
    %v1118 = vsel %vm1037, %v1115, %v1117
    %v1119 = vrot.slane %v613, 1
    %v1120 = vsel %vm1037, %v1117, %v1119
    %v1121 = vrot.slane %v618, 1
    %v1122 = vsel %vm1037, %v1119, %v1121
    %v1123 = vrot.slane %v623, 1
    %v1124 = vrot.slane %v628, 1
    %v1125 = vsel %vm1037, %v1123, %v1124
    %v1126 = vrot.slane %v633, 1
    %v1127 = vsel %vm1037, %v1124, %v1126
    %v1128 = vrot.slane %v638, 1
    %v1129 = vsel %vm1037, %v1126, %v1128
    %v1130 = vrot.slane %v643, 1
    %v1131 = vsel %vm1037, %v1128, %v1130
    %v1132 = vrot.slane %v648, 1
    %v1133 = vsel %vm1037, %v1130, %v1132
    %v1134 = vrot.slane %v653, 1
    %v1135 = vsel %vm1037, %v1132, %v1134
    %v1136 = vrot.slane %v658, 1
    %v1137 = vsel %vm1037, %v1134, %v1136
    %v1138 = vrot.slane %v663, 1
    %v1139 = vsel %vm1037, %v1136, %v1138
    %v1140 = vrot.slane %v668, 1
    %v1141 = vrot.slane %v673, 1
    %v1142 = vsel %vm1037, %v1140, %v1141
    %v1143 = vrot.slane %v678, 1
    %v1144 = vsel %vm1037, %v1141, %v1143
    %v1145 = vrot.slane %v683, 1
    %v1146 = vsel %vm1037, %v1143, %v1145
    %v1147 = vrot.slane %v688, 1
    %v1148 = vsel %vm1037, %v1145, %v1147
    %v1149 = vrot.slane %v693, 1
    %v1150 = vsel %vm1037, %v1147, %v1149
    %v1151 = vrot.slane %v698, 1
    %v1152 = vsel %vm1037, %v1149, %v1151
    %v1153 = vrot.slane %v703, 1
    %v1154 = vsel %vm1037, %v1151, %v1153
    %v1155 = vrot.slane %v708, 1
    %v1156 = vsel %vm1037, %v1153, %v1155
    %v1157 = vrot.slane %v713, 1
    %v1158 = vrot.slane %v718, 1
    %v1159 = vsel %vm1037, %v1157, %v1158
    %v1160 = vrot.slane %v723, 1
    %v1161 = vsel %vm1037, %v1158, %v1160
    %v1162 = vrot.slane %v728, 1
    %v1163 = vsel %vm1037, %v1160, %v1162
    %v1164 = vrot.slane %v733, 1
    %v1165 = vsel %vm1037, %v1162, %v1164
    %v1166 = vrot.slane %v738, 1
    %v1167 = vsel %vm1037, %v1164, %v1166
    %v1168 = vrot.slane %v743, 1
    %v1169 = vsel %vm1037, %v1166, %v1168
    %v1170 = vrot.slane %v748, 1
    %v1171 = vsel %vm1037, %v1168, %v1170
    %v1172 = vrot.slane %v753, 1
    %v1173 = vsel %vm1037, %v1170, %v1172
    %vm1238 = vcmask 97328
    %v1239 = vsel %vm1238, %v1040, 0.0
    %v1240 = vsel %vm1238, %v1042, 0.0
    %v1241 = vadd.f32 %v1239, %v1240
    %v1242 = vsel %vm1238, %v1044, 0.0
    %v1243 = vadd.f32 %v1241, %v1242
    %v1244 = vsel %vm1238, %v1046, 0.0
    %v1245 = vadd.f32 %v1243, %v1244
    %v1246 = vrot.slane %v1245, 4
    %v1247 = vadd.f32 %v1245, %v1246
    %v1248 = vrot.slane %v1247, 2
    %v1249 = vadd.f32 %v1247, %v1248
    %v1250 = vrot.slane %v1249, 1
    %v1251 = vadd.f32 %v1249, %v1250
    %v1252 = vsel %vm1238, %v1048, 0.0
    %v1253 = vsel %vm1238, %v1050, 0.0
    %v1254 = vadd.f32 %v1252, %v1253
    %v1255 = vsel %vm1238, %v1052, 0.0
    %v1256 = vadd.f32 %v1254, %v1255
    %v1257 = vsel %vm1238, %v1054, 0.0
    %v1258 = vadd.f32 %v1256, %v1257
    %v1259 = vrot.slane %v1258, 4
    %v1260 = vadd.f32 %v1258, %v1259
    %v1261 = vrot.slane %v1260, 2
    %v1262 = vadd.f32 %v1260, %v1261
    %v1263 = vrot.slane %v1262, 1
    %v1264 = vadd.f32 %v1262, %v1263
    %v1265 = vsel %vm1238, %v1057, 0.0
    %v1266 = vsel %vm1238, %v1059, 0.0
    %v1267 = vadd.f32 %v1265, %v1266
    %v1268 = vsel %vm1238, %v1061, 0.0
    %v1269 = vadd.f32 %v1267, %v1268
    %v1270 = vsel %vm1238, %v1063, 0.0
    %v1271 = vadd.f32 %v1269, %v1270
    %v1272 = vrot.slane %v1271, 4
    %v1273 = vadd.f32 %v1271, %v1272
    %v1274 = vrot.slane %v1273, 2
    %v1275 = vadd.f32 %v1273, %v1274
    %v1276 = vrot.slane %v1275, 1
    %v1277 = vadd.f32 %v1275, %v1276
    %v1278 = vsel %vm1238, %v1065, 0.0
    %v1279 = vsel %vm1238, %v1067, 0.0
    %v1280 = vadd.f32 %v1278, %v1279
    %v1281 = vsel %vm1238, %v1069, 0.0
    %v1282 = vadd.f32 %v1280, %v1281
    %v1283 = vsel %vm1238, %v1071, 0.0
    %v1284 = vadd.f32 %v1282, %v1283
    %v1285 = vrot.slane %v1284, 4
    %v1286 = vadd.f32 %v1284, %v1285
    %v1287 = vrot.slane %v1286, 2
    %v1288 = vadd.f32 %v1286, %v1287
    %v1289 = vrot.slane %v1288, 1
    %v1290 = vadd.f32 %v1288, %v1289
    %v1291 = vsel %vm1238, %v1074, 0.0
    %v1292 = vsel %vm1238, %v1076, 0.0
    %v1293 = vadd.f32 %v1291, %v1292
    %v1294 = vsel %vm1238, %v1078, 0.0
    %v1295 = vadd.f32 %v1293, %v1294
    %v1296 = vsel %vm1238, %v1080, 0.0
    %v1297 = vadd.f32 %v1295, %v1296
    %v1298 = vrot.slane %v1297, 4
    %v1299 = vadd.f32 %v1297, %v1298
    %v1300 = vrot.slane %v1299, 2
    %v1301 = vadd.f32 %v1299, %v1300
    %v1302 = vrot.slane %v1301, 1
    %v1303 = vadd.f32 %v1301, %v1302
    %v1304 = vsel %vm1238, %v1082, 0.0
    %v1305 = vsel %vm1238, %v1084, 0.0
    %v1306 = vadd.f32 %v1304, %v1305
    %v1307 = vsel %vm1238, %v1086, 0.0
    %v1308 = vadd.f32 %v1306, %v1307
    %v1309 = vsel %vm1238, %v1088, 0.0
    %v1310 = vadd.f32 %v1308, %v1309
    %v1311 = vrot.slane %v1310, 4
    %v1312 = vadd.f32 %v1310, %v1311
    %v1313 = vrot.slane %v1312, 2
    %v1314 = vadd.f32 %v1312, %v1313
    %v1315 = vrot.slane %v1314, 1
    %v1316 = vadd.f32 %v1314, %v1315
    %v1317 = vsel %vm1238, %v1091, 0.0
    %v1318 = vsel %vm1238, %v1093, 0.0
    %v1319 = vadd.f32 %v1317, %v1318
    %v1320 = vsel %vm1238, %v1095, 0.0
    %v1321 = vadd.f32 %v1319, %v1320
    %v1322 = vsel %vm1238, %v1097, 0.0
    %v1323 = vadd.f32 %v1321, %v1322
    %v1324 = vrot.slane %v1323, 4
    %v1325 = vadd.f32 %v1323, %v1324
    %v1326 = vrot.slane %v1325, 2
    %v1327 = vadd.f32 %v1325, %v1326
    %v1328 = vrot.slane %v1327, 1
    %v1329 = vadd.f32 %v1327, %v1328
    %v1330 = vsel %vm1238, %v1099, 0.0
    %v1331 = vsel %vm1238, %v1101, 0.0
    %v1332 = vadd.f32 %v1330, %v1331
    %v1333 = vsel %vm1238, %v1103, 0.0
    %v1334 = vadd.f32 %v1332, %v1333
    %v1335 = vsel %vm1238, %v1105, 0.0
    %v1336 = vadd.f32 %v1334, %v1335
    %v1337 = vrot.slane %v1336, 4
    %v1338 = vadd.f32 %v1336, %v1337
    %v1339 = vrot.slane %v1338, 2
    %v1340 = vadd.f32 %v1338, %v1339
    %v1341 = vrot.slane %v1340, 1
    %v1342 = vadd.f32 %v1340, %v1341
    %v1343 = vsel %vm1238, %v1108, 0.0
    %v1344 = vsel %vm1238, %v1110, 0.0
    %v1345 = vadd.f32 %v1343, %v1344
    %v1346 = vsel %vm1238, %v1112, 0.0
    %v1347 = vadd.f32 %v1345, %v1346
    %v1348 = vsel %vm1238, %v1114, 0.0
    %v1349 = vadd.f32 %v1347, %v1348
    %v1350 = vrot.slane %v1349, 4
    %v1351 = vadd.f32 %v1349, %v1350
    %v1352 = vrot.slane %v1351, 2
    %v1353 = vadd.f32 %v1351, %v1352
    %v1354 = vrot.slane %v1353, 1
    %v1355 = vadd.f32 %v1353, %v1354
    %v1356 = vsel %vm1238, %v1116, 0.0
    %v1357 = vsel %vm1238, %v1118, 0.0
    %v1358 = vadd.f32 %v1356, %v1357
    %v1359 = vsel %vm1238, %v1120, 0.0
    %v1360 = vadd.f32 %v1358, %v1359
    %v1361 = vsel %vm1238, %v1122, 0.0
    %v1362 = vadd.f32 %v1360, %v1361
    %v1363 = vrot.slane %v1362, 4
    %v1364 = vadd.f32 %v1362, %v1363
    %v1365 = vrot.slane %v1364, 2
    %v1366 = vadd.f32 %v1364, %v1365
    %v1367 = vrot.slane %v1366, 1
    %v1368 = vadd.f32 %v1366, %v1367
    %v1369 = vsel %vm1238, %v1125, 0.0
    %v1370 = vsel %vm1238, %v1127, 0.0
    %v1371 = vadd.f32 %v1369, %v1370
    %v1372 = vsel %vm1238, %v1129, 0.0
    %v1373 = vadd.f32 %v1371, %v1372
    %v1374 = vsel %vm1238, %v1131, 0.0
    %v1375 = vadd.f32 %v1373, %v1374
    %v1376 = vrot.slane %v1375, 4
    %v1377 = vadd.f32 %v1375, %v1376
    %v1378 = vrot.slane %v1377, 2
    %v1379 = vadd.f32 %v1377, %v1378
    %v1380 = vrot.slane %v1379, 1
    %v1381 = vadd.f32 %v1379, %v1380
    %v1382 = vsel %vm1238, %v1133, 0.0
    %v1383 = vsel %vm1238, %v1135, 0.0
    %v1384 = vadd.f32 %v1382, %v1383
    %v1385 = vsel %vm1238, %v1137, 0.0
    %v1386 = vadd.f32 %v1384, %v1385
    %v1387 = vsel %vm1238, %v1139, 0.0
    %v1388 = vadd.f32 %v1386, %v1387
    %v1389 = vrot.slane %v1388, 4
    %v1390 = vadd.f32 %v1388, %v1389
    %v1391 = vrot.slane %v1390, 2
    %v1392 = vadd.f32 %v1390, %v1391
    %v1393 = vrot.slane %v1392, 1
    %v1394 = vadd.f32 %v1392, %v1393
    %v1395 = vsel %vm1238, %v1142, 0.0
    %v1396 = vsel %vm1238, %v1144, 0.0
    %v1397 = vadd.f32 %v1395, %v1396
    %v1398 = vsel %vm1238, %v1146, 0.0
    %v1399 = vadd.f32 %v1397, %v1398
    %v1400 = vsel %vm1238, %v1148, 0.0
    %v1401 = vadd.f32 %v1399, %v1400
    %v1402 = vrot.slane %v1401, 4
    %v1403 = vadd.f32 %v1401, %v1402
    %v1404 = vrot.slane %v1403, 2
    %v1405 = vadd.f32 %v1403, %v1404
    %v1406 = vrot.slane %v1405, 1
    %v1407 = vadd.f32 %v1405, %v1406
    %v1408 = vsel %vm1238, %v1150, 0.0
    %v1409 = vsel %vm1238, %v1152, 0.0
    %v1410 = vadd.f32 %v1408, %v1409
    %v1411 = vsel %vm1238, %v1154, 0.0
    %v1412 = vadd.f32 %v1410, %v1411
    %v1413 = vsel %vm1238, %v1156, 0.0
    %v1414 = vadd.f32 %v1412, %v1413
    %v1415 = vrot.slane %v1414, 4
    %v1416 = vadd.f32 %v1414, %v1415
    %v1417 = vrot.slane %v1416, 2
    %v1418 = vadd.f32 %v1416, %v1417
    %v1419 = vrot.slane %v1418, 1
    %v1420 = vadd.f32 %v1418, %v1419
    %v1421 = vsel %vm1238, %v1159, 0.0
    %v1422 = vsel %vm1238, %v1161, 0.0
    %v1423 = vadd.f32 %v1421, %v1422
    %v1424 = vsel %vm1238, %v1163, 0.0
    %v1425 = vadd.f32 %v1423, %v1424
    %v1426 = vsel %vm1238, %v1165, 0.0
    %v1427 = vadd.f32 %v1425, %v1426
    %v1428 = vrot.slane %v1427, 4
    %v1429 = vadd.f32 %v1427, %v1428
    %v1430 = vrot.slane %v1429, 2
    %v1431 = vadd.f32 %v1429, %v1430
    %v1432 = vrot.slane %v1431, 1
    %v1433 = vadd.f32 %v1431, %v1432
    %v1434 = vsel %vm1238, %v1167, 0.0
    %v1435 = vsel %vm1238, %v1169, 0.0
    %v1436 = vadd.f32 %v1434, %v1435
    %v1437 = vsel %vm1238, %v1171, 0.0
    %v1438 = vadd.f32 %v1436, %v1437
    %v1439 = vsel %vm1238, %v1173, 0.0
    %v1440 = vadd.f32 %v1438, %v1439
    %v1441 = vrot.slane %v1440, 4
    %v1442 = vadd.f32 %v1440, %v1441
    %v1443 = vrot.slane %v1442, 2
    %v1444 = vadd.f32 %v1442, %v1443
    %v1445 = vrot.slane %v1444, 1
    %v1446 = vadd.f32 %v1444, %v1445
    %1463 = vrot.lane.b32.xlu0 %v1251, 122
    %v1464 = vpop.permute.xlu0 %1463
    %1465 = vrot.lane.b32.xlu0 %v1264, 122
    %v1466 = vpop.permute.xlu0 %1465
    %1467 = vrot.lane.b32.xlu0 %v1277, 122
    %v1468 = vpop.permute.xlu0 %1467
    %1469 = vrot.lane.b32.xlu0 %v1290, 122
    %v1470 = vpop.permute.xlu0 %1469
    %1471 = vrot.lane.b32.xlu0 %v1303, 122
    %v1472 = vpop.permute.xlu0 %1471
    %1473 = vrot.lane.b32.xlu0 %v1316, 122
    %v1474 = vpop.permute.xlu0 %1473
    %1475 = vrot.lane.b32.xlu0 %v1329, 122
    %v1476 = vpop.permute.xlu0 %1475
    %1477 = vrot.lane.b32.xlu0 %v1342, 122
    %v1478 = vpop.permute.xlu0 %1477
    %1479 = vrot.lane.b32.xlu0 %v1355, 122
    %v1480 = vpop.permute.xlu0 %1479
    %1481 = vrot.lane.b32.xlu0 %v1368, 122
    %v1482 = vpop.permute.xlu0 %1481
    %1483 = vrot.lane.b32.xlu0 %v1381, 122
    %v1484 = vpop.permute.xlu0 %1483
    %1485 = vrot.lane.b32.xlu0 %v1394, 122
    %v1486 = vpop.permute.xlu0 %1485
    %1487 = vrot.lane.b32.xlu0 %v1407, 122
    %v1488 = vpop.permute.xlu0 %1487
    %1489 = vrot.lane.b32.xlu0 %v1420, 122
    %v1490 = vpop.permute.xlu0 %1489
    %1491 = vrot.lane.b32.xlu0 %v1433, 122
    %v1492 = vpop.permute.xlu0 %1491
    %1493 = vrot.lane.b32.xlu0 %v1446, 122
    %v1494 = vpop.permute.xlu0 %1493
    %v1511 = vadd.f32 %v769, %v1464
    %v1512 = vadd.f32 %v782, %v1466
    %v1513 = vadd.f32 %v795, %v1468
    %v1514 = vadd.f32 %v808, %v1470
    %v1515 = vadd.f32 %v821, %v1472
    %v1516 = vadd.f32 %v834, %v1474
    %v1517 = vadd.f32 %v847, %v1476
    %v1518 = vadd.f32 %v860, %v1478
    %v1519 = vadd.f32 %v873, %v1480
    %v1520 = vadd.f32 %v886, %v1482
    %v1521 = vadd.f32 %v899, %v1484
    %v1522 = vadd.f32 %v912, %v1486
    %v1523 = vadd.f32 %v925, %v1488
    %v1524 = vadd.f32 %v938, %v1490
    %v1525 = vadd.f32 %v951, %v1492
    %v1526 = vadd.f32 %v964, %v1494
    %vm1527 = vcmask 1045504
    %v1528 = vrot.slane %v398, 2
    %v1529 = vrot.slane %v403, 2
    %v1530 = vsel %vm1527, %v1528, %v1529
    %v1531 = vrot.slane %v408, 2
    %v1532 = vsel %vm1527, %v1529, %v1531
    %v1533 = vrot.slane %v413, 2
    %v1534 = vsel %vm1527, %v1531, %v1533
    %v1535 = vrot.slane %v418, 2
    %v1536 = vsel %vm1527, %v1533, %v1535
    %v1537 = vrot.slane %v423, 2
    %v1538 = vsel %vm1527, %v1535, %v1537
    %v1539 = vrot.slane %v428, 2
    %v1540 = vsel %vm1527, %v1537, %v1539
    %v1541 = vrot.slane %v433, 2
    %v1542 = vsel %vm1527, %v1539, %v1541
    %v1543 = vrot.slane %v438, 2
    %v1544 = vsel %vm1527, %v1541, %v1543
    %v1545 = vrot.slane %v443, 2
    %v1546 = vrot.slane %v448, 2
    %v1547 = vsel %vm1527, %v1545, %v1546
    %v1548 = vrot.slane %v453, 2
    %v1549 = vsel %vm1527, %v1546, %v1548
    %v1550 = vrot.slane %v458, 2
    %v1551 = vsel %vm1527, %v1548, %v1550
    %v1552 = vrot.slane %v463, 2
    %v1553 = vsel %vm1527, %v1550, %v1552
    %v1554 = vrot.slane %v468, 2
    %v1555 = vsel %vm1527, %v1552, %v1554
    %v1556 = vrot.slane %v473, 2
    %v1557 = vsel %vm1527, %v1554, %v1556
    %v1558 = vrot.slane %v478, 2
    %v1559 = vsel %vm1527, %v1556, %v1558
    %v1560 = vrot.slane %v483, 2
    %v1561 = vsel %vm1527, %v1558, %v1560
    %v1562 = vrot.slane %v488, 2
    %v1563 = vrot.slane %v493, 2
    %v1564 = vsel %vm1527, %v1562, %v1563
    %v1565 = vrot.slane %v498, 2
    %v1566 = vsel %vm1527, %v1563, %v1565
    %v1567 = vrot.slane %v503, 2
    %v1568 = vsel %vm1527, %v1565, %v1567
    %v1569 = vrot.slane %v508, 2
    %v1570 = vsel %vm1527, %v1567, %v1569
    %v1571 = vrot.slane %v513, 2
    %v1572 = vsel %vm1527, %v1569, %v1571
    %v1573 = vrot.slane %v518, 2
    %v1574 = vsel %vm1527, %v1571, %v1573
    %v1575 = vrot.slane %v523, 2
    %v1576 = vsel %vm1527, %v1573, %v1575
    %v1577 = vrot.slane %v528, 2
    %v1578 = vsel %vm1527, %v1575, %v1577
    %v1579 = vrot.slane %v533, 2
    %v1580 = vrot.slane %v538, 2
    %v1581 = vsel %vm1527, %v1579, %v1580
    %v1582 = vrot.slane %v543, 2
    %v1583 = vsel %vm1527, %v1580, %v1582
    %v1584 = vrot.slane %v548, 2
    %v1585 = vsel %vm1527, %v1582, %v1584
    %v1586 = vrot.slane %v553, 2
    %v1587 = vsel %vm1527, %v1584, %v1586
    %v1588 = vrot.slane %v558, 2
    %v1589 = vsel %vm1527, %v1586, %v1588
    %v1590 = vrot.slane %v563, 2
    %v1591 = vsel %vm1527, %v1588, %v1590
    %v1592 = vrot.slane %v568, 2
    %v1593 = vsel %vm1527, %v1590, %v1592
    %v1594 = vrot.slane %v573, 2
    %v1595 = vsel %vm1527, %v1592, %v1594
    %v1596 = vrot.slane %v578, 2
    %v1597 = vrot.slane %v583, 2
    %v1598 = vsel %vm1527, %v1596, %v1597
    %v1599 = vrot.slane %v588, 2
    %v1600 = vsel %vm1527, %v1597, %v1599
    %v1601 = vrot.slane %v593, 2
    %v1602 = vsel %vm1527, %v1599, %v1601
    %v1603 = vrot.slane %v598, 2
    %v1604 = vsel %vm1527, %v1601, %v1603
    %v1605 = vrot.slane %v603, 2
    %v1606 = vsel %vm1527, %v1603, %v1605
    %v1607 = vrot.slane %v608, 2
    %v1608 = vsel %vm1527, %v1605, %v1607
    %v1609 = vrot.slane %v613, 2
    %v1610 = vsel %vm1527, %v1607, %v1609
    %v1611 = vrot.slane %v618, 2
    %v1612 = vsel %vm1527, %v1609, %v1611
    %v1613 = vrot.slane %v623, 2
    %v1614 = vrot.slane %v628, 2
    %v1615 = vsel %vm1527, %v1613, %v1614
    %v1616 = vrot.slane %v633, 2
    %v1617 = vsel %vm1527, %v1614, %v1616
    %v1618 = vrot.slane %v638, 2
    %v1619 = vsel %vm1527, %v1616, %v1618
    %v1620 = vrot.slane %v643, 2
    %v1621 = vsel %vm1527, %v1618, %v1620
    %v1622 = vrot.slane %v648, 2
    %v1623 = vsel %vm1527, %v1620, %v1622
    %v1624 = vrot.slane %v653, 2
    %v1625 = vsel %vm1527, %v1622, %v1624
    %v1626 = vrot.slane %v658, 2
    %v1627 = vsel %vm1527, %v1624, %v1626
    %v1628 = vrot.slane %v663, 2
    %v1629 = vsel %vm1527, %v1626, %v1628
    %v1630 = vrot.slane %v668, 2
    %v1631 = vrot.slane %v673, 2
    %v1632 = vsel %vm1527, %v1630, %v1631
    %v1633 = vrot.slane %v678, 2
    %v1634 = vsel %vm1527, %v1631, %v1633
    %v1635 = vrot.slane %v683, 2
    %v1636 = vsel %vm1527, %v1633, %v1635
    %v1637 = vrot.slane %v688, 2
    %v1638 = vsel %vm1527, %v1635, %v1637
    %v1639 = vrot.slane %v693, 2
    %v1640 = vsel %vm1527, %v1637, %v1639
    %v1641 = vrot.slane %v698, 2
    %v1642 = vsel %vm1527, %v1639, %v1641
    %v1643 = vrot.slane %v703, 2
    %v1644 = vsel %vm1527, %v1641, %v1643
    %v1645 = vrot.slane %v708, 2
    %v1646 = vsel %vm1527, %v1643, %v1645
    %v1647 = vrot.slane %v713, 2
    %v1648 = vrot.slane %v718, 2
    %v1649 = vsel %vm1527, %v1647, %v1648
    %v1650 = vrot.slane %v723, 2
    %v1651 = vsel %vm1527, %v1648, %v1650
    %v1652 = vrot.slane %v728, 2
    %v1653 = vsel %vm1527, %v1650, %v1652
    %v1654 = vrot.slane %v733, 2
    %v1655 = vsel %vm1527, %v1652, %v1654
    %v1656 = vrot.slane %v738, 2
    %v1657 = vsel %vm1527, %v1654, %v1656
    %v1658 = vrot.slane %v743, 2
    %v1659 = vsel %vm1527, %v1656, %v1658
    %v1660 = vrot.slane %v748, 2
    %v1661 = vsel %vm1527, %v1658, %v1660
    %v1662 = vrot.slane %v753, 2
    %v1663 = vsel %vm1527, %v1660, %v1662
    %vm1728 = vcmask 146528
    %v1729 = vsel %vm1728, %v1530, 0.0
    %v1730 = vsel %vm1728, %v1532, 0.0
    %v1731 = vadd.f32 %v1729, %v1730
    %v1732 = vsel %vm1728, %v1534, 0.0
    %v1733 = vadd.f32 %v1731, %v1732
    %v1734 = vsel %vm1728, %v1536, 0.0
    %v1735 = vadd.f32 %v1733, %v1734
    %v1736 = vrot.slane %v1735, 4
    %v1737 = vadd.f32 %v1735, %v1736
    %v1738 = vrot.slane %v1737, 2
    %v1739 = vadd.f32 %v1737, %v1738
    %v1740 = vrot.slane %v1739, 1
    %v1741 = vadd.f32 %v1739, %v1740
    %v1742 = vsel %vm1728, %v1538, 0.0
    %v1743 = vsel %vm1728, %v1540, 0.0
    %v1744 = vadd.f32 %v1742, %v1743
    %v1745 = vsel %vm1728, %v1542, 0.0
    %v1746 = vadd.f32 %v1744, %v1745
    %v1747 = vsel %vm1728, %v1544, 0.0
    %v1748 = vadd.f32 %v1746, %v1747
    %v1749 = vrot.slane %v1748, 4
    %v1750 = vadd.f32 %v1748, %v1749
    %v1751 = vrot.slane %v1750, 2
    %v1752 = vadd.f32 %v1750, %v1751
    %v1753 = vrot.slane %v1752, 1
    %v1754 = vadd.f32 %v1752, %v1753
    %v1755 = vsel %vm1728, %v1547, 0.0
    %v1756 = vsel %vm1728, %v1549, 0.0
    %v1757 = vadd.f32 %v1755, %v1756
    %v1758 = vsel %vm1728, %v1551, 0.0
    %v1759 = vadd.f32 %v1757, %v1758
    %v1760 = vsel %vm1728, %v1553, 0.0
    %v1761 = vadd.f32 %v1759, %v1760
    %v1762 = vrot.slane %v1761, 4
    %v1763 = vadd.f32 %v1761, %v1762
    %v1764 = vrot.slane %v1763, 2
    %v1765 = vadd.f32 %v1763, %v1764
    %v1766 = vrot.slane %v1765, 1
    %v1767 = vadd.f32 %v1765, %v1766
    %v1768 = vsel %vm1728, %v1555, 0.0
    %v1769 = vsel %vm1728, %v1557, 0.0
    %v1770 = vadd.f32 %v1768, %v1769
    %v1771 = vsel %vm1728, %v1559, 0.0
    %v1772 = vadd.f32 %v1770, %v1771
    %v1773 = vsel %vm1728, %v1561, 0.0
    %v1774 = vadd.f32 %v1772, %v1773
    %v1775 = vrot.slane %v1774, 4
    %v1776 = vadd.f32 %v1774, %v1775
    %v1777 = vrot.slane %v1776, 2
    %v1778 = vadd.f32 %v1776, %v1777
    %v1779 = vrot.slane %v1778, 1
    %v1780 = vadd.f32 %v1778, %v1779
    %v1781 = vsel %vm1728, %v1564, 0.0
    %v1782 = vsel %vm1728, %v1566, 0.0
    %v1783 = vadd.f32 %v1781, %v1782
    %v1784 = vsel %vm1728, %v1568, 0.0
    %v1785 = vadd.f32 %v1783, %v1784
    %v1786 = vsel %vm1728, %v1570, 0.0
    %v1787 = vadd.f32 %v1785, %v1786
    %v1788 = vrot.slane %v1787, 4
    %v1789 = vadd.f32 %v1787, %v1788
    %v1790 = vrot.slane %v1789, 2
    %v1791 = vadd.f32 %v1789, %v1790
    %v1792 = vrot.slane %v1791, 1
    %v1793 = vadd.f32 %v1791, %v1792
    %v1794 = vsel %vm1728, %v1572, 0.0
    %v1795 = vsel %vm1728, %v1574, 0.0
    %v1796 = vadd.f32 %v1794, %v1795
    %v1797 = vsel %vm1728, %v1576, 0.0
    %v1798 = vadd.f32 %v1796, %v1797
    %v1799 = vsel %vm1728, %v1578, 0.0
    %v1800 = vadd.f32 %v1798, %v1799
    %v1801 = vrot.slane %v1800, 4
    %v1802 = vadd.f32 %v1800, %v1801
    %v1803 = vrot.slane %v1802, 2
    %v1804 = vadd.f32 %v1802, %v1803
    %v1805 = vrot.slane %v1804, 1
    %v1806 = vadd.f32 %v1804, %v1805
    %v1807 = vsel %vm1728, %v1581, 0.0
    %v1808 = vsel %vm1728, %v1583, 0.0
    %v1809 = vadd.f32 %v1807, %v1808
    %v1810 = vsel %vm1728, %v1585, 0.0
    %v1811 = vadd.f32 %v1809, %v1810
    %v1812 = vsel %vm1728, %v1587, 0.0
    %v1813 = vadd.f32 %v1811, %v1812
    %v1814 = vrot.slane %v1813, 4
    %v1815 = vadd.f32 %v1813, %v1814
    %v1816 = vrot.slane %v1815, 2
    %v1817 = vadd.f32 %v1815, %v1816
    %v1818 = vrot.slane %v1817, 1
    %v1819 = vadd.f32 %v1817, %v1818
    %v1820 = vsel %vm1728, %v1589, 0.0
    %v1821 = vsel %vm1728, %v1591, 0.0
    %v1822 = vadd.f32 %v1820, %v1821
    %v1823 = vsel %vm1728, %v1593, 0.0
    %v1824 = vadd.f32 %v1822, %v1823
    %v1825 = vsel %vm1728, %v1595, 0.0
    %v1826 = vadd.f32 %v1824, %v1825
    %v1827 = vrot.slane %v1826, 4
    %v1828 = vadd.f32 %v1826, %v1827
    %v1829 = vrot.slane %v1828, 2
    %v1830 = vadd.f32 %v1828, %v1829
    %v1831 = vrot.slane %v1830, 1
    %v1832 = vadd.f32 %v1830, %v1831
    %v1833 = vsel %vm1728, %v1598, 0.0
    %v1834 = vsel %vm1728, %v1600, 0.0
    %v1835 = vadd.f32 %v1833, %v1834
    %v1836 = vsel %vm1728, %v1602, 0.0
    %v1837 = vadd.f32 %v1835, %v1836
    %v1838 = vsel %vm1728, %v1604, 0.0
    %v1839 = vadd.f32 %v1837, %v1838
    %v1840 = vrot.slane %v1839, 4
    %v1841 = vadd.f32 %v1839, %v1840
    %v1842 = vrot.slane %v1841, 2
    %v1843 = vadd.f32 %v1841, %v1842
    %v1844 = vrot.slane %v1843, 1
    %v1845 = vadd.f32 %v1843, %v1844
    %v1846 = vsel %vm1728, %v1606, 0.0
    %v1847 = vsel %vm1728, %v1608, 0.0
    %v1848 = vadd.f32 %v1846, %v1847
    %v1849 = vsel %vm1728, %v1610, 0.0
    %v1850 = vadd.f32 %v1848, %v1849
    %v1851 = vsel %vm1728, %v1612, 0.0
    %v1852 = vadd.f32 %v1850, %v1851
    %v1853 = vrot.slane %v1852, 4
    %v1854 = vadd.f32 %v1852, %v1853
    %v1855 = vrot.slane %v1854, 2
    %v1856 = vadd.f32 %v1854, %v1855
    %v1857 = vrot.slane %v1856, 1
    %v1858 = vadd.f32 %v1856, %v1857
    %v1859 = vsel %vm1728, %v1615, 0.0
    %v1860 = vsel %vm1728, %v1617, 0.0
    %v1861 = vadd.f32 %v1859, %v1860
    %v1862 = vsel %vm1728, %v1619, 0.0
    %v1863 = vadd.f32 %v1861, %v1862
    %v1864 = vsel %vm1728, %v1621, 0.0
    %v1865 = vadd.f32 %v1863, %v1864
    %v1866 = vrot.slane %v1865, 4
    %v1867 = vadd.f32 %v1865, %v1866
    %v1868 = vrot.slane %v1867, 2
    %v1869 = vadd.f32 %v1867, %v1868
    %v1870 = vrot.slane %v1869, 1
    %v1871 = vadd.f32 %v1869, %v1870
    %v1872 = vsel %vm1728, %v1623, 0.0
    %v1873 = vsel %vm1728, %v1625, 0.0
    %v1874 = vadd.f32 %v1872, %v1873
    %v1875 = vsel %vm1728, %v1627, 0.0
    %v1876 = vadd.f32 %v1874, %v1875
    %v1877 = vsel %vm1728, %v1629, 0.0
    %v1878 = vadd.f32 %v1876, %v1877
    %v1879 = vrot.slane %v1878, 4
    %v1880 = vadd.f32 %v1878, %v1879
    %v1881 = vrot.slane %v1880, 2
    %v1882 = vadd.f32 %v1880, %v1881
    %v1883 = vrot.slane %v1882, 1
    %v1884 = vadd.f32 %v1882, %v1883
    %v1885 = vsel %vm1728, %v1632, 0.0
    %v1886 = vsel %vm1728, %v1634, 0.0
    %v1887 = vadd.f32 %v1885, %v1886
    %v1888 = vsel %vm1728, %v1636, 0.0
    %v1889 = vadd.f32 %v1887, %v1888
    %v1890 = vsel %vm1728, %v1638, 0.0
    %v1891 = vadd.f32 %v1889, %v1890
    %v1892 = vrot.slane %v1891, 4
    %v1893 = vadd.f32 %v1891, %v1892
    %v1894 = vrot.slane %v1893, 2
    %v1895 = vadd.f32 %v1893, %v1894
    %v1896 = vrot.slane %v1895, 1
    %v1897 = vadd.f32 %v1895, %v1896
    %v1898 = vsel %vm1728, %v1640, 0.0
    %v1899 = vsel %vm1728, %v1642, 0.0
    %v1900 = vadd.f32 %v1898, %v1899
    %v1901 = vsel %vm1728, %v1644, 0.0
    %v1902 = vadd.f32 %v1900, %v1901
    %v1903 = vsel %vm1728, %v1646, 0.0
    %v1904 = vadd.f32 %v1902, %v1903
    %v1905 = vrot.slane %v1904, 4
    %v1906 = vadd.f32 %v1904, %v1905
    %v1907 = vrot.slane %v1906, 2
    %v1908 = vadd.f32 %v1906, %v1907
    %v1909 = vrot.slane %v1908, 1
    %v1910 = vadd.f32 %v1908, %v1909
    %v1911 = vsel %vm1728, %v1649, 0.0
    %v1912 = vsel %vm1728, %v1651, 0.0
    %v1913 = vadd.f32 %v1911, %v1912
    %v1914 = vsel %vm1728, %v1653, 0.0
    %v1915 = vadd.f32 %v1913, %v1914
    %v1916 = vsel %vm1728, %v1655, 0.0
    %v1917 = vadd.f32 %v1915, %v1916
    %v1918 = vrot.slane %v1917, 4
    %v1919 = vadd.f32 %v1917, %v1918
    %v1920 = vrot.slane %v1919, 2
    %v1921 = vadd.f32 %v1919, %v1920
    %v1922 = vrot.slane %v1921, 1
    %v1923 = vadd.f32 %v1921, %v1922
    %v1924 = vsel %vm1728, %v1657, 0.0
    %v1925 = vsel %vm1728, %v1659, 0.0
    %v1926 = vadd.f32 %v1924, %v1925
    %v1927 = vsel %vm1728, %v1661, 0.0
    %v1928 = vadd.f32 %v1926, %v1927
    %v1929 = vsel %vm1728, %v1663, 0.0
    %v1930 = vadd.f32 %v1928, %v1929
    %v1931 = vrot.slane %v1930, 4
    %v1932 = vadd.f32 %v1930, %v1931
    %v1933 = vrot.slane %v1932, 2
    %v1934 = vadd.f32 %v1932, %v1933
    %v1935 = vrot.slane %v1934, 1
    %v1936 = vadd.f32 %v1934, %v1935
    %1953 = vrot.lane.b32.xlu0 %v1741, 116
    %v1954 = vpop.permute.xlu0 %1953
    %1955 = vrot.lane.b32.xlu0 %v1754, 116
    %v1956 = vpop.permute.xlu0 %1955
    %1957 = vrot.lane.b32.xlu0 %v1767, 116
    %v1958 = vpop.permute.xlu0 %1957
    %1959 = vrot.lane.b32.xlu0 %v1780, 116
    %v1960 = vpop.permute.xlu0 %1959
    %1961 = vrot.lane.b32.xlu0 %v1793, 116
    %v1962 = vpop.permute.xlu0 %1961
    %1963 = vrot.lane.b32.xlu0 %v1806, 116
    %v1964 = vpop.permute.xlu0 %1963
    %1965 = vrot.lane.b32.xlu0 %v1819, 116
    %v1966 = vpop.permute.xlu0 %1965
    %1967 = vrot.lane.b32.xlu0 %v1832, 116
    %v1968 = vpop.permute.xlu0 %1967
    %1969 = vrot.lane.b32.xlu0 %v1845, 116
    %v1970 = vpop.permute.xlu0 %1969
    %1971 = vrot.lane.b32.xlu0 %v1858, 116
    %v1972 = vpop.permute.xlu0 %1971
    %1973 = vrot.lane.b32.xlu0 %v1871, 116
    %v1974 = vpop.permute.xlu0 %1973
    %1975 = vrot.lane.b32.xlu0 %v1884, 116
    %v1976 = vpop.permute.xlu0 %1975
    %1977 = vrot.lane.b32.xlu0 %v1897, 116
    %v1978 = vpop.permute.xlu0 %1977
    %1979 = vrot.lane.b32.xlu0 %v1910, 116
    %v1980 = vpop.permute.xlu0 %1979
    %1981 = vrot.lane.b32.xlu0 %v1923, 116
    %v1982 = vpop.permute.xlu0 %1981
    %1983 = vrot.lane.b32.xlu0 %v1936, 116
    %v1984 = vpop.permute.xlu0 %1983
    %v2001 = vadd.f32 %v1511, %v1954
    %v2002 = vadd.f32 %v1512, %v1956
    %v2003 = vadd.f32 %v1513, %v1958
    %v2004 = vadd.f32 %v1514, %v1960
    %v2005 = vadd.f32 %v1515, %v1962
    %v2006 = vadd.f32 %v1516, %v1964
    %v2007 = vadd.f32 %v1517, %v1966
    %v2008 = vadd.f32 %v1518, %v1968
    %v2009 = vadd.f32 %v1519, %v1970
    %v2010 = vadd.f32 %v1520, %v1972
    %v2011 = vadd.f32 %v1521, %v1974
    %v2012 = vadd.f32 %v1522, %v1976
    %v2013 = vadd.f32 %v1523, %v1978
    %v2014 = vadd.f32 %v1524, %v1980
    %v2015 = vadd.f32 %v1525, %v1982
    %v2016 = vadd.f32 %v1526, %v1984
    %v2017 = vld [vmem:[%s3] sm:$0xff]
    %v2018 = vld [vmem:[%s3 + $0x8] sm:$0xff]
    %v2019 = vld [vmem:[#allocation2] ss:$4 sm:$0xff]
    %s2020 = scalar_lea.vmem [#allocation2], 32
    %v2021 = vld [vmem:[%s2020] ss:$4 sm:$0xff]
    %s2022 = scalar_lea.vmem [#allocation2], 1
    %v2023 = vld [vmem:[%s2022] ss:$4 sm:$0xff]
    %s2024 = scalar_lea.vmem [#allocation2], 33
    %v2025 = vld [vmem:[%s2024] ss:$4 sm:$0xff]
    %s2026 = scalar_lea.vmem [#allocation2], 2
    %v2027 = vld [vmem:[%s2026] ss:$4 sm:$0xff]
    %s2028 = scalar_lea.vmem [#allocation2], 34
    %v2029 = vld [vmem:[%s2028] ss:$4 sm:$0xff]
    %2031 = vset.pattern.permute.xlu0 0
    %2032 = vperm.xlu0 %2031, %v2001
    %v2033 = vpop.permute.xlu0 %2032
    %2036 = vset.pattern.permute.xlu0 0
    %2037 = vperm.xlu0 %2036, %v2002
    %v2038 = vpop.permute.xlu0 %2037
    %2041 = vset.pattern.permute.xlu0 0
    %2042 = vperm.xlu0 %2041, %v2003
    %v2043 = vpop.permute.xlu0 %2042
    %2046 = vset.pattern.permute.xlu0 0
    %2047 = vperm.xlu0 %2046, %v2004
    %v2048 = vpop.permute.xlu0 %2047
    %2051 = vset.pattern.permute.xlu0 0
    %2052 = vperm.xlu0 %2051, %v2005
    %v2053 = vpop.permute.xlu0 %2052
    %2056 = vset.pattern.permute.xlu0 0
    %2057 = vperm.xlu0 %2056, %v2006
    %v2058 = vpop.permute.xlu0 %2057
    %2061 = vset.pattern.permute.xlu0 0
    %2062 = vperm.xlu0 %2061, %v2007
    %v2063 = vpop.permute.xlu0 %2062
    %2066 = vset.pattern.permute.xlu0 0
    %2067 = vperm.xlu0 %2066, %v2008
    %v2068 = vpop.permute.xlu0 %2067
    %2071 = vset.pattern.permute.xlu0 0
    %2072 = vperm.xlu0 %2071, %v2009
    %v2073 = vpop.permute.xlu0 %2072
    %2076 = vset.pattern.permute.xlu0 0
    %2077 = vperm.xlu0 %2076, %v2010
    %v2078 = vpop.permute.xlu0 %2077
    %2081 = vset.pattern.permute.xlu0 0
    %2082 = vperm.xlu0 %2081, %v2011
    %v2083 = vpop.permute.xlu0 %2082
    %2086 = vset.pattern.permute.xlu0 0
    %2087 = vperm.xlu0 %2086, %v2012
    %v2088 = vpop.permute.xlu0 %2087
    %2091 = vset.pattern.permute.xlu0 0
    %2092 = vperm.xlu0 %2091, %v2013
    %v2093 = vpop.permute.xlu0 %2092
    %2096 = vset.pattern.permute.xlu0 0
    %2097 = vperm.xlu0 %2096, %v2014
    %v2098 = vpop.permute.xlu0 %2097
    %2101 = vset.pattern.permute.xlu0 0
    %2102 = vperm.xlu0 %2101, %v2015
    %v2103 = vpop.permute.xlu0 %2102
    %2106 = vset.pattern.permute.xlu0 0
    %2107 = vperm.xlu0 %2106, %v2016
    %v2108 = vpop.permute.xlu0 %2107
    %v2112 = vlaneseq
    %v2113 = vshrl.u32 %v2112, 7
    %v2114 = vsub.s32 0, %v2113
    %v2115 = vrot.slane %v2019, %v2114
    %v2116 = vlaneseq
    %v2117 = vshrl.u32 %v2116, 7
    %v2118 = vsub.s32 1, %v2117
    %v2119 = vrot.slane %v2019, %v2118
    %v2120 = vlaneseq
    %v2121 = vshrl.u32 %v2120, 7
    %v2122 = vsub.s32 2, %v2121
    %v2123 = vrot.slane %v2019, %v2122
    %v2124 = vlaneseq
    %v2125 = vshrl.u32 %v2124, 7
    %v2126 = vsub.s32 3, %v2125
    %v2127 = vrot.slane %v2019, %v2126
    %v2128 = vlaneseq
    %v2129 = vshrl.u32 %v2128, 7
    %v2130 = vsub.s32 4, %v2129
    %v2131 = vrot.slane %v2019, %v2130
    %v2132 = vlaneseq
    %v2133 = vshrl.u32 %v2132, 7
    %v2134 = vsub.s32 5, %v2133
    %v2135 = vrot.slane %v2019, %v2134
    %v2136 = vlaneseq
    %v2137 = vshrl.u32 %v2136, 7
    %v2138 = vsub.s32 6, %v2137
    %v2139 = vrot.slane %v2019, %v2138
    %v2140 = vlaneseq
    %v2141 = vshrl.u32 %v2140, 7
    %v2142 = vsub.s32 7, %v2141
    %v2143 = vrot.slane %v2019, %v2142
    %v2144 = vlaneseq
    %v2145 = vshrl.u32 %v2144, 7
    %v2146 = vsub.s32 0, %v2145
    %v2147 = vrot.slane %v2021, %v2146
    %v2148 = vlaneseq
    %v2149 = vshrl.u32 %v2148, 7
    %v2150 = vsub.s32 1, %v2149
    %v2151 = vrot.slane %v2021, %v2150
    %v2152 = vlaneseq
    %v2153 = vshrl.u32 %v2152, 7
    %v2154 = vsub.s32 2, %v2153
    %v2155 = vrot.slane %v2021, %v2154
    %v2156 = vlaneseq
    %v2157 = vshrl.u32 %v2156, 7
    %v2158 = vsub.s32 3, %v2157
    %v2159 = vrot.slane %v2021, %v2158
    %v2160 = vlaneseq
    %v2161 = vshrl.u32 %v2160, 7
    %v2162 = vsub.s32 4, %v2161
    %v2163 = vrot.slane %v2021, %v2162
    %v2164 = vlaneseq
    %v2165 = vshrl.u32 %v2164, 7
    %v2166 = vsub.s32 5, %v2165
    %v2167 = vrot.slane %v2021, %v2166
    %v2168 = vlaneseq
    %v2169 = vshrl.u32 %v2168, 7
    %v2170 = vsub.s32 6, %v2169
    %v2171 = vrot.slane %v2021, %v2170
    %v2172 = vlaneseq
    %v2173 = vshrl.u32 %v2172, 7
    %v2174 = vsub.s32 7, %v2173
    %v2175 = vrot.slane %v2021, %v2174
    %v2192 = vmul.f32 %v2033, %v2115
    %v2193 = vmul.f32 %v2033, %v2119
    %v2194 = vmul.f32 %v2033, %v2123
    %v2195 = vmul.f32 %v2033, %v2127
    %v2196 = vmul.f32 %v2033, %v2131
    %v2197 = vmul.f32 %v2033, %v2135
    %v2198 = vmul.f32 %v2033, %v2139
    %v2199 = vmul.f32 %v2033, %v2143
    %v2200 = vmul.f32 %v2033, %v2147
    %v2201 = vmul.f32 %v2033, %v2151
    %v2202 = vmul.f32 %v2033, %v2155
    %v2203 = vmul.f32 %v2033, %v2159
    %v2204 = vmul.f32 %v2033, %v2163
    %v2205 = vmul.f32 %v2033, %v2167
    %v2206 = vmul.f32 %v2033, %v2171
    %v2207 = vmul.f32 %v2033, %v2175
    %v2208 = vmul.f32 %v2038, %v2115
    %v2209 = vmul.f32 %v2038, %v2119
    %v2210 = vmul.f32 %v2038, %v2123
    %v2211 = vmul.f32 %v2038, %v2127
    %v2212 = vmul.f32 %v2038, %v2131
    %v2213 = vmul.f32 %v2038, %v2135
    %v2214 = vmul.f32 %v2038, %v2139
    %v2215 = vmul.f32 %v2038, %v2143
    %v2216 = vmul.f32 %v2038, %v2147
    %v2217 = vmul.f32 %v2038, %v2151
    %v2218 = vmul.f32 %v2038, %v2155
    %v2219 = vmul.f32 %v2038, %v2159
    %v2220 = vmul.f32 %v2038, %v2163
    %v2221 = vmul.f32 %v2038, %v2167
    %v2222 = vmul.f32 %v2038, %v2171
    %v2223 = vmul.f32 %v2038, %v2175
    %v2224 = vmul.f32 %v2043, %v2115
    %v2225 = vmul.f32 %v2043, %v2119
    %v2226 = vmul.f32 %v2043, %v2123
    %v2227 = vmul.f32 %v2043, %v2127
    %v2228 = vmul.f32 %v2043, %v2131
    %v2229 = vmul.f32 %v2043, %v2135
    %v2230 = vmul.f32 %v2043, %v2139
    %v2231 = vmul.f32 %v2043, %v2143
    %v2232 = vmul.f32 %v2043, %v2147
    %v2233 = vmul.f32 %v2043, %v2151
    %v2234 = vmul.f32 %v2043, %v2155
    %v2235 = vmul.f32 %v2043, %v2159
    %v2236 = vmul.f32 %v2043, %v2163
    %v2237 = vmul.f32 %v2043, %v2167
    %v2238 = vmul.f32 %v2043, %v2171
    %v2239 = vmul.f32 %v2043, %v2175
    %v2240 = vmul.f32 %v2048, %v2115
    %v2241 = vmul.f32 %v2048, %v2119
    %v2242 = vmul.f32 %v2048, %v2123
    %v2243 = vmul.f32 %v2048, %v2127
    %v2244 = vmul.f32 %v2048, %v2131
    %v2245 = vmul.f32 %v2048, %v2135
    %v2246 = vmul.f32 %v2048, %v2139
    %v2247 = vmul.f32 %v2048, %v2143
    %v2248 = vmul.f32 %v2048, %v2147
    %v2249 = vmul.f32 %v2048, %v2151
    %v2250 = vmul.f32 %v2048, %v2155
    %v2251 = vmul.f32 %v2048, %v2159
    %v2252 = vmul.f32 %v2048, %v2163
    %v2253 = vmul.f32 %v2048, %v2167
    %v2254 = vmul.f32 %v2048, %v2171
    %v2255 = vmul.f32 %v2048, %v2175
    %v2256 = vmul.f32 %v2053, %v2115
    %v2257 = vmul.f32 %v2053, %v2119
    %v2258 = vmul.f32 %v2053, %v2123
    %v2259 = vmul.f32 %v2053, %v2127
    %v2260 = vmul.f32 %v2053, %v2131
    %v2261 = vmul.f32 %v2053, %v2135
    %v2262 = vmul.f32 %v2053, %v2139
    %v2263 = vmul.f32 %v2053, %v2143
    %v2264 = vmul.f32 %v2053, %v2147
    %v2265 = vmul.f32 %v2053, %v2151
    %v2266 = vmul.f32 %v2053, %v2155
    %v2267 = vmul.f32 %v2053, %v2159
    %v2268 = vmul.f32 %v2053, %v2163
    %v2269 = vmul.f32 %v2053, %v2167
    %v2270 = vmul.f32 %v2053, %v2171
    %v2271 = vmul.f32 %v2053, %v2175
    %v2272 = vmul.f32 %v2058, %v2115
    %v2273 = vmul.f32 %v2058, %v2119
    %v2274 = vmul.f32 %v2058, %v2123
    %v2275 = vmul.f32 %v2058, %v2127
    %v2276 = vmul.f32 %v2058, %v2131
    %v2277 = vmul.f32 %v2058, %v2135
    %v2278 = vmul.f32 %v2058, %v2139
    %v2279 = vmul.f32 %v2058, %v2143
    %v2280 = vmul.f32 %v2058, %v2147
    %v2281 = vmul.f32 %v2058, %v2151
    %v2282 = vmul.f32 %v2058, %v2155
    %v2283 = vmul.f32 %v2058, %v2159
    %v2284 = vmul.f32 %v2058, %v2163
    %v2285 = vmul.f32 %v2058, %v2167
    %v2286 = vmul.f32 %v2058, %v2171
    %v2287 = vmul.f32 %v2058, %v2175
    %v2288 = vmul.f32 %v2063, %v2115
    %v2289 = vmul.f32 %v2063, %v2119
    %v2290 = vmul.f32 %v2063, %v2123
    %v2291 = vmul.f32 %v2063, %v2127
    %v2292 = vmul.f32 %v2063, %v2131
    %v2293 = vmul.f32 %v2063, %v2135
    %v2294 = vmul.f32 %v2063, %v2139
    %v2295 = vmul.f32 %v2063, %v2143
    %v2296 = vmul.f32 %v2063, %v2147
    %v2297 = vmul.f32 %v2063, %v2151
    %v2298 = vmul.f32 %v2063, %v2155
    %v2299 = vmul.f32 %v2063, %v2159
    %v2300 = vmul.f32 %v2063, %v2163
    %v2301 = vmul.f32 %v2063, %v2167
    %v2302 = vmul.f32 %v2063, %v2171
    %v2303 = vmul.f32 %v2063, %v2175
    %v2304 = vmul.f32 %v2068, %v2115
    %v2305 = vmul.f32 %v2068, %v2119
    %v2306 = vmul.f32 %v2068, %v2123
    %v2307 = vmul.f32 %v2068, %v2127
    %v2308 = vmul.f32 %v2068, %v2131
    %v2309 = vmul.f32 %v2068, %v2135
    %v2310 = vmul.f32 %v2068, %v2139
    %v2311 = vmul.f32 %v2068, %v2143
    %v2312 = vmul.f32 %v2068, %v2147
    %v2313 = vmul.f32 %v2068, %v2151
    %v2314 = vmul.f32 %v2068, %v2155
    %v2315 = vmul.f32 %v2068, %v2159
    %v2316 = vmul.f32 %v2068, %v2163
    %v2317 = vmul.f32 %v2068, %v2167
    %v2318 = vmul.f32 %v2068, %v2171
    %v2319 = vmul.f32 %v2068, %v2175
    %v2320 = vmul.f32 %v2073, %v2115
    %v2321 = vmul.f32 %v2073, %v2119
    %v2322 = vmul.f32 %v2073, %v2123
    %v2323 = vmul.f32 %v2073, %v2127
    %v2324 = vmul.f32 %v2073, %v2131
    %v2325 = vmul.f32 %v2073, %v2135
    %v2326 = vmul.f32 %v2073, %v2139
    %v2327 = vmul.f32 %v2073, %v2143
    %v2328 = vmul.f32 %v2073, %v2147
    %v2329 = vmul.f32 %v2073, %v2151
    %v2330 = vmul.f32 %v2073, %v2155
    %v2331 = vmul.f32 %v2073, %v2159
    %v2332 = vmul.f32 %v2073, %v2163
    %v2333 = vmul.f32 %v2073, %v2167
    %v2334 = vmul.f32 %v2073, %v2171
    %v2335 = vmul.f32 %v2073, %v2175
    %v2336 = vmul.f32 %v2078, %v2115
    %v2337 = vmul.f32 %v2078, %v2119
    %v2338 = vmul.f32 %v2078, %v2123
    %v2339 = vmul.f32 %v2078, %v2127
    %v2340 = vmul.f32 %v2078, %v2131
    %v2341 = vmul.f32 %v2078, %v2135
    %v2342 = vmul.f32 %v2078, %v2139
    %v2343 = vmul.f32 %v2078, %v2143
    %v2344 = vmul.f32 %v2078, %v2147
    %v2345 = vmul.f32 %v2078, %v2151
    %v2346 = vmul.f32 %v2078, %v2155
    %v2347 = vmul.f32 %v2078, %v2159
    %v2348 = vmul.f32 %v2078, %v2163
    %v2349 = vmul.f32 %v2078, %v2167
    %v2350 = vmul.f32 %v2078, %v2171
    %v2351 = vmul.f32 %v2078, %v2175
    %v2352 = vmul.f32 %v2083, %v2115
    %v2353 = vmul.f32 %v2083, %v2119
    %v2354 = vmul.f32 %v2083, %v2123
    %v2355 = vmul.f32 %v2083, %v2127
    %v2356 = vmul.f32 %v2083, %v2131
    %v2357 = vmul.f32 %v2083, %v2135
    %v2358 = vmul.f32 %v2083, %v2139
    %v2359 = vmul.f32 %v2083, %v2143
    %v2360 = vmul.f32 %v2083, %v2147
    %v2361 = vmul.f32 %v2083, %v2151
    %v2362 = vmul.f32 %v2083, %v2155
    %v2363 = vmul.f32 %v2083, %v2159
    %v2364 = vmul.f32 %v2083, %v2163
    %v2365 = vmul.f32 %v2083, %v2167
    %v2366 = vmul.f32 %v2083, %v2171
    %v2367 = vmul.f32 %v2083, %v2175
    %v2368 = vmul.f32 %v2088, %v2115
    %v2369 = vmul.f32 %v2088, %v2119
    %v2370 = vmul.f32 %v2088, %v2123
    %v2371 = vmul.f32 %v2088, %v2127
    %v2372 = vmul.f32 %v2088, %v2131
    %v2373 = vmul.f32 %v2088, %v2135
    %v2374 = vmul.f32 %v2088, %v2139
    %v2375 = vmul.f32 %v2088, %v2143
    %v2376 = vmul.f32 %v2088, %v2147
    %v2377 = vmul.f32 %v2088, %v2151
    %v2378 = vmul.f32 %v2088, %v2155
    %v2379 = vmul.f32 %v2088, %v2159
    %v2380 = vmul.f32 %v2088, %v2163
    %v2381 = vmul.f32 %v2088, %v2167
    %v2382 = vmul.f32 %v2088, %v2171
    %v2383 = vmul.f32 %v2088, %v2175
    %v2384 = vmul.f32 %v2093, %v2115
    %v2385 = vmul.f32 %v2093, %v2119
    %v2386 = vmul.f32 %v2093, %v2123
    %v2387 = vmul.f32 %v2093, %v2127
    %v2388 = vmul.f32 %v2093, %v2131
    %v2389 = vmul.f32 %v2093, %v2135
    %v2390 = vmul.f32 %v2093, %v2139
    %v2391 = vmul.f32 %v2093, %v2143
    %v2392 = vmul.f32 %v2093, %v2147
    %v2393 = vmul.f32 %v2093, %v2151
    %v2394 = vmul.f32 %v2093, %v2155
    %v2395 = vmul.f32 %v2093, %v2159
    %v2396 = vmul.f32 %v2093, %v2163
    %v2397 = vmul.f32 %v2093, %v2167
    %v2398 = vmul.f32 %v2093, %v2171
    %v2399 = vmul.f32 %v2093, %v2175
    %v2400 = vmul.f32 %v2098, %v2115
    %v2401 = vmul.f32 %v2098, %v2119
    %v2402 = vmul.f32 %v2098, %v2123
    %v2403 = vmul.f32 %v2098, %v2127
    %v2404 = vmul.f32 %v2098, %v2131
    %v2405 = vmul.f32 %v2098, %v2135
    %v2406 = vmul.f32 %v2098, %v2139
    %v2407 = vmul.f32 %v2098, %v2143
    %v2408 = vmul.f32 %v2098, %v2147
    %v2409 = vmul.f32 %v2098, %v2151
    %v2410 = vmul.f32 %v2098, %v2155
    %v2411 = vmul.f32 %v2098, %v2159
    %v2412 = vmul.f32 %v2098, %v2163
    %v2413 = vmul.f32 %v2098, %v2167
    %v2414 = vmul.f32 %v2098, %v2171
    %v2415 = vmul.f32 %v2098, %v2175
    %v2416 = vmul.f32 %v2103, %v2115
    %v2417 = vmul.f32 %v2103, %v2119
    %v2418 = vmul.f32 %v2103, %v2123
    %v2419 = vmul.f32 %v2103, %v2127
    %v2420 = vmul.f32 %v2103, %v2131
    %v2421 = vmul.f32 %v2103, %v2135
    %v2422 = vmul.f32 %v2103, %v2139
    %v2423 = vmul.f32 %v2103, %v2143
    %v2424 = vmul.f32 %v2103, %v2147
    %v2425 = vmul.f32 %v2103, %v2151
    %v2426 = vmul.f32 %v2103, %v2155
    %v2427 = vmul.f32 %v2103, %v2159
    %v2428 = vmul.f32 %v2103, %v2163
    %v2429 = vmul.f32 %v2103, %v2167
    %v2430 = vmul.f32 %v2103, %v2171
    %v2431 = vmul.f32 %v2103, %v2175
    %v2432 = vmul.f32 %v2108, %v2115
    %v2433 = vmul.f32 %v2108, %v2119
    %v2434 = vmul.f32 %v2108, %v2123
    %v2435 = vmul.f32 %v2108, %v2127
    %v2436 = vmul.f32 %v2108, %v2131
    %v2437 = vmul.f32 %v2108, %v2135
    %v2438 = vmul.f32 %v2108, %v2139
    %v2439 = vmul.f32 %v2108, %v2143
    %v2440 = vmul.f32 %v2108, %v2147
    %v2441 = vmul.f32 %v2108, %v2151
    %v2442 = vmul.f32 %v2108, %v2155
    %v2443 = vmul.f32 %v2108, %v2159
    %v2444 = vmul.f32 %v2108, %v2163
    %v2445 = vmul.f32 %v2108, %v2167
    %v2446 = vmul.f32 %v2108, %v2171
    %v2447 = vmul.f32 %v2108, %v2175
    %v2450 = vlaneseq
    %v2451 = vshrl.u32 %v2450, 7
    %v2452 = vsub.s32 0, %v2451
    %v2453 = vrot.slane %v2017, %v2452
    %v2454 = vlaneseq
    %v2455 = vshrl.u32 %v2454, 7
    %v2456 = vsub.s32 1, %v2455
    %v2457 = vrot.slane %v2017, %v2456
    %v2458 = vlaneseq
    %v2459 = vshrl.u32 %v2458, 7
    %v2460 = vsub.s32 2, %v2459
    %v2461 = vrot.slane %v2017, %v2460
    %v2462 = vlaneseq
    %v2463 = vshrl.u32 %v2462, 7
    %v2464 = vsub.s32 3, %v2463
    %v2465 = vrot.slane %v2017, %v2464
    %v2466 = vlaneseq
    %v2467 = vshrl.u32 %v2466, 7
    %v2468 = vsub.s32 4, %v2467
    %v2469 = vrot.slane %v2017, %v2468
    %v2470 = vlaneseq
    %v2471 = vshrl.u32 %v2470, 7
    %v2472 = vsub.s32 5, %v2471
    %v2473 = vrot.slane %v2017, %v2472
    %v2474 = vlaneseq
    %v2475 = vshrl.u32 %v2474, 7
    %v2476 = vsub.s32 6, %v2475
    %v2477 = vrot.slane %v2017, %v2476
    %v2478 = vlaneseq
    %v2479 = vshrl.u32 %v2478, 7
    %v2480 = vsub.s32 7, %v2479
    %v2481 = vrot.slane %v2017, %v2480
    %v2482 = vlaneseq
    %v2483 = vshrl.u32 %v2482, 7
    %v2484 = vsub.s32 0, %v2483
    %v2485 = vrot.slane %v2018, %v2484
    %v2486 = vlaneseq
    %v2487 = vshrl.u32 %v2486, 7
    %v2488 = vsub.s32 1, %v2487
    %v2489 = vrot.slane %v2018, %v2488
    %v2490 = vlaneseq
    %v2491 = vshrl.u32 %v2490, 7
    %v2492 = vsub.s32 2, %v2491
    %v2493 = vrot.slane %v2018, %v2492
    %v2494 = vlaneseq
    %v2495 = vshrl.u32 %v2494, 7
    %v2496 = vsub.s32 3, %v2495
    %v2497 = vrot.slane %v2018, %v2496
    %v2498 = vlaneseq
    %v2499 = vshrl.u32 %v2498, 7
    %v2500 = vsub.s32 4, %v2499
    %v2501 = vrot.slane %v2018, %v2500
    %v2502 = vlaneseq
    %v2503 = vshrl.u32 %v2502, 7
    %v2504 = vsub.s32 5, %v2503
    %v2505 = vrot.slane %v2018, %v2504
    %v2506 = vlaneseq
    %v2507 = vshrl.u32 %v2506, 7
    %v2508 = vsub.s32 6, %v2507
    %v2509 = vrot.slane %v2018, %v2508
    %v2510 = vlaneseq
    %v2511 = vshrl.u32 %v2510, 7
    %v2512 = vsub.s32 7, %v2511
    %v2513 = vrot.slane %v2018, %v2512
    %v2786 = vrot.slane %v2208, 7
    %vm2787 = vcmask 1041409
    %v2788 = vsel %vm2787, %v2786, %v2192
    %v2789 = vrot.slane %v2224, 6
    %vm2790 = vcmask 1042434
    %v2791 = vsel %vm2790, %v2789, %v2788
    %v2792 = vrot.slane %v2240, 5
    %vm2793 = vcmask 1043459
    %v2794 = vsel %vm2793, %v2792, %v2791
    %v2795 = vrot.slane %v2256, 4
    %vm2796 = vcmask 1044484
    %v2797 = vsel %vm2796, %v2795, %v2794
    %v2798 = vrot.slane %v2272, 3
    %vm2799 = vcmask 1045509
    %v2800 = vsel %vm2799, %v2798, %v2797
    %v2801 = vrot.slane %v2288, 2
    %vm2802 = vcmask 1046534
    %v2803 = vsel %vm2802, %v2801, %v2800
    %v2804 = vrot.slane %v2304, 1
    %vm2805 = vcmask 1047559
    %v2806 = vsel %vm2805, %v2804, %v2803
    %v2807 = vrot.slane %v2209, 7
    %v2808 = vsel %vm2787, %v2807, %v2193
    %v2809 = vrot.slane %v2225, 6
    %v2810 = vsel %vm2790, %v2809, %v2808
    %v2811 = vrot.slane %v2241, 5
    %v2812 = vsel %vm2793, %v2811, %v2810
    %v2813 = vrot.slane %v2257, 4
    %v2814 = vsel %vm2796, %v2813, %v2812
    %v2815 = vrot.slane %v2273, 3
    %v2816 = vsel %vm2799, %v2815, %v2814
    %v2817 = vrot.slane %v2289, 2
    %v2818 = vsel %vm2802, %v2817, %v2816
    %v2819 = vrot.slane %v2305, 1
    %v2820 = vsel %vm2805, %v2819, %v2818
    %v2821 = vrot.slane %v2210, 7
    %v2822 = vsel %vm2787, %v2821, %v2194
    %v2823 = vrot.slane %v2226, 6
    %v2824 = vsel %vm2790, %v2823, %v2822
    %v2825 = vrot.slane %v2242, 5
    %v2826 = vsel %vm2793, %v2825, %v2824
    %v2827 = vrot.slane %v2258, 4
    %v2828 = vsel %vm2796, %v2827, %v2826
    %v2829 = vrot.slane %v2274, 3
    %v2830 = vsel %vm2799, %v2829, %v2828
    %v2831 = vrot.slane %v2290, 2
    %v2832 = vsel %vm2802, %v2831, %v2830
    %v2833 = vrot.slane %v2306, 1
    %v2834 = vsel %vm2805, %v2833, %v2832
    %v2835 = vrot.slane %v2211, 7
    %v2836 = vsel %vm2787, %v2835, %v2195
    %v2837 = vrot.slane %v2227, 6
    %v2838 = vsel %vm2790, %v2837, %v2836
    %v2839 = vrot.slane %v2243, 5
    %v2840 = vsel %vm2793, %v2839, %v2838
    %v2841 = vrot.slane %v2259, 4
    %v2842 = vsel %vm2796, %v2841, %v2840
    %v2843 = vrot.slane %v2275, 3
    %v2844 = vsel %vm2799, %v2843, %v2842
    %v2845 = vrot.slane %v2291, 2
    %v2846 = vsel %vm2802, %v2845, %v2844
    %v2847 = vrot.slane %v2307, 1
    %v2848 = vsel %vm2805, %v2847, %v2846
    %v2849 = vrot.slane %v2212, 7
    %v2850 = vsel %vm2787, %v2849, %v2196
    %v2851 = vrot.slane %v2228, 6
    %v2852 = vsel %vm2790, %v2851, %v2850
    %v2853 = vrot.slane %v2244, 5
    %v2854 = vsel %vm2793, %v2853, %v2852
    %v2855 = vrot.slane %v2260, 4
    %v2856 = vsel %vm2796, %v2855, %v2854
    %v2857 = vrot.slane %v2276, 3
    %v2858 = vsel %vm2799, %v2857, %v2856
    %v2859 = vrot.slane %v2292, 2
    %v2860 = vsel %vm2802, %v2859, %v2858
    %v2861 = vrot.slane %v2308, 1
    %v2862 = vsel %vm2805, %v2861, %v2860
    %v2863 = vrot.slane %v2213, 7
    %v2864 = vsel %vm2787, %v2863, %v2197
    %v2865 = vrot.slane %v2229, 6
    %v2866 = vsel %vm2790, %v2865, %v2864
    %v2867 = vrot.slane %v2245, 5
    %v2868 = vsel %vm2793, %v2867, %v2866
    %v2869 = vrot.slane %v2261, 4
    %v2870 = vsel %vm2796, %v2869, %v2868
    %v2871 = vrot.slane %v2277, 3
    %v2872 = vsel %vm2799, %v2871, %v2870
    %v2873 = vrot.slane %v2293, 2
    %v2874 = vsel %vm2802, %v2873, %v2872
    %v2875 = vrot.slane %v2309, 1
    %v2876 = vsel %vm2805, %v2875, %v2874
    %v2877 = vrot.slane %v2214, 7
    %v2878 = vsel %vm2787, %v2877, %v2198
    %v2879 = vrot.slane %v2230, 6
    %v2880 = vsel %vm2790, %v2879, %v2878
    %v2881 = vrot.slane %v2246, 5
    %v2882 = vsel %vm2793, %v2881, %v2880
    %v2883 = vrot.slane %v2262, 4
    %v2884 = vsel %vm2796, %v2883, %v2882
    %v2885 = vrot.slane %v2278, 3
    %v2886 = vsel %vm2799, %v2885, %v2884
    %v2887 = vrot.slane %v2294, 2
    %v2888 = vsel %vm2802, %v2887, %v2886
    %v2889 = vrot.slane %v2310, 1
    %v2890 = vsel %vm2805, %v2889, %v2888
    %v2891 = vrot.slane %v2215, 7
    %v2892 = vsel %vm2787, %v2891, %v2199
    %v2893 = vrot.slane %v2231, 6
    %v2894 = vsel %vm2790, %v2893, %v2892
    %v2895 = vrot.slane %v2247, 5
    %v2896 = vsel %vm2793, %v2895, %v2894
    %v2897 = vrot.slane %v2263, 4
    %v2898 = vsel %vm2796, %v2897, %v2896
    %v2899 = vrot.slane %v2279, 3
    %v2900 = vsel %vm2799, %v2899, %v2898
    %v2901 = vrot.slane %v2295, 2
    %v2902 = vsel %vm2802, %v2901, %v2900
    %v2903 = vrot.slane %v2311, 1
    %v2904 = vsel %vm2805, %v2903, %v2902
    %v2905 = vrot.slane %v2216, 7
    %v2906 = vsel %vm2787, %v2905, %v2200
    %v2907 = vrot.slane %v2232, 6
    %v2908 = vsel %vm2790, %v2907, %v2906
    %v2909 = vrot.slane %v2248, 5
    %v2910 = vsel %vm2793, %v2909, %v2908
    %v2911 = vrot.slane %v2264, 4
    %v2912 = vsel %vm2796, %v2911, %v2910
    %v2913 = vrot.slane %v2280, 3
    %v2914 = vsel %vm2799, %v2913, %v2912
    %v2915 = vrot.slane %v2296, 2
    %v2916 = vsel %vm2802, %v2915, %v2914
    %v2917 = vrot.slane %v2312, 1
    %v2918 = vsel %vm2805, %v2917, %v2916
    %v2919 = vrot.slane %v2217, 7
    %v2920 = vsel %vm2787, %v2919, %v2201
    %v2921 = vrot.slane %v2233, 6
    %v2922 = vsel %vm2790, %v2921, %v2920
    %v2923 = vrot.slane %v2249, 5
    %v2924 = vsel %vm2793, %v2923, %v2922
    %v2925 = vrot.slane %v2265, 4
    %v2926 = vsel %vm2796, %v2925, %v2924
    %v2927 = vrot.slane %v2281, 3
    %v2928 = vsel %vm2799, %v2927, %v2926
    %v2929 = vrot.slane %v2297, 2
    %v2930 = vsel %vm2802, %v2929, %v2928
    %v2931 = vrot.slane %v2313, 1
    %v2932 = vsel %vm2805, %v2931, %v2930
    %v2933 = vrot.slane %v2218, 7
    %v2934 = vsel %vm2787, %v2933, %v2202
    %v2935 = vrot.slane %v2234, 6
    %v2936 = vsel %vm2790, %v2935, %v2934
    %v2937 = vrot.slane %v2250, 5
    %v2938 = vsel %vm2793, %v2937, %v2936
    %v2939 = vrot.slane %v2266, 4
    %v2940 = vsel %vm2796, %v2939, %v2938
    %v2941 = vrot.slane %v2282, 3
    %v2942 = vsel %vm2799, %v2941, %v2940
    %v2943 = vrot.slane %v2298, 2
    %v2944 = vsel %vm2802, %v2943, %v2942
    %v2945 = vrot.slane %v2314, 1
    %v2946 = vsel %vm2805, %v2945, %v2944
    %v2947 = vrot.slane %v2219, 7
    %v2948 = vsel %vm2787, %v2947, %v2203
    %v2949 = vrot.slane %v2235, 6
    %v2950 = vsel %vm2790, %v2949, %v2948
    %v2951 = vrot.slane %v2251, 5
    %v2952 = vsel %vm2793, %v2951, %v2950
    %v2953 = vrot.slane %v2267, 4
    %v2954 = vsel %vm2796, %v2953, %v2952
    %v2955 = vrot.slane %v2283, 3
    %v2956 = vsel %vm2799, %v2955, %v2954
    %v2957 = vrot.slane %v2299, 2
    %v2958 = vsel %vm2802, %v2957, %v2956
    %v2959 = vrot.slane %v2315, 1
    %v2960 = vsel %vm2805, %v2959, %v2958
    %v2961 = vrot.slane %v2220, 7
    %v2962 = vsel %vm2787, %v2961, %v2204
    %v2963 = vrot.slane %v2236, 6
    %v2964 = vsel %vm2790, %v2963, %v2962
    %v2965 = vrot.slane %v2252, 5
    %v2966 = vsel %vm2793, %v2965, %v2964
    %v2967 = vrot.slane %v2268, 4
    %v2968 = vsel %vm2796, %v2967, %v2966
    %v2969 = vrot.slane %v2284, 3
    %v2970 = vsel %vm2799, %v2969, %v2968
    %v2971 = vrot.slane %v2300, 2
    %v2972 = vsel %vm2802, %v2971, %v2970
    %v2973 = vrot.slane %v2316, 1
    %v2974 = vsel %vm2805, %v2973, %v2972
    %v2975 = vrot.slane %v2221, 7
    %v2976 = vsel %vm2787, %v2975, %v2205
    %v2977 = vrot.slane %v2237, 6
    %v2978 = vsel %vm2790, %v2977, %v2976
    %v2979 = vrot.slane %v2253, 5
    %v2980 = vsel %vm2793, %v2979, %v2978
    %v2981 = vrot.slane %v2269, 4
    %v2982 = vsel %vm2796, %v2981, %v2980
    %v2983 = vrot.slane %v2285, 3
    %v2984 = vsel %vm2799, %v2983, %v2982
    %v2985 = vrot.slane %v2301, 2
    %v2986 = vsel %vm2802, %v2985, %v2984
    %v2987 = vrot.slane %v2317, 1
    %v2988 = vsel %vm2805, %v2987, %v2986
    %v2989 = vrot.slane %v2222, 7
    %v2990 = vsel %vm2787, %v2989, %v2206
    %v2991 = vrot.slane %v2238, 6
    %v2992 = vsel %vm2790, %v2991, %v2990
    %v2993 = vrot.slane %v2254, 5
    %v2994 = vsel %vm2793, %v2993, %v2992
    %v2995 = vrot.slane %v2270, 4
    %v2996 = vsel %vm2796, %v2995, %v2994
    %v2997 = vrot.slane %v2286, 3
    %v2998 = vsel %vm2799, %v2997, %v2996
    %v2999 = vrot.slane %v2302, 2
    %v3000 = vsel %vm2802, %v2999, %v2998
    %v3001 = vrot.slane %v2318, 1
    %v3002 = vsel %vm2805, %v3001, %v3000
    %v3003 = vrot.slane %v2223, 7
    %v3004 = vsel %vm2787, %v3003, %v2207
    %v3005 = vrot.slane %v2239, 6
    %v3006 = vsel %vm2790, %v3005, %v3004
    %v3007 = vrot.slane %v2255, 5
    %v3008 = vsel %vm2793, %v3007, %v3006
    %v3009 = vrot.slane %v2271, 4
    %v3010 = vsel %vm2796, %v3009, %v3008
    %v3011 = vrot.slane %v2287, 3
    %v3012 = vsel %vm2799, %v3011, %v3010
    %v3013 = vrot.slane %v2303, 2
    %v3014 = vsel %vm2802, %v3013, %v3012
    %v3015 = vrot.slane %v2319, 1
    %v3016 = vsel %vm2805, %v3015, %v3014
    %v3017 = vrot.slane %v2336, 7
    %v3018 = vsel %vm2787, %v3017, %v2320
    %v3019 = vrot.slane %v2352, 6
    %v3020 = vsel %vm2790, %v3019, %v3018
    %v3021 = vrot.slane %v2368, 5
    %v3022 = vsel %vm2793, %v3021, %v3020
    %v3023 = vrot.slane %v2384, 4
    %v3024 = vsel %vm2796, %v3023, %v3022
    %v3025 = vrot.slane %v2400, 3
    %v3026 = vsel %vm2799, %v3025, %v3024
    %v3027 = vrot.slane %v2416, 2
    %v3028 = vsel %vm2802, %v3027, %v3026
    %v3029 = vrot.slane %v2432, 1
    %v3030 = vsel %vm2805, %v3029, %v3028
    %v3031 = vrot.slane %v2337, 7
    %v3032 = vsel %vm2787, %v3031, %v2321
    %v3033 = vrot.slane %v2353, 6
    %v3034 = vsel %vm2790, %v3033, %v3032
    %v3035 = vrot.slane %v2369, 5
    %v3036 = vsel %vm2793, %v3035, %v3034
    %v3037 = vrot.slane %v2385, 4
    %v3038 = vsel %vm2796, %v3037, %v3036
    %v3039 = vrot.slane %v2401, 3
    %v3040 = vsel %vm2799, %v3039, %v3038
    %v3041 = vrot.slane %v2417, 2
    %v3042 = vsel %vm2802, %v3041, %v3040
    %v3043 = vrot.slane %v2433, 1
    %v3044 = vsel %vm2805, %v3043, %v3042
    %v3045 = vrot.slane %v2338, 7
    %v3046 = vsel %vm2787, %v3045, %v2322
    %v3047 = vrot.slane %v2354, 6
    %v3048 = vsel %vm2790, %v3047, %v3046
    %v3049 = vrot.slane %v2370, 5
    %v3050 = vsel %vm2793, %v3049, %v3048
    %v3051 = vrot.slane %v2386, 4
    %v3052 = vsel %vm2796, %v3051, %v3050
    %v3053 = vrot.slane %v2402, 3
    %v3054 = vsel %vm2799, %v3053, %v3052
    %v3055 = vrot.slane %v2418, 2
    %v3056 = vsel %vm2802, %v3055, %v3054
    %v3057 = vrot.slane %v2434, 1
    %v3058 = vsel %vm2805, %v3057, %v3056
    %v3059 = vrot.slane %v2339, 7
    %v3060 = vsel %vm2787, %v3059, %v2323
    %v3061 = vrot.slane %v2355, 6
    %v3062 = vsel %vm2790, %v3061, %v3060
    %v3063 = vrot.slane %v2371, 5
    %v3064 = vsel %vm2793, %v3063, %v3062
    %v3065 = vrot.slane %v2387, 4
    %v3066 = vsel %vm2796, %v3065, %v3064
    %v3067 = vrot.slane %v2403, 3
    %v3068 = vsel %vm2799, %v3067, %v3066
    %v3069 = vrot.slane %v2419, 2
    %v3070 = vsel %vm2802, %v3069, %v3068
    %v3071 = vrot.slane %v2435, 1
    %v3072 = vsel %vm2805, %v3071, %v3070
    %v3073 = vrot.slane %v2340, 7
    %v3074 = vsel %vm2787, %v3073, %v2324
    %v3075 = vrot.slane %v2356, 6
    %v3076 = vsel %vm2790, %v3075, %v3074
    %v3077 = vrot.slane %v2372, 5
    %v3078 = vsel %vm2793, %v3077, %v3076
    %v3079 = vrot.slane %v2388, 4
    %v3080 = vsel %vm2796, %v3079, %v3078
    %v3081 = vrot.slane %v2404, 3
    %v3082 = vsel %vm2799, %v3081, %v3080
    %v3083 = vrot.slane %v2420, 2
    %v3084 = vsel %vm2802, %v3083, %v3082
    %v3085 = vrot.slane %v2436, 1
    %v3086 = vsel %vm2805, %v3085, %v3084
    %v3087 = vrot.slane %v2341, 7
    %v3088 = vsel %vm2787, %v3087, %v2325
    %v3089 = vrot.slane %v2357, 6
    %v3090 = vsel %vm2790, %v3089, %v3088
    %v3091 = vrot.slane %v2373, 5
    %v3092 = vsel %vm2793, %v3091, %v3090
    %v3093 = vrot.slane %v2389, 4
    %v3094 = vsel %vm2796, %v3093, %v3092
    %v3095 = vrot.slane %v2405, 3
    %v3096 = vsel %vm2799, %v3095, %v3094
    %v3097 = vrot.slane %v2421, 2
    %v3098 = vsel %vm2802, %v3097, %v3096
    %v3099 = vrot.slane %v2437, 1
    %v3100 = vsel %vm2805, %v3099, %v3098
    %v3101 = vrot.slane %v2342, 7
    %v3102 = vsel %vm2787, %v3101, %v2326
    %v3103 = vrot.slane %v2358, 6
    %v3104 = vsel %vm2790, %v3103, %v3102
    %v3105 = vrot.slane %v2374, 5
    %v3106 = vsel %vm2793, %v3105, %v3104
    %v3107 = vrot.slane %v2390, 4
    %v3108 = vsel %vm2796, %v3107, %v3106
    %v3109 = vrot.slane %v2406, 3
    %v3110 = vsel %vm2799, %v3109, %v3108
    %v3111 = vrot.slane %v2422, 2
    %v3112 = vsel %vm2802, %v3111, %v3110
    %v3113 = vrot.slane %v2438, 1
    %v3114 = vsel %vm2805, %v3113, %v3112
    %v3115 = vrot.slane %v2343, 7
    %v3116 = vsel %vm2787, %v3115, %v2327
    %v3117 = vrot.slane %v2359, 6
    %v3118 = vsel %vm2790, %v3117, %v3116
    %v3119 = vrot.slane %v2375, 5
    %v3120 = vsel %vm2793, %v3119, %v3118
    %v3121 = vrot.slane %v2391, 4
    %v3122 = vsel %vm2796, %v3121, %v3120
    %v3123 = vrot.slane %v2407, 3
    %v3124 = vsel %vm2799, %v3123, %v3122
    %v3125 = vrot.slane %v2423, 2
    %v3126 = vsel %vm2802, %v3125, %v3124
    %v3127 = vrot.slane %v2439, 1
    %v3128 = vsel %vm2805, %v3127, %v3126
    %v3129 = vrot.slane %v2344, 7
    %v3130 = vsel %vm2787, %v3129, %v2328
    %v3131 = vrot.slane %v2360, 6
    %v3132 = vsel %vm2790, %v3131, %v3130
    %v3133 = vrot.slane %v2376, 5
    %v3134 = vsel %vm2793, %v3133, %v3132
    %v3135 = vrot.slane %v2392, 4
    %v3136 = vsel %vm2796, %v3135, %v3134
    %v3137 = vrot.slane %v2408, 3
    %v3138 = vsel %vm2799, %v3137, %v3136
    %v3139 = vrot.slane %v2424, 2
    %v3140 = vsel %vm2802, %v3139, %v3138
    %v3141 = vrot.slane %v2440, 1
    %v3142 = vsel %vm2805, %v3141, %v3140
    %v3143 = vrot.slane %v2345, 7
    %v3144 = vsel %vm2787, %v3143, %v2329
    %v3145 = vrot.slane %v2361, 6
    %v3146 = vsel %vm2790, %v3145, %v3144
    %v3147 = vrot.slane %v2377, 5
    %v3148 = vsel %vm2793, %v3147, %v3146
    %v3149 = vrot.slane %v2393, 4
    %v3150 = vsel %vm2796, %v3149, %v3148
    %v3151 = vrot.slane %v2409, 3
    %v3152 = vsel %vm2799, %v3151, %v3150
    %v3153 = vrot.slane %v2425, 2
    %v3154 = vsel %vm2802, %v3153, %v3152
    %v3155 = vrot.slane %v2441, 1
    %v3156 = vsel %vm2805, %v3155, %v3154
    %v3157 = vrot.slane %v2346, 7
    %v3158 = vsel %vm2787, %v3157, %v2330
    %v3159 = vrot.slane %v2362, 6
    %v3160 = vsel %vm2790, %v3159, %v3158
    %v3161 = vrot.slane %v2378, 5
    %v3162 = vsel %vm2793, %v3161, %v3160
    %v3163 = vrot.slane %v2394, 4
    %v3164 = vsel %vm2796, %v3163, %v3162
    %v3165 = vrot.slane %v2410, 3
    %v3166 = vsel %vm2799, %v3165, %v3164
    %v3167 = vrot.slane %v2426, 2
    %v3168 = vsel %vm2802, %v3167, %v3166
    %v3169 = vrot.slane %v2442, 1
    %v3170 = vsel %vm2805, %v3169, %v3168
    %v3171 = vrot.slane %v2347, 7
    %v3172 = vsel %vm2787, %v3171, %v2331
    %v3173 = vrot.slane %v2363, 6
    %v3174 = vsel %vm2790, %v3173, %v3172
    %v3175 = vrot.slane %v2379, 5
    %v3176 = vsel %vm2793, %v3175, %v3174
    %v3177 = vrot.slane %v2395, 4
    %v3178 = vsel %vm2796, %v3177, %v3176
    %v3179 = vrot.slane %v2411, 3
    %v3180 = vsel %vm2799, %v3179, %v3178
    %v3181 = vrot.slane %v2427, 2
    %v3182 = vsel %vm2802, %v3181, %v3180
    %v3183 = vrot.slane %v2443, 1
    %v3184 = vsel %vm2805, %v3183, %v3182
    %v3185 = vrot.slane %v2348, 7
    %v3186 = vsel %vm2787, %v3185, %v2332
    %v3187 = vrot.slane %v2364, 6
    %v3188 = vsel %vm2790, %v3187, %v3186
    %v3189 = vrot.slane %v2380, 5
    %v3190 = vsel %vm2793, %v3189, %v3188
    %v3191 = vrot.slane %v2396, 4
    %v3192 = vsel %vm2796, %v3191, %v3190
    %v3193 = vrot.slane %v2412, 3
    %v3194 = vsel %vm2799, %v3193, %v3192
    %v3195 = vrot.slane %v2428, 2
    %v3196 = vsel %vm2802, %v3195, %v3194
    %v3197 = vrot.slane %v2444, 1
    %v3198 = vsel %vm2805, %v3197, %v3196
    %v3199 = vrot.slane %v2349, 7
    %v3200 = vsel %vm2787, %v3199, %v2333
    %v3201 = vrot.slane %v2365, 6
    %v3202 = vsel %vm2790, %v3201, %v3200
    %v3203 = vrot.slane %v2381, 5
    %v3204 = vsel %vm2793, %v3203, %v3202
    %v3205 = vrot.slane %v2397, 4
    %v3206 = vsel %vm2796, %v3205, %v3204
    %v3207 = vrot.slane %v2413, 3
    %v3208 = vsel %vm2799, %v3207, %v3206
    %v3209 = vrot.slane %v2429, 2
    %v3210 = vsel %vm2802, %v3209, %v3208
    %v3211 = vrot.slane %v2445, 1
    %v3212 = vsel %vm2805, %v3211, %v3210
    %v3213 = vrot.slane %v2350, 7
    %v3214 = vsel %vm2787, %v3213, %v2334
    %v3215 = vrot.slane %v2366, 6
    %v3216 = vsel %vm2790, %v3215, %v3214
    %v3217 = vrot.slane %v2382, 5
    %v3218 = vsel %vm2793, %v3217, %v3216
    %v3219 = vrot.slane %v2398, 4
    %v3220 = vsel %vm2796, %v3219, %v3218
    %v3221 = vrot.slane %v2414, 3
    %v3222 = vsel %vm2799, %v3221, %v3220
    %v3223 = vrot.slane %v2430, 2
    %v3224 = vsel %vm2802, %v3223, %v3222
    %v3225 = vrot.slane %v2446, 1
    %v3226 = vsel %vm2805, %v3225, %v3224
    %v3227 = vrot.slane %v2351, 7
    %v3228 = vsel %vm2787, %v3227, %v2335
    %v3229 = vrot.slane %v2367, 6
    %v3230 = vsel %vm2790, %v3229, %v3228
    %v3231 = vrot.slane %v2383, 5
    %v3232 = vsel %vm2793, %v3231, %v3230
    %v3233 = vrot.slane %v2399, 4
    %v3234 = vsel %vm2796, %v3233, %v3232
    %v3235 = vrot.slane %v2415, 3
    %v3236 = vsel %vm2799, %v3235, %v3234
    %v3237 = vrot.slane %v2431, 2
    %v3238 = vsel %vm2802, %v3237, %v3236
    %v3239 = vrot.slane %v2447, 1
    %v3240 = vsel %vm2805, %v3239, %v3238
    %v3273 = vadd.f32 %v2453, %v2806
    %v3274 = vadd.f32 %v2457, %v2820
    %v3275 = vadd.f32 %v2461, %v2834
    %v3276 = vadd.f32 %v2465, %v2848
    %v3277 = vadd.f32 %v2469, %v2862
    %v3278 = vadd.f32 %v2473, %v2876
    %v3279 = vadd.f32 %v2477, %v2890
    %v3280 = vadd.f32 %v2481, %v2904
    %v3281 = vadd.f32 %v2485, %v2918
    %v3282 = vadd.f32 %v2489, %v2932
    %v3283 = vadd.f32 %v2493, %v2946
    %v3284 = vadd.f32 %v2497, %v2960
    %v3285 = vadd.f32 %v2501, %v2974
    %v3286 = vadd.f32 %v2505, %v2988
    %v3287 = vadd.f32 %v2509, %v3002
    %v3288 = vadd.f32 %v2513, %v3016
    %v3289 = vadd.f32 %v2453, %v3030
    %v3290 = vadd.f32 %v2457, %v3044
    %v3291 = vadd.f32 %v2461, %v3058
    %v3292 = vadd.f32 %v2465, %v3072
    %v3293 = vadd.f32 %v2469, %v3086
    %v3294 = vadd.f32 %v2473, %v3100
    %v3295 = vadd.f32 %v2477, %v3114
    %v3296 = vadd.f32 %v2481, %v3128
    %v3297 = vadd.f32 %v2485, %v3142
    %v3298 = vadd.f32 %v2489, %v3156
    %v3299 = vadd.f32 %v2493, %v3170
    %v3300 = vadd.f32 %v2497, %v3184
    %v3301 = vadd.f32 %v2501, %v3198
    %v3302 = vadd.f32 %v2505, %v3212
    %v3303 = vadd.f32 %v2509, %v3226
    %v3304 = vadd.f32 %v2513, %v3240
    %3305 = vset.pattern.permute.xlu0 2
    %3306 = vperm.xlu0 %3305, %v2001
    %v3307 = vpop.permute.xlu0 %3306
    %3309 = vset.pattern.permute.xlu0 2
    %3310 = vperm.xlu0 %3309, %v2002
    %v3311 = vpop.permute.xlu0 %3310
    %3313 = vset.pattern.permute.xlu0 2
    %3314 = vperm.xlu0 %3313, %v2003
    %v3315 = vpop.permute.xlu0 %3314
    %3317 = vset.pattern.permute.xlu0 2
    %3318 = vperm.xlu0 %3317, %v2004
    %v3319 = vpop.permute.xlu0 %3318
    %3321 = vset.pattern.permute.xlu0 2
    %3322 = vperm.xlu0 %3321, %v2005
    %v3323 = vpop.permute.xlu0 %3322
    %3325 = vset.pattern.permute.xlu0 2
    %3326 = vperm.xlu0 %3325, %v2006
    %v3327 = vpop.permute.xlu0 %3326
    %3329 = vset.pattern.permute.xlu0 2
    %3330 = vperm.xlu0 %3329, %v2007
    %v3331 = vpop.permute.xlu0 %3330
    %3333 = vset.pattern.permute.xlu0 2
    %3334 = vperm.xlu0 %3333, %v2008
    %v3335 = vpop.permute.xlu0 %3334
    %3337 = vset.pattern.permute.xlu0 2
    %3338 = vperm.xlu0 %3337, %v2009
    %v3339 = vpop.permute.xlu0 %3338
    %3341 = vset.pattern.permute.xlu0 2
    %3342 = vperm.xlu0 %3341, %v2010
    %v3343 = vpop.permute.xlu0 %3342
    %3345 = vset.pattern.permute.xlu0 2
    %3346 = vperm.xlu0 %3345, %v2011
    %v3347 = vpop.permute.xlu0 %3346
    %3349 = vset.pattern.permute.xlu0 2
    %3350 = vperm.xlu0 %3349, %v2012
    %v3351 = vpop.permute.xlu0 %3350
    %3353 = vset.pattern.permute.xlu0 2
    %3354 = vperm.xlu0 %3353, %v2013
    %v3355 = vpop.permute.xlu0 %3354
    %3357 = vset.pattern.permute.xlu0 2
    %3358 = vperm.xlu0 %3357, %v2014
    %v3359 = vpop.permute.xlu0 %3358
    %3361 = vset.pattern.permute.xlu0 2
    %3362 = vperm.xlu0 %3361, %v2015
    %v3363 = vpop.permute.xlu0 %3362
    %3365 = vset.pattern.permute.xlu0 2
    %3366 = vperm.xlu0 %3365, %v2016
    %v3367 = vpop.permute.xlu0 %3366
    %v3371 = vlaneseq
    %v3372 = vshrl.u32 %v3371, 7
    %v3373 = vsub.s32 0, %v3372
    %v3374 = vrot.slane %v2023, %v3373
    %v3375 = vlaneseq
    %v3376 = vshrl.u32 %v3375, 7
    %v3377 = vsub.s32 1, %v3376
    %v3378 = vrot.slane %v2023, %v3377
    %v3379 = vlaneseq
    %v3380 = vshrl.u32 %v3379, 7
    %v3381 = vsub.s32 2, %v3380
    %v3382 = vrot.slane %v2023, %v3381
    %v3383 = vlaneseq
    %v3384 = vshrl.u32 %v3383, 7
    %v3385 = vsub.s32 3, %v3384
    %v3386 = vrot.slane %v2023, %v3385
    %v3387 = vlaneseq
    %v3388 = vshrl.u32 %v3387, 7
    %v3389 = vsub.s32 4, %v3388
    %v3390 = vrot.slane %v2023, %v3389
    %v3391 = vlaneseq
    %v3392 = vshrl.u32 %v3391, 7
    %v3393 = vsub.s32 5, %v3392
    %v3394 = vrot.slane %v2023, %v3393
    %v3395 = vlaneseq
    %v3396 = vshrl.u32 %v3395, 7
    %v3397 = vsub.s32 6, %v3396
    %v3398 = vrot.slane %v2023, %v3397
    %v3399 = vlaneseq
    %v3400 = vshrl.u32 %v3399, 7
    %v3401 = vsub.s32 7, %v3400
    %v3402 = vrot.slane %v2023, %v3401
    %v3403 = vlaneseq
    %v3404 = vshrl.u32 %v3403, 7
    %v3405 = vsub.s32 0, %v3404
    %v3406 = vrot.slane %v2025, %v3405
    %v3407 = vlaneseq
    %v3408 = vshrl.u32 %v3407, 7
    %v3409 = vsub.s32 1, %v3408
    %v3410 = vrot.slane %v2025, %v3409
    %v3411 = vlaneseq
    %v3412 = vshrl.u32 %v3411, 7
    %v3413 = vsub.s32 2, %v3412
    %v3414 = vrot.slane %v2025, %v3413
    %v3415 = vlaneseq
    %v3416 = vshrl.u32 %v3415, 7
    %v3417 = vsub.s32 3, %v3416
    %v3418 = vrot.slane %v2025, %v3417
    %v3419 = vlaneseq
    %v3420 = vshrl.u32 %v3419, 7
    %v3421 = vsub.s32 4, %v3420
    %v3422 = vrot.slane %v2025, %v3421
    %v3423 = vlaneseq
    %v3424 = vshrl.u32 %v3423, 7
    %v3425 = vsub.s32 5, %v3424
    %v3426 = vrot.slane %v2025, %v3425
    %v3427 = vlaneseq
    %v3428 = vshrl.u32 %v3427, 7
    %v3429 = vsub.s32 6, %v3428
    %v3430 = vrot.slane %v2025, %v3429
    %v3431 = vlaneseq
    %v3432 = vshrl.u32 %v3431, 7
    %v3433 = vsub.s32 7, %v3432
    %v3434 = vrot.slane %v2025, %v3433
    %v3451 = vmul.f32 %v3307, %v3374
    %v3452 = vmul.f32 %v3307, %v3378
    %v3453 = vmul.f32 %v3307, %v3382
    %v3454 = vmul.f32 %v3307, %v3386
    %v3455 = vmul.f32 %v3307, %v3390
    %v3456 = vmul.f32 %v3307, %v3394
    %v3457 = vmul.f32 %v3307, %v3398
    %v3458 = vmul.f32 %v3307, %v3402
    %v3459 = vmul.f32 %v3307, %v3406
    %v3460 = vmul.f32 %v3307, %v3410
    %v3461 = vmul.f32 %v3307, %v3414
    %v3462 = vmul.f32 %v3307, %v3418
    %v3463 = vmul.f32 %v3307, %v3422
    %v3464 = vmul.f32 %v3307, %v3426
    %v3465 = vmul.f32 %v3307, %v3430
    %v3466 = vmul.f32 %v3307, %v3434
    %v3467 = vmul.f32 %v3311, %v3374
    %v3468 = vmul.f32 %v3311, %v3378
    %v3469 = vmul.f32 %v3311, %v3382
    %v3470 = vmul.f32 %v3311, %v3386
    %v3471 = vmul.f32 %v3311, %v3390
    %v3472 = vmul.f32 %v3311, %v3394
    %v3473 = vmul.f32 %v3311, %v3398
    %v3474 = vmul.f32 %v3311, %v3402
    %v3475 = vmul.f32 %v3311, %v3406
    %v3476 = vmul.f32 %v3311, %v3410
    %v3477 = vmul.f32 %v3311, %v3414
    %v3478 = vmul.f32 %v3311, %v3418
    %v3479 = vmul.f32 %v3311, %v3422
    %v3480 = vmul.f32 %v3311, %v3426
    %v3481 = vmul.f32 %v3311, %v3430
    %v3482 = vmul.f32 %v3311, %v3434
    %v3483 = vmul.f32 %v3315, %v3374
    %v3484 = vmul.f32 %v3315, %v3378
    %v3485 = vmul.f32 %v3315, %v3382
    %v3486 = vmul.f32 %v3315, %v3386
    %v3487 = vmul.f32 %v3315, %v3390
    %v3488 = vmul.f32 %v3315, %v3394
    %v3489 = vmul.f32 %v3315, %v3398
    %v3490 = vmul.f32 %v3315, %v3402
    %v3491 = vmul.f32 %v3315, %v3406
    %v3492 = vmul.f32 %v3315, %v3410
    %v3493 = vmul.f32 %v3315, %v3414
    %v3494 = vmul.f32 %v3315, %v3418
    %v3495 = vmul.f32 %v3315, %v3422
    %v3496 = vmul.f32 %v3315, %v3426
    %v3497 = vmul.f32 %v3315, %v3430
    %v3498 = vmul.f32 %v3315, %v3434
    %v3499 = vmul.f32 %v3319, %v3374
    %v3500 = vmul.f32 %v3319, %v3378
    %v3501 = vmul.f32 %v3319, %v3382
    %v3502 = vmul.f32 %v3319, %v3386
    %v3503 = vmul.f32 %v3319, %v3390
    %v3504 = vmul.f32 %v3319, %v3394
    %v3505 = vmul.f32 %v3319, %v3398
    %v3506 = vmul.f32 %v3319, %v3402
    %v3507 = vmul.f32 %v3319, %v3406
    %v3508 = vmul.f32 %v3319, %v3410
    %v3509 = vmul.f32 %v3319, %v3414
    %v3510 = vmul.f32 %v3319, %v3418
    %v3511 = vmul.f32 %v3319, %v3422
    %v3512 = vmul.f32 %v3319, %v3426
    %v3513 = vmul.f32 %v3319, %v3430
    %v3514 = vmul.f32 %v3319, %v3434
    %v3515 = vmul.f32 %v3323, %v3374
    %v3516 = vmul.f32 %v3323, %v3378
    %v3517 = vmul.f32 %v3323, %v3382
    %v3518 = vmul.f32 %v3323, %v3386
    %v3519 = vmul.f32 %v3323, %v3390
    %v3520 = vmul.f32 %v3323, %v3394
    %v3521 = vmul.f32 %v3323, %v3398
    %v3522 = vmul.f32 %v3323, %v3402
    %v3523 = vmul.f32 %v3323, %v3406
    %v3524 = vmul.f32 %v3323, %v3410
    %v3525 = vmul.f32 %v3323, %v3414
    %v3526 = vmul.f32 %v3323, %v3418
    %v3527 = vmul.f32 %v3323, %v3422
    %v3528 = vmul.f32 %v3323, %v3426
    %v3529 = vmul.f32 %v3323, %v3430
    %v3530 = vmul.f32 %v3323, %v3434
    %v3531 = vmul.f32 %v3327, %v3374
    %v3532 = vmul.f32 %v3327, %v3378
    %v3533 = vmul.f32 %v3327, %v3382
    %v3534 = vmul.f32 %v3327, %v3386
    %v3535 = vmul.f32 %v3327, %v3390
    %v3536 = vmul.f32 %v3327, %v3394
    %v3537 = vmul.f32 %v3327, %v3398
    %v3538 = vmul.f32 %v3327, %v3402
    %v3539 = vmul.f32 %v3327, %v3406
    %v3540 = vmul.f32 %v3327, %v3410
    %v3541 = vmul.f32 %v3327, %v3414
    %v3542 = vmul.f32 %v3327, %v3418
    %v3543 = vmul.f32 %v3327, %v3422
    %v3544 = vmul.f32 %v3327, %v3426
    %v3545 = vmul.f32 %v3327, %v3430
    %v3546 = vmul.f32 %v3327, %v3434
    %v3547 = vmul.f32 %v3331, %v3374
    %v3548 = vmul.f32 %v3331, %v3378
    %v3549 = vmul.f32 %v3331, %v3382
    %v3550 = vmul.f32 %v3331, %v3386
    %v3551 = vmul.f32 %v3331, %v3390
    %v3552 = vmul.f32 %v3331, %v3394
    %v3553 = vmul.f32 %v3331, %v3398
    %v3554 = vmul.f32 %v3331, %v3402
    %v3555 = vmul.f32 %v3331, %v3406
    %v3556 = vmul.f32 %v3331, %v3410
    %v3557 = vmul.f32 %v3331, %v3414
    %v3558 = vmul.f32 %v3331, %v3418
    %v3559 = vmul.f32 %v3331, %v3422
    %v3560 = vmul.f32 %v3331, %v3426
    %v3561 = vmul.f32 %v3331, %v3430
    %v3562 = vmul.f32 %v3331, %v3434
    %v3563 = vmul.f32 %v3335, %v3374
    %v3564 = vmul.f32 %v3335, %v3378
    %v3565 = vmul.f32 %v3335, %v3382
    %v3566 = vmul.f32 %v3335, %v3386
    %v3567 = vmul.f32 %v3335, %v3390
    %v3568 = vmul.f32 %v3335, %v3394
    %v3569 = vmul.f32 %v3335, %v3398
    %v3570 = vmul.f32 %v3335, %v3402
    %v3571 = vmul.f32 %v3335, %v3406
    %v3572 = vmul.f32 %v3335, %v3410
    %v3573 = vmul.f32 %v3335, %v3414
    %v3574 = vmul.f32 %v3335, %v3418
    %v3575 = vmul.f32 %v3335, %v3422
    %v3576 = vmul.f32 %v3335, %v3426
    %v3577 = vmul.f32 %v3335, %v3430
    %v3578 = vmul.f32 %v3335, %v3434
    %v3579 = vmul.f32 %v3339, %v3374
    %v3580 = vmul.f32 %v3339, %v3378
    %v3581 = vmul.f32 %v3339, %v3382
    %v3582 = vmul.f32 %v3339, %v3386
    %v3583 = vmul.f32 %v3339, %v3390
    %v3584 = vmul.f32 %v3339, %v3394
    %v3585 = vmul.f32 %v3339, %v3398
    %v3586 = vmul.f32 %v3339, %v3402
    %v3587 = vmul.f32 %v3339, %v3406
    %v3588 = vmul.f32 %v3339, %v3410
    %v3589 = vmul.f32 %v3339, %v3414
    %v3590 = vmul.f32 %v3339, %v3418
    %v3591 = vmul.f32 %v3339, %v3422
    %v3592 = vmul.f32 %v3339, %v3426
    %v3593 = vmul.f32 %v3339, %v3430
    %v3594 = vmul.f32 %v3339, %v3434
    %v3595 = vmul.f32 %v3343, %v3374
    %v3596 = vmul.f32 %v3343, %v3378
    %v3597 = vmul.f32 %v3343, %v3382
    %v3598 = vmul.f32 %v3343, %v3386
    %v3599 = vmul.f32 %v3343, %v3390
    %v3600 = vmul.f32 %v3343, %v3394
    %v3601 = vmul.f32 %v3343, %v3398
    %v3602 = vmul.f32 %v3343, %v3402
    %v3603 = vmul.f32 %v3343, %v3406
    %v3604 = vmul.f32 %v3343, %v3410
    %v3605 = vmul.f32 %v3343, %v3414
    %v3606 = vmul.f32 %v3343, %v3418
    %v3607 = vmul.f32 %v3343, %v3422
    %v3608 = vmul.f32 %v3343, %v3426
    %v3609 = vmul.f32 %v3343, %v3430
    %v3610 = vmul.f32 %v3343, %v3434
    %v3611 = vmul.f32 %v3347, %v3374
    %v3612 = vmul.f32 %v3347, %v3378
    %v3613 = vmul.f32 %v3347, %v3382
    %v3614 = vmul.f32 %v3347, %v3386
    %v3615 = vmul.f32 %v3347, %v3390
    %v3616 = vmul.f32 %v3347, %v3394
    %v3617 = vmul.f32 %v3347, %v3398
    %v3618 = vmul.f32 %v3347, %v3402
    %v3619 = vmul.f32 %v3347, %v3406
    %v3620 = vmul.f32 %v3347, %v3410
    %v3621 = vmul.f32 %v3347, %v3414
    %v3622 = vmul.f32 %v3347, %v3418
    %v3623 = vmul.f32 %v3347, %v3422
    %v3624 = vmul.f32 %v3347, %v3426
    %v3625 = vmul.f32 %v3347, %v3430
    %v3626 = vmul.f32 %v3347, %v3434
    %v3627 = vmul.f32 %v3351, %v3374
    %v3628 = vmul.f32 %v3351, %v3378
    %v3629 = vmul.f32 %v3351, %v3382
    %v3630 = vmul.f32 %v3351, %v3386
    %v3631 = vmul.f32 %v3351, %v3390
    %v3632 = vmul.f32 %v3351, %v3394
    %v3633 = vmul.f32 %v3351, %v3398
    %v3634 = vmul.f32 %v3351, %v3402
    %v3635 = vmul.f32 %v3351, %v3406
    %v3636 = vmul.f32 %v3351, %v3410
    %v3637 = vmul.f32 %v3351, %v3414
    %v3638 = vmul.f32 %v3351, %v3418
    %v3639 = vmul.f32 %v3351, %v3422
    %v3640 = vmul.f32 %v3351, %v3426
    %v3641 = vmul.f32 %v3351, %v3430
    %v3642 = vmul.f32 %v3351, %v3434
    %v3643 = vmul.f32 %v3355, %v3374
    %v3644 = vmul.f32 %v3355, %v3378
    %v3645 = vmul.f32 %v3355, %v3382
    %v3646 = vmul.f32 %v3355, %v3386
    %v3647 = vmul.f32 %v3355, %v3390
    %v3648 = vmul.f32 %v3355, %v3394
    %v3649 = vmul.f32 %v3355, %v3398
    %v3650 = vmul.f32 %v3355, %v3402
    %v3651 = vmul.f32 %v3355, %v3406
    %v3652 = vmul.f32 %v3355, %v3410
    %v3653 = vmul.f32 %v3355, %v3414
    %v3654 = vmul.f32 %v3355, %v3418
    %v3655 = vmul.f32 %v3355, %v3422
    %v3656 = vmul.f32 %v3355, %v3426
    %v3657 = vmul.f32 %v3355, %v3430
    %v3658 = vmul.f32 %v3355, %v3434
    %v3659 = vmul.f32 %v3359, %v3374
    %v3660 = vmul.f32 %v3359, %v3378
    %v3661 = vmul.f32 %v3359, %v3382
    %v3662 = vmul.f32 %v3359, %v3386
    %v3663 = vmul.f32 %v3359, %v3390
    %v3664 = vmul.f32 %v3359, %v3394
    %v3665 = vmul.f32 %v3359, %v3398
    %v3666 = vmul.f32 %v3359, %v3402
    %v3667 = vmul.f32 %v3359, %v3406
    %v3668 = vmul.f32 %v3359, %v3410
    %v3669 = vmul.f32 %v3359, %v3414
    %v3670 = vmul.f32 %v3359, %v3418
    %v3671 = vmul.f32 %v3359, %v3422
    %v3672 = vmul.f32 %v3359, %v3426
    %v3673 = vmul.f32 %v3359, %v3430
    %v3674 = vmul.f32 %v3359, %v3434
    %v3675 = vmul.f32 %v3363, %v3374
    %v3676 = vmul.f32 %v3363, %v3378
    %v3677 = vmul.f32 %v3363, %v3382
    %v3678 = vmul.f32 %v3363, %v3386
    %v3679 = vmul.f32 %v3363, %v3390
    %v3680 = vmul.f32 %v3363, %v3394
    %v3681 = vmul.f32 %v3363, %v3398
    %v3682 = vmul.f32 %v3363, %v3402
    %v3683 = vmul.f32 %v3363, %v3406
    %v3684 = vmul.f32 %v3363, %v3410
    %v3685 = vmul.f32 %v3363, %v3414
    %v3686 = vmul.f32 %v3363, %v3418
    %v3687 = vmul.f32 %v3363, %v3422
    %v3688 = vmul.f32 %v3363, %v3426
    %v3689 = vmul.f32 %v3363, %v3430
    %v3690 = vmul.f32 %v3363, %v3434
    %v3691 = vmul.f32 %v3367, %v3374
    %v3692 = vmul.f32 %v3367, %v3378
    %v3693 = vmul.f32 %v3367, %v3382
    %v3694 = vmul.f32 %v3367, %v3386
    %v3695 = vmul.f32 %v3367, %v3390
    %v3696 = vmul.f32 %v3367, %v3394
    %v3697 = vmul.f32 %v3367, %v3398
    %v3698 = vmul.f32 %v3367, %v3402
    %v3699 = vmul.f32 %v3367, %v3406
    %v3700 = vmul.f32 %v3367, %v3410
    %v3701 = vmul.f32 %v3367, %v3414
    %v3702 = vmul.f32 %v3367, %v3418
    %v3703 = vmul.f32 %v3367, %v3422
    %v3704 = vmul.f32 %v3367, %v3426
    %v3705 = vmul.f32 %v3367, %v3430
    %v3706 = vmul.f32 %v3367, %v3434
    %v3963 = vrot.slane %v3467, 7
    %v3964 = vsel %vm2787, %v3963, %v3451
    %v3965 = vrot.slane %v3483, 6
    %v3966 = vsel %vm2790, %v3965, %v3964
    %v3967 = vrot.slane %v3499, 5
    %v3968 = vsel %vm2793, %v3967, %v3966
    %v3969 = vrot.slane %v3515, 4
    %v3970 = vsel %vm2796, %v3969, %v3968
    %v3971 = vrot.slane %v3531, 3
    %v3972 = vsel %vm2799, %v3971, %v3970
    %v3973 = vrot.slane %v3547, 2
    %v3974 = vsel %vm2802, %v3973, %v3972
    %v3975 = vrot.slane %v3563, 1
    %v3976 = vsel %vm2805, %v3975, %v3974
    %v3977 = vrot.slane %v3468, 7
    %v3978 = vsel %vm2787, %v3977, %v3452
    %v3979 = vrot.slane %v3484, 6
    %v3980 = vsel %vm2790, %v3979, %v3978
    %v3981 = vrot.slane %v3500, 5
    %v3982 = vsel %vm2793, %v3981, %v3980
    %v3983 = vrot.slane %v3516, 4
    %v3984 = vsel %vm2796, %v3983, %v3982
    %v3985 = vrot.slane %v3532, 3
    %v3986 = vsel %vm2799, %v3985, %v3984
    %v3987 = vrot.slane %v3548, 2
    %v3988 = vsel %vm2802, %v3987, %v3986
    %v3989 = vrot.slane %v3564, 1
    %v3990 = vsel %vm2805, %v3989, %v3988
    %v3991 = vrot.slane %v3469, 7
    %v3992 = vsel %vm2787, %v3991, %v3453
    %v3993 = vrot.slane %v3485, 6
    %v3994 = vsel %vm2790, %v3993, %v3992
    %v3995 = vrot.slane %v3501, 5
    %v3996 = vsel %vm2793, %v3995, %v3994
    %v3997 = vrot.slane %v3517, 4
    %v3998 = vsel %vm2796, %v3997, %v3996
    %v3999 = vrot.slane %v3533, 3
    %v4000 = vsel %vm2799, %v3999, %v3998
    %v4001 = vrot.slane %v3549, 2
    %v4002 = vsel %vm2802, %v4001, %v4000
    %v4003 = vrot.slane %v3565, 1
    %v4004 = vsel %vm2805, %v4003, %v4002
    %v4005 = vrot.slane %v3470, 7
    %v4006 = vsel %vm2787, %v4005, %v3454
    %v4007 = vrot.slane %v3486, 6
    %v4008 = vsel %vm2790, %v4007, %v4006
    %v4009 = vrot.slane %v3502, 5
    %v4010 = vsel %vm2793, %v4009, %v4008
    %v4011 = vrot.slane %v3518, 4
    %v4012 = vsel %vm2796, %v4011, %v4010
    %v4013 = vrot.slane %v3534, 3
    %v4014 = vsel %vm2799, %v4013, %v4012
    %v4015 = vrot.slane %v3550, 2
    %v4016 = vsel %vm2802, %v4015, %v4014
    %v4017 = vrot.slane %v3566, 1
    %v4018 = vsel %vm2805, %v4017, %v4016
    %v4019 = vrot.slane %v3471, 7
    %v4020 = vsel %vm2787, %v4019, %v3455
    %v4021 = vrot.slane %v3487, 6
    %v4022 = vsel %vm2790, %v4021, %v4020
    %v4023 = vrot.slane %v3503, 5
    %v4024 = vsel %vm2793, %v4023, %v4022
    %v4025 = vrot.slane %v3519, 4
    %v4026 = vsel %vm2796, %v4025, %v4024
    %v4027 = vrot.slane %v3535, 3
    %v4028 = vsel %vm2799, %v4027, %v4026
    %v4029 = vrot.slane %v3551, 2
    %v4030 = vsel %vm2802, %v4029, %v4028
    %v4031 = vrot.slane %v3567, 1
    %v4032 = vsel %vm2805, %v4031, %v4030
    %v4033 = vrot.slane %v3472, 7
    %v4034 = vsel %vm2787, %v4033, %v3456
    %v4035 = vrot.slane %v3488, 6
    %v4036 = vsel %vm2790, %v4035, %v4034
    %v4037 = vrot.slane %v3504, 5
    %v4038 = vsel %vm2793, %v4037, %v4036
    %v4039 = vrot.slane %v3520, 4
    %v4040 = vsel %vm2796, %v4039, %v4038
    %v4041 = vrot.slane %v3536, 3
    %v4042 = vsel %vm2799, %v4041, %v4040
    %v4043 = vrot.slane %v3552, 2
    %v4044 = vsel %vm2802, %v4043, %v4042
    %v4045 = vrot.slane %v3568, 1
    %v4046 = vsel %vm2805, %v4045, %v4044
    %v4047 = vrot.slane %v3473, 7
    %v4048 = vsel %vm2787, %v4047, %v3457
    %v4049 = vrot.slane %v3489, 6
    %v4050 = vsel %vm2790, %v4049, %v4048
    %v4051 = vrot.slane %v3505, 5
    %v4052 = vsel %vm2793, %v4051, %v4050
    %v4053 = vrot.slane %v3521, 4
    %v4054 = vsel %vm2796, %v4053, %v4052
    %v4055 = vrot.slane %v3537, 3
    %v4056 = vsel %vm2799, %v4055, %v4054
    %v4057 = vrot.slane %v3553, 2
    %v4058 = vsel %vm2802, %v4057, %v4056
    %v4059 = vrot.slane %v3569, 1
    %v4060 = vsel %vm2805, %v4059, %v4058
    %v4061 = vrot.slane %v3474, 7
    %v4062 = vsel %vm2787, %v4061, %v3458
    %v4063 = vrot.slane %v3490, 6
    %v4064 = vsel %vm2790, %v4063, %v4062
    %v4065 = vrot.slane %v3506, 5
    %v4066 = vsel %vm2793, %v4065, %v4064
    %v4067 = vrot.slane %v3522, 4
    %v4068 = vsel %vm2796, %v4067, %v4066
    %v4069 = vrot.slane %v3538, 3
    %v4070 = vsel %vm2799, %v4069, %v4068
    %v4071 = vrot.slane %v3554, 2
    %v4072 = vsel %vm2802, %v4071, %v4070
    %v4073 = vrot.slane %v3570, 1
    %v4074 = vsel %vm2805, %v4073, %v4072
    %v4075 = vrot.slane %v3475, 7
    %v4076 = vsel %vm2787, %v4075, %v3459
    %v4077 = vrot.slane %v3491, 6
    %v4078 = vsel %vm2790, %v4077, %v4076
    %v4079 = vrot.slane %v3507, 5
    %v4080 = vsel %vm2793, %v4079, %v4078
    %v4081 = vrot.slane %v3523, 4
    %v4082 = vsel %vm2796, %v4081, %v4080
    %v4083 = vrot.slane %v3539, 3
    %v4084 = vsel %vm2799, %v4083, %v4082
    %v4085 = vrot.slane %v3555, 2
    %v4086 = vsel %vm2802, %v4085, %v4084
    %v4087 = vrot.slane %v3571, 1
    %v4088 = vsel %vm2805, %v4087, %v4086
    %v4089 = vrot.slane %v3476, 7
    %v4090 = vsel %vm2787, %v4089, %v3460
    %v4091 = vrot.slane %v3492, 6
    %v4092 = vsel %vm2790, %v4091, %v4090
    %v4093 = vrot.slane %v3508, 5
    %v4094 = vsel %vm2793, %v4093, %v4092
    %v4095 = vrot.slane %v3524, 4
    %v4096 = vsel %vm2796, %v4095, %v4094
    %v4097 = vrot.slane %v3540, 3
    %v4098 = vsel %vm2799, %v4097, %v4096
    %v4099 = vrot.slane %v3556, 2
    %v4100 = vsel %vm2802, %v4099, %v4098
    %v4101 = vrot.slane %v3572, 1
    %v4102 = vsel %vm2805, %v4101, %v4100
    %v4103 = vrot.slane %v3477, 7
    %v4104 = vsel %vm2787, %v4103, %v3461
    %v4105 = vrot.slane %v3493, 6
    %v4106 = vsel %vm2790, %v4105, %v4104
    %v4107 = vrot.slane %v3509, 5
    %v4108 = vsel %vm2793, %v4107, %v4106
    %v4109 = vrot.slane %v3525, 4
    %v4110 = vsel %vm2796, %v4109, %v4108
    %v4111 = vrot.slane %v3541, 3
    %v4112 = vsel %vm2799, %v4111, %v4110
    %v4113 = vrot.slane %v3557, 2
    %v4114 = vsel %vm2802, %v4113, %v4112
    %v4115 = vrot.slane %v3573, 1
    %v4116 = vsel %vm2805, %v4115, %v4114
    %v4117 = vrot.slane %v3478, 7
    %v4118 = vsel %vm2787, %v4117, %v3462
    %v4119 = vrot.slane %v3494, 6
    %v4120 = vsel %vm2790, %v4119, %v4118
    %v4121 = vrot.slane %v3510, 5
    %v4122 = vsel %vm2793, %v4121, %v4120
    %v4123 = vrot.slane %v3526, 4
    %v4124 = vsel %vm2796, %v4123, %v4122
    %v4125 = vrot.slane %v3542, 3
    %v4126 = vsel %vm2799, %v4125, %v4124
    %v4127 = vrot.slane %v3558, 2
    %v4128 = vsel %vm2802, %v4127, %v4126
    %v4129 = vrot.slane %v3574, 1
    %v4130 = vsel %vm2805, %v4129, %v4128
    %v4131 = vrot.slane %v3479, 7
    %v4132 = vsel %vm2787, %v4131, %v3463
    %v4133 = vrot.slane %v3495, 6
    %v4134 = vsel %vm2790, %v4133, %v4132
    %v4135 = vrot.slane %v3511, 5
    %v4136 = vsel %vm2793, %v4135, %v4134
    %v4137 = vrot.slane %v3527, 4
    %v4138 = vsel %vm2796, %v4137, %v4136
    %v4139 = vrot.slane %v3543, 3
    %v4140 = vsel %vm2799, %v4139, %v4138
    %v4141 = vrot.slane %v3559, 2
    %v4142 = vsel %vm2802, %v4141, %v4140
    %v4143 = vrot.slane %v3575, 1
    %v4144 = vsel %vm2805, %v4143, %v4142
    %v4145 = vrot.slane %v3480, 7
    %v4146 = vsel %vm2787, %v4145, %v3464
    %v4147 = vrot.slane %v3496, 6
    %v4148 = vsel %vm2790, %v4147, %v4146
    %v4149 = vrot.slane %v3512, 5
    %v4150 = vsel %vm2793, %v4149, %v4148
    %v4151 = vrot.slane %v3528, 4
    %v4152 = vsel %vm2796, %v4151, %v4150
    %v4153 = vrot.slane %v3544, 3
    %v4154 = vsel %vm2799, %v4153, %v4152
    %v4155 = vrot.slane %v3560, 2
    %v4156 = vsel %vm2802, %v4155, %v4154
    %v4157 = vrot.slane %v3576, 1
    %v4158 = vsel %vm2805, %v4157, %v4156
    %v4159 = vrot.slane %v3481, 7
    %v4160 = vsel %vm2787, %v4159, %v3465
    %v4161 = vrot.slane %v3497, 6
    %v4162 = vsel %vm2790, %v4161, %v4160
    %v4163 = vrot.slane %v3513, 5
    %v4164 = vsel %vm2793, %v4163, %v4162
    %v4165 = vrot.slane %v3529, 4
    %v4166 = vsel %vm2796, %v4165, %v4164
    %v4167 = vrot.slane %v3545, 3
    %v4168 = vsel %vm2799, %v4167, %v4166
    %v4169 = vrot.slane %v3561, 2
    %v4170 = vsel %vm2802, %v4169, %v4168
    %v4171 = vrot.slane %v3577, 1
    %v4172 = vsel %vm2805, %v4171, %v4170
    %v4173 = vrot.slane %v3482, 7
    %v4174 = vsel %vm2787, %v4173, %v3466
    %v4175 = vrot.slane %v3498, 6
    %v4176 = vsel %vm2790, %v4175, %v4174
    %v4177 = vrot.slane %v3514, 5
    %v4178 = vsel %vm2793, %v4177, %v4176
    %v4179 = vrot.slane %v3530, 4
    %v4180 = vsel %vm2796, %v4179, %v4178
    %v4181 = vrot.slane %v3546, 3
    %v4182 = vsel %vm2799, %v4181, %v4180
    %v4183 = vrot.slane %v3562, 2
    %v4184 = vsel %vm2802, %v4183, %v4182
    %v4185 = vrot.slane %v3578, 1
    %v4186 = vsel %vm2805, %v4185, %v4184
    %v4187 = vrot.slane %v3595, 7
    %v4188 = vsel %vm2787, %v4187, %v3579
    %v4189 = vrot.slane %v3611, 6
    %v4190 = vsel %vm2790, %v4189, %v4188
    %v4191 = vrot.slane %v3627, 5
    %v4192 = vsel %vm2793, %v4191, %v4190
    %v4193 = vrot.slane %v3643, 4
    %v4194 = vsel %vm2796, %v4193, %v4192
    %v4195 = vrot.slane %v3659, 3
    %v4196 = vsel %vm2799, %v4195, %v4194
    %v4197 = vrot.slane %v3675, 2
    %v4198 = vsel %vm2802, %v4197, %v4196
    %v4199 = vrot.slane %v3691, 1
    %v4200 = vsel %vm2805, %v4199, %v4198
    %v4201 = vrot.slane %v3596, 7
    %v4202 = vsel %vm2787, %v4201, %v3580
    %v4203 = vrot.slane %v3612, 6
    %v4204 = vsel %vm2790, %v4203, %v4202
    %v4205 = vrot.slane %v3628, 5
    %v4206 = vsel %vm2793, %v4205, %v4204
    %v4207 = vrot.slane %v3644, 4
    %v4208 = vsel %vm2796, %v4207, %v4206
    %v4209 = vrot.slane %v3660, 3
    %v4210 = vsel %vm2799, %v4209, %v4208
    %v4211 = vrot.slane %v3676, 2
    %v4212 = vsel %vm2802, %v4211, %v4210
    %v4213 = vrot.slane %v3692, 1
    %v4214 = vsel %vm2805, %v4213, %v4212
    %v4215 = vrot.slane %v3597, 7
    %v4216 = vsel %vm2787, %v4215, %v3581
    %v4217 = vrot.slane %v3613, 6
    %v4218 = vsel %vm2790, %v4217, %v4216
    %v4219 = vrot.slane %v3629, 5
    %v4220 = vsel %vm2793, %v4219, %v4218
    %v4221 = vrot.slane %v3645, 4
    %v4222 = vsel %vm2796, %v4221, %v4220
    %v4223 = vrot.slane %v3661, 3
    %v4224 = vsel %vm2799, %v4223, %v4222
    %v4225 = vrot.slane %v3677, 2
    %v4226 = vsel %vm2802, %v4225, %v4224
    %v4227 = vrot.slane %v3693, 1
    %v4228 = vsel %vm2805, %v4227, %v4226
    %v4229 = vrot.slane %v3598, 7
    %v4230 = vsel %vm2787, %v4229, %v3582
    %v4231 = vrot.slane %v3614, 6
    %v4232 = vsel %vm2790, %v4231, %v4230
    %v4233 = vrot.slane %v3630, 5
    %v4234 = vsel %vm2793, %v4233, %v4232
    %v4235 = vrot.slane %v3646, 4
    %v4236 = vsel %vm2796, %v4235, %v4234
    %v4237 = vrot.slane %v3662, 3
    %v4238 = vsel %vm2799, %v4237, %v4236
    %v4239 = vrot.slane %v3678, 2
    %v4240 = vsel %vm2802, %v4239, %v4238
    %v4241 = vrot.slane %v3694, 1
    %v4242 = vsel %vm2805, %v4241, %v4240
    %v4243 = vrot.slane %v3599, 7
    %v4244 = vsel %vm2787, %v4243, %v3583
    %v4245 = vrot.slane %v3615, 6
    %v4246 = vsel %vm2790, %v4245, %v4244
    %v4247 = vrot.slane %v3631, 5
    %v4248 = vsel %vm2793, %v4247, %v4246
    %v4249 = vrot.slane %v3647, 4
    %v4250 = vsel %vm2796, %v4249, %v4248
    %v4251 = vrot.slane %v3663, 3
    %v4252 = vsel %vm2799, %v4251, %v4250
    %v4253 = vrot.slane %v3679, 2
    %v4254 = vsel %vm2802, %v4253, %v4252
    %v4255 = vrot.slane %v3695, 1
    %v4256 = vsel %vm2805, %v4255, %v4254
    %v4257 = vrot.slane %v3600, 7
    %v4258 = vsel %vm2787, %v4257, %v3584
    %v4259 = vrot.slane %v3616, 6
    %v4260 = vsel %vm2790, %v4259, %v4258
    %v4261 = vrot.slane %v3632, 5
    %v4262 = vsel %vm2793, %v4261, %v4260
    %v4263 = vrot.slane %v3648, 4
    %v4264 = vsel %vm2796, %v4263, %v4262
    %v4265 = vrot.slane %v3664, 3
    %v4266 = vsel %vm2799, %v4265, %v4264
    %v4267 = vrot.slane %v3680, 2
    %v4268 = vsel %vm2802, %v4267, %v4266
    %v4269 = vrot.slane %v3696, 1
    %v4270 = vsel %vm2805, %v4269, %v4268
    %v4271 = vrot.slane %v3601, 7
    %v4272 = vsel %vm2787, %v4271, %v3585
    %v4273 = vrot.slane %v3617, 6
    %v4274 = vsel %vm2790, %v4273, %v4272
    %v4275 = vrot.slane %v3633, 5
    %v4276 = vsel %vm2793, %v4275, %v4274
    %v4277 = vrot.slane %v3649, 4
    %v4278 = vsel %vm2796, %v4277, %v4276
    %v4279 = vrot.slane %v3665, 3
    %v4280 = vsel %vm2799, %v4279, %v4278
    %v4281 = vrot.slane %v3681, 2
    %v4282 = vsel %vm2802, %v4281, %v4280
    %v4283 = vrot.slane %v3697, 1
    %v4284 = vsel %vm2805, %v4283, %v4282
    %v4285 = vrot.slane %v3602, 7
    %v4286 = vsel %vm2787, %v4285, %v3586
    %v4287 = vrot.slane %v3618, 6
    %v4288 = vsel %vm2790, %v4287, %v4286
    %v4289 = vrot.slane %v3634, 5
    %v4290 = vsel %vm2793, %v4289, %v4288
    %v4291 = vrot.slane %v3650, 4
    %v4292 = vsel %vm2796, %v4291, %v4290
    %v4293 = vrot.slane %v3666, 3
    %v4294 = vsel %vm2799, %v4293, %v4292
    %v4295 = vrot.slane %v3682, 2
    %v4296 = vsel %vm2802, %v4295, %v4294
    %v4297 = vrot.slane %v3698, 1
    %v4298 = vsel %vm2805, %v4297, %v4296
    %v4299 = vrot.slane %v3603, 7
    %v4300 = vsel %vm2787, %v4299, %v3587
    %v4301 = vrot.slane %v3619, 6
    %v4302 = vsel %vm2790, %v4301, %v4300
    %v4303 = vrot.slane %v3635, 5
    %v4304 = vsel %vm2793, %v4303, %v4302
    %v4305 = vrot.slane %v3651, 4
    %v4306 = vsel %vm2796, %v4305, %v4304
    %v4307 = vrot.slane %v3667, 3
    %v4308 = vsel %vm2799, %v4307, %v4306
    %v4309 = vrot.slane %v3683, 2
    %v4310 = vsel %vm2802, %v4309, %v4308
    %v4311 = vrot.slane %v3699, 1
    %v4312 = vsel %vm2805, %v4311, %v4310
    %v4313 = vrot.slane %v3604, 7
    %v4314 = vsel %vm2787, %v4313, %v3588
    %v4315 = vrot.slane %v3620, 6
    %v4316 = vsel %vm2790, %v4315, %v4314
    %v4317 = vrot.slane %v3636, 5
    %v4318 = vsel %vm2793, %v4317, %v4316
    %v4319 = vrot.slane %v3652, 4
    %v4320 = vsel %vm2796, %v4319, %v4318
    %v4321 = vrot.slane %v3668, 3
    %v4322 = vsel %vm2799, %v4321, %v4320
    %v4323 = vrot.slane %v3684, 2
    %v4324 = vsel %vm2802, %v4323, %v4322
    %v4325 = vrot.slane %v3700, 1
    %v4326 = vsel %vm2805, %v4325, %v4324
    %v4327 = vrot.slane %v3605, 7
    %v4328 = vsel %vm2787, %v4327, %v3589
    %v4329 = vrot.slane %v3621, 6
    %v4330 = vsel %vm2790, %v4329, %v4328
    %v4331 = vrot.slane %v3637, 5
    %v4332 = vsel %vm2793, %v4331, %v4330
    %v4333 = vrot.slane %v3653, 4
    %v4334 = vsel %vm2796, %v4333, %v4332
    %v4335 = vrot.slane %v3669, 3
    %v4336 = vsel %vm2799, %v4335, %v4334
    %v4337 = vrot.slane %v3685, 2
    %v4338 = vsel %vm2802, %v4337, %v4336
    %v4339 = vrot.slane %v3701, 1
    %v4340 = vsel %vm2805, %v4339, %v4338
    %v4341 = vrot.slane %v3606, 7
    %v4342 = vsel %vm2787, %v4341, %v3590
    %v4343 = vrot.slane %v3622, 6
    %v4344 = vsel %vm2790, %v4343, %v4342
    %v4345 = vrot.slane %v3638, 5
    %v4346 = vsel %vm2793, %v4345, %v4344
    %v4347 = vrot.slane %v3654, 4
    %v4348 = vsel %vm2796, %v4347, %v4346
    %v4349 = vrot.slane %v3670, 3
    %v4350 = vsel %vm2799, %v4349, %v4348
    %v4351 = vrot.slane %v3686, 2
    %v4352 = vsel %vm2802, %v4351, %v4350
    %v4353 = vrot.slane %v3702, 1
    %v4354 = vsel %vm2805, %v4353, %v4352
    %v4355 = vrot.slane %v3607, 7
    %v4356 = vsel %vm2787, %v4355, %v3591
    %v4357 = vrot.slane %v3623, 6
    %v4358 = vsel %vm2790, %v4357, %v4356
    %v4359 = vrot.slane %v3639, 5
    %v4360 = vsel %vm2793, %v4359, %v4358
    %v4361 = vrot.slane %v3655, 4
    %v4362 = vsel %vm2796, %v4361, %v4360
    %v4363 = vrot.slane %v3671, 3
    %v4364 = vsel %vm2799, %v4363, %v4362
    %v4365 = vrot.slane %v3687, 2
    %v4366 = vsel %vm2802, %v4365, %v4364
    %v4367 = vrot.slane %v3703, 1
    %v4368 = vsel %vm2805, %v4367, %v4366
    %v4369 = vrot.slane %v3608, 7
    %v4370 = vsel %vm2787, %v4369, %v3592
    %v4371 = vrot.slane %v3624, 6
    %v4372 = vsel %vm2790, %v4371, %v4370
    %v4373 = vrot.slane %v3640, 5
    %v4374 = vsel %vm2793, %v4373, %v4372
    %v4375 = vrot.slane %v3656, 4
    %v4376 = vsel %vm2796, %v4375, %v4374
    %v4377 = vrot.slane %v3672, 3
    %v4378 = vsel %vm2799, %v4377, %v4376
    %v4379 = vrot.slane %v3688, 2
    %v4380 = vsel %vm2802, %v4379, %v4378
    %v4381 = vrot.slane %v3704, 1
    %v4382 = vsel %vm2805, %v4381, %v4380
    %v4383 = vrot.slane %v3609, 7
    %v4384 = vsel %vm2787, %v4383, %v3593
    %v4385 = vrot.slane %v3625, 6
    %v4386 = vsel %vm2790, %v4385, %v4384
    %v4387 = vrot.slane %v3641, 5
    %v4388 = vsel %vm2793, %v4387, %v4386
    %v4389 = vrot.slane %v3657, 4
    %v4390 = vsel %vm2796, %v4389, %v4388
    %v4391 = vrot.slane %v3673, 3
    %v4392 = vsel %vm2799, %v4391, %v4390
    %v4393 = vrot.slane %v3689, 2
    %v4394 = vsel %vm2802, %v4393, %v4392
    %v4395 = vrot.slane %v3705, 1
    %v4396 = vsel %vm2805, %v4395, %v4394
    %v4397 = vrot.slane %v3610, 7
    %v4398 = vsel %vm2787, %v4397, %v3594
    %v4399 = vrot.slane %v3626, 6
    %v4400 = vsel %vm2790, %v4399, %v4398
    %v4401 = vrot.slane %v3642, 5
    %v4402 = vsel %vm2793, %v4401, %v4400
    %v4403 = vrot.slane %v3658, 4
    %v4404 = vsel %vm2796, %v4403, %v4402
    %v4405 = vrot.slane %v3674, 3
    %v4406 = vsel %vm2799, %v4405, %v4404
    %v4407 = vrot.slane %v3690, 2
    %v4408 = vsel %vm2802, %v4407, %v4406
    %v4409 = vrot.slane %v3706, 1
    %v4410 = vsel %vm2805, %v4409, %v4408
    %v4443 = vadd.f32 %v3273, %v3976
    %v4444 = vadd.f32 %v3274, %v3990
    %v4445 = vadd.f32 %v3275, %v4004
    %v4446 = vadd.f32 %v3276, %v4018
    %v4447 = vadd.f32 %v3277, %v4032
    %v4448 = vadd.f32 %v3278, %v4046
    %v4449 = vadd.f32 %v3279, %v4060
    %v4450 = vadd.f32 %v3280, %v4074
    %v4451 = vadd.f32 %v3281, %v4088
    %v4452 = vadd.f32 %v3282, %v4102
    %v4453 = vadd.f32 %v3283, %v4116
    %v4454 = vadd.f32 %v3284, %v4130
    %v4455 = vadd.f32 %v3285, %v4144
    %v4456 = vadd.f32 %v3286, %v4158
    %v4457 = vadd.f32 %v3287, %v4172
    %v4458 = vadd.f32 %v3288, %v4186
    %v4459 = vadd.f32 %v3289, %v4200
    %v4460 = vadd.f32 %v3290, %v4214
    %v4461 = vadd.f32 %v3291, %v4228
    %v4462 = vadd.f32 %v3292, %v4242
    %v4463 = vadd.f32 %v3293, %v4256
    %v4464 = vadd.f32 %v3294, %v4270
    %v4465 = vadd.f32 %v3295, %v4284
    %v4466 = vadd.f32 %v3296, %v4298
    %v4467 = vadd.f32 %v3297, %v4312
    %v4468 = vadd.f32 %v3298, %v4326
    %v4469 = vadd.f32 %v3299, %v4340
    %v4470 = vadd.f32 %v3300, %v4354
    %v4471 = vadd.f32 %v3301, %v4368
    %v4472 = vadd.f32 %v3302, %v4382
    %v4473 = vadd.f32 %v3303, %v4396
    %v4474 = vadd.f32 %v3304, %v4410
    %4475 = vset.pattern.permute.xlu0 4
    %4476 = vperm.xlu0 %4475, %v2001
    %v4477 = vpop.permute.xlu0 %4476
    %4479 = vset.pattern.permute.xlu0 4
    %4480 = vperm.xlu0 %4479, %v2002
    %v4481 = vpop.permute.xlu0 %4480
    %4483 = vset.pattern.permute.xlu0 4
    %4484 = vperm.xlu0 %4483, %v2003
    %v4485 = vpop.permute.xlu0 %4484
    %4487 = vset.pattern.permute.xlu0 4
    %4488 = vperm.xlu0 %4487, %v2004
    %v4489 = vpop.permute.xlu0 %4488
    %4491 = vset.pattern.permute.xlu0 4
    %4492 = vperm.xlu0 %4491, %v2005
    %v4493 = vpop.permute.xlu0 %4492
    %4495 = vset.pattern.permute.xlu0 4
    %4496 = vperm.xlu0 %4495, %v2006
    %v4497 = vpop.permute.xlu0 %4496
    %4499 = vset.pattern.permute.xlu0 4
    %4500 = vperm.xlu0 %4499, %v2007
    %v4501 = vpop.permute.xlu0 %4500
    %4503 = vset.pattern.permute.xlu0 4
    %4504 = vperm.xlu0 %4503, %v2008
    %v4505 = vpop.permute.xlu0 %4504
    %4507 = vset.pattern.permute.xlu0 4
    %4508 = vperm.xlu0 %4507, %v2009
    %v4509 = vpop.permute.xlu0 %4508
    %4511 = vset.pattern.permute.xlu0 4
    %4512 = vperm.xlu0 %4511, %v2010
    %v4513 = vpop.permute.xlu0 %4512
    %4515 = vset.pattern.permute.xlu0 4
    %4516 = vperm.xlu0 %4515, %v2011
    %v4517 = vpop.permute.xlu0 %4516
    %4519 = vset.pattern.permute.xlu0 4
    %4520 = vperm.xlu0 %4519, %v2012
    %v4521 = vpop.permute.xlu0 %4520
    %4523 = vset.pattern.permute.xlu0 4
    %4524 = vperm.xlu0 %4523, %v2013
    %v4525 = vpop.permute.xlu0 %4524
    %4527 = vset.pattern.permute.xlu0 4
    %4528 = vperm.xlu0 %4527, %v2014
    %v4529 = vpop.permute.xlu0 %4528
    %4531 = vset.pattern.permute.xlu0 4
    %4532 = vperm.xlu0 %4531, %v2015
    %v4533 = vpop.permute.xlu0 %4532
    %4535 = vset.pattern.permute.xlu0 4
    %4536 = vperm.xlu0 %4535, %v2016
    %v4537 = vpop.permute.xlu0 %4536
    %v4541 = vlaneseq
    %v4542 = vshrl.u32 %v4541, 7
    %v4543 = vsub.s32 0, %v4542
    %v4544 = vrot.slane %v2027, %v4543
    %v4545 = vlaneseq
    %v4546 = vshrl.u32 %v4545, 7
    %v4547 = vsub.s32 1, %v4546
    %v4548 = vrot.slane %v2027, %v4547
    %v4549 = vlaneseq
    %v4550 = vshrl.u32 %v4549, 7
    %v4551 = vsub.s32 2, %v4550
    %v4552 = vrot.slane %v2027, %v4551
    %v4553 = vlaneseq
    %v4554 = vshrl.u32 %v4553, 7
    %v4555 = vsub.s32 3, %v4554
    %v4556 = vrot.slane %v2027, %v4555
    %v4557 = vlaneseq
    %v4558 = vshrl.u32 %v4557, 7
    %v4559 = vsub.s32 4, %v4558
    %v4560 = vrot.slane %v2027, %v4559
    %v4561 = vlaneseq
    %v4562 = vshrl.u32 %v4561, 7
    %v4563 = vsub.s32 5, %v4562
    %v4564 = vrot.slane %v2027, %v4563
    %v4565 = vlaneseq
    %v4566 = vshrl.u32 %v4565, 7
    %v4567 = vsub.s32 6, %v4566
    %v4568 = vrot.slane %v2027, %v4567
    %v4569 = vlaneseq
    %v4570 = vshrl.u32 %v4569, 7
    %v4571 = vsub.s32 7, %v4570
    %v4572 = vrot.slane %v2027, %v4571
    %v4573 = vlaneseq
    %v4574 = vshrl.u32 %v4573, 7
    %v4575 = vsub.s32 0, %v4574
    %v4576 = vrot.slane %v2029, %v4575
    %v4577 = vlaneseq
    %v4578 = vshrl.u32 %v4577, 7
    %v4579 = vsub.s32 1, %v4578
    %v4580 = vrot.slane %v2029, %v4579
    %v4581 = vlaneseq
    %v4582 = vshrl.u32 %v4581, 7
    %v4583 = vsub.s32 2, %v4582
    %v4584 = vrot.slane %v2029, %v4583
    %v4585 = vlaneseq
    %v4586 = vshrl.u32 %v4585, 7
    %v4587 = vsub.s32 3, %v4586
    %v4588 = vrot.slane %v2029, %v4587
    %v4589 = vlaneseq
    %v4590 = vshrl.u32 %v4589, 7
    %v4591 = vsub.s32 4, %v4590
    %v4592 = vrot.slane %v2029, %v4591
    %v4593 = vlaneseq
    %v4594 = vshrl.u32 %v4593, 7
    %v4595 = vsub.s32 5, %v4594
    %v4596 = vrot.slane %v2029, %v4595
    %v4597 = vlaneseq
    %v4598 = vshrl.u32 %v4597, 7
    %v4599 = vsub.s32 6, %v4598
    %v4600 = vrot.slane %v2029, %v4599
    %v4601 = vlaneseq
    %v4602 = vshrl.u32 %v4601, 7
    %v4603 = vsub.s32 7, %v4602
    %v4604 = vrot.slane %v2029, %v4603
    %v4621 = vmul.f32 %v4477, %v4544
    %v4622 = vmul.f32 %v4477, %v4548
    %v4623 = vmul.f32 %v4477, %v4552
    %v4624 = vmul.f32 %v4477, %v4556
    %v4625 = vmul.f32 %v4477, %v4560
    %v4626 = vmul.f32 %v4477, %v4564
    %v4627 = vmul.f32 %v4477, %v4568
    %v4628 = vmul.f32 %v4477, %v4572
    %v4629 = vmul.f32 %v4477, %v4576
    %v4630 = vmul.f32 %v4477, %v4580
    %v4631 = vmul.f32 %v4477, %v4584
    %v4632 = vmul.f32 %v4477, %v4588
    %v4633 = vmul.f32 %v4477, %v4592
    %v4634 = vmul.f32 %v4477, %v4596
    %v4635 = vmul.f32 %v4477, %v4600
    %v4636 = vmul.f32 %v4477, %v4604
    %v4637 = vmul.f32 %v4481, %v4544
    %v4638 = vmul.f32 %v4481, %v4548
    %v4639 = vmul.f32 %v4481, %v4552
    %v4640 = vmul.f32 %v4481, %v4556
    %v4641 = vmul.f32 %v4481, %v4560
    %v4642 = vmul.f32 %v4481, %v4564
    %v4643 = vmul.f32 %v4481, %v4568
    %v4644 = vmul.f32 %v4481, %v4572
    %v4645 = vmul.f32 %v4481, %v4576
    %v4646 = vmul.f32 %v4481, %v4580
    %v4647 = vmul.f32 %v4481, %v4584
    %v4648 = vmul.f32 %v4481, %v4588
    %v4649 = vmul.f32 %v4481, %v4592
    %v4650 = vmul.f32 %v4481, %v4596
    %v4651 = vmul.f32 %v4481, %v4600
    %v4652 = vmul.f32 %v4481, %v4604
    %v4653 = vmul.f32 %v4485, %v4544
    %v4654 = vmul.f32 %v4485, %v4548
    %v4655 = vmul.f32 %v4485, %v4552
    %v4656 = vmul.f32 %v4485, %v4556
    %v4657 = vmul.f32 %v4485, %v4560
    %v4658 = vmul.f32 %v4485, %v4564
    %v4659 = vmul.f32 %v4485, %v4568
    %v4660 = vmul.f32 %v4485, %v4572
    %v4661 = vmul.f32 %v4485, %v4576
    %v4662 = vmul.f32 %v4485, %v4580
    %v4663 = vmul.f32 %v4485, %v4584
    %v4664 = vmul.f32 %v4485, %v4588
    %v4665 = vmul.f32 %v4485, %v4592
    %v4666 = vmul.f32 %v4485, %v4596
    %v4667 = vmul.f32 %v4485, %v4600
    %v4668 = vmul.f32 %v4485, %v4604
    %v4669 = vmul.f32 %v4489, %v4544
    %v4670 = vmul.f32 %v4489, %v4548
    %v4671 = vmul.f32 %v4489, %v4552
    %v4672 = vmul.f32 %v4489, %v4556
    %v4673 = vmul.f32 %v4489, %v4560
    %v4674 = vmul.f32 %v4489, %v4564
    %v4675 = vmul.f32 %v4489, %v4568
    %v4676 = vmul.f32 %v4489, %v4572
    %v4677 = vmul.f32 %v4489, %v4576
    %v4678 = vmul.f32 %v4489, %v4580
    %v4679 = vmul.f32 %v4489, %v4584
    %v4680 = vmul.f32 %v4489, %v4588
    %v4681 = vmul.f32 %v4489, %v4592
    %v4682 = vmul.f32 %v4489, %v4596
    %v4683 = vmul.f32 %v4489, %v4600
    %v4684 = vmul.f32 %v4489, %v4604
    %v4685 = vmul.f32 %v4493, %v4544
    %v4686 = vmul.f32 %v4493, %v4548
    %v4687 = vmul.f32 %v4493, %v4552
    %v4688 = vmul.f32 %v4493, %v4556
    %v4689 = vmul.f32 %v4493, %v4560
    %v4690 = vmul.f32 %v4493, %v4564
    %v4691 = vmul.f32 %v4493, %v4568
    %v4692 = vmul.f32 %v4493, %v4572
    %v4693 = vmul.f32 %v4493, %v4576
    %v4694 = vmul.f32 %v4493, %v4580
    %v4695 = vmul.f32 %v4493, %v4584
    %v4696 = vmul.f32 %v4493, %v4588
    %v4697 = vmul.f32 %v4493, %v4592
    %v4698 = vmul.f32 %v4493, %v4596
    %v4699 = vmul.f32 %v4493, %v4600
    %v4700 = vmul.f32 %v4493, %v4604
    %v4701 = vmul.f32 %v4497, %v4544
    %v4702 = vmul.f32 %v4497, %v4548
    %v4703 = vmul.f32 %v4497, %v4552
    %v4704 = vmul.f32 %v4497, %v4556
    %v4705 = vmul.f32 %v4497, %v4560
    %v4706 = vmul.f32 %v4497, %v4564
    %v4707 = vmul.f32 %v4497, %v4568
    %v4708 = vmul.f32 %v4497, %v4572
    %v4709 = vmul.f32 %v4497, %v4576
    %v4710 = vmul.f32 %v4497, %v4580
    %v4711 = vmul.f32 %v4497, %v4584
    %v4712 = vmul.f32 %v4497, %v4588
    %v4713 = vmul.f32 %v4497, %v4592
    %v4714 = vmul.f32 %v4497, %v4596
    %v4715 = vmul.f32 %v4497, %v4600
    %v4716 = vmul.f32 %v4497, %v4604
    %v4717 = vmul.f32 %v4501, %v4544
    %v4718 = vmul.f32 %v4501, %v4548
    %v4719 = vmul.f32 %v4501, %v4552
    %v4720 = vmul.f32 %v4501, %v4556
    %v4721 = vmul.f32 %v4501, %v4560
    %v4722 = vmul.f32 %v4501, %v4564
    %v4723 = vmul.f32 %v4501, %v4568
    %v4724 = vmul.f32 %v4501, %v4572
    %v4725 = vmul.f32 %v4501, %v4576
    %v4726 = vmul.f32 %v4501, %v4580
    %v4727 = vmul.f32 %v4501, %v4584
    %v4728 = vmul.f32 %v4501, %v4588
    %v4729 = vmul.f32 %v4501, %v4592
    %v4730 = vmul.f32 %v4501, %v4596
    %v4731 = vmul.f32 %v4501, %v4600
    %v4732 = vmul.f32 %v4501, %v4604
    %v4733 = vmul.f32 %v4505, %v4544
    %v4734 = vmul.f32 %v4505, %v4548
    %v4735 = vmul.f32 %v4505, %v4552
    %v4736 = vmul.f32 %v4505, %v4556
    %v4737 = vmul.f32 %v4505, %v4560
    %v4738 = vmul.f32 %v4505, %v4564
    %v4739 = vmul.f32 %v4505, %v4568
    %v4740 = vmul.f32 %v4505, %v4572
    %v4741 = vmul.f32 %v4505, %v4576
    %v4742 = vmul.f32 %v4505, %v4580
    %v4743 = vmul.f32 %v4505, %v4584
    %v4744 = vmul.f32 %v4505, %v4588
    %v4745 = vmul.f32 %v4505, %v4592
    %v4746 = vmul.f32 %v4505, %v4596
    %v4747 = vmul.f32 %v4505, %v4600
    %v4748 = vmul.f32 %v4505, %v4604
    %v4749 = vmul.f32 %v4509, %v4544
    %v4750 = vmul.f32 %v4509, %v4548
    %v4751 = vmul.f32 %v4509, %v4552
    %v4752 = vmul.f32 %v4509, %v4556
    %v4753 = vmul.f32 %v4509, %v4560
    %v4754 = vmul.f32 %v4509, %v4564
    %v4755 = vmul.f32 %v4509, %v4568
    %v4756 = vmul.f32 %v4509, %v4572
    %v4757 = vmul.f32 %v4509, %v4576
    %v4758 = vmul.f32 %v4509, %v4580
    %v4759 = vmul.f32 %v4509, %v4584
    %v4760 = vmul.f32 %v4509, %v4588
    %v4761 = vmul.f32 %v4509, %v4592
    %v4762 = vmul.f32 %v4509, %v4596
    %v4763 = vmul.f32 %v4509, %v4600
    %v4764 = vmul.f32 %v4509, %v4604
    %v4765 = vmul.f32 %v4513, %v4544
    %v4766 = vmul.f32 %v4513, %v4548
    %v4767 = vmul.f32 %v4513, %v4552
    %v4768 = vmul.f32 %v4513, %v4556
    %v4769 = vmul.f32 %v4513, %v4560
    %v4770 = vmul.f32 %v4513, %v4564
    %v4771 = vmul.f32 %v4513, %v4568
    %v4772 = vmul.f32 %v4513, %v4572
    %v4773 = vmul.f32 %v4513, %v4576
    %v4774 = vmul.f32 %v4513, %v4580
    %v4775 = vmul.f32 %v4513, %v4584
    %v4776 = vmul.f32 %v4513, %v4588
    %v4777 = vmul.f32 %v4513, %v4592
    %v4778 = vmul.f32 %v4513, %v4596
    %v4779 = vmul.f32 %v4513, %v4600
    %v4780 = vmul.f32 %v4513, %v4604
    %v4781 = vmul.f32 %v4517, %v4544
    %v4782 = vmul.f32 %v4517, %v4548
    %v4783 = vmul.f32 %v4517, %v4552
    %v4784 = vmul.f32 %v4517, %v4556
    %v4785 = vmul.f32 %v4517, %v4560
    %v4786 = vmul.f32 %v4517, %v4564
    %v4787 = vmul.f32 %v4517, %v4568
    %v4788 = vmul.f32 %v4517, %v4572
    %v4789 = vmul.f32 %v4517, %v4576
    %v4790 = vmul.f32 %v4517, %v4580
    %v4791 = vmul.f32 %v4517, %v4584
    %v4792 = vmul.f32 %v4517, %v4588
    %v4793 = vmul.f32 %v4517, %v4592
    %v4794 = vmul.f32 %v4517, %v4596
    %v4795 = vmul.f32 %v4517, %v4600
    %v4796 = vmul.f32 %v4517, %v4604
    %v4797 = vmul.f32 %v4521, %v4544
    %v4798 = vmul.f32 %v4521, %v4548
    %v4799 = vmul.f32 %v4521, %v4552
    %v4800 = vmul.f32 %v4521, %v4556
    %v4801 = vmul.f32 %v4521, %v4560
    %v4802 = vmul.f32 %v4521, %v4564
    %v4803 = vmul.f32 %v4521, %v4568
    %v4804 = vmul.f32 %v4521, %v4572
    %v4805 = vmul.f32 %v4521, %v4576
    %v4806 = vmul.f32 %v4521, %v4580
    %v4807 = vmul.f32 %v4521, %v4584
    %v4808 = vmul.f32 %v4521, %v4588
    %v4809 = vmul.f32 %v4521, %v4592
    %v4810 = vmul.f32 %v4521, %v4596
    %v4811 = vmul.f32 %v4521, %v4600
    %v4812 = vmul.f32 %v4521, %v4604
    %v4813 = vmul.f32 %v4525, %v4544
    %v4814 = vmul.f32 %v4525, %v4548
    %v4815 = vmul.f32 %v4525, %v4552
    %v4816 = vmul.f32 %v4525, %v4556
    %v4817 = vmul.f32 %v4525, %v4560
    %v4818 = vmul.f32 %v4525, %v4564
    %v4819 = vmul.f32 %v4525, %v4568
    %v4820 = vmul.f32 %v4525, %v4572
    %v4821 = vmul.f32 %v4525, %v4576
    %v4822 = vmul.f32 %v4525, %v4580
    %v4823 = vmul.f32 %v4525, %v4584
    %v4824 = vmul.f32 %v4525, %v4588
    %v4825 = vmul.f32 %v4525, %v4592
    %v4826 = vmul.f32 %v4525, %v4596
    %v4827 = vmul.f32 %v4525, %v4600
    %v4828 = vmul.f32 %v4525, %v4604
    %v4829 = vmul.f32 %v4529, %v4544
    %v4830 = vmul.f32 %v4529, %v4548
    %v4831 = vmul.f32 %v4529, %v4552
    %v4832 = vmul.f32 %v4529, %v4556
    %v4833 = vmul.f32 %v4529, %v4560
    %v4834 = vmul.f32 %v4529, %v4564
    %v4835 = vmul.f32 %v4529, %v4568
    %v4836 = vmul.f32 %v4529, %v4572
    %v4837 = vmul.f32 %v4529, %v4576
    %v4838 = vmul.f32 %v4529, %v4580
    %v4839 = vmul.f32 %v4529, %v4584
    %v4840 = vmul.f32 %v4529, %v4588
    %v4841 = vmul.f32 %v4529, %v4592
    %v4842 = vmul.f32 %v4529, %v4596
    %v4843 = vmul.f32 %v4529, %v4600
    %v4844 = vmul.f32 %v4529, %v4604
    %v4845 = vmul.f32 %v4533, %v4544
    %v4846 = vmul.f32 %v4533, %v4548
    %v4847 = vmul.f32 %v4533, %v4552
    %v4848 = vmul.f32 %v4533, %v4556
    %v4849 = vmul.f32 %v4533, %v4560
    %v4850 = vmul.f32 %v4533, %v4564
    %v4851 = vmul.f32 %v4533, %v4568
    %v4852 = vmul.f32 %v4533, %v4572
    %v4853 = vmul.f32 %v4533, %v4576
    %v4854 = vmul.f32 %v4533, %v4580
    %v4855 = vmul.f32 %v4533, %v4584
    %v4856 = vmul.f32 %v4533, %v4588
    %v4857 = vmul.f32 %v4533, %v4592
    %v4858 = vmul.f32 %v4533, %v4596
    %v4859 = vmul.f32 %v4533, %v4600
    %v4860 = vmul.f32 %v4533, %v4604
    %v4861 = vmul.f32 %v4537, %v4544
    %v4862 = vmul.f32 %v4537, %v4548
    %v4863 = vmul.f32 %v4537, %v4552
    %v4864 = vmul.f32 %v4537, %v4556
    %v4865 = vmul.f32 %v4537, %v4560
    %v4866 = vmul.f32 %v4537, %v4564
    %v4867 = vmul.f32 %v4537, %v4568
    %v4868 = vmul.f32 %v4537, %v4572
    %v4869 = vmul.f32 %v4537, %v4576
    %v4870 = vmul.f32 %v4537, %v4580
    %v4871 = vmul.f32 %v4537, %v4584
    %v4872 = vmul.f32 %v4537, %v4588
    %v4873 = vmul.f32 %v4537, %v4592
    %v4874 = vmul.f32 %v4537, %v4596
    %v4875 = vmul.f32 %v4537, %v4600
    %v4876 = vmul.f32 %v4537, %v4604
    %v5133 = vrot.slane %v4637, 7
    %v5134 = vsel %vm2787, %v5133, %v4621
    %v5135 = vrot.slane %v4653, 6
    %v5136 = vsel %vm2790, %v5135, %v5134
    %v5137 = vrot.slane %v4669, 5
    %v5138 = vsel %vm2793, %v5137, %v5136
    %v5139 = vrot.slane %v4685, 4
    %v5140 = vsel %vm2796, %v5139, %v5138
    %v5141 = vrot.slane %v4701, 3
    %v5142 = vsel %vm2799, %v5141, %v5140
    %v5143 = vrot.slane %v4717, 2
    %v5144 = vsel %vm2802, %v5143, %v5142
    %v5145 = vrot.slane %v4733, 1
    %v5146 = vsel %vm2805, %v5145, %v5144
    %v5147 = vrot.slane %v4638, 7
    %v5148 = vsel %vm2787, %v5147, %v4622
    %v5149 = vrot.slane %v4654, 6
    %v5150 = vsel %vm2790, %v5149, %v5148
    %v5151 = vrot.slane %v4670, 5
    %v5152 = vsel %vm2793, %v5151, %v5150
    %v5153 = vrot.slane %v4686, 4
    %v5154 = vsel %vm2796, %v5153, %v5152
    %v5155 = vrot.slane %v4702, 3
    %v5156 = vsel %vm2799, %v5155, %v5154
    %v5157 = vrot.slane %v4718, 2
    %v5158 = vsel %vm2802, %v5157, %v5156
    %v5159 = vrot.slane %v4734, 1
    %v5160 = vsel %vm2805, %v5159, %v5158
    %v5161 = vrot.slane %v4639, 7
    %v5162 = vsel %vm2787, %v5161, %v4623
    %v5163 = vrot.slane %v4655, 6
    %v5164 = vsel %vm2790, %v5163, %v5162
    %v5165 = vrot.slane %v4671, 5
    %v5166 = vsel %vm2793, %v5165, %v5164
    %v5167 = vrot.slane %v4687, 4
    %v5168 = vsel %vm2796, %v5167, %v5166
    %v5169 = vrot.slane %v4703, 3
    %v5170 = vsel %vm2799, %v5169, %v5168
    %v5171 = vrot.slane %v4719, 2
    %v5172 = vsel %vm2802, %v5171, %v5170
    %v5173 = vrot.slane %v4735, 1
    %v5174 = vsel %vm2805, %v5173, %v5172
    %v5175 = vrot.slane %v4640, 7
    %v5176 = vsel %vm2787, %v5175, %v4624
    %v5177 = vrot.slane %v4656, 6
    %v5178 = vsel %vm2790, %v5177, %v5176
    %v5179 = vrot.slane %v4672, 5
    %v5180 = vsel %vm2793, %v5179, %v5178
    %v5181 = vrot.slane %v4688, 4
    %v5182 = vsel %vm2796, %v5181, %v5180
    %v5183 = vrot.slane %v4704, 3
    %v5184 = vsel %vm2799, %v5183, %v5182
    %v5185 = vrot.slane %v4720, 2
    %v5186 = vsel %vm2802, %v5185, %v5184
    %v5187 = vrot.slane %v4736, 1
    %v5188 = vsel %vm2805, %v5187, %v5186
    %v5189 = vrot.slane %v4641, 7
    %v5190 = vsel %vm2787, %v5189, %v4625
    %v5191 = vrot.slane %v4657, 6
    %v5192 = vsel %vm2790, %v5191, %v5190
    %v5193 = vrot.slane %v4673, 5
    %v5194 = vsel %vm2793, %v5193, %v5192
    %v5195 = vrot.slane %v4689, 4
    %v5196 = vsel %vm2796, %v5195, %v5194
    %v5197 = vrot.slane %v4705, 3
    %v5198 = vsel %vm2799, %v5197, %v5196
    %v5199 = vrot.slane %v4721, 2
    %v5200 = vsel %vm2802, %v5199, %v5198
    %v5201 = vrot.slane %v4737, 1
    %v5202 = vsel %vm2805, %v5201, %v5200
    %v5203 = vrot.slane %v4642, 7
    %v5204 = vsel %vm2787, %v5203, %v4626
    %v5205 = vrot.slane %v4658, 6
    %v5206 = vsel %vm2790, %v5205, %v5204
    %v5207 = vrot.slane %v4674, 5
    %v5208 = vsel %vm2793, %v5207, %v5206
    %v5209 = vrot.slane %v4690, 4
    %v5210 = vsel %vm2796, %v5209, %v5208
    %v5211 = vrot.slane %v4706, 3
    %v5212 = vsel %vm2799, %v5211, %v5210
    %v5213 = vrot.slane %v4722, 2
    %v5214 = vsel %vm2802, %v5213, %v5212
    %v5215 = vrot.slane %v4738, 1
    %v5216 = vsel %vm2805, %v5215, %v5214
    %v5217 = vrot.slane %v4643, 7
    %v5218 = vsel %vm2787, %v5217, %v4627
    %v5219 = vrot.slane %v4659, 6
    %v5220 = vsel %vm2790, %v5219, %v5218
    %v5221 = vrot.slane %v4675, 5
    %v5222 = vsel %vm2793, %v5221, %v5220
    %v5223 = vrot.slane %v4691, 4
    %v5224 = vsel %vm2796, %v5223, %v5222
    %v5225 = vrot.slane %v4707, 3
    %v5226 = vsel %vm2799, %v5225, %v5224
    %v5227 = vrot.slane %v4723, 2
    %v5228 = vsel %vm2802, %v5227, %v5226
    %v5229 = vrot.slane %v4739, 1
    %v5230 = vsel %vm2805, %v5229, %v5228
    %v5231 = vrot.slane %v4644, 7
    %v5232 = vsel %vm2787, %v5231, %v4628
    %v5233 = vrot.slane %v4660, 6
    %v5234 = vsel %vm2790, %v5233, %v5232
    %v5235 = vrot.slane %v4676, 5
    %v5236 = vsel %vm2793, %v5235, %v5234
    %v5237 = vrot.slane %v4692, 4
    %v5238 = vsel %vm2796, %v5237, %v5236
    %v5239 = vrot.slane %v4708, 3
    %v5240 = vsel %vm2799, %v5239, %v5238
    %v5241 = vrot.slane %v4724, 2
    %v5242 = vsel %vm2802, %v5241, %v5240
    %v5243 = vrot.slane %v4740, 1
    %v5244 = vsel %vm2805, %v5243, %v5242
    %v5245 = vrot.slane %v4645, 7
    %v5246 = vsel %vm2787, %v5245, %v4629
    %v5247 = vrot.slane %v4661, 6
    %v5248 = vsel %vm2790, %v5247, %v5246
    %v5249 = vrot.slane %v4677, 5
    %v5250 = vsel %vm2793, %v5249, %v5248
    %v5251 = vrot.slane %v4693, 4
    %v5252 = vsel %vm2796, %v5251, %v5250
    %v5253 = vrot.slane %v4709, 3
    %v5254 = vsel %vm2799, %v5253, %v5252
    %v5255 = vrot.slane %v4725, 2
    %v5256 = vsel %vm2802, %v5255, %v5254
    %v5257 = vrot.slane %v4741, 1
    %v5258 = vsel %vm2805, %v5257, %v5256
    %v5259 = vrot.slane %v4646, 7
    %v5260 = vsel %vm2787, %v5259, %v4630
    %v5261 = vrot.slane %v4662, 6
    %v5262 = vsel %vm2790, %v5261, %v5260
    %v5263 = vrot.slane %v4678, 5
    %v5264 = vsel %vm2793, %v5263, %v5262
    %v5265 = vrot.slane %v4694, 4
    %v5266 = vsel %vm2796, %v5265, %v5264
    %v5267 = vrot.slane %v4710, 3
    %v5268 = vsel %vm2799, %v5267, %v5266
    %v5269 = vrot.slane %v4726, 2
    %v5270 = vsel %vm2802, %v5269, %v5268
    %v5271 = vrot.slane %v4742, 1
    %v5272 = vsel %vm2805, %v5271, %v5270
    %v5273 = vrot.slane %v4647, 7
    %v5274 = vsel %vm2787, %v5273, %v4631
    %v5275 = vrot.slane %v4663, 6
    %v5276 = vsel %vm2790, %v5275, %v5274
    %v5277 = vrot.slane %v4679, 5
    %v5278 = vsel %vm2793, %v5277, %v5276
    %v5279 = vrot.slane %v4695, 4
    %v5280 = vsel %vm2796, %v5279, %v5278
    %v5281 = vrot.slane %v4711, 3
    %v5282 = vsel %vm2799, %v5281, %v5280
    %v5283 = vrot.slane %v4727, 2
    %v5284 = vsel %vm2802, %v5283, %v5282
    %v5285 = vrot.slane %v4743, 1
    %v5286 = vsel %vm2805, %v5285, %v5284
    %v5287 = vrot.slane %v4648, 7
    %v5288 = vsel %vm2787, %v5287, %v4632
    %v5289 = vrot.slane %v4664, 6
    %v5290 = vsel %vm2790, %v5289, %v5288
    %v5291 = vrot.slane %v4680, 5
    %v5292 = vsel %vm2793, %v5291, %v5290
    %v5293 = vrot.slane %v4696, 4
    %v5294 = vsel %vm2796, %v5293, %v5292
    %v5295 = vrot.slane %v4712, 3
    %v5296 = vsel %vm2799, %v5295, %v5294
    %v5297 = vrot.slane %v4728, 2
    %v5298 = vsel %vm2802, %v5297, %v5296
    %v5299 = vrot.slane %v4744, 1
    %v5300 = vsel %vm2805, %v5299, %v5298
    %v5301 = vrot.slane %v4649, 7
    %v5302 = vsel %vm2787, %v5301, %v4633
    %v5303 = vrot.slane %v4665, 6
    %v5304 = vsel %vm2790, %v5303, %v5302
    %v5305 = vrot.slane %v4681, 5
    %v5306 = vsel %vm2793, %v5305, %v5304
    %v5307 = vrot.slane %v4697, 4
    %v5308 = vsel %vm2796, %v5307, %v5306
    %v5309 = vrot.slane %v4713, 3
    %v5310 = vsel %vm2799, %v5309, %v5308
    %v5311 = vrot.slane %v4729, 2
    %v5312 = vsel %vm2802, %v5311, %v5310
    %v5313 = vrot.slane %v4745, 1
    %v5314 = vsel %vm2805, %v5313, %v5312
    %v5315 = vrot.slane %v4650, 7
    %v5316 = vsel %vm2787, %v5315, %v4634
    %v5317 = vrot.slane %v4666, 6
    %v5318 = vsel %vm2790, %v5317, %v5316
    %v5319 = vrot.slane %v4682, 5
    %v5320 = vsel %vm2793, %v5319, %v5318
    %v5321 = vrot.slane %v4698, 4
    %v5322 = vsel %vm2796, %v5321, %v5320
    %v5323 = vrot.slane %v4714, 3
    %v5324 = vsel %vm2799, %v5323, %v5322
    %v5325 = vrot.slane %v4730, 2
    %v5326 = vsel %vm2802, %v5325, %v5324
    %v5327 = vrot.slane %v4746, 1
    %v5328 = vsel %vm2805, %v5327, %v5326
    %v5329 = vrot.slane %v4651, 7
    %v5330 = vsel %vm2787, %v5329, %v4635
    %v5331 = vrot.slane %v4667, 6
    %v5332 = vsel %vm2790, %v5331, %v5330
    %v5333 = vrot.slane %v4683, 5
    %v5334 = vsel %vm2793, %v5333, %v5332
    %v5335 = vrot.slane %v4699, 4
    %v5336 = vsel %vm2796, %v5335, %v5334
    %v5337 = vrot.slane %v4715, 3
    %v5338 = vsel %vm2799, %v5337, %v5336
    %v5339 = vrot.slane %v4731, 2
    %v5340 = vsel %vm2802, %v5339, %v5338
    %v5341 = vrot.slane %v4747, 1
    %v5342 = vsel %vm2805, %v5341, %v5340
    %v5343 = vrot.slane %v4652, 7
    %v5344 = vsel %vm2787, %v5343, %v4636
    %v5345 = vrot.slane %v4668, 6
    %v5346 = vsel %vm2790, %v5345, %v5344
    %v5347 = vrot.slane %v4684, 5
    %v5348 = vsel %vm2793, %v5347, %v5346
    %v5349 = vrot.slane %v4700, 4
    %v5350 = vsel %vm2796, %v5349, %v5348
    %v5351 = vrot.slane %v4716, 3
    %v5352 = vsel %vm2799, %v5351, %v5350
    %v5353 = vrot.slane %v4732, 2
    %v5354 = vsel %vm2802, %v5353, %v5352
    %v5355 = vrot.slane %v4748, 1
    %v5356 = vsel %vm2805, %v5355, %v5354
    %v5357 = vrot.slane %v4765, 7
    %v5358 = vsel %vm2787, %v5357, %v4749
    %v5359 = vrot.slane %v4781, 6
    %v5360 = vsel %vm2790, %v5359, %v5358
    %v5361 = vrot.slane %v4797, 5
    %v5362 = vsel %vm2793, %v5361, %v5360
    %v5363 = vrot.slane %v4813, 4
    %v5364 = vsel %vm2796, %v5363, %v5362
    %v5365 = vrot.slane %v4829, 3
    %v5366 = vsel %vm2799, %v5365, %v5364
    %v5367 = vrot.slane %v4845, 2
    %v5368 = vsel %vm2802, %v5367, %v5366
    %v5369 = vrot.slane %v4861, 1
    %v5370 = vsel %vm2805, %v5369, %v5368
    %v5371 = vrot.slane %v4766, 7
    %v5372 = vsel %vm2787, %v5371, %v4750
    %v5373 = vrot.slane %v4782, 6
    %v5374 = vsel %vm2790, %v5373, %v5372
    %v5375 = vrot.slane %v4798, 5
    %v5376 = vsel %vm2793, %v5375, %v5374
    %v5377 = vrot.slane %v4814, 4
    %v5378 = vsel %vm2796, %v5377, %v5376
    %v5379 = vrot.slane %v4830, 3
    %v5380 = vsel %vm2799, %v5379, %v5378
    %v5381 = vrot.slane %v4846, 2
    %v5382 = vsel %vm2802, %v5381, %v5380
    %v5383 = vrot.slane %v4862, 1
    %v5384 = vsel %vm2805, %v5383, %v5382
    %v5385 = vrot.slane %v4767, 7
    %v5386 = vsel %vm2787, %v5385, %v4751
    %v5387 = vrot.slane %v4783, 6
    %v5388 = vsel %vm2790, %v5387, %v5386
    %v5389 = vrot.slane %v4799, 5
    %v5390 = vsel %vm2793, %v5389, %v5388
    %v5391 = vrot.slane %v4815, 4
    %v5392 = vsel %vm2796, %v5391, %v5390
    %v5393 = vrot.slane %v4831, 3
    %v5394 = vsel %vm2799, %v5393, %v5392
    %v5395 = vrot.slane %v4847, 2
    %v5396 = vsel %vm2802, %v5395, %v5394
    %v5397 = vrot.slane %v4863, 1
    %v5398 = vsel %vm2805, %v5397, %v5396
    %v5399 = vrot.slane %v4768, 7
    %v5400 = vsel %vm2787, %v5399, %v4752
    %v5401 = vrot.slane %v4784, 6
    %v5402 = vsel %vm2790, %v5401, %v5400
    %v5403 = vrot.slane %v4800, 5
    %v5404 = vsel %vm2793, %v5403, %v5402
    %v5405 = vrot.slane %v4816, 4
    %v5406 = vsel %vm2796, %v5405, %v5404
    %v5407 = vrot.slane %v4832, 3
    %v5408 = vsel %vm2799, %v5407, %v5406
    %v5409 = vrot.slane %v4848, 2
    %v5410 = vsel %vm2802, %v5409, %v5408
    %v5411 = vrot.slane %v4864, 1
    %v5412 = vsel %vm2805, %v5411, %v5410
    %v5413 = vrot.slane %v4769, 7
    %v5414 = vsel %vm2787, %v5413, %v4753
    %v5415 = vrot.slane %v4785, 6
    %v5416 = vsel %vm2790, %v5415, %v5414
    %v5417 = vrot.slane %v4801, 5
    %v5418 = vsel %vm2793, %v5417, %v5416
    %v5419 = vrot.slane %v4817, 4
    %v5420 = vsel %vm2796, %v5419, %v5418
    %v5421 = vrot.slane %v4833, 3
    %v5422 = vsel %vm2799, %v5421, %v5420
    %v5423 = vrot.slane %v4849, 2
    %v5424 = vsel %vm2802, %v5423, %v5422
    %v5425 = vrot.slane %v4865, 1
    %v5426 = vsel %vm2805, %v5425, %v5424
    %v5427 = vrot.slane %v4770, 7
    %v5428 = vsel %vm2787, %v5427, %v4754
    %v5429 = vrot.slane %v4786, 6
    %v5430 = vsel %vm2790, %v5429, %v5428
    %v5431 = vrot.slane %v4802, 5
    %v5432 = vsel %vm2793, %v5431, %v5430
    %v5433 = vrot.slane %v4818, 4
    %v5434 = vsel %vm2796, %v5433, %v5432
    %v5435 = vrot.slane %v4834, 3
    %v5436 = vsel %vm2799, %v5435, %v5434
    %v5437 = vrot.slane %v4850, 2
    %v5438 = vsel %vm2802, %v5437, %v5436
    %v5439 = vrot.slane %v4866, 1
    %v5440 = vsel %vm2805, %v5439, %v5438
    %v5441 = vrot.slane %v4771, 7
    %v5442 = vsel %vm2787, %v5441, %v4755
    %v5443 = vrot.slane %v4787, 6
    %v5444 = vsel %vm2790, %v5443, %v5442
    %v5445 = vrot.slane %v4803, 5
    %v5446 = vsel %vm2793, %v5445, %v5444
    %v5447 = vrot.slane %v4819, 4
    %v5448 = vsel %vm2796, %v5447, %v5446
    %v5449 = vrot.slane %v4835, 3
    %v5450 = vsel %vm2799, %v5449, %v5448
    %v5451 = vrot.slane %v4851, 2
    %v5452 = vsel %vm2802, %v5451, %v5450
    %v5453 = vrot.slane %v4867, 1
    %v5454 = vsel %vm2805, %v5453, %v5452
    %v5455 = vrot.slane %v4772, 7
    %v5456 = vsel %vm2787, %v5455, %v4756
    %v5457 = vrot.slane %v4788, 6
    %v5458 = vsel %vm2790, %v5457, %v5456
    %v5459 = vrot.slane %v4804, 5
    %v5460 = vsel %vm2793, %v5459, %v5458
    %v5461 = vrot.slane %v4820, 4
    %v5462 = vsel %vm2796, %v5461, %v5460
    %v5463 = vrot.slane %v4836, 3
    %v5464 = vsel %vm2799, %v5463, %v5462
    %v5465 = vrot.slane %v4852, 2
    %v5466 = vsel %vm2802, %v5465, %v5464
    %v5467 = vrot.slane %v4868, 1
    %v5468 = vsel %vm2805, %v5467, %v5466
    %v5469 = vrot.slane %v4773, 7
    %v5470 = vsel %vm2787, %v5469, %v4757
    %v5471 = vrot.slane %v4789, 6
    %v5472 = vsel %vm2790, %v5471, %v5470
    %v5473 = vrot.slane %v4805, 5
    %v5474 = vsel %vm2793, %v5473, %v5472
    %v5475 = vrot.slane %v4821, 4
    %v5476 = vsel %vm2796, %v5475, %v5474
    %v5477 = vrot.slane %v4837, 3
    %v5478 = vsel %vm2799, %v5477, %v5476
    %v5479 = vrot.slane %v4853, 2
    %v5480 = vsel %vm2802, %v5479, %v5478
    %v5481 = vrot.slane %v4869, 1
    %v5482 = vsel %vm2805, %v5481, %v5480
    %v5483 = vrot.slane %v4774, 7
    %v5484 = vsel %vm2787, %v5483, %v4758
    %v5485 = vrot.slane %v4790, 6
    %v5486 = vsel %vm2790, %v5485, %v5484
    %v5487 = vrot.slane %v4806, 5
    %v5488 = vsel %vm2793, %v5487, %v5486
    %v5489 = vrot.slane %v4822, 4
    %v5490 = vsel %vm2796, %v5489, %v5488
    %v5491 = vrot.slane %v4838, 3
    %v5492 = vsel %vm2799, %v5491, %v5490
    %v5493 = vrot.slane %v4854, 2
    %v5494 = vsel %vm2802, %v5493, %v5492
    %v5495 = vrot.slane %v4870, 1
    %v5496 = vsel %vm2805, %v5495, %v5494
    %v5497 = vrot.slane %v4775, 7
    %v5498 = vsel %vm2787, %v5497, %v4759
    %v5499 = vrot.slane %v4791, 6
    %v5500 = vsel %vm2790, %v5499, %v5498
    %v5501 = vrot.slane %v4807, 5
    %v5502 = vsel %vm2793, %v5501, %v5500
    %v5503 = vrot.slane %v4823, 4
    %v5504 = vsel %vm2796, %v5503, %v5502
    %v5505 = vrot.slane %v4839, 3
    %v5506 = vsel %vm2799, %v5505, %v5504
    %v5507 = vrot.slane %v4855, 2
    %v5508 = vsel %vm2802, %v5507, %v5506
    %v5509 = vrot.slane %v4871, 1
    %v5510 = vsel %vm2805, %v5509, %v5508
    %v5511 = vrot.slane %v4776, 7
    %v5512 = vsel %vm2787, %v5511, %v4760
    %v5513 = vrot.slane %v4792, 6
    %v5514 = vsel %vm2790, %v5513, %v5512
    %v5515 = vrot.slane %v4808, 5
    %v5516 = vsel %vm2793, %v5515, %v5514
    %v5517 = vrot.slane %v4824, 4
    %v5518 = vsel %vm2796, %v5517, %v5516
    %v5519 = vrot.slane %v4840, 3
    %v5520 = vsel %vm2799, %v5519, %v5518
    %v5521 = vrot.slane %v4856, 2
    %v5522 = vsel %vm2802, %v5521, %v5520
    %v5523 = vrot.slane %v4872, 1
    %v5524 = vsel %vm2805, %v5523, %v5522
    %v5525 = vrot.slane %v4777, 7
    %v5526 = vsel %vm2787, %v5525, %v4761
    %v5527 = vrot.slane %v4793, 6
    %v5528 = vsel %vm2790, %v5527, %v5526
    %v5529 = vrot.slane %v4809, 5
    %v5530 = vsel %vm2793, %v5529, %v5528
    %v5531 = vrot.slane %v4825, 4
    %v5532 = vsel %vm2796, %v5531, %v5530
    %v5533 = vrot.slane %v4841, 3
    %v5534 = vsel %vm2799, %v5533, %v5532
    %v5535 = vrot.slane %v4857, 2
    %v5536 = vsel %vm2802, %v5535, %v5534
    %v5537 = vrot.slane %v4873, 1
    %v5538 = vsel %vm2805, %v5537, %v5536
    %v5539 = vrot.slane %v4778, 7
    %v5540 = vsel %vm2787, %v5539, %v4762
    %v5541 = vrot.slane %v4794, 6
    %v5542 = vsel %vm2790, %v5541, %v5540
    %v5543 = vrot.slane %v4810, 5
    %v5544 = vsel %vm2793, %v5543, %v5542
    %v5545 = vrot.slane %v4826, 4
    %v5546 = vsel %vm2796, %v5545, %v5544
    %v5547 = vrot.slane %v4842, 3
    %v5548 = vsel %vm2799, %v5547, %v5546
    %v5549 = vrot.slane %v4858, 2
    %v5550 = vsel %vm2802, %v5549, %v5548
    %v5551 = vrot.slane %v4874, 1
    %v5552 = vsel %vm2805, %v5551, %v5550
    %v5553 = vrot.slane %v4779, 7
    %v5554 = vsel %vm2787, %v5553, %v4763
    %v5555 = vrot.slane %v4795, 6
    %v5556 = vsel %vm2790, %v5555, %v5554
    %v5557 = vrot.slane %v4811, 5
    %v5558 = vsel %vm2793, %v5557, %v5556
    %v5559 = vrot.slane %v4827, 4
    %v5560 = vsel %vm2796, %v5559, %v5558
    %v5561 = vrot.slane %v4843, 3
    %v5562 = vsel %vm2799, %v5561, %v5560
    %v5563 = vrot.slane %v4859, 2
    %v5564 = vsel %vm2802, %v5563, %v5562
    %v5565 = vrot.slane %v4875, 1
    %v5566 = vsel %vm2805, %v5565, %v5564
    %v5567 = vrot.slane %v4780, 7
    %v5568 = vsel %vm2787, %v5567, %v4764
    %v5569 = vrot.slane %v4796, 6
    %v5570 = vsel %vm2790, %v5569, %v5568
    %v5571 = vrot.slane %v4812, 5
    %v5572 = vsel %vm2793, %v5571, %v5570
    %v5573 = vrot.slane %v4828, 4
    %v5574 = vsel %vm2796, %v5573, %v5572
    %v5575 = vrot.slane %v4844, 3
    %v5576 = vsel %vm2799, %v5575, %v5574
    %v5577 = vrot.slane %v4860, 2
    %v5578 = vsel %vm2802, %v5577, %v5576
    %v5579 = vrot.slane %v4876, 1
    %v5580 = vsel %vm2805, %v5579, %v5578
    %v5613 = vadd.f32 %v4443, %v5146
    %v5614 = vadd.f32 %v4444, %v5160
    %v5615 = vadd.f32 %v4445, %v5174
    %v5616 = vadd.f32 %v4446, %v5188
    %v5617 = vadd.f32 %v4447, %v5202
    %v5618 = vadd.f32 %v4448, %v5216
    %v5619 = vadd.f32 %v4449, %v5230
    %v5620 = vadd.f32 %v4450, %v5244
    %v5621 = vadd.f32 %v4451, %v5258
    %v5622 = vadd.f32 %v4452, %v5272
    %v5623 = vadd.f32 %v4453, %v5286
    %v5624 = vadd.f32 %v4454, %v5300
    %v5625 = vadd.f32 %v4455, %v5314
    %v5626 = vadd.f32 %v4456, %v5328
    %v5627 = vadd.f32 %v4457, %v5342
    %v5628 = vadd.f32 %v4458, %v5356
    %v5629 = vadd.f32 %v4459, %v5370
    %v5630 = vadd.f32 %v4460, %v5384
    %v5631 = vadd.f32 %v4461, %v5398
    %v5632 = vadd.f32 %v4462, %v5412
    %v5633 = vadd.f32 %v4463, %v5426
    %v5634 = vadd.f32 %v4464, %v5440
    %v5635 = vadd.f32 %v4465, %v5454
    %v5636 = vadd.f32 %v4466, %v5468
    %v5637 = vadd.f32 %v4467, %v5482
    %v5638 = vadd.f32 %v4468, %v5496
    %v5639 = vadd.f32 %v4469, %v5510
    %v5640 = vadd.f32 %v4470, %v5524
    %v5641 = vadd.f32 %v4471, %v5538
    %v5642 = vadd.f32 %v4472, %v5552
    %v5643 = vadd.f32 %v4473, %v5566
    %v5644 = vadd.f32 %v4474, %v5580
    %v5645 = vmax.f32 %v5613, 0.0
    %v5646 = vmax.f32 %v5614, 0.0
    %v5647 = vmax.f32 %v5615, 0.0
    %v5648 = vmax.f32 %v5616, 0.0
    %v5649 = vmax.f32 %v5617, 0.0
    %v5650 = vmax.f32 %v5618, 0.0
    %v5651 = vmax.f32 %v5619, 0.0
    %v5652 = vmax.f32 %v5620, 0.0
    %v5653 = vmax.f32 %v5621, 0.0
    %v5654 = vmax.f32 %v5622, 0.0
    %v5655 = vmax.f32 %v5623, 0.0
    %v5656 = vmax.f32 %v5624, 0.0
    %v5657 = vmax.f32 %v5625, 0.0
    %v5658 = vmax.f32 %v5626, 0.0
    %v5659 = vmax.f32 %v5627, 0.0
    %v5660 = vmax.f32 %v5628, 0.0
    %v5661 = vmax.f32 %v5629, 0.0
    %v5662 = vmax.f32 %v5630, 0.0
    %v5663 = vmax.f32 %v5631, 0.0
    %v5664 = vmax.f32 %v5632, 0.0
    %v5665 = vmax.f32 %v5633, 0.0
    %v5666 = vmax.f32 %v5634, 0.0
    %v5667 = vmax.f32 %v5635, 0.0
    %v5668 = vmax.f32 %v5636, 0.0
    %v5669 = vmax.f32 %v5637, 0.0
    %v5670 = vmax.f32 %v5638, 0.0
    %v5671 = vmax.f32 %v5639, 0.0
    %v5672 = vmax.f32 %v5640, 0.0
    %v5673 = vmax.f32 %v5641, 0.0
    %v5674 = vmax.f32 %v5642, 0.0
    %v5675 = vmax.f32 %v5643, 0.0
    %v5676 = vmax.f32 %v5644, 0.0
    %5677 = vset.pattern.permute.xlu0 1
    %5678 = vperm.xlu0 %5677, %v2001
    %v5679 = vpop.permute.xlu0 %5678
    %5681 = vset.pattern.permute.xlu0 1
    %5682 = vperm.xlu0 %5681, %v2002
    %v5683 = vpop.permute.xlu0 %5682
    %5685 = vset.pattern.permute.xlu0 1
    %5686 = vperm.xlu0 %5685, %v2003
    %v5687 = vpop.permute.xlu0 %5686
    %5689 = vset.pattern.permute.xlu0 1
    %5690 = vperm.xlu0 %5689, %v2004
    %v5691 = vpop.permute.xlu0 %5690
    %5693 = vset.pattern.permute.xlu0 1
    %5694 = vperm.xlu0 %5693, %v2005
    %v5695 = vpop.permute.xlu0 %5694
    %5697 = vset.pattern.permute.xlu0 1
    %5698 = vperm.xlu0 %5697, %v2006
    %v5699 = vpop.permute.xlu0 %5698
    %5701 = vset.pattern.permute.xlu0 1
    %5702 = vperm.xlu0 %5701, %v2007
    %v5703 = vpop.permute.xlu0 %5702
    %5705 = vset.pattern.permute.xlu0 1
    %5706 = vperm.xlu0 %5705, %v2008
    %v5707 = vpop.permute.xlu0 %5706
    %5709 = vset.pattern.permute.xlu0 1
    %5710 = vperm.xlu0 %5709, %v2009
    %v5711 = vpop.permute.xlu0 %5710
    %5713 = vset.pattern.permute.xlu0 1
    %5714 = vperm.xlu0 %5713, %v2010
    %v5715 = vpop.permute.xlu0 %5714
    %5717 = vset.pattern.permute.xlu0 1
    %5718 = vperm.xlu0 %5717, %v2011
    %v5719 = vpop.permute.xlu0 %5718
    %5721 = vset.pattern.permute.xlu0 1
    %5722 = vperm.xlu0 %5721, %v2012
    %v5723 = vpop.permute.xlu0 %5722
    %5725 = vset.pattern.permute.xlu0 1
    %5726 = vperm.xlu0 %5725, %v2013
    %v5727 = vpop.permute.xlu0 %5726
    %5729 = vset.pattern.permute.xlu0 1
    %5730 = vperm.xlu0 %5729, %v2014
    %v5731 = vpop.permute.xlu0 %5730
    %5733 = vset.pattern.permute.xlu0 1
    %5734 = vperm.xlu0 %5733, %v2015
    %v5735 = vpop.permute.xlu0 %5734
    %5737 = vset.pattern.permute.xlu0 1
    %5738 = vperm.xlu0 %5737, %v2016
    %v5739 = vpop.permute.xlu0 %5738
    %v5741 = vmul.f32 %v5679, %v2115
    %v5742 = vmul.f32 %v5679, %v2119
    %v5743 = vmul.f32 %v5679, %v2123
    %v5744 = vmul.f32 %v5679, %v2127
    %v5745 = vmul.f32 %v5679, %v2131
    %v5746 = vmul.f32 %v5679, %v2135
    %v5747 = vmul.f32 %v5679, %v2139
    %v5748 = vmul.f32 %v5679, %v2143
    %v5749 = vmul.f32 %v5679, %v2147
    %v5750 = vmul.f32 %v5679, %v2151
    %v5751 = vmul.f32 %v5679, %v2155
    %v5752 = vmul.f32 %v5679, %v2159
    %v5753 = vmul.f32 %v5679, %v2163
    %v5754 = vmul.f32 %v5679, %v2167
    %v5755 = vmul.f32 %v5679, %v2171
    %v5756 = vmul.f32 %v5679, %v2175
    %v5757 = vmul.f32 %v5683, %v2115
    %v5758 = vmul.f32 %v5683, %v2119
    %v5759 = vmul.f32 %v5683, %v2123
    %v5760 = vmul.f32 %v5683, %v2127
    %v5761 = vmul.f32 %v5683, %v2131
    %v5762 = vmul.f32 %v5683, %v2135
    %v5763 = vmul.f32 %v5683, %v2139
    %v5764 = vmul.f32 %v5683, %v2143
    %v5765 = vmul.f32 %v5683, %v2147
    %v5766 = vmul.f32 %v5683, %v2151
    %v5767 = vmul.f32 %v5683, %v2155
    %v5768 = vmul.f32 %v5683, %v2159
    %v5769 = vmul.f32 %v5683, %v2163
    %v5770 = vmul.f32 %v5683, %v2167
    %v5771 = vmul.f32 %v5683, %v2171
    %v5772 = vmul.f32 %v5683, %v2175
    %v5773 = vmul.f32 %v5687, %v2115
    %v5774 = vmul.f32 %v5687, %v2119
    %v5775 = vmul.f32 %v5687, %v2123
    %v5776 = vmul.f32 %v5687, %v2127
    %v5777 = vmul.f32 %v5687, %v2131
    %v5778 = vmul.f32 %v5687, %v2135
    %v5779 = vmul.f32 %v5687, %v2139
    %v5780 = vmul.f32 %v5687, %v2143
    %v5781 = vmul.f32 %v5687, %v2147
    %v5782 = vmul.f32 %v5687, %v2151
    %v5783 = vmul.f32 %v5687, %v2155
    %v5784 = vmul.f32 %v5687, %v2159
    %v5785 = vmul.f32 %v5687, %v2163
    %v5786 = vmul.f32 %v5687, %v2167
    %v5787 = vmul.f32 %v5687, %v2171
    %v5788 = vmul.f32 %v5687, %v2175
    %v5789 = vmul.f32 %v5691, %v2115
    %v5790 = vmul.f32 %v5691, %v2119
    %v5791 = vmul.f32 %v5691, %v2123
    %v5792 = vmul.f32 %v5691, %v2127
    %v5793 = vmul.f32 %v5691, %v2131
    %v5794 = vmul.f32 %v5691, %v2135
    %v5795 = vmul.f32 %v5691, %v2139
    %v5796 = vmul.f32 %v5691, %v2143
    %v5797 = vmul.f32 %v5691, %v2147
    %v5798 = vmul.f32 %v5691, %v2151
    %v5799 = vmul.f32 %v5691, %v2155
    %v5800 = vmul.f32 %v5691, %v2159
    %v5801 = vmul.f32 %v5691, %v2163
    %v5802 = vmul.f32 %v5691, %v2167
    %v5803 = vmul.f32 %v5691, %v2171
    %v5804 = vmul.f32 %v5691, %v2175
    %v5805 = vmul.f32 %v5695, %v2115
    %v5806 = vmul.f32 %v5695, %v2119
    %v5807 = vmul.f32 %v5695, %v2123
    %v5808 = vmul.f32 %v5695, %v2127
    %v5809 = vmul.f32 %v5695, %v2131
    %v5810 = vmul.f32 %v5695, %v2135
    %v5811 = vmul.f32 %v5695, %v2139
    %v5812 = vmul.f32 %v5695, %v2143
    %v5813 = vmul.f32 %v5695, %v2147
    %v5814 = vmul.f32 %v5695, %v2151
    %v5815 = vmul.f32 %v5695, %v2155
    %v5816 = vmul.f32 %v5695, %v2159
    %v5817 = vmul.f32 %v5695, %v2163
    %v5818 = vmul.f32 %v5695, %v2167
    %v5819 = vmul.f32 %v5695, %v2171
    %v5820 = vmul.f32 %v5695, %v2175
    %v5821 = vmul.f32 %v5699, %v2115
    %v5822 = vmul.f32 %v5699, %v2119
    %v5823 = vmul.f32 %v5699, %v2123
    %v5824 = vmul.f32 %v5699, %v2127
    %v5825 = vmul.f32 %v5699, %v2131
    %v5826 = vmul.f32 %v5699, %v2135
    %v5827 = vmul.f32 %v5699, %v2139
    %v5828 = vmul.f32 %v5699, %v2143
    %v5829 = vmul.f32 %v5699, %v2147
    %v5830 = vmul.f32 %v5699, %v2151
    %v5831 = vmul.f32 %v5699, %v2155
    %v5832 = vmul.f32 %v5699, %v2159
    %v5833 = vmul.f32 %v5699, %v2163
    %v5834 = vmul.f32 %v5699, %v2167
    %v5835 = vmul.f32 %v5699, %v2171
    %v5836 = vmul.f32 %v5699, %v2175
    %v5837 = vmul.f32 %v5703, %v2115
    %v5838 = vmul.f32 %v5703, %v2119
    %v5839 = vmul.f32 %v5703, %v2123
    %v5840 = vmul.f32 %v5703, %v2127
    %v5841 = vmul.f32 %v5703, %v2131
    %v5842 = vmul.f32 %v5703, %v2135
    %v5843 = vmul.f32 %v5703, %v2139
    %v5844 = vmul.f32 %v5703, %v2143
    %v5845 = vmul.f32 %v5703, %v2147
    %v5846 = vmul.f32 %v5703, %v2151
    %v5847 = vmul.f32 %v5703, %v2155
    %v5848 = vmul.f32 %v5703, %v2159
    %v5849 = vmul.f32 %v5703, %v2163
    %v5850 = vmul.f32 %v5703, %v2167
    %v5851 = vmul.f32 %v5703, %v2171
    %v5852 = vmul.f32 %v5703, %v2175
    %v5853 = vmul.f32 %v5707, %v2115
    %v5854 = vmul.f32 %v5707, %v2119
    %v5855 = vmul.f32 %v5707, %v2123
    %v5856 = vmul.f32 %v5707, %v2127
    %v5857 = vmul.f32 %v5707, %v2131
    %v5858 = vmul.f32 %v5707, %v2135
    %v5859 = vmul.f32 %v5707, %v2139
    %v5860 = vmul.f32 %v5707, %v2143
    %v5861 = vmul.f32 %v5707, %v2147
    %v5862 = vmul.f32 %v5707, %v2151
    %v5863 = vmul.f32 %v5707, %v2155
    %v5864 = vmul.f32 %v5707, %v2159
    %v5865 = vmul.f32 %v5707, %v2163
    %v5866 = vmul.f32 %v5707, %v2167
    %v5867 = vmul.f32 %v5707, %v2171
    %v5868 = vmul.f32 %v5707, %v2175
    %v5869 = vmul.f32 %v5711, %v2115
    %v5870 = vmul.f32 %v5711, %v2119
    %v5871 = vmul.f32 %v5711, %v2123
    %v5872 = vmul.f32 %v5711, %v2127
    %v5873 = vmul.f32 %v5711, %v2131
    %v5874 = vmul.f32 %v5711, %v2135
    %v5875 = vmul.f32 %v5711, %v2139
    %v5876 = vmul.f32 %v5711, %v2143
    %v5877 = vmul.f32 %v5711, %v2147
    %v5878 = vmul.f32 %v5711, %v2151
    %v5879 = vmul.f32 %v5711, %v2155
    %v5880 = vmul.f32 %v5711, %v2159
    %v5881 = vmul.f32 %v5711, %v2163
    %v5882 = vmul.f32 %v5711, %v2167
    %v5883 = vmul.f32 %v5711, %v2171
    %v5884 = vmul.f32 %v5711, %v2175
    %v5885 = vmul.f32 %v5715, %v2115
    %v5886 = vmul.f32 %v5715, %v2119
    %v5887 = vmul.f32 %v5715, %v2123
    %v5888 = vmul.f32 %v5715, %v2127
    %v5889 = vmul.f32 %v5715, %v2131
    %v5890 = vmul.f32 %v5715, %v2135
    %v5891 = vmul.f32 %v5715, %v2139
    %v5892 = vmul.f32 %v5715, %v2143
    %v5893 = vmul.f32 %v5715, %v2147
    %v5894 = vmul.f32 %v5715, %v2151
    %v5895 = vmul.f32 %v5715, %v2155
    %v5896 = vmul.f32 %v5715, %v2159
    %v5897 = vmul.f32 %v5715, %v2163
    %v5898 = vmul.f32 %v5715, %v2167
    %v5899 = vmul.f32 %v5715, %v2171
    %v5900 = vmul.f32 %v5715, %v2175
    %v5901 = vmul.f32 %v5719, %v2115
    %v5902 = vmul.f32 %v5719, %v2119
    %v5903 = vmul.f32 %v5719, %v2123
    %v5904 = vmul.f32 %v5719, %v2127
    %v5905 = vmul.f32 %v5719, %v2131
    %v5906 = vmul.f32 %v5719, %v2135
    %v5907 = vmul.f32 %v5719, %v2139
    %v5908 = vmul.f32 %v5719, %v2143
    %v5909 = vmul.f32 %v5719, %v2147
    %v5910 = vmul.f32 %v5719, %v2151
    %v5911 = vmul.f32 %v5719, %v2155
    %v5912 = vmul.f32 %v5719, %v2159
    %v5913 = vmul.f32 %v5719, %v2163
    %v5914 = vmul.f32 %v5719, %v2167
    %v5915 = vmul.f32 %v5719, %v2171
    %v5916 = vmul.f32 %v5719, %v2175
    %v5917 = vmul.f32 %v5723, %v2115
    %v5918 = vmul.f32 %v5723, %v2119
    %v5919 = vmul.f32 %v5723, %v2123
    %v5920 = vmul.f32 %v5723, %v2127
    %v5921 = vmul.f32 %v5723, %v2131
    %v5922 = vmul.f32 %v5723, %v2135
    %v5923 = vmul.f32 %v5723, %v2139
    %v5924 = vmul.f32 %v5723, %v2143
    %v5925 = vmul.f32 %v5723, %v2147
    %v5926 = vmul.f32 %v5723, %v2151
    %v5927 = vmul.f32 %v5723, %v2155
    %v5928 = vmul.f32 %v5723, %v2159
    %v5929 = vmul.f32 %v5723, %v2163
    %v5930 = vmul.f32 %v5723, %v2167
    %v5931 = vmul.f32 %v5723, %v2171
    %v5932 = vmul.f32 %v5723, %v2175
    %v5933 = vmul.f32 %v5727, %v2115
    %v5934 = vmul.f32 %v5727, %v2119
    %v5935 = vmul.f32 %v5727, %v2123
    %v5936 = vmul.f32 %v5727, %v2127
    %v5937 = vmul.f32 %v5727, %v2131
    %v5938 = vmul.f32 %v5727, %v2135
    %v5939 = vmul.f32 %v5727, %v2139
    %v5940 = vmul.f32 %v5727, %v2143
    %v5941 = vmul.f32 %v5727, %v2147
    %v5942 = vmul.f32 %v5727, %v2151
    %v5943 = vmul.f32 %v5727, %v2155
    %v5944 = vmul.f32 %v5727, %v2159
    %v5945 = vmul.f32 %v5727, %v2163
    %v5946 = vmul.f32 %v5727, %v2167
    %v5947 = vmul.f32 %v5727, %v2171
    %v5948 = vmul.f32 %v5727, %v2175
    %v5949 = vmul.f32 %v5731, %v2115
    %v5950 = vmul.f32 %v5731, %v2119
    %v5951 = vmul.f32 %v5731, %v2123
    %v5952 = vmul.f32 %v5731, %v2127
    %v5953 = vmul.f32 %v5731, %v2131
    %v5954 = vmul.f32 %v5731, %v2135
    %v5955 = vmul.f32 %v5731, %v2139
    %v5956 = vmul.f32 %v5731, %v2143
    %v5957 = vmul.f32 %v5731, %v2147
    %v5958 = vmul.f32 %v5731, %v2151
    %v5959 = vmul.f32 %v5731, %v2155
    %v5960 = vmul.f32 %v5731, %v2159
    %v5961 = vmul.f32 %v5731, %v2163
    %v5962 = vmul.f32 %v5731, %v2167
    %v5963 = vmul.f32 %v5731, %v2171
    %v5964 = vmul.f32 %v5731, %v2175
    %v5965 = vmul.f32 %v5735, %v2115
    %v5966 = vmul.f32 %v5735, %v2119
    %v5967 = vmul.f32 %v5735, %v2123
    %v5968 = vmul.f32 %v5735, %v2127
    %v5969 = vmul.f32 %v5735, %v2131
    %v5970 = vmul.f32 %v5735, %v2135
    %v5971 = vmul.f32 %v5735, %v2139
    %v5972 = vmul.f32 %v5735, %v2143
    %v5973 = vmul.f32 %v5735, %v2147
    %v5974 = vmul.f32 %v5735, %v2151
    %v5975 = vmul.f32 %v5735, %v2155
    %v5976 = vmul.f32 %v5735, %v2159
    %v5977 = vmul.f32 %v5735, %v2163
    %v5978 = vmul.f32 %v5735, %v2167
    %v5979 = vmul.f32 %v5735, %v2171
    %v5980 = vmul.f32 %v5735, %v2175
    %v5981 = vmul.f32 %v5739, %v2115
    %v5982 = vmul.f32 %v5739, %v2119
    %v5983 = vmul.f32 %v5739, %v2123
    %v5984 = vmul.f32 %v5739, %v2127
    %v5985 = vmul.f32 %v5739, %v2131
    %v5986 = vmul.f32 %v5739, %v2135
    %v5987 = vmul.f32 %v5739, %v2139
    %v5988 = vmul.f32 %v5739, %v2143
    %v5989 = vmul.f32 %v5739, %v2147
    %v5990 = vmul.f32 %v5739, %v2151
    %v5991 = vmul.f32 %v5739, %v2155
    %v5992 = vmul.f32 %v5739, %v2159
    %v5993 = vmul.f32 %v5739, %v2163
    %v5994 = vmul.f32 %v5739, %v2167
    %v5995 = vmul.f32 %v5739, %v2171
    %v5996 = vmul.f32 %v5739, %v2175
    %v6253 = vrot.slane %v5757, 7
    %v6254 = vsel %vm2787, %v6253, %v5741
    %v6255 = vrot.slane %v5773, 6
    %v6256 = vsel %vm2790, %v6255, %v6254
    %v6257 = vrot.slane %v5789, 5
    %v6258 = vsel %vm2793, %v6257, %v6256
    %v6259 = vrot.slane %v5805, 4
    %v6260 = vsel %vm2796, %v6259, %v6258
    %v6261 = vrot.slane %v5821, 3
    %v6262 = vsel %vm2799, %v6261, %v6260
    %v6263 = vrot.slane %v5837, 2
    %v6264 = vsel %vm2802, %v6263, %v6262
    %v6265 = vrot.slane %v5853, 1
    %v6266 = vsel %vm2805, %v6265, %v6264
    %v6267 = vrot.slane %v5758, 7
    %v6268 = vsel %vm2787, %v6267, %v5742
    %v6269 = vrot.slane %v5774, 6
    %v6270 = vsel %vm2790, %v6269, %v6268
    %v6271 = vrot.slane %v5790, 5
    %v6272 = vsel %vm2793, %v6271, %v6270
    %v6273 = vrot.slane %v5806, 4
    %v6274 = vsel %vm2796, %v6273, %v6272
    %v6275 = vrot.slane %v5822, 3
    %v6276 = vsel %vm2799, %v6275, %v6274
    %v6277 = vrot.slane %v5838, 2
    %v6278 = vsel %vm2802, %v6277, %v6276
    %v6279 = vrot.slane %v5854, 1
    %v6280 = vsel %vm2805, %v6279, %v6278
    %v6281 = vrot.slane %v5759, 7
    %v6282 = vsel %vm2787, %v6281, %v5743
    %v6283 = vrot.slane %v5775, 6
    %v6284 = vsel %vm2790, %v6283, %v6282
    %v6285 = vrot.slane %v5791, 5
    %v6286 = vsel %vm2793, %v6285, %v6284
    %v6287 = vrot.slane %v5807, 4
    %v6288 = vsel %vm2796, %v6287, %v6286
    %v6289 = vrot.slane %v5823, 3
    %v6290 = vsel %vm2799, %v6289, %v6288
    %v6291 = vrot.slane %v5839, 2
    %v6292 = vsel %vm2802, %v6291, %v6290
    %v6293 = vrot.slane %v5855, 1
    %v6294 = vsel %vm2805, %v6293, %v6292
    %v6295 = vrot.slane %v5760, 7
    %v6296 = vsel %vm2787, %v6295, %v5744
    %v6297 = vrot.slane %v5776, 6
    %v6298 = vsel %vm2790, %v6297, %v6296
    %v6299 = vrot.slane %v5792, 5
    %v6300 = vsel %vm2793, %v6299, %v6298
    %v6301 = vrot.slane %v5808, 4
    %v6302 = vsel %vm2796, %v6301, %v6300
    %v6303 = vrot.slane %v5824, 3
    %v6304 = vsel %vm2799, %v6303, %v6302
    %v6305 = vrot.slane %v5840, 2
    %v6306 = vsel %vm2802, %v6305, %v6304
    %v6307 = vrot.slane %v5856, 1
    %v6308 = vsel %vm2805, %v6307, %v6306
    %v6309 = vrot.slane %v5761, 7
    %v6310 = vsel %vm2787, %v6309, %v5745
    %v6311 = vrot.slane %v5777, 6
    %v6312 = vsel %vm2790, %v6311, %v6310
    %v6313 = vrot.slane %v5793, 5
    %v6314 = vsel %vm2793, %v6313, %v6312
    %v6315 = vrot.slane %v5809, 4
    %v6316 = vsel %vm2796, %v6315, %v6314
    %v6317 = vrot.slane %v5825, 3
    %v6318 = vsel %vm2799, %v6317, %v6316
    %v6319 = vrot.slane %v5841, 2
    %v6320 = vsel %vm2802, %v6319, %v6318
    %v6321 = vrot.slane %v5857, 1
    %v6322 = vsel %vm2805, %v6321, %v6320
    %v6323 = vrot.slane %v5762, 7
    %v6324 = vsel %vm2787, %v6323, %v5746
    %v6325 = vrot.slane %v5778, 6
    %v6326 = vsel %vm2790, %v6325, %v6324
    %v6327 = vrot.slane %v5794, 5
    %v6328 = vsel %vm2793, %v6327, %v6326
    %v6329 = vrot.slane %v5810, 4
    %v6330 = vsel %vm2796, %v6329, %v6328
    %v6331 = vrot.slane %v5826, 3
    %v6332 = vsel %vm2799, %v6331, %v6330
    %v6333 = vrot.slane %v5842, 2
    %v6334 = vsel %vm2802, %v6333, %v6332
    %v6335 = vrot.slane %v5858, 1
    %v6336 = vsel %vm2805, %v6335, %v6334
    %v6337 = vrot.slane %v5763, 7
    %v6338 = vsel %vm2787, %v6337, %v5747
    %v6339 = vrot.slane %v5779, 6
    %v6340 = vsel %vm2790, %v6339, %v6338
    %v6341 = vrot.slane %v5795, 5
    %v6342 = vsel %vm2793, %v6341, %v6340
    %v6343 = vrot.slane %v5811, 4
    %v6344 = vsel %vm2796, %v6343, %v6342
    %v6345 = vrot.slane %v5827, 3
    %v6346 = vsel %vm2799, %v6345, %v6344
    %v6347 = vrot.slane %v5843, 2
    %v6348 = vsel %vm2802, %v6347, %v6346
    %v6349 = vrot.slane %v5859, 1
    %v6350 = vsel %vm2805, %v6349, %v6348
    %v6351 = vrot.slane %v5764, 7
    %v6352 = vsel %vm2787, %v6351, %v5748
    %v6353 = vrot.slane %v5780, 6
    %v6354 = vsel %vm2790, %v6353, %v6352
    %v6355 = vrot.slane %v5796, 5
    %v6356 = vsel %vm2793, %v6355, %v6354
    %v6357 = vrot.slane %v5812, 4
    %v6358 = vsel %vm2796, %v6357, %v6356
    %v6359 = vrot.slane %v5828, 3
    %v6360 = vsel %vm2799, %v6359, %v6358
    %v6361 = vrot.slane %v5844, 2
    %v6362 = vsel %vm2802, %v6361, %v6360
    %v6363 = vrot.slane %v5860, 1
    %v6364 = vsel %vm2805, %v6363, %v6362
    %v6365 = vrot.slane %v5765, 7
    %v6366 = vsel %vm2787, %v6365, %v5749
    %v6367 = vrot.slane %v5781, 6
    %v6368 = vsel %vm2790, %v6367, %v6366
    %v6369 = vrot.slane %v5797, 5
    %v6370 = vsel %vm2793, %v6369, %v6368
    %v6371 = vrot.slane %v5813, 4
    %v6372 = vsel %vm2796, %v6371, %v6370
    %v6373 = vrot.slane %v5829, 3
    %v6374 = vsel %vm2799, %v6373, %v6372
    %v6375 = vrot.slane %v5845, 2
    %v6376 = vsel %vm2802, %v6375, %v6374
    %v6377 = vrot.slane %v5861, 1
    %v6378 = vsel %vm2805, %v6377, %v6376
    %v6379 = vrot.slane %v5766, 7
    %v6380 = vsel %vm2787, %v6379, %v5750
    %v6381 = vrot.slane %v5782, 6
    %v6382 = vsel %vm2790, %v6381, %v6380
    %v6383 = vrot.slane %v5798, 5
    %v6384 = vsel %vm2793, %v6383, %v6382
    %v6385 = vrot.slane %v5814, 4
    %v6386 = vsel %vm2796, %v6385, %v6384
    %v6387 = vrot.slane %v5830, 3
    %v6388 = vsel %vm2799, %v6387, %v6386
    %v6389 = vrot.slane %v5846, 2
    %v6390 = vsel %vm2802, %v6389, %v6388
    %v6391 = vrot.slane %v5862, 1
    %v6392 = vsel %vm2805, %v6391, %v6390
    %v6393 = vrot.slane %v5767, 7
    %v6394 = vsel %vm2787, %v6393, %v5751
    %v6395 = vrot.slane %v5783, 6
    %v6396 = vsel %vm2790, %v6395, %v6394
    %v6397 = vrot.slane %v5799, 5
    %v6398 = vsel %vm2793, %v6397, %v6396
    %v6399 = vrot.slane %v5815, 4
    %v6400 = vsel %vm2796, %v6399, %v6398
    %v6401 = vrot.slane %v5831, 3
    %v6402 = vsel %vm2799, %v6401, %v6400
    %v6403 = vrot.slane %v5847, 2
    %v6404 = vsel %vm2802, %v6403, %v6402
    %v6405 = vrot.slane %v5863, 1
    %v6406 = vsel %vm2805, %v6405, %v6404
    %v6407 = vrot.slane %v5768, 7
    %v6408 = vsel %vm2787, %v6407, %v5752
    %v6409 = vrot.slane %v5784, 6
    %v6410 = vsel %vm2790, %v6409, %v6408
    %v6411 = vrot.slane %v5800, 5
    %v6412 = vsel %vm2793, %v6411, %v6410
    %v6413 = vrot.slane %v5816, 4
    %v6414 = vsel %vm2796, %v6413, %v6412
    %v6415 = vrot.slane %v5832, 3
    %v6416 = vsel %vm2799, %v6415, %v6414
    %v6417 = vrot.slane %v5848, 2
    %v6418 = vsel %vm2802, %v6417, %v6416
    %v6419 = vrot.slane %v5864, 1
    %v6420 = vsel %vm2805, %v6419, %v6418
    %v6421 = vrot.slane %v5769, 7
    %v6422 = vsel %vm2787, %v6421, %v5753
    %v6423 = vrot.slane %v5785, 6
    %v6424 = vsel %vm2790, %v6423, %v6422
    %v6425 = vrot.slane %v5801, 5
    %v6426 = vsel %vm2793, %v6425, %v6424
    %v6427 = vrot.slane %v5817, 4
    %v6428 = vsel %vm2796, %v6427, %v6426
    %v6429 = vrot.slane %v5833, 3
    %v6430 = vsel %vm2799, %v6429, %v6428
    %v6431 = vrot.slane %v5849, 2
    %v6432 = vsel %vm2802, %v6431, %v6430
    %v6433 = vrot.slane %v5865, 1
    %v6434 = vsel %vm2805, %v6433, %v6432
    %v6435 = vrot.slane %v5770, 7
    %v6436 = vsel %vm2787, %v6435, %v5754
    %v6437 = vrot.slane %v5786, 6
    %v6438 = vsel %vm2790, %v6437, %v6436
    %v6439 = vrot.slane %v5802, 5
    %v6440 = vsel %vm2793, %v6439, %v6438
    %v6441 = vrot.slane %v5818, 4
    %v6442 = vsel %vm2796, %v6441, %v6440
    %v6443 = vrot.slane %v5834, 3
    %v6444 = vsel %vm2799, %v6443, %v6442
    %v6445 = vrot.slane %v5850, 2
    %v6446 = vsel %vm2802, %v6445, %v6444
    %v6447 = vrot.slane %v5866, 1
    %v6448 = vsel %vm2805, %v6447, %v6446
    %v6449 = vrot.slane %v5771, 7
    %v6450 = vsel %vm2787, %v6449, %v5755
    %v6451 = vrot.slane %v5787, 6
    %v6452 = vsel %vm2790, %v6451, %v6450
    %v6453 = vrot.slane %v5803, 5
    %v6454 = vsel %vm2793, %v6453, %v6452
    %v6455 = vrot.slane %v5819, 4
    %v6456 = vsel %vm2796, %v6455, %v6454
    %v6457 = vrot.slane %v5835, 3
    %v6458 = vsel %vm2799, %v6457, %v6456
    %v6459 = vrot.slane %v5851, 2
    %v6460 = vsel %vm2802, %v6459, %v6458
    %v6461 = vrot.slane %v5867, 1
    %v6462 = vsel %vm2805, %v6461, %v6460
    %v6463 = vrot.slane %v5772, 7
    %v6464 = vsel %vm2787, %v6463, %v5756
    %v6465 = vrot.slane %v5788, 6
    %v6466 = vsel %vm2790, %v6465, %v6464
    %v6467 = vrot.slane %v5804, 5
    %v6468 = vsel %vm2793, %v6467, %v6466
    %v6469 = vrot.slane %v5820, 4
    %v6470 = vsel %vm2796, %v6469, %v6468
    %v6471 = vrot.slane %v5836, 3
    %v6472 = vsel %vm2799, %v6471, %v6470
    %v6473 = vrot.slane %v5852, 2
    %v6474 = vsel %vm2802, %v6473, %v6472
    %v6475 = vrot.slane %v5868, 1
    %v6476 = vsel %vm2805, %v6475, %v6474
    %v6477 = vrot.slane %v5885, 7
    %v6478 = vsel %vm2787, %v6477, %v5869
    %v6479 = vrot.slane %v5901, 6
    %v6480 = vsel %vm2790, %v6479, %v6478
    %v6481 = vrot.slane %v5917, 5
    %v6482 = vsel %vm2793, %v6481, %v6480
    %v6483 = vrot.slane %v5933, 4
    %v6484 = vsel %vm2796, %v6483, %v6482
    %v6485 = vrot.slane %v5949, 3
    %v6486 = vsel %vm2799, %v6485, %v6484
    %v6487 = vrot.slane %v5965, 2
    %v6488 = vsel %vm2802, %v6487, %v6486
    %v6489 = vrot.slane %v5981, 1
    %v6490 = vsel %vm2805, %v6489, %v6488
    %v6491 = vrot.slane %v5886, 7
    %v6492 = vsel %vm2787, %v6491, %v5870
    %v6493 = vrot.slane %v5902, 6
    %v6494 = vsel %vm2790, %v6493, %v6492
    %v6495 = vrot.slane %v5918, 5
    %v6496 = vsel %vm2793, %v6495, %v6494
    %v6497 = vrot.slane %v5934, 4
    %v6498 = vsel %vm2796, %v6497, %v6496
    %v6499 = vrot.slane %v5950, 3
    %v6500 = vsel %vm2799, %v6499, %v6498
    %v6501 = vrot.slane %v5966, 2
    %v6502 = vsel %vm2802, %v6501, %v6500
    %v6503 = vrot.slane %v5982, 1
    %v6504 = vsel %vm2805, %v6503, %v6502
    %v6505 = vrot.slane %v5887, 7
    %v6506 = vsel %vm2787, %v6505, %v5871
    %v6507 = vrot.slane %v5903, 6
    %v6508 = vsel %vm2790, %v6507, %v6506
    %v6509 = vrot.slane %v5919, 5
    %v6510 = vsel %vm2793, %v6509, %v6508
    %v6511 = vrot.slane %v5935, 4
    %v6512 = vsel %vm2796, %v6511, %v6510
    %v6513 = vrot.slane %v5951, 3
    %v6514 = vsel %vm2799, %v6513, %v6512
    %v6515 = vrot.slane %v5967, 2
    %v6516 = vsel %vm2802, %v6515, %v6514
    %v6517 = vrot.slane %v5983, 1
    %v6518 = vsel %vm2805, %v6517, %v6516
    %v6519 = vrot.slane %v5888, 7
    %v6520 = vsel %vm2787, %v6519, %v5872
    %v6521 = vrot.slane %v5904, 6
    %v6522 = vsel %vm2790, %v6521, %v6520
    %v6523 = vrot.slane %v5920, 5
    %v6524 = vsel %vm2793, %v6523, %v6522
    %v6525 = vrot.slane %v5936, 4
    %v6526 = vsel %vm2796, %v6525, %v6524
    %v6527 = vrot.slane %v5952, 3
    %v6528 = vsel %vm2799, %v6527, %v6526
    %v6529 = vrot.slane %v5968, 2
    %v6530 = vsel %vm2802, %v6529, %v6528
    %v6531 = vrot.slane %v5984, 1
    %v6532 = vsel %vm2805, %v6531, %v6530
    %v6533 = vrot.slane %v5889, 7
    %v6534 = vsel %vm2787, %v6533, %v5873
    %v6535 = vrot.slane %v5905, 6
    %v6536 = vsel %vm2790, %v6535, %v6534
    %v6537 = vrot.slane %v5921, 5
    %v6538 = vsel %vm2793, %v6537, %v6536
    %v6539 = vrot.slane %v5937, 4
    %v6540 = vsel %vm2796, %v6539, %v6538
    %v6541 = vrot.slane %v5953, 3
    %v6542 = vsel %vm2799, %v6541, %v6540
    %v6543 = vrot.slane %v5969, 2
    %v6544 = vsel %vm2802, %v6543, %v6542
    %v6545 = vrot.slane %v5985, 1
    %v6546 = vsel %vm2805, %v6545, %v6544
    %v6547 = vrot.slane %v5890, 7
    %v6548 = vsel %vm2787, %v6547, %v5874
    %v6549 = vrot.slane %v5906, 6
    %v6550 = vsel %vm2790, %v6549, %v6548
    %v6551 = vrot.slane %v5922, 5
    %v6552 = vsel %vm2793, %v6551, %v6550
    %v6553 = vrot.slane %v5938, 4
    %v6554 = vsel %vm2796, %v6553, %v6552
    %v6555 = vrot.slane %v5954, 3
    %v6556 = vsel %vm2799, %v6555, %v6554
    %v6557 = vrot.slane %v5970, 2
    %v6558 = vsel %vm2802, %v6557, %v6556
    %v6559 = vrot.slane %v5986, 1
    %v6560 = vsel %vm2805, %v6559, %v6558
    %v6561 = vrot.slane %v5891, 7
    %v6562 = vsel %vm2787, %v6561, %v5875
    %v6563 = vrot.slane %v5907, 6
    %v6564 = vsel %vm2790, %v6563, %v6562
    %v6565 = vrot.slane %v5923, 5
    %v6566 = vsel %vm2793, %v6565, %v6564
    %v6567 = vrot.slane %v5939, 4
    %v6568 = vsel %vm2796, %v6567, %v6566
    %v6569 = vrot.slane %v5955, 3
    %v6570 = vsel %vm2799, %v6569, %v6568
    %v6571 = vrot.slane %v5971, 2
    %v6572 = vsel %vm2802, %v6571, %v6570
    %v6573 = vrot.slane %v5987, 1
    %v6574 = vsel %vm2805, %v6573, %v6572
    %v6575 = vrot.slane %v5892, 7
    %v6576 = vsel %vm2787, %v6575, %v5876
    %v6577 = vrot.slane %v5908, 6
    %v6578 = vsel %vm2790, %v6577, %v6576
    %v6579 = vrot.slane %v5924, 5
    %v6580 = vsel %vm2793, %v6579, %v6578
    %v6581 = vrot.slane %v5940, 4
    %v6582 = vsel %vm2796, %v6581, %v6580
    %v6583 = vrot.slane %v5956, 3
    %v6584 = vsel %vm2799, %v6583, %v6582
    %v6585 = vrot.slane %v5972, 2
    %v6586 = vsel %vm2802, %v6585, %v6584
    %v6587 = vrot.slane %v5988, 1
    %v6588 = vsel %vm2805, %v6587, %v6586
    %v6589 = vrot.slane %v5893, 7
    %v6590 = vsel %vm2787, %v6589, %v5877
    %v6591 = vrot.slane %v5909, 6
    %v6592 = vsel %vm2790, %v6591, %v6590
    %v6593 = vrot.slane %v5925, 5
    %v6594 = vsel %vm2793, %v6593, %v6592
    %v6595 = vrot.slane %v5941, 4
    %v6596 = vsel %vm2796, %v6595, %v6594
    %v6597 = vrot.slane %v5957, 3
    %v6598 = vsel %vm2799, %v6597, %v6596
    %v6599 = vrot.slane %v5973, 2
    %v6600 = vsel %vm2802, %v6599, %v6598
    %v6601 = vrot.slane %v5989, 1
    %v6602 = vsel %vm2805, %v6601, %v6600
    %v6603 = vrot.slane %v5894, 7
    %v6604 = vsel %vm2787, %v6603, %v5878
    %v6605 = vrot.slane %v5910, 6
    %v6606 = vsel %vm2790, %v6605, %v6604
    %v6607 = vrot.slane %v5926, 5
    %v6608 = vsel %vm2793, %v6607, %v6606
    %v6609 = vrot.slane %v5942, 4
    %v6610 = vsel %vm2796, %v6609, %v6608
    %v6611 = vrot.slane %v5958, 3
    %v6612 = vsel %vm2799, %v6611, %v6610
    %v6613 = vrot.slane %v5974, 2
    %v6614 = vsel %vm2802, %v6613, %v6612
    %v6615 = vrot.slane %v5990, 1
    %v6616 = vsel %vm2805, %v6615, %v6614
    %v6617 = vrot.slane %v5895, 7
    %v6618 = vsel %vm2787, %v6617, %v5879
    %v6619 = vrot.slane %v5911, 6
    %v6620 = vsel %vm2790, %v6619, %v6618
    %v6621 = vrot.slane %v5927, 5
    %v6622 = vsel %vm2793, %v6621, %v6620
    %v6623 = vrot.slane %v5943, 4
    %v6624 = vsel %vm2796, %v6623, %v6622
    %v6625 = vrot.slane %v5959, 3
    %v6626 = vsel %vm2799, %v6625, %v6624
    %v6627 = vrot.slane %v5975, 2
    %v6628 = vsel %vm2802, %v6627, %v6626
    %v6629 = vrot.slane %v5991, 1
    %v6630 = vsel %vm2805, %v6629, %v6628
    %v6631 = vrot.slane %v5896, 7
    %v6632 = vsel %vm2787, %v6631, %v5880
    %v6633 = vrot.slane %v5912, 6
    %v6634 = vsel %vm2790, %v6633, %v6632
    %v6635 = vrot.slane %v5928, 5
    %v6636 = vsel %vm2793, %v6635, %v6634
    %v6637 = vrot.slane %v5944, 4
    %v6638 = vsel %vm2796, %v6637, %v6636
    %v6639 = vrot.slane %v5960, 3
    %v6640 = vsel %vm2799, %v6639, %v6638
    %v6641 = vrot.slane %v5976, 2
    %v6642 = vsel %vm2802, %v6641, %v6640
    %v6643 = vrot.slane %v5992, 1
    %v6644 = vsel %vm2805, %v6643, %v6642
    %v6645 = vrot.slane %v5897, 7
    %v6646 = vsel %vm2787, %v6645, %v5881
    %v6647 = vrot.slane %v5913, 6
    %v6648 = vsel %vm2790, %v6647, %v6646
    %v6649 = vrot.slane %v5929, 5
    %v6650 = vsel %vm2793, %v6649, %v6648
    %v6651 = vrot.slane %v5945, 4
    %v6652 = vsel %vm2796, %v6651, %v6650
    %v6653 = vrot.slane %v5961, 3
    %v6654 = vsel %vm2799, %v6653, %v6652
    %v6655 = vrot.slane %v5977, 2
    %v6656 = vsel %vm2802, %v6655, %v6654
    %v6657 = vrot.slane %v5993, 1
    %v6658 = vsel %vm2805, %v6657, %v6656
    %v6659 = vrot.slane %v5898, 7
    %v6660 = vsel %vm2787, %v6659, %v5882
    %v6661 = vrot.slane %v5914, 6
    %v6662 = vsel %vm2790, %v6661, %v6660
    %v6663 = vrot.slane %v5930, 5
    %v6664 = vsel %vm2793, %v6663, %v6662
    %v6665 = vrot.slane %v5946, 4
    %v6666 = vsel %vm2796, %v6665, %v6664
    %v6667 = vrot.slane %v5962, 3
    %v6668 = vsel %vm2799, %v6667, %v6666
    %v6669 = vrot.slane %v5978, 2
    %v6670 = vsel %vm2802, %v6669, %v6668
    %v6671 = vrot.slane %v5994, 1
    %v6672 = vsel %vm2805, %v6671, %v6670
    %v6673 = vrot.slane %v5899, 7
    %v6674 = vsel %vm2787, %v6673, %v5883
    %v6675 = vrot.slane %v5915, 6
    %v6676 = vsel %vm2790, %v6675, %v6674
    %v6677 = vrot.slane %v5931, 5
    %v6678 = vsel %vm2793, %v6677, %v6676
    %v6679 = vrot.slane %v5947, 4
    %v6680 = vsel %vm2796, %v6679, %v6678
    %v6681 = vrot.slane %v5963, 3
    %v6682 = vsel %vm2799, %v6681, %v6680
    %v6683 = vrot.slane %v5979, 2
    %v6684 = vsel %vm2802, %v6683, %v6682
    %v6685 = vrot.slane %v5995, 1
    %v6686 = vsel %vm2805, %v6685, %v6684
    %v6687 = vrot.slane %v5900, 7
    %v6688 = vsel %vm2787, %v6687, %v5884
    %v6689 = vrot.slane %v5916, 6
    %v6690 = vsel %vm2790, %v6689, %v6688
    %v6691 = vrot.slane %v5932, 5
    %v6692 = vsel %vm2793, %v6691, %v6690
    %v6693 = vrot.slane %v5948, 4
    %v6694 = vsel %vm2796, %v6693, %v6692
    %v6695 = vrot.slane %v5964, 3
    %v6696 = vsel %vm2799, %v6695, %v6694
    %v6697 = vrot.slane %v5980, 2
    %v6698 = vsel %vm2802, %v6697, %v6696
    %v6699 = vrot.slane %v5996, 1
    %v6700 = vsel %vm2805, %v6699, %v6698
    %v6733 = vadd.f32 %v2453, %v6266
    %v6734 = vadd.f32 %v2457, %v6280
    %v6735 = vadd.f32 %v2461, %v6294
    %v6736 = vadd.f32 %v2465, %v6308
    %v6737 = vadd.f32 %v2469, %v6322
    %v6738 = vadd.f32 %v2473, %v6336
    %v6739 = vadd.f32 %v2477, %v6350
    %v6740 = vadd.f32 %v2481, %v6364
    %v6741 = vadd.f32 %v2485, %v6378
    %v6742 = vadd.f32 %v2489, %v6392
    %v6743 = vadd.f32 %v2493, %v6406
    %v6744 = vadd.f32 %v2497, %v6420
    %v6745 = vadd.f32 %v2501, %v6434
    %v6746 = vadd.f32 %v2505, %v6448
    %v6747 = vadd.f32 %v2509, %v6462
    %v6748 = vadd.f32 %v2513, %v6476
    %v6749 = vadd.f32 %v2453, %v6490
    %v6750 = vadd.f32 %v2457, %v6504
    %v6751 = vadd.f32 %v2461, %v6518
    %v6752 = vadd.f32 %v2465, %v6532
    %v6753 = vadd.f32 %v2469, %v6546
    %v6754 = vadd.f32 %v2473, %v6560
    %v6755 = vadd.f32 %v2477, %v6574
    %v6756 = vadd.f32 %v2481, %v6588
    %v6757 = vadd.f32 %v2485, %v6602
    %v6758 = vadd.f32 %v2489, %v6616
    %v6759 = vadd.f32 %v2493, %v6630
    %v6760 = vadd.f32 %v2497, %v6644
    %v6761 = vadd.f32 %v2501, %v6658
    %v6762 = vadd.f32 %v2505, %v6672
    %v6763 = vadd.f32 %v2509, %v6686
    %v6764 = vadd.f32 %v2513, %v6700
    %6765 = vset.pattern.permute.xlu0 3
    %6766 = vperm.xlu0 %6765, %v2001
    %v6767 = vpop.permute.xlu0 %6766
    %6769 = vset.pattern.permute.xlu0 3
    %6770 = vperm.xlu0 %6769, %v2002
    %v6771 = vpop.permute.xlu0 %6770
    %6773 = vset.pattern.permute.xlu0 3
    %6774 = vperm.xlu0 %6773, %v2003
    %v6775 = vpop.permute.xlu0 %6774
    %6777 = vset.pattern.permute.xlu0 3
    %6778 = vperm.xlu0 %6777, %v2004
    %v6779 = vpop.permute.xlu0 %6778
    %6781 = vset.pattern.permute.xlu0 3
    %6782 = vperm.xlu0 %6781, %v2005
    %v6783 = vpop.permute.xlu0 %6782
    %6785 = vset.pattern.permute.xlu0 3
    %6786 = vperm.xlu0 %6785, %v2006
    %v6787 = vpop.permute.xlu0 %6786
    %6789 = vset.pattern.permute.xlu0 3
    %6790 = vperm.xlu0 %6789, %v2007
    %v6791 = vpop.permute.xlu0 %6790
    %6793 = vset.pattern.permute.xlu0 3
    %6794 = vperm.xlu0 %6793, %v2008
    %v6795 = vpop.permute.xlu0 %6794
    %6797 = vset.pattern.permute.xlu0 3
    %6798 = vperm.xlu0 %6797, %v2009
    %v6799 = vpop.permute.xlu0 %6798
    %6801 = vset.pattern.permute.xlu0 3
    %6802 = vperm.xlu0 %6801, %v2010
    %v6803 = vpop.permute.xlu0 %6802
    %6805 = vset.pattern.permute.xlu0 3
    %6806 = vperm.xlu0 %6805, %v2011
    %v6807 = vpop.permute.xlu0 %6806
    %6809 = vset.pattern.permute.xlu0 3
    %6810 = vperm.xlu0 %6809, %v2012
    %v6811 = vpop.permute.xlu0 %6810
    %6813 = vset.pattern.permute.xlu0 3
    %6814 = vperm.xlu0 %6813, %v2013
    %v6815 = vpop.permute.xlu0 %6814
    %6817 = vset.pattern.permute.xlu0 3
    %6818 = vperm.xlu0 %6817, %v2014
    %v6819 = vpop.permute.xlu0 %6818
    %6821 = vset.pattern.permute.xlu0 3
    %6822 = vperm.xlu0 %6821, %v2015
    %v6823 = vpop.permute.xlu0 %6822
    %6825 = vset.pattern.permute.xlu0 3
    %6826 = vperm.xlu0 %6825, %v2016
    %v6827 = vpop.permute.xlu0 %6826
    %v6829 = vmul.f32 %v6767, %v3374
    %v6830 = vmul.f32 %v6767, %v3378
    %v6831 = vmul.f32 %v6767, %v3382
    %v6832 = vmul.f32 %v6767, %v3386
    %v6833 = vmul.f32 %v6767, %v3390
    %v6834 = vmul.f32 %v6767, %v3394
    %v6835 = vmul.f32 %v6767, %v3398
    %v6836 = vmul.f32 %v6767, %v3402
    %v6837 = vmul.f32 %v6767, %v3406
    %v6838 = vmul.f32 %v6767, %v3410
    %v6839 = vmul.f32 %v6767, %v3414
    %v6840 = vmul.f32 %v6767, %v3418
    %v6841 = vmul.f32 %v6767, %v3422
    %v6842 = vmul.f32 %v6767, %v3426
    %v6843 = vmul.f32 %v6767, %v3430
    %v6844 = vmul.f32 %v6767, %v3434
    %v6845 = vmul.f32 %v6771, %v3374
    %v6846 = vmul.f32 %v6771, %v3378
    %v6847 = vmul.f32 %v6771, %v3382
    %v6848 = vmul.f32 %v6771, %v3386
    %v6849 = vmul.f32 %v6771, %v3390
    %v6850 = vmul.f32 %v6771, %v3394
    %v6851 = vmul.f32 %v6771, %v3398
    %v6852 = vmul.f32 %v6771, %v3402
    %v6853 = vmul.f32 %v6771, %v3406
    %v6854 = vmul.f32 %v6771, %v3410
    %v6855 = vmul.f32 %v6771, %v3414
    %v6856 = vmul.f32 %v6771, %v3418
    %v6857 = vmul.f32 %v6771, %v3422
    %v6858 = vmul.f32 %v6771, %v3426
    %v6859 = vmul.f32 %v6771, %v3430
    %v6860 = vmul.f32 %v6771, %v3434
    %v6861 = vmul.f32 %v6775, %v3374
    %v6862 = vmul.f32 %v6775, %v3378
    %v6863 = vmul.f32 %v6775, %v3382
    %v6864 = vmul.f32 %v6775, %v3386
    %v6865 = vmul.f32 %v6775, %v3390
    %v6866 = vmul.f32 %v6775, %v3394
    %v6867 = vmul.f32 %v6775, %v3398
    %v6868 = vmul.f32 %v6775, %v3402
    %v6869 = vmul.f32 %v6775, %v3406
    %v6870 = vmul.f32 %v6775, %v3410
    %v6871 = vmul.f32 %v6775, %v3414
    %v6872 = vmul.f32 %v6775, %v3418
    %v6873 = vmul.f32 %v6775, %v3422
    %v6874 = vmul.f32 %v6775, %v3426
    %v6875 = vmul.f32 %v6775, %v3430
    %v6876 = vmul.f32 %v6775, %v3434
    %v6877 = vmul.f32 %v6779, %v3374
    %v6878 = vmul.f32 %v6779, %v3378
    %v6879 = vmul.f32 %v6779, %v3382
    %v6880 = vmul.f32 %v6779, %v3386
    %v6881 = vmul.f32 %v6779, %v3390
    %v6882 = vmul.f32 %v6779, %v3394
    %v6883 = vmul.f32 %v6779, %v3398
    %v6884 = vmul.f32 %v6779, %v3402
    %v6885 = vmul.f32 %v6779, %v3406
    %v6886 = vmul.f32 %v6779, %v3410
    %v6887 = vmul.f32 %v6779, %v3414
    %v6888 = vmul.f32 %v6779, %v3418
    %v6889 = vmul.f32 %v6779, %v3422
    %v6890 = vmul.f32 %v6779, %v3426
    %v6891 = vmul.f32 %v6779, %v3430
    %v6892 = vmul.f32 %v6779, %v3434
    %v6893 = vmul.f32 %v6783, %v3374
    %v6894 = vmul.f32 %v6783, %v3378
    %v6895 = vmul.f32 %v6783, %v3382
    %v6896 = vmul.f32 %v6783, %v3386
    %v6897 = vmul.f32 %v6783, %v3390
    %v6898 = vmul.f32 %v6783, %v3394
    %v6899 = vmul.f32 %v6783, %v3398
    %v6900 = vmul.f32 %v6783, %v3402
    %v6901 = vmul.f32 %v6783, %v3406
    %v6902 = vmul.f32 %v6783, %v3410
    %v6903 = vmul.f32 %v6783, %v3414
    %v6904 = vmul.f32 %v6783, %v3418
    %v6905 = vmul.f32 %v6783, %v3422
    %v6906 = vmul.f32 %v6783, %v3426
    %v6907 = vmul.f32 %v6783, %v3430
    %v6908 = vmul.f32 %v6783, %v3434
    %v6909 = vmul.f32 %v6787, %v3374
    %v6910 = vmul.f32 %v6787, %v3378
    %v6911 = vmul.f32 %v6787, %v3382
    %v6912 = vmul.f32 %v6787, %v3386
    %v6913 = vmul.f32 %v6787, %v3390
    %v6914 = vmul.f32 %v6787, %v3394
    %v6915 = vmul.f32 %v6787, %v3398
    %v6916 = vmul.f32 %v6787, %v3402
    %v6917 = vmul.f32 %v6787, %v3406
    %v6918 = vmul.f32 %v6787, %v3410
    %v6919 = vmul.f32 %v6787, %v3414
    %v6920 = vmul.f32 %v6787, %v3418
    %v6921 = vmul.f32 %v6787, %v3422
    %v6922 = vmul.f32 %v6787, %v3426
    %v6923 = vmul.f32 %v6787, %v3430
    %v6924 = vmul.f32 %v6787, %v3434
    %v6925 = vmul.f32 %v6791, %v3374
    %v6926 = vmul.f32 %v6791, %v3378
    %v6927 = vmul.f32 %v6791, %v3382
    %v6928 = vmul.f32 %v6791, %v3386
    %v6929 = vmul.f32 %v6791, %v3390
    %v6930 = vmul.f32 %v6791, %v3394
    %v6931 = vmul.f32 %v6791, %v3398
    %v6932 = vmul.f32 %v6791, %v3402
    %v6933 = vmul.f32 %v6791, %v3406
    %v6934 = vmul.f32 %v6791, %v3410
    %v6935 = vmul.f32 %v6791, %v3414
    %v6936 = vmul.f32 %v6791, %v3418
    %v6937 = vmul.f32 %v6791, %v3422
    %v6938 = vmul.f32 %v6791, %v3426
    %v6939 = vmul.f32 %v6791, %v3430
    %v6940 = vmul.f32 %v6791, %v3434
    %v6941 = vmul.f32 %v6795, %v3374
    %v6942 = vmul.f32 %v6795, %v3378
    %v6943 = vmul.f32 %v6795, %v3382
    %v6944 = vmul.f32 %v6795, %v3386
    %v6945 = vmul.f32 %v6795, %v3390
    %v6946 = vmul.f32 %v6795, %v3394
    %v6947 = vmul.f32 %v6795, %v3398
    %v6948 = vmul.f32 %v6795, %v3402
    %v6949 = vmul.f32 %v6795, %v3406
    %v6950 = vmul.f32 %v6795, %v3410
    %v6951 = vmul.f32 %v6795, %v3414
    %v6952 = vmul.f32 %v6795, %v3418
    %v6953 = vmul.f32 %v6795, %v3422
    %v6954 = vmul.f32 %v6795, %v3426
    %v6955 = vmul.f32 %v6795, %v3430
    %v6956 = vmul.f32 %v6795, %v3434
    %v6957 = vmul.f32 %v6799, %v3374
    %v6958 = vmul.f32 %v6799, %v3378
    %v6959 = vmul.f32 %v6799, %v3382
    %v6960 = vmul.f32 %v6799, %v3386
    %v6961 = vmul.f32 %v6799, %v3390
    %v6962 = vmul.f32 %v6799, %v3394
    %v6963 = vmul.f32 %v6799, %v3398
    %v6964 = vmul.f32 %v6799, %v3402
    %v6965 = vmul.f32 %v6799, %v3406
    %v6966 = vmul.f32 %v6799, %v3410
    %v6967 = vmul.f32 %v6799, %v3414
    %v6968 = vmul.f32 %v6799, %v3418
    %v6969 = vmul.f32 %v6799, %v3422
    %v6970 = vmul.f32 %v6799, %v3426
    %v6971 = vmul.f32 %v6799, %v3430
    %v6972 = vmul.f32 %v6799, %v3434
    %v6973 = vmul.f32 %v6803, %v3374
    %v6974 = vmul.f32 %v6803, %v3378
    %v6975 = vmul.f32 %v6803, %v3382
    %v6976 = vmul.f32 %v6803, %v3386
    %v6977 = vmul.f32 %v6803, %v3390
    %v6978 = vmul.f32 %v6803, %v3394
    %v6979 = vmul.f32 %v6803, %v3398
    %v6980 = vmul.f32 %v6803, %v3402
    %v6981 = vmul.f32 %v6803, %v3406
    %v6982 = vmul.f32 %v6803, %v3410
    %v6983 = vmul.f32 %v6803, %v3414
    %v6984 = vmul.f32 %v6803, %v3418
    %v6985 = vmul.f32 %v6803, %v3422
    %v6986 = vmul.f32 %v6803, %v3426
    %v6987 = vmul.f32 %v6803, %v3430
    %v6988 = vmul.f32 %v6803, %v3434
    %v6989 = vmul.f32 %v6807, %v3374
    %v6990 = vmul.f32 %v6807, %v3378
    %v6991 = vmul.f32 %v6807, %v3382
    %v6992 = vmul.f32 %v6807, %v3386
    %v6993 = vmul.f32 %v6807, %v3390
    %v6994 = vmul.f32 %v6807, %v3394
    %v6995 = vmul.f32 %v6807, %v3398
    %v6996 = vmul.f32 %v6807, %v3402
    %v6997 = vmul.f32 %v6807, %v3406
    %v6998 = vmul.f32 %v6807, %v3410
    %v6999 = vmul.f32 %v6807, %v3414
    %v7000 = vmul.f32 %v6807, %v3418
    %v7001 = vmul.f32 %v6807, %v3422
    %v7002 = vmul.f32 %v6807, %v3426
    %v7003 = vmul.f32 %v6807, %v3430
    %v7004 = vmul.f32 %v6807, %v3434
    %v7005 = vmul.f32 %v6811, %v3374
    %v7006 = vmul.f32 %v6811, %v3378
    %v7007 = vmul.f32 %v6811, %v3382
    %v7008 = vmul.f32 %v6811, %v3386
    %v7009 = vmul.f32 %v6811, %v3390
    %v7010 = vmul.f32 %v6811, %v3394
    %v7011 = vmul.f32 %v6811, %v3398
    %v7012 = vmul.f32 %v6811, %v3402
    %v7013 = vmul.f32 %v6811, %v3406
    %v7014 = vmul.f32 %v6811, %v3410
    %v7015 = vmul.f32 %v6811, %v3414
    %v7016 = vmul.f32 %v6811, %v3418
    %v7017 = vmul.f32 %v6811, %v3422
    %v7018 = vmul.f32 %v6811, %v3426
    %v7019 = vmul.f32 %v6811, %v3430
    %v7020 = vmul.f32 %v6811, %v3434
    %v7021 = vmul.f32 %v6815, %v3374
    %v7022 = vmul.f32 %v6815, %v3378
    %v7023 = vmul.f32 %v6815, %v3382
    %v7024 = vmul.f32 %v6815, %v3386
    %v7025 = vmul.f32 %v6815, %v3390
    %v7026 = vmul.f32 %v6815, %v3394
    %v7027 = vmul.f32 %v6815, %v3398
    %v7028 = vmul.f32 %v6815, %v3402
    %v7029 = vmul.f32 %v6815, %v3406
    %v7030 = vmul.f32 %v6815, %v3410
    %v7031 = vmul.f32 %v6815, %v3414
    %v7032 = vmul.f32 %v6815, %v3418
    %v7033 = vmul.f32 %v6815, %v3422
    %v7034 = vmul.f32 %v6815, %v3426
    %v7035 = vmul.f32 %v6815, %v3430
    %v7036 = vmul.f32 %v6815, %v3434
    %v7037 = vmul.f32 %v6819, %v3374
    %v7038 = vmul.f32 %v6819, %v3378
    %v7039 = vmul.f32 %v6819, %v3382
    %v7040 = vmul.f32 %v6819, %v3386
    %v7041 = vmul.f32 %v6819, %v3390
    %v7042 = vmul.f32 %v6819, %v3394
    %v7043 = vmul.f32 %v6819, %v3398
    %v7044 = vmul.f32 %v6819, %v3402
    %v7045 = vmul.f32 %v6819, %v3406
    %v7046 = vmul.f32 %v6819, %v3410
    %v7047 = vmul.f32 %v6819, %v3414
    %v7048 = vmul.f32 %v6819, %v3418
    %v7049 = vmul.f32 %v6819, %v3422
    %v7050 = vmul.f32 %v6819, %v3426
    %v7051 = vmul.f32 %v6819, %v3430
    %v7052 = vmul.f32 %v6819, %v3434
    %v7053 = vmul.f32 %v6823, %v3374
    %v7054 = vmul.f32 %v6823, %v3378
    %v7055 = vmul.f32 %v6823, %v3382
    %v7056 = vmul.f32 %v6823, %v3386
    %v7057 = vmul.f32 %v6823, %v3390
    %v7058 = vmul.f32 %v6823, %v3394
    %v7059 = vmul.f32 %v6823, %v3398
    %v7060 = vmul.f32 %v6823, %v3402
    %v7061 = vmul.f32 %v6823, %v3406
    %v7062 = vmul.f32 %v6823, %v3410
    %v7063 = vmul.f32 %v6823, %v3414
    %v7064 = vmul.f32 %v6823, %v3418
    %v7065 = vmul.f32 %v6823, %v3422
    %v7066 = vmul.f32 %v6823, %v3426
    %v7067 = vmul.f32 %v6823, %v3430
    %v7068 = vmul.f32 %v6823, %v3434
    %v7069 = vmul.f32 %v6827, %v3374
    %v7070 = vmul.f32 %v6827, %v3378
    %v7071 = vmul.f32 %v6827, %v3382
    %v7072 = vmul.f32 %v6827, %v3386
    %v7073 = vmul.f32 %v6827, %v3390
    %v7074 = vmul.f32 %v6827, %v3394
    %v7075 = vmul.f32 %v6827, %v3398
    %v7076 = vmul.f32 %v6827, %v3402
    %v7077 = vmul.f32 %v6827, %v3406
    %v7078 = vmul.f32 %v6827, %v3410
    %v7079 = vmul.f32 %v6827, %v3414
    %v7080 = vmul.f32 %v6827, %v3418
    %v7081 = vmul.f32 %v6827, %v3422
    %v7082 = vmul.f32 %v6827, %v3426
    %v7083 = vmul.f32 %v6827, %v3430
    %v7084 = vmul.f32 %v6827, %v3434
    %v7341 = vrot.slane %v6845, 7
    %v7342 = vsel %vm2787, %v7341, %v6829
    %v7343 = vrot.slane %v6861, 6
    %v7344 = vsel %vm2790, %v7343, %v7342
    %v7345 = vrot.slane %v6877, 5
    %v7346 = vsel %vm2793, %v7345, %v7344
    %v7347 = vrot.slane %v6893, 4
    %v7348 = vsel %vm2796, %v7347, %v7346
    %v7349 = vrot.slane %v6909, 3
    %v7350 = vsel %vm2799, %v7349, %v7348
    %v7351 = vrot.slane %v6925, 2
    %v7352 = vsel %vm2802, %v7351, %v7350
    %v7353 = vrot.slane %v6941, 1
    %v7354 = vsel %vm2805, %v7353, %v7352
    %v7355 = vrot.slane %v6846, 7
    %v7356 = vsel %vm2787, %v7355, %v6830
    %v7357 = vrot.slane %v6862, 6
    %v7358 = vsel %vm2790, %v7357, %v7356
    %v7359 = vrot.slane %v6878, 5
    %v7360 = vsel %vm2793, %v7359, %v7358
    %v7361 = vrot.slane %v6894, 4
    %v7362 = vsel %vm2796, %v7361, %v7360
    %v7363 = vrot.slane %v6910, 3
    %v7364 = vsel %vm2799, %v7363, %v7362
    %v7365 = vrot.slane %v6926, 2
    %v7366 = vsel %vm2802, %v7365, %v7364
    %v7367 = vrot.slane %v6942, 1
    %v7368 = vsel %vm2805, %v7367, %v7366
    %v7369 = vrot.slane %v6847, 7
    %v7370 = vsel %vm2787, %v7369, %v6831
    %v7371 = vrot.slane %v6863, 6
    %v7372 = vsel %vm2790, %v7371, %v7370
    %v7373 = vrot.slane %v6879, 5
    %v7374 = vsel %vm2793, %v7373, %v7372
    %v7375 = vrot.slane %v6895, 4
    %v7376 = vsel %vm2796, %v7375, %v7374
    %v7377 = vrot.slane %v6911, 3
    %v7378 = vsel %vm2799, %v7377, %v7376
    %v7379 = vrot.slane %v6927, 2
    %v7380 = vsel %vm2802, %v7379, %v7378
    %v7381 = vrot.slane %v6943, 1
    %v7382 = vsel %vm2805, %v7381, %v7380
    %v7383 = vrot.slane %v6848, 7
    %v7384 = vsel %vm2787, %v7383, %v6832
    %v7385 = vrot.slane %v6864, 6
    %v7386 = vsel %vm2790, %v7385, %v7384
    %v7387 = vrot.slane %v6880, 5
    %v7388 = vsel %vm2793, %v7387, %v7386
    %v7389 = vrot.slane %v6896, 4
    %v7390 = vsel %vm2796, %v7389, %v7388
    %v7391 = vrot.slane %v6912, 3
    %v7392 = vsel %vm2799, %v7391, %v7390
    %v7393 = vrot.slane %v6928, 2
    %v7394 = vsel %vm2802, %v7393, %v7392
    %v7395 = vrot.slane %v6944, 1
    %v7396 = vsel %vm2805, %v7395, %v7394
    %v7397 = vrot.slane %v6849, 7
    %v7398 = vsel %vm2787, %v7397, %v6833
    %v7399 = vrot.slane %v6865, 6
    %v7400 = vsel %vm2790, %v7399, %v7398
    %v7401 = vrot.slane %v6881, 5
    %v7402 = vsel %vm2793, %v7401, %v7400
    %v7403 = vrot.slane %v6897, 4
    %v7404 = vsel %vm2796, %v7403, %v7402
    %v7405 = vrot.slane %v6913, 3
    %v7406 = vsel %vm2799, %v7405, %v7404
    %v7407 = vrot.slane %v6929, 2
    %v7408 = vsel %vm2802, %v7407, %v7406
    %v7409 = vrot.slane %v6945, 1
    %v7410 = vsel %vm2805, %v7409, %v7408
    %v7411 = vrot.slane %v6850, 7
    %v7412 = vsel %vm2787, %v7411, %v6834
    %v7413 = vrot.slane %v6866, 6
    %v7414 = vsel %vm2790, %v7413, %v7412
    %v7415 = vrot.slane %v6882, 5
    %v7416 = vsel %vm2793, %v7415, %v7414
    %v7417 = vrot.slane %v6898, 4
    %v7418 = vsel %vm2796, %v7417, %v7416
    %v7419 = vrot.slane %v6914, 3
    %v7420 = vsel %vm2799, %v7419, %v7418
    %v7421 = vrot.slane %v6930, 2
    %v7422 = vsel %vm2802, %v7421, %v7420
    %v7423 = vrot.slane %v6946, 1
    %v7424 = vsel %vm2805, %v7423, %v7422
    %v7425 = vrot.slane %v6851, 7
    %v7426 = vsel %vm2787, %v7425, %v6835
    %v7427 = vrot.slane %v6867, 6
    %v7428 = vsel %vm2790, %v7427, %v7426
    %v7429 = vrot.slane %v6883, 5
    %v7430 = vsel %vm2793, %v7429, %v7428
    %v7431 = vrot.slane %v6899, 4
    %v7432 = vsel %vm2796, %v7431, %v7430
    %v7433 = vrot.slane %v6915, 3
    %v7434 = vsel %vm2799, %v7433, %v7432
    %v7435 = vrot.slane %v6931, 2
    %v7436 = vsel %vm2802, %v7435, %v7434
    %v7437 = vrot.slane %v6947, 1
    %v7438 = vsel %vm2805, %v7437, %v7436
    %v7439 = vrot.slane %v6852, 7
    %v7440 = vsel %vm2787, %v7439, %v6836
    %v7441 = vrot.slane %v6868, 6
    %v7442 = vsel %vm2790, %v7441, %v7440
    %v7443 = vrot.slane %v6884, 5
    %v7444 = vsel %vm2793, %v7443, %v7442
    %v7445 = vrot.slane %v6900, 4
    %v7446 = vsel %vm2796, %v7445, %v7444
    %v7447 = vrot.slane %v6916, 3
    %v7448 = vsel %vm2799, %v7447, %v7446
    %v7449 = vrot.slane %v6932, 2
    %v7450 = vsel %vm2802, %v7449, %v7448
    %v7451 = vrot.slane %v6948, 1
    %v7452 = vsel %vm2805, %v7451, %v7450
    %v7453 = vrot.slane %v6853, 7
    %v7454 = vsel %vm2787, %v7453, %v6837
    %v7455 = vrot.slane %v6869, 6
    %v7456 = vsel %vm2790, %v7455, %v7454
    %v7457 = vrot.slane %v6885, 5
    %v7458 = vsel %vm2793, %v7457, %v7456
    %v7459 = vrot.slane %v6901, 4
    %v7460 = vsel %vm2796, %v7459, %v7458
    %v7461 = vrot.slane %v6917, 3
    %v7462 = vsel %vm2799, %v7461, %v7460
    %v7463 = vrot.slane %v6933, 2
    %v7464 = vsel %vm2802, %v7463, %v7462
    %v7465 = vrot.slane %v6949, 1
    %v7466 = vsel %vm2805, %v7465, %v7464
    %v7467 = vrot.slane %v6854, 7
    %v7468 = vsel %vm2787, %v7467, %v6838
    %v7469 = vrot.slane %v6870, 6
    %v7470 = vsel %vm2790, %v7469, %v7468
    %v7471 = vrot.slane %v6886, 5
    %v7472 = vsel %vm2793, %v7471, %v7470
    %v7473 = vrot.slane %v6902, 4
    %v7474 = vsel %vm2796, %v7473, %v7472
    %v7475 = vrot.slane %v6918, 3
    %v7476 = vsel %vm2799, %v7475, %v7474
    %v7477 = vrot.slane %v6934, 2
    %v7478 = vsel %vm2802, %v7477, %v7476
    %v7479 = vrot.slane %v6950, 1
    %v7480 = vsel %vm2805, %v7479, %v7478
    %v7481 = vrot.slane %v6855, 7
    %v7482 = vsel %vm2787, %v7481, %v6839
    %v7483 = vrot.slane %v6871, 6
    %v7484 = vsel %vm2790, %v7483, %v7482
    %v7485 = vrot.slane %v6887, 5
    %v7486 = vsel %vm2793, %v7485, %v7484
    %v7487 = vrot.slane %v6903, 4
    %v7488 = vsel %vm2796, %v7487, %v7486
    %v7489 = vrot.slane %v6919, 3
    %v7490 = vsel %vm2799, %v7489, %v7488
    %v7491 = vrot.slane %v6935, 2
    %v7492 = vsel %vm2802, %v7491, %v7490
    %v7493 = vrot.slane %v6951, 1
    %v7494 = vsel %vm2805, %v7493, %v7492
    %v7495 = vrot.slane %v6856, 7
    %v7496 = vsel %vm2787, %v7495, %v6840
    %v7497 = vrot.slane %v6872, 6
    %v7498 = vsel %vm2790, %v7497, %v7496
    %v7499 = vrot.slane %v6888, 5
    %v7500 = vsel %vm2793, %v7499, %v7498
    %v7501 = vrot.slane %v6904, 4
    %v7502 = vsel %vm2796, %v7501, %v7500
    %v7503 = vrot.slane %v6920, 3
    %v7504 = vsel %vm2799, %v7503, %v7502
    %v7505 = vrot.slane %v6936, 2
    %v7506 = vsel %vm2802, %v7505, %v7504
    %v7507 = vrot.slane %v6952, 1
    %v7508 = vsel %vm2805, %v7507, %v7506
    %v7509 = vrot.slane %v6857, 7
    %v7510 = vsel %vm2787, %v7509, %v6841
    %v7511 = vrot.slane %v6873, 6
    %v7512 = vsel %vm2790, %v7511, %v7510
    %v7513 = vrot.slane %v6889, 5
    %v7514 = vsel %vm2793, %v7513, %v7512
    %v7515 = vrot.slane %v6905, 4
    %v7516 = vsel %vm2796, %v7515, %v7514
    %v7517 = vrot.slane %v6921, 3
    %v7518 = vsel %vm2799, %v7517, %v7516
    %v7519 = vrot.slane %v6937, 2
    %v7520 = vsel %vm2802, %v7519, %v7518
    %v7521 = vrot.slane %v6953, 1
    %v7522 = vsel %vm2805, %v7521, %v7520
    %v7523 = vrot.slane %v6858, 7
    %v7524 = vsel %vm2787, %v7523, %v6842
    %v7525 = vrot.slane %v6874, 6
    %v7526 = vsel %vm2790, %v7525, %v7524
    %v7527 = vrot.slane %v6890, 5
    %v7528 = vsel %vm2793, %v7527, %v7526
    %v7529 = vrot.slane %v6906, 4
    %v7530 = vsel %vm2796, %v7529, %v7528
    %v7531 = vrot.slane %v6922, 3
    %v7532 = vsel %vm2799, %v7531, %v7530
    %v7533 = vrot.slane %v6938, 2
    %v7534 = vsel %vm2802, %v7533, %v7532
    %v7535 = vrot.slane %v6954, 1
    %v7536 = vsel %vm2805, %v7535, %v7534
    %v7537 = vrot.slane %v6859, 7
    %v7538 = vsel %vm2787, %v7537, %v6843
    %v7539 = vrot.slane %v6875, 6
    %v7540 = vsel %vm2790, %v7539, %v7538
    %v7541 = vrot.slane %v6891, 5
    %v7542 = vsel %vm2793, %v7541, %v7540
    %v7543 = vrot.slane %v6907, 4
    %v7544 = vsel %vm2796, %v7543, %v7542
    %v7545 = vrot.slane %v6923, 3
    %v7546 = vsel %vm2799, %v7545, %v7544
    %v7547 = vrot.slane %v6939, 2
    %v7548 = vsel %vm2802, %v7547, %v7546
    %v7549 = vrot.slane %v6955, 1
    %v7550 = vsel %vm2805, %v7549, %v7548
    %v7551 = vrot.slane %v6860, 7
    %v7552 = vsel %vm2787, %v7551, %v6844
    %v7553 = vrot.slane %v6876, 6
    %v7554 = vsel %vm2790, %v7553, %v7552
    %v7555 = vrot.slane %v6892, 5
    %v7556 = vsel %vm2793, %v7555, %v7554
    %v7557 = vrot.slane %v6908, 4
    %v7558 = vsel %vm2796, %v7557, %v7556
    %v7559 = vrot.slane %v6924, 3
    %v7560 = vsel %vm2799, %v7559, %v7558
    %v7561 = vrot.slane %v6940, 2
    %v7562 = vsel %vm2802, %v7561, %v7560
    %v7563 = vrot.slane %v6956, 1
    %v7564 = vsel %vm2805, %v7563, %v7562
    %v7565 = vrot.slane %v6973, 7
    %v7566 = vsel %vm2787, %v7565, %v6957
    %v7567 = vrot.slane %v6989, 6
    %v7568 = vsel %vm2790, %v7567, %v7566
    %v7569 = vrot.slane %v7005, 5
    %v7570 = vsel %vm2793, %v7569, %v7568
    %v7571 = vrot.slane %v7021, 4
    %v7572 = vsel %vm2796, %v7571, %v7570
    %v7573 = vrot.slane %v7037, 3
    %v7574 = vsel %vm2799, %v7573, %v7572
    %v7575 = vrot.slane %v7053, 2
    %v7576 = vsel %vm2802, %v7575, %v7574
    %v7577 = vrot.slane %v7069, 1
    %v7578 = vsel %vm2805, %v7577, %v7576
    %v7579 = vrot.slane %v6974, 7
    %v7580 = vsel %vm2787, %v7579, %v6958
    %v7581 = vrot.slane %v6990, 6
    %v7582 = vsel %vm2790, %v7581, %v7580
    %v7583 = vrot.slane %v7006, 5
    %v7584 = vsel %vm2793, %v7583, %v7582
    %v7585 = vrot.slane %v7022, 4
    %v7586 = vsel %vm2796, %v7585, %v7584
    %v7587 = vrot.slane %v7038, 3
    %v7588 = vsel %vm2799, %v7587, %v7586
    %v7589 = vrot.slane %v7054, 2
    %v7590 = vsel %vm2802, %v7589, %v7588
    %v7591 = vrot.slane %v7070, 1
    %v7592 = vsel %vm2805, %v7591, %v7590
    %v7593 = vrot.slane %v6975, 7
    %v7594 = vsel %vm2787, %v7593, %v6959
    %v7595 = vrot.slane %v6991, 6
    %v7596 = vsel %vm2790, %v7595, %v7594
    %v7597 = vrot.slane %v7007, 5
    %v7598 = vsel %vm2793, %v7597, %v7596
    %v7599 = vrot.slane %v7023, 4
    %v7600 = vsel %vm2796, %v7599, %v7598
    %v7601 = vrot.slane %v7039, 3
    %v7602 = vsel %vm2799, %v7601, %v7600
    %v7603 = vrot.slane %v7055, 2
    %v7604 = vsel %vm2802, %v7603, %v7602
    %v7605 = vrot.slane %v7071, 1
    %v7606 = vsel %vm2805, %v7605, %v7604
    %v7607 = vrot.slane %v6976, 7
    %v7608 = vsel %vm2787, %v7607, %v6960
    %v7609 = vrot.slane %v6992, 6
    %v7610 = vsel %vm2790, %v7609, %v7608
    %v7611 = vrot.slane %v7008, 5
    %v7612 = vsel %vm2793, %v7611, %v7610
    %v7613 = vrot.slane %v7024, 4
    %v7614 = vsel %vm2796, %v7613, %v7612
    %v7615 = vrot.slane %v7040, 3
    %v7616 = vsel %vm2799, %v7615, %v7614
    %v7617 = vrot.slane %v7056, 2
    %v7618 = vsel %vm2802, %v7617, %v7616
    %v7619 = vrot.slane %v7072, 1
    %v7620 = vsel %vm2805, %v7619, %v7618
    %v7621 = vrot.slane %v6977, 7
    %v7622 = vsel %vm2787, %v7621, %v6961
    %v7623 = vrot.slane %v6993, 6
    %v7624 = vsel %vm2790, %v7623, %v7622
    %v7625 = vrot.slane %v7009, 5
    %v7626 = vsel %vm2793, %v7625, %v7624
    %v7627 = vrot.slane %v7025, 4
    %v7628 = vsel %vm2796, %v7627, %v7626
    %v7629 = vrot.slane %v7041, 3
    %v7630 = vsel %vm2799, %v7629, %v7628
    %v7631 = vrot.slane %v7057, 2
    %v7632 = vsel %vm2802, %v7631, %v7630
    %v7633 = vrot.slane %v7073, 1
    %v7634 = vsel %vm2805, %v7633, %v7632
    %v7635 = vrot.slane %v6978, 7
    %v7636 = vsel %vm2787, %v7635, %v6962
    %v7637 = vrot.slane %v6994, 6
    %v7638 = vsel %vm2790, %v7637, %v7636
    %v7639 = vrot.slane %v7010, 5
    %v7640 = vsel %vm2793, %v7639, %v7638
    %v7641 = vrot.slane %v7026, 4
    %v7642 = vsel %vm2796, %v7641, %v7640
    %v7643 = vrot.slane %v7042, 3
    %v7644 = vsel %vm2799, %v7643, %v7642
    %v7645 = vrot.slane %v7058, 2
    %v7646 = vsel %vm2802, %v7645, %v7644
    %v7647 = vrot.slane %v7074, 1
    %v7648 = vsel %vm2805, %v7647, %v7646
    %v7649 = vrot.slane %v6979, 7
    %v7650 = vsel %vm2787, %v7649, %v6963
    %v7651 = vrot.slane %v6995, 6
    %v7652 = vsel %vm2790, %v7651, %v7650
    %v7653 = vrot.slane %v7011, 5
    %v7654 = vsel %vm2793, %v7653, %v7652
    %v7655 = vrot.slane %v7027, 4
    %v7656 = vsel %vm2796, %v7655, %v7654
    %v7657 = vrot.slane %v7043, 3
    %v7658 = vsel %vm2799, %v7657, %v7656
    %v7659 = vrot.slane %v7059, 2
    %v7660 = vsel %vm2802, %v7659, %v7658
    %v7661 = vrot.slane %v7075, 1
    %v7662 = vsel %vm2805, %v7661, %v7660
    %v7663 = vrot.slane %v6980, 7
    %v7664 = vsel %vm2787, %v7663, %v6964
    %v7665 = vrot.slane %v6996, 6
    %v7666 = vsel %vm2790, %v7665, %v7664
    %v7667 = vrot.slane %v7012, 5
    %v7668 = vsel %vm2793, %v7667, %v7666
    %v7669 = vrot.slane %v7028, 4
    %v7670 = vsel %vm2796, %v7669, %v7668
    %v7671 = vrot.slane %v7044, 3
    %v7672 = vsel %vm2799, %v7671, %v7670
    %v7673 = vrot.slane %v7060, 2
    %v7674 = vsel %vm2802, %v7673, %v7672
    %v7675 = vrot.slane %v7076, 1
    %v7676 = vsel %vm2805, %v7675, %v7674
    %v7677 = vrot.slane %v6981, 7
    %v7678 = vsel %vm2787, %v7677, %v6965
    %v7679 = vrot.slane %v6997, 6
    %v7680 = vsel %vm2790, %v7679, %v7678
    %v7681 = vrot.slane %v7013, 5
    %v7682 = vsel %vm2793, %v7681, %v7680
    %v7683 = vrot.slane %v7029, 4
    %v7684 = vsel %vm2796, %v7683, %v7682
    %v7685 = vrot.slane %v7045, 3
    %v7686 = vsel %vm2799, %v7685, %v7684
    %v7687 = vrot.slane %v7061, 2
    %v7688 = vsel %vm2802, %v7687, %v7686
    %v7689 = vrot.slane %v7077, 1
    %v7690 = vsel %vm2805, %v7689, %v7688
    %v7691 = vrot.slane %v6982, 7
    %v7692 = vsel %vm2787, %v7691, %v6966
    %v7693 = vrot.slane %v6998, 6
    %v7694 = vsel %vm2790, %v7693, %v7692
    %v7695 = vrot.slane %v7014, 5
    %v7696 = vsel %vm2793, %v7695, %v7694
    %v7697 = vrot.slane %v7030, 4
    %v7698 = vsel %vm2796, %v7697, %v7696
    %v7699 = vrot.slane %v7046, 3
    %v7700 = vsel %vm2799, %v7699, %v7698
    %v7701 = vrot.slane %v7062, 2
    %v7702 = vsel %vm2802, %v7701, %v7700
    %v7703 = vrot.slane %v7078, 1
    %v7704 = vsel %vm2805, %v7703, %v7702
    %v7705 = vrot.slane %v6983, 7
    %v7706 = vsel %vm2787, %v7705, %v6967
    %v7707 = vrot.slane %v6999, 6
    %v7708 = vsel %vm2790, %v7707, %v7706
    %v7709 = vrot.slane %v7015, 5
    %v7710 = vsel %vm2793, %v7709, %v7708
    %v7711 = vrot.slane %v7031, 4
    %v7712 = vsel %vm2796, %v7711, %v7710
    %v7713 = vrot.slane %v7047, 3
    %v7714 = vsel %vm2799, %v7713, %v7712
    %v7715 = vrot.slane %v7063, 2
    %v7716 = vsel %vm2802, %v7715, %v7714
    %v7717 = vrot.slane %v7079, 1
    %v7718 = vsel %vm2805, %v7717, %v7716
    %v7719 = vrot.slane %v6984, 7
    %v7720 = vsel %vm2787, %v7719, %v6968
    %v7721 = vrot.slane %v7000, 6
    %v7722 = vsel %vm2790, %v7721, %v7720
    %v7723 = vrot.slane %v7016, 5
    %v7724 = vsel %vm2793, %v7723, %v7722
    %v7725 = vrot.slane %v7032, 4
    %v7726 = vsel %vm2796, %v7725, %v7724
    %v7727 = vrot.slane %v7048, 3
    %v7728 = vsel %vm2799, %v7727, %v7726
    %v7729 = vrot.slane %v7064, 2
    %v7730 = vsel %vm2802, %v7729, %v7728
    %v7731 = vrot.slane %v7080, 1
    %v7732 = vsel %vm2805, %v7731, %v7730
    %v7733 = vrot.slane %v6985, 7
    %v7734 = vsel %vm2787, %v7733, %v6969
    %v7735 = vrot.slane %v7001, 6
    %v7736 = vsel %vm2790, %v7735, %v7734
    %v7737 = vrot.slane %v7017, 5
    %v7738 = vsel %vm2793, %v7737, %v7736
    %v7739 = vrot.slane %v7033, 4
    %v7740 = vsel %vm2796, %v7739, %v7738
    %v7741 = vrot.slane %v7049, 3
    %v7742 = vsel %vm2799, %v7741, %v7740
    %v7743 = vrot.slane %v7065, 2
    %v7744 = vsel %vm2802, %v7743, %v7742
    %v7745 = vrot.slane %v7081, 1
    %v7746 = vsel %vm2805, %v7745, %v7744
    %v7747 = vrot.slane %v6986, 7
    %v7748 = vsel %vm2787, %v7747, %v6970
    %v7749 = vrot.slane %v7002, 6
    %v7750 = vsel %vm2790, %v7749, %v7748
    %v7751 = vrot.slane %v7018, 5
    %v7752 = vsel %vm2793, %v7751, %v7750
    %v7753 = vrot.slane %v7034, 4
    %v7754 = vsel %vm2796, %v7753, %v7752
    %v7755 = vrot.slane %v7050, 3
    %v7756 = vsel %vm2799, %v7755, %v7754
    %v7757 = vrot.slane %v7066, 2
    %v7758 = vsel %vm2802, %v7757, %v7756
    %v7759 = vrot.slane %v7082, 1
    %v7760 = vsel %vm2805, %v7759, %v7758
    %v7761 = vrot.slane %v6987, 7
    %v7762 = vsel %vm2787, %v7761, %v6971
    %v7763 = vrot.slane %v7003, 6
    %v7764 = vsel %vm2790, %v7763, %v7762
    %v7765 = vrot.slane %v7019, 5
    %v7766 = vsel %vm2793, %v7765, %v7764
    %v7767 = vrot.slane %v7035, 4
    %v7768 = vsel %vm2796, %v7767, %v7766
    %v7769 = vrot.slane %v7051, 3
    %v7770 = vsel %vm2799, %v7769, %v7768
    %v7771 = vrot.slane %v7067, 2
    %v7772 = vsel %vm2802, %v7771, %v7770
    %v7773 = vrot.slane %v7083, 1
    %v7774 = vsel %vm2805, %v7773, %v7772
    %v7775 = vrot.slane %v6988, 7
    %v7776 = vsel %vm2787, %v7775, %v6972
    %v7777 = vrot.slane %v7004, 6
    %v7778 = vsel %vm2790, %v7777, %v7776
    %v7779 = vrot.slane %v7020, 5
    %v7780 = vsel %vm2793, %v7779, %v7778
    %v7781 = vrot.slane %v7036, 4
    %v7782 = vsel %vm2796, %v7781, %v7780
    %v7783 = vrot.slane %v7052, 3
    %v7784 = vsel %vm2799, %v7783, %v7782
    %v7785 = vrot.slane %v7068, 2
    %v7786 = vsel %vm2802, %v7785, %v7784
    %v7787 = vrot.slane %v7084, 1
    %v7788 = vsel %vm2805, %v7787, %v7786
    %v7821 = vadd.f32 %v6733, %v7354
    %v7822 = vadd.f32 %v6734, %v7368
    %v7823 = vadd.f32 %v6735, %v7382
    %v7824 = vadd.f32 %v6736, %v7396
    %v7825 = vadd.f32 %v6737, %v7410
    %v7826 = vadd.f32 %v6738, %v7424
    %v7827 = vadd.f32 %v6739, %v7438
    %v7828 = vadd.f32 %v6740, %v7452
    %v7829 = vadd.f32 %v6741, %v7466
    %v7830 = vadd.f32 %v6742, %v7480
    %v7831 = vadd.f32 %v6743, %v7494
    %v7832 = vadd.f32 %v6744, %v7508
    %v7833 = vadd.f32 %v6745, %v7522
    %v7834 = vadd.f32 %v6746, %v7536
    %v7835 = vadd.f32 %v6747, %v7550
    %v7836 = vadd.f32 %v6748, %v7564
    %v7837 = vadd.f32 %v6749, %v7578
    %v7838 = vadd.f32 %v6750, %v7592
    %v7839 = vadd.f32 %v6751, %v7606
    %v7840 = vadd.f32 %v6752, %v7620
    %v7841 = vadd.f32 %v6753, %v7634
    %v7842 = vadd.f32 %v6754, %v7648
    %v7843 = vadd.f32 %v6755, %v7662
    %v7844 = vadd.f32 %v6756, %v7676
    %v7845 = vadd.f32 %v6757, %v7690
    %v7846 = vadd.f32 %v6758, %v7704
    %v7847 = vadd.f32 %v6759, %v7718
    %v7848 = vadd.f32 %v6760, %v7732
    %v7849 = vadd.f32 %v6761, %v7746
    %v7850 = vadd.f32 %v6762, %v7760
    %v7851 = vadd.f32 %v6763, %v7774
    %v7852 = vadd.f32 %v6764, %v7788
    %7853 = vset.pattern.permute.xlu0 5
    %7854 = vperm.xlu0 %7853, %v2001
    %v7855 = vpop.permute.xlu0 %7854
    %7857 = vset.pattern.permute.xlu0 5
    %7858 = vperm.xlu0 %7857, %v2002
    %v7859 = vpop.permute.xlu0 %7858
    %7861 = vset.pattern.permute.xlu0 5
    %7862 = vperm.xlu0 %7861, %v2003
    %v7863 = vpop.permute.xlu0 %7862
    %7865 = vset.pattern.permute.xlu0 5
    %7866 = vperm.xlu0 %7865, %v2004
    %v7867 = vpop.permute.xlu0 %7866
    %7869 = vset.pattern.permute.xlu0 5
    %7870 = vperm.xlu0 %7869, %v2005
    %v7871 = vpop.permute.xlu0 %7870
    %7873 = vset.pattern.permute.xlu0 5
    %7874 = vperm.xlu0 %7873, %v2006
    %v7875 = vpop.permute.xlu0 %7874
    %7877 = vset.pattern.permute.xlu0 5
    %7878 = vperm.xlu0 %7877, %v2007
    %v7879 = vpop.permute.xlu0 %7878
    %7881 = vset.pattern.permute.xlu0 5
    %7882 = vperm.xlu0 %7881, %v2008
    %v7883 = vpop.permute.xlu0 %7882
    %7885 = vset.pattern.permute.xlu0 5
    %7886 = vperm.xlu0 %7885, %v2009
    %v7887 = vpop.permute.xlu0 %7886
    %7889 = vset.pattern.permute.xlu0 5
    %7890 = vperm.xlu0 %7889, %v2010
    %v7891 = vpop.permute.xlu0 %7890
    %7893 = vset.pattern.permute.xlu0 5
    %7894 = vperm.xlu0 %7893, %v2011
    %v7895 = vpop.permute.xlu0 %7894
    %7897 = vset.pattern.permute.xlu0 5
    %7898 = vperm.xlu0 %7897, %v2012
    %v7899 = vpop.permute.xlu0 %7898
    %7901 = vset.pattern.permute.xlu0 5
    %7902 = vperm.xlu0 %7901, %v2013
    %v7903 = vpop.permute.xlu0 %7902
    %7905 = vset.pattern.permute.xlu0 5
    %7906 = vperm.xlu0 %7905, %v2014
    %v7907 = vpop.permute.xlu0 %7906
    %7909 = vset.pattern.permute.xlu0 5
    %7910 = vperm.xlu0 %7909, %v2015
    %v7911 = vpop.permute.xlu0 %7910
    %7913 = vset.pattern.permute.xlu0 5
    %7914 = vperm.xlu0 %7913, %v2016
    %v7915 = vpop.permute.xlu0 %7914
    %v7917 = vmul.f32 %v7855, %v4544
    %v7918 = vmul.f32 %v7855, %v4548
    %v7919 = vmul.f32 %v7855, %v4552
    %v7920 = vmul.f32 %v7855, %v4556
    %v7921 = vmul.f32 %v7855, %v4560
    %v7922 = vmul.f32 %v7855, %v4564
    %v7923 = vmul.f32 %v7855, %v4568
    %v7924 = vmul.f32 %v7855, %v4572
    %v7925 = vmul.f32 %v7855, %v4576
    %v7926 = vmul.f32 %v7855, %v4580
    %v7927 = vmul.f32 %v7855, %v4584
    %v7928 = vmul.f32 %v7855, %v4588
    %v7929 = vmul.f32 %v7855, %v4592
    %v7930 = vmul.f32 %v7855, %v4596
    %v7931 = vmul.f32 %v7855, %v4600
    %v7932 = vmul.f32 %v7855, %v4604
    %v7933 = vmul.f32 %v7859, %v4544
    %v7934 = vmul.f32 %v7859, %v4548
    %v7935 = vmul.f32 %v7859, %v4552
    %v7936 = vmul.f32 %v7859, %v4556
    %v7937 = vmul.f32 %v7859, %v4560
    %v7938 = vmul.f32 %v7859, %v4564
    %v7939 = vmul.f32 %v7859, %v4568
    %v7940 = vmul.f32 %v7859, %v4572
    %v7941 = vmul.f32 %v7859, %v4576
    %v7942 = vmul.f32 %v7859, %v4580
    %v7943 = vmul.f32 %v7859, %v4584
    %v7944 = vmul.f32 %v7859, %v4588
    %v7945 = vmul.f32 %v7859, %v4592
    %v7946 = vmul.f32 %v7859, %v4596
    %v7947 = vmul.f32 %v7859, %v4600
    %v7948 = vmul.f32 %v7859, %v4604
    %v7949 = vmul.f32 %v7863, %v4544
    %v7950 = vmul.f32 %v7863, %v4548
    %v7951 = vmul.f32 %v7863, %v4552
    %v7952 = vmul.f32 %v7863, %v4556
    %v7953 = vmul.f32 %v7863, %v4560
    %v7954 = vmul.f32 %v7863, %v4564
    %v7955 = vmul.f32 %v7863, %v4568
    %v7956 = vmul.f32 %v7863, %v4572
    %v7957 = vmul.f32 %v7863, %v4576
    %v7958 = vmul.f32 %v7863, %v4580
    %v7959 = vmul.f32 %v7863, %v4584
    %v7960 = vmul.f32 %v7863, %v4588
    %v7961 = vmul.f32 %v7863, %v4592
    %v7962 = vmul.f32 %v7863, %v4596
    %v7963 = vmul.f32 %v7863, %v4600
    %v7964 = vmul.f32 %v7863, %v4604
    %v7965 = vmul.f32 %v7867, %v4544
    %v7966 = vmul.f32 %v7867, %v4548
    %v7967 = vmul.f32 %v7867, %v4552
    %v7968 = vmul.f32 %v7867, %v4556
    %v7969 = vmul.f32 %v7867, %v4560
    %v7970 = vmul.f32 %v7867, %v4564
    %v7971 = vmul.f32 %v7867, %v4568
    %v7972 = vmul.f32 %v7867, %v4572
    %v7973 = vmul.f32 %v7867, %v4576
    %v7974 = vmul.f32 %v7867, %v4580
    %v7975 = vmul.f32 %v7867, %v4584
    %v7976 = vmul.f32 %v7867, %v4588
    %v7977 = vmul.f32 %v7867, %v4592
    %v7978 = vmul.f32 %v7867, %v4596
    %v7979 = vmul.f32 %v7867, %v4600
    %v7980 = vmul.f32 %v7867, %v4604
    %v7981 = vmul.f32 %v7871, %v4544
    %v7982 = vmul.f32 %v7871, %v4548
    %v7983 = vmul.f32 %v7871, %v4552
    %v7984 = vmul.f32 %v7871, %v4556
    %v7985 = vmul.f32 %v7871, %v4560
    %v7986 = vmul.f32 %v7871, %v4564
    %v7987 = vmul.f32 %v7871, %v4568
    %v7988 = vmul.f32 %v7871, %v4572
    %v7989 = vmul.f32 %v7871, %v4576
    %v7990 = vmul.f32 %v7871, %v4580
    %v7991 = vmul.f32 %v7871, %v4584
    %v7992 = vmul.f32 %v7871, %v4588
    %v7993 = vmul.f32 %v7871, %v4592
    %v7994 = vmul.f32 %v7871, %v4596
    %v7995 = vmul.f32 %v7871, %v4600
    %v7996 = vmul.f32 %v7871, %v4604
    %v7997 = vmul.f32 %v7875, %v4544
    %v7998 = vmul.f32 %v7875, %v4548
    %v7999 = vmul.f32 %v7875, %v4552
    %v8000 = vmul.f32 %v7875, %v4556
    %v8001 = vmul.f32 %v7875, %v4560
    %v8002 = vmul.f32 %v7875, %v4564
    %v8003 = vmul.f32 %v7875, %v4568
    %v8004 = vmul.f32 %v7875, %v4572
    %v8005 = vmul.f32 %v7875, %v4576
    %v8006 = vmul.f32 %v7875, %v4580
    %v8007 = vmul.f32 %v7875, %v4584
    %v8008 = vmul.f32 %v7875, %v4588
    %v8009 = vmul.f32 %v7875, %v4592
    %v8010 = vmul.f32 %v7875, %v4596
    %v8011 = vmul.f32 %v7875, %v4600
    %v8012 = vmul.f32 %v7875, %v4604
    %v8013 = vmul.f32 %v7879, %v4544
    %v8014 = vmul.f32 %v7879, %v4548
    %v8015 = vmul.f32 %v7879, %v4552
    %v8016 = vmul.f32 %v7879, %v4556
    %v8017 = vmul.f32 %v7879, %v4560
    %v8018 = vmul.f32 %v7879, %v4564
    %v8019 = vmul.f32 %v7879, %v4568
    %v8020 = vmul.f32 %v7879, %v4572
    %v8021 = vmul.f32 %v7879, %v4576
    %v8022 = vmul.f32 %v7879, %v4580
    %v8023 = vmul.f32 %v7879, %v4584
    %v8024 = vmul.f32 %v7879, %v4588
    %v8025 = vmul.f32 %v7879, %v4592
    %v8026 = vmul.f32 %v7879, %v4596
    %v8027 = vmul.f32 %v7879, %v4600
    %v8028 = vmul.f32 %v7879, %v4604
    %v8029 = vmul.f32 %v7883, %v4544
    %v8030 = vmul.f32 %v7883, %v4548
    %v8031 = vmul.f32 %v7883, %v4552
    %v8032 = vmul.f32 %v7883, %v4556
    %v8033 = vmul.f32 %v7883, %v4560
    %v8034 = vmul.f32 %v7883, %v4564
    %v8035 = vmul.f32 %v7883, %v4568
    %v8036 = vmul.f32 %v7883, %v4572
    %v8037 = vmul.f32 %v7883, %v4576
    %v8038 = vmul.f32 %v7883, %v4580
    %v8039 = vmul.f32 %v7883, %v4584
    %v8040 = vmul.f32 %v7883, %v4588
    %v8041 = vmul.f32 %v7883, %v4592
    %v8042 = vmul.f32 %v7883, %v4596
    %v8043 = vmul.f32 %v7883, %v4600
    %v8044 = vmul.f32 %v7883, %v4604
    %v8045 = vmul.f32 %v7887, %v4544
    %v8046 = vmul.f32 %v7887, %v4548
    %v8047 = vmul.f32 %v7887, %v4552
    %v8048 = vmul.f32 %v7887, %v4556
    %v8049 = vmul.f32 %v7887, %v4560
    %v8050 = vmul.f32 %v7887, %v4564
    %v8051 = vmul.f32 %v7887, %v4568
    %v8052 = vmul.f32 %v7887, %v4572
    %v8053 = vmul.f32 %v7887, %v4576
    %v8054 = vmul.f32 %v7887, %v4580
    %v8055 = vmul.f32 %v7887, %v4584
    %v8056 = vmul.f32 %v7887, %v4588
    %v8057 = vmul.f32 %v7887, %v4592
    %v8058 = vmul.f32 %v7887, %v4596
    %v8059 = vmul.f32 %v7887, %v4600
    %v8060 = vmul.f32 %v7887, %v4604
    %v8061 = vmul.f32 %v7891, %v4544
    %v8062 = vmul.f32 %v7891, %v4548
    %v8063 = vmul.f32 %v7891, %v4552
    %v8064 = vmul.f32 %v7891, %v4556
    %v8065 = vmul.f32 %v7891, %v4560
    %v8066 = vmul.f32 %v7891, %v4564
    %v8067 = vmul.f32 %v7891, %v4568
    %v8068 = vmul.f32 %v7891, %v4572
    %v8069 = vmul.f32 %v7891, %v4576
    %v8070 = vmul.f32 %v7891, %v4580
    %v8071 = vmul.f32 %v7891, %v4584
    %v8072 = vmul.f32 %v7891, %v4588
    %v8073 = vmul.f32 %v7891, %v4592
    %v8074 = vmul.f32 %v7891, %v4596
    %v8075 = vmul.f32 %v7891, %v4600
    %v8076 = vmul.f32 %v7891, %v4604
    %v8077 = vmul.f32 %v7895, %v4544
    %v8078 = vmul.f32 %v7895, %v4548
    %v8079 = vmul.f32 %v7895, %v4552
    %v8080 = vmul.f32 %v7895, %v4556
    %v8081 = vmul.f32 %v7895, %v4560
    %v8082 = vmul.f32 %v7895, %v4564
    %v8083 = vmul.f32 %v7895, %v4568
    %v8084 = vmul.f32 %v7895, %v4572
    %v8085 = vmul.f32 %v7895, %v4576
    %v8086 = vmul.f32 %v7895, %v4580
    %v8087 = vmul.f32 %v7895, %v4584
    %v8088 = vmul.f32 %v7895, %v4588
    %v8089 = vmul.f32 %v7895, %v4592
    %v8090 = vmul.f32 %v7895, %v4596
    %v8091 = vmul.f32 %v7895, %v4600
    %v8092 = vmul.f32 %v7895, %v4604
    %v8093 = vmul.f32 %v7899, %v4544
    %v8094 = vmul.f32 %v7899, %v4548
    %v8095 = vmul.f32 %v7899, %v4552
    %v8096 = vmul.f32 %v7899, %v4556
    %v8097 = vmul.f32 %v7899, %v4560
    %v8098 = vmul.f32 %v7899, %v4564
    %v8099 = vmul.f32 %v7899, %v4568
    %v8100 = vmul.f32 %v7899, %v4572
    %v8101 = vmul.f32 %v7899, %v4576
    %v8102 = vmul.f32 %v7899, %v4580
    %v8103 = vmul.f32 %v7899, %v4584
    %v8104 = vmul.f32 %v7899, %v4588
    %v8105 = vmul.f32 %v7899, %v4592
    %v8106 = vmul.f32 %v7899, %v4596
    %v8107 = vmul.f32 %v7899, %v4600
    %v8108 = vmul.f32 %v7899, %v4604
    %v8109 = vmul.f32 %v7903, %v4544
    %v8110 = vmul.f32 %v7903, %v4548
    %v8111 = vmul.f32 %v7903, %v4552
    %v8112 = vmul.f32 %v7903, %v4556
    %v8113 = vmul.f32 %v7903, %v4560
    %v8114 = vmul.f32 %v7903, %v4564
    %v8115 = vmul.f32 %v7903, %v4568
    %v8116 = vmul.f32 %v7903, %v4572
    %v8117 = vmul.f32 %v7903, %v4576
    %v8118 = vmul.f32 %v7903, %v4580
    %v8119 = vmul.f32 %v7903, %v4584
    %v8120 = vmul.f32 %v7903, %v4588
    %v8121 = vmul.f32 %v7903, %v4592
    %v8122 = vmul.f32 %v7903, %v4596
    %v8123 = vmul.f32 %v7903, %v4600
    %v8124 = vmul.f32 %v7903, %v4604
    %v8125 = vmul.f32 %v7907, %v4544
    %v8126 = vmul.f32 %v7907, %v4548
    %v8127 = vmul.f32 %v7907, %v4552
    %v8128 = vmul.f32 %v7907, %v4556
    %v8129 = vmul.f32 %v7907, %v4560
    %v8130 = vmul.f32 %v7907, %v4564
    %v8131 = vmul.f32 %v7907, %v4568
    %v8132 = vmul.f32 %v7907, %v4572
    %v8133 = vmul.f32 %v7907, %v4576
    %v8134 = vmul.f32 %v7907, %v4580
    %v8135 = vmul.f32 %v7907, %v4584
    %v8136 = vmul.f32 %v7907, %v4588
    %v8137 = vmul.f32 %v7907, %v4592
    %v8138 = vmul.f32 %v7907, %v4596
    %v8139 = vmul.f32 %v7907, %v4600
    %v8140 = vmul.f32 %v7907, %v4604
    %v8141 = vmul.f32 %v7911, %v4544
    %v8142 = vmul.f32 %v7911, %v4548
    %v8143 = vmul.f32 %v7911, %v4552
    %v8144 = vmul.f32 %v7911, %v4556
    %v8145 = vmul.f32 %v7911, %v4560
    %v8146 = vmul.f32 %v7911, %v4564
    %v8147 = vmul.f32 %v7911, %v4568
    %v8148 = vmul.f32 %v7911, %v4572
    %v8149 = vmul.f32 %v7911, %v4576
    %v8150 = vmul.f32 %v7911, %v4580
    %v8151 = vmul.f32 %v7911, %v4584
    %v8152 = vmul.f32 %v7911, %v4588
    %v8153 = vmul.f32 %v7911, %v4592
    %v8154 = vmul.f32 %v7911, %v4596
    %v8155 = vmul.f32 %v7911, %v4600
    %v8156 = vmul.f32 %v7911, %v4604
    %v8157 = vmul.f32 %v7915, %v4544
    %v8158 = vmul.f32 %v7915, %v4548
    %v8159 = vmul.f32 %v7915, %v4552
    %v8160 = vmul.f32 %v7915, %v4556
    %v8161 = vmul.f32 %v7915, %v4560
    %v8162 = vmul.f32 %v7915, %v4564
    %v8163 = vmul.f32 %v7915, %v4568
    %v8164 = vmul.f32 %v7915, %v4572
    %v8165 = vmul.f32 %v7915, %v4576
    %v8166 = vmul.f32 %v7915, %v4580
    %v8167 = vmul.f32 %v7915, %v4584
    %v8168 = vmul.f32 %v7915, %v4588
    %v8169 = vmul.f32 %v7915, %v4592
    %v8170 = vmul.f32 %v7915, %v4596
    %v8171 = vmul.f32 %v7915, %v4600
    %v8172 = vmul.f32 %v7915, %v4604
    %v8429 = vrot.slane %v7933, 7
    %v8430 = vsel %vm2787, %v8429, %v7917
    %v8431 = vrot.slane %v7949, 6
    %v8432 = vsel %vm2790, %v8431, %v8430
    %v8433 = vrot.slane %v7965, 5
    %v8434 = vsel %vm2793, %v8433, %v8432
    %v8435 = vrot.slane %v7981, 4
    %v8436 = vsel %vm2796, %v8435, %v8434
    %v8437 = vrot.slane %v7997, 3
    %v8438 = vsel %vm2799, %v8437, %v8436
    %v8439 = vrot.slane %v8013, 2
    %v8440 = vsel %vm2802, %v8439, %v8438
    %v8441 = vrot.slane %v8029, 1
    %v8442 = vsel %vm2805, %v8441, %v8440
    %v8443 = vrot.slane %v7934, 7
    %v8444 = vsel %vm2787, %v8443, %v7918
    %v8445 = vrot.slane %v7950, 6
    %v8446 = vsel %vm2790, %v8445, %v8444
    %v8447 = vrot.slane %v7966, 5
    %v8448 = vsel %vm2793, %v8447, %v8446
    %v8449 = vrot.slane %v7982, 4
    %v8450 = vsel %vm2796, %v8449, %v8448
    %v8451 = vrot.slane %v7998, 3
    %v8452 = vsel %vm2799, %v8451, %v8450
    %v8453 = vrot.slane %v8014, 2
    %v8454 = vsel %vm2802, %v8453, %v8452
    %v8455 = vrot.slane %v8030, 1
    %v8456 = vsel %vm2805, %v8455, %v8454
    %v8457 = vrot.slane %v7935, 7
    %v8458 = vsel %vm2787, %v8457, %v7919
    %v8459 = vrot.slane %v7951, 6
    %v8460 = vsel %vm2790, %v8459, %v8458
    %v8461 = vrot.slane %v7967, 5
    %v8462 = vsel %vm2793, %v8461, %v8460
    %v8463 = vrot.slane %v7983, 4
    %v8464 = vsel %vm2796, %v8463, %v8462
    %v8465 = vrot.slane %v7999, 3
    %v8466 = vsel %vm2799, %v8465, %v8464
    %v8467 = vrot.slane %v8015, 2
    %v8468 = vsel %vm2802, %v8467, %v8466
    %v8469 = vrot.slane %v8031, 1
    %v8470 = vsel %vm2805, %v8469, %v8468
    %v8471 = vrot.slane %v7936, 7
    %v8472 = vsel %vm2787, %v8471, %v7920
    %v8473 = vrot.slane %v7952, 6
    %v8474 = vsel %vm2790, %v8473, %v8472
    %v8475 = vrot.slane %v7968, 5
    %v8476 = vsel %vm2793, %v8475, %v8474
    %v8477 = vrot.slane %v7984, 4
    %v8478 = vsel %vm2796, %v8477, %v8476
    %v8479 = vrot.slane %v8000, 3
    %v8480 = vsel %vm2799, %v8479, %v8478
    %v8481 = vrot.slane %v8016, 2
    %v8482 = vsel %vm2802, %v8481, %v8480
    %v8483 = vrot.slane %v8032, 1
    %v8484 = vsel %vm2805, %v8483, %v8482
    %v8485 = vrot.slane %v7937, 7
    %v8486 = vsel %vm2787, %v8485, %v7921
    %v8487 = vrot.slane %v7953, 6
    %v8488 = vsel %vm2790, %v8487, %v8486
    %v8489 = vrot.slane %v7969, 5
    %v8490 = vsel %vm2793, %v8489, %v8488
    %v8491 = vrot.slane %v7985, 4
    %v8492 = vsel %vm2796, %v8491, %v8490
    %v8493 = vrot.slane %v8001, 3
    %v8494 = vsel %vm2799, %v8493, %v8492
    %v8495 = vrot.slane %v8017, 2
    %v8496 = vsel %vm2802, %v8495, %v8494
    %v8497 = vrot.slane %v8033, 1
    %v8498 = vsel %vm2805, %v8497, %v8496
    %v8499 = vrot.slane %v7938, 7
    %v8500 = vsel %vm2787, %v8499, %v7922
    %v8501 = vrot.slane %v7954, 6
    %v8502 = vsel %vm2790, %v8501, %v8500
    %v8503 = vrot.slane %v7970, 5
    %v8504 = vsel %vm2793, %v8503, %v8502
    %v8505 = vrot.slane %v7986, 4
    %v8506 = vsel %vm2796, %v8505, %v8504
    %v8507 = vrot.slane %v8002, 3
    %v8508 = vsel %vm2799, %v8507, %v8506
    %v8509 = vrot.slane %v8018, 2
    %v8510 = vsel %vm2802, %v8509, %v8508
    %v8511 = vrot.slane %v8034, 1
    %v8512 = vsel %vm2805, %v8511, %v8510
    %v8513 = vrot.slane %v7939, 7
    %v8514 = vsel %vm2787, %v8513, %v7923
    %v8515 = vrot.slane %v7955, 6
    %v8516 = vsel %vm2790, %v8515, %v8514
    %v8517 = vrot.slane %v7971, 5
    %v8518 = vsel %vm2793, %v8517, %v8516
    %v8519 = vrot.slane %v7987, 4
    %v8520 = vsel %vm2796, %v8519, %v8518
    %v8521 = vrot.slane %v8003, 3
    %v8522 = vsel %vm2799, %v8521, %v8520
    %v8523 = vrot.slane %v8019, 2
    %v8524 = vsel %vm2802, %v8523, %v8522
    %v8525 = vrot.slane %v8035, 1
    %v8526 = vsel %vm2805, %v8525, %v8524
    %v8527 = vrot.slane %v7940, 7
    %v8528 = vsel %vm2787, %v8527, %v7924
    %v8529 = vrot.slane %v7956, 6
    %v8530 = vsel %vm2790, %v8529, %v8528
    %v8531 = vrot.slane %v7972, 5
    %v8532 = vsel %vm2793, %v8531, %v8530
    %v8533 = vrot.slane %v7988, 4
    %v8534 = vsel %vm2796, %v8533, %v8532
    %v8535 = vrot.slane %v8004, 3
    %v8536 = vsel %vm2799, %v8535, %v8534
    %v8537 = vrot.slane %v8020, 2
    %v8538 = vsel %vm2802, %v8537, %v8536
    %v8539 = vrot.slane %v8036, 1
    %v8540 = vsel %vm2805, %v8539, %v8538
    %v8541 = vrot.slane %v7941, 7
    %v8542 = vsel %vm2787, %v8541, %v7925
    %v8543 = vrot.slane %v7957, 6
    %v8544 = vsel %vm2790, %v8543, %v8542
    %v8545 = vrot.slane %v7973, 5
    %v8546 = vsel %vm2793, %v8545, %v8544
    %v8547 = vrot.slane %v7989, 4
    %v8548 = vsel %vm2796, %v8547, %v8546
    %v8549 = vrot.slane %v8005, 3
    %v8550 = vsel %vm2799, %v8549, %v8548
    %v8551 = vrot.slane %v8021, 2
    %v8552 = vsel %vm2802, %v8551, %v8550
    %v8553 = vrot.slane %v8037, 1
    %v8554 = vsel %vm2805, %v8553, %v8552
    %v8555 = vrot.slane %v7942, 7
    %v8556 = vsel %vm2787, %v8555, %v7926
    %v8557 = vrot.slane %v7958, 6
    %v8558 = vsel %vm2790, %v8557, %v8556
    %v8559 = vrot.slane %v7974, 5
    %v8560 = vsel %vm2793, %v8559, %v8558
    %v8561 = vrot.slane %v7990, 4
    %v8562 = vsel %vm2796, %v8561, %v8560
    %v8563 = vrot.slane %v8006, 3
    %v8564 = vsel %vm2799, %v8563, %v8562
    %v8565 = vrot.slane %v8022, 2
    %v8566 = vsel %vm2802, %v8565, %v8564
    %v8567 = vrot.slane %v8038, 1
    %v8568 = vsel %vm2805, %v8567, %v8566
    %v8569 = vrot.slane %v7943, 7
    %v8570 = vsel %vm2787, %v8569, %v7927
    %v8571 = vrot.slane %v7959, 6
    %v8572 = vsel %vm2790, %v8571, %v8570
    %v8573 = vrot.slane %v7975, 5
    %v8574 = vsel %vm2793, %v8573, %v8572
    %v8575 = vrot.slane %v7991, 4
    %v8576 = vsel %vm2796, %v8575, %v8574
    %v8577 = vrot.slane %v8007, 3
    %v8578 = vsel %vm2799, %v8577, %v8576
    %v8579 = vrot.slane %v8023, 2
    %v8580 = vsel %vm2802, %v8579, %v8578
    %v8581 = vrot.slane %v8039, 1
    %v8582 = vsel %vm2805, %v8581, %v8580
    %v8583 = vrot.slane %v7944, 7
    %v8584 = vsel %vm2787, %v8583, %v7928
    %v8585 = vrot.slane %v7960, 6
    %v8586 = vsel %vm2790, %v8585, %v8584
    %v8587 = vrot.slane %v7976, 5
    %v8588 = vsel %vm2793, %v8587, %v8586
    %v8589 = vrot.slane %v7992, 4
    %v8590 = vsel %vm2796, %v8589, %v8588
    %v8591 = vrot.slane %v8008, 3
    %v8592 = vsel %vm2799, %v8591, %v8590
    %v8593 = vrot.slane %v8024, 2
    %v8594 = vsel %vm2802, %v8593, %v8592
    %v8595 = vrot.slane %v8040, 1
    %v8596 = vsel %vm2805, %v8595, %v8594
    %v8597 = vrot.slane %v7945, 7
    %v8598 = vsel %vm2787, %v8597, %v7929
    %v8599 = vrot.slane %v7961, 6
    %v8600 = vsel %vm2790, %v8599, %v8598
    %v8601 = vrot.slane %v7977, 5
    %v8602 = vsel %vm2793, %v8601, %v8600
    %v8603 = vrot.slane %v7993, 4
    %v8604 = vsel %vm2796, %v8603, %v8602
    %v8605 = vrot.slane %v8009, 3
    %v8606 = vsel %vm2799, %v8605, %v8604
    %v8607 = vrot.slane %v8025, 2
    %v8608 = vsel %vm2802, %v8607, %v8606
    %v8609 = vrot.slane %v8041, 1
    %v8610 = vsel %vm2805, %v8609, %v8608
    %v8611 = vrot.slane %v7946, 7
    %v8612 = vsel %vm2787, %v8611, %v7930
    %v8613 = vrot.slane %v7962, 6
    %v8614 = vsel %vm2790, %v8613, %v8612
    %v8615 = vrot.slane %v7978, 5
    %v8616 = vsel %vm2793, %v8615, %v8614
    %v8617 = vrot.slane %v7994, 4
    %v8618 = vsel %vm2796, %v8617, %v8616
    %v8619 = vrot.slane %v8010, 3
    %v8620 = vsel %vm2799, %v8619, %v8618
    %v8621 = vrot.slane %v8026, 2
    %v8622 = vsel %vm2802, %v8621, %v8620
    %v8623 = vrot.slane %v8042, 1
    %v8624 = vsel %vm2805, %v8623, %v8622
    %v8625 = vrot.slane %v7947, 7
    %v8626 = vsel %vm2787, %v8625, %v7931
    %v8627 = vrot.slane %v7963, 6
    %v8628 = vsel %vm2790, %v8627, %v8626
    %v8629 = vrot.slane %v7979, 5
    %v8630 = vsel %vm2793, %v8629, %v8628
    %v8631 = vrot.slane %v7995, 4
    %v8632 = vsel %vm2796, %v8631, %v8630
    %v8633 = vrot.slane %v8011, 3
    %v8634 = vsel %vm2799, %v8633, %v8632
    %v8635 = vrot.slane %v8027, 2
    %v8636 = vsel %vm2802, %v8635, %v8634
    %v8637 = vrot.slane %v8043, 1
    %v8638 = vsel %vm2805, %v8637, %v8636
    %v8639 = vrot.slane %v7948, 7
    %v8640 = vsel %vm2787, %v8639, %v7932
    %v8641 = vrot.slane %v7964, 6
    %v8642 = vsel %vm2790, %v8641, %v8640
    %v8643 = vrot.slane %v7980, 5
    %v8644 = vsel %vm2793, %v8643, %v8642
    %v8645 = vrot.slane %v7996, 4
    %v8646 = vsel %vm2796, %v8645, %v8644
    %v8647 = vrot.slane %v8012, 3
    %v8648 = vsel %vm2799, %v8647, %v8646
    %v8649 = vrot.slane %v8028, 2
    %v8650 = vsel %vm2802, %v8649, %v8648
    %v8651 = vrot.slane %v8044, 1
    %v8652 = vsel %vm2805, %v8651, %v8650
    %v8653 = vrot.slane %v8061, 7
    %v8654 = vsel %vm2787, %v8653, %v8045
    %v8655 = vrot.slane %v8077, 6
    %v8656 = vsel %vm2790, %v8655, %v8654
    %v8657 = vrot.slane %v8093, 5
    %v8658 = vsel %vm2793, %v8657, %v8656
    %v8659 = vrot.slane %v8109, 4
    %v8660 = vsel %vm2796, %v8659, %v8658
    %v8661 = vrot.slane %v8125, 3
    %v8662 = vsel %vm2799, %v8661, %v8660
    %v8663 = vrot.slane %v8141, 2
    %v8664 = vsel %vm2802, %v8663, %v8662
    %v8665 = vrot.slane %v8157, 1
    %v8666 = vsel %vm2805, %v8665, %v8664
    %v8667 = vrot.slane %v8062, 7
    %v8668 = vsel %vm2787, %v8667, %v8046
    %v8669 = vrot.slane %v8078, 6
    %v8670 = vsel %vm2790, %v8669, %v8668
    %v8671 = vrot.slane %v8094, 5
    %v8672 = vsel %vm2793, %v8671, %v8670
    %v8673 = vrot.slane %v8110, 4
    %v8674 = vsel %vm2796, %v8673, %v8672
    %v8675 = vrot.slane %v8126, 3
    %v8676 = vsel %vm2799, %v8675, %v8674
    %v8677 = vrot.slane %v8142, 2
    %v8678 = vsel %vm2802, %v8677, %v8676
    %v8679 = vrot.slane %v8158, 1
    %v8680 = vsel %vm2805, %v8679, %v8678
    %v8681 = vrot.slane %v8063, 7
    %v8682 = vsel %vm2787, %v8681, %v8047
    %v8683 = vrot.slane %v8079, 6
    %v8684 = vsel %vm2790, %v8683, %v8682
    %v8685 = vrot.slane %v8095, 5
    %v8686 = vsel %vm2793, %v8685, %v8684
    %v8687 = vrot.slane %v8111, 4
    %v8688 = vsel %vm2796, %v8687, %v8686
    %v8689 = vrot.slane %v8127, 3
    %v8690 = vsel %vm2799, %v8689, %v8688
    %v8691 = vrot.slane %v8143, 2
    %v8692 = vsel %vm2802, %v8691, %v8690
    %v8693 = vrot.slane %v8159, 1
    %v8694 = vsel %vm2805, %v8693, %v8692
    %v8695 = vrot.slane %v8064, 7
    %v8696 = vsel %vm2787, %v8695, %v8048
    %v8697 = vrot.slane %v8080, 6
    %v8698 = vsel %vm2790, %v8697, %v8696
    %v8699 = vrot.slane %v8096, 5
    %v8700 = vsel %vm2793, %v8699, %v8698
    %v8701 = vrot.slane %v8112, 4
    %v8702 = vsel %vm2796, %v8701, %v8700
    %v8703 = vrot.slane %v8128, 3
    %v8704 = vsel %vm2799, %v8703, %v8702
    %v8705 = vrot.slane %v8144, 2
    %v8706 = vsel %vm2802, %v8705, %v8704
    %v8707 = vrot.slane %v8160, 1
    %v8708 = vsel %vm2805, %v8707, %v8706
    %v8709 = vrot.slane %v8065, 7
    %v8710 = vsel %vm2787, %v8709, %v8049
    %v8711 = vrot.slane %v8081, 6
    %v8712 = vsel %vm2790, %v8711, %v8710
    %v8713 = vrot.slane %v8097, 5
    %v8714 = vsel %vm2793, %v8713, %v8712
    %v8715 = vrot.slane %v8113, 4
    %v8716 = vsel %vm2796, %v8715, %v8714
    %v8717 = vrot.slane %v8129, 3
    %v8718 = vsel %vm2799, %v8717, %v8716
    %v8719 = vrot.slane %v8145, 2
    %v8720 = vsel %vm2802, %v8719, %v8718
    %v8721 = vrot.slane %v8161, 1
    %v8722 = vsel %vm2805, %v8721, %v8720
    %v8723 = vrot.slane %v8066, 7
    %v8724 = vsel %vm2787, %v8723, %v8050
    %v8725 = vrot.slane %v8082, 6
    %v8726 = vsel %vm2790, %v8725, %v8724
    %v8727 = vrot.slane %v8098, 5
    %v8728 = vsel %vm2793, %v8727, %v8726
    %v8729 = vrot.slane %v8114, 4
    %v8730 = vsel %vm2796, %v8729, %v8728
    %v8731 = vrot.slane %v8130, 3
    %v8732 = vsel %vm2799, %v8731, %v8730
    %v8733 = vrot.slane %v8146, 2
    %v8734 = vsel %vm2802, %v8733, %v8732
    %v8735 = vrot.slane %v8162, 1
    %v8736 = vsel %vm2805, %v8735, %v8734
    %v8737 = vrot.slane %v8067, 7
    %v8738 = vsel %vm2787, %v8737, %v8051
    %v8739 = vrot.slane %v8083, 6
    %v8740 = vsel %vm2790, %v8739, %v8738
    %v8741 = vrot.slane %v8099, 5
    %v8742 = vsel %vm2793, %v8741, %v8740
    %v8743 = vrot.slane %v8115, 4
    %v8744 = vsel %vm2796, %v8743, %v8742
    %v8745 = vrot.slane %v8131, 3
    %v8746 = vsel %vm2799, %v8745, %v8744
    %v8747 = vrot.slane %v8147, 2
    %v8748 = vsel %vm2802, %v8747, %v8746
    %v8749 = vrot.slane %v8163, 1
    %v8750 = vsel %vm2805, %v8749, %v8748
    %v8751 = vrot.slane %v8068, 7
    %v8752 = vsel %vm2787, %v8751, %v8052
    %v8753 = vrot.slane %v8084, 6
    %v8754 = vsel %vm2790, %v8753, %v8752
    %v8755 = vrot.slane %v8100, 5
    %v8756 = vsel %vm2793, %v8755, %v8754
    %v8757 = vrot.slane %v8116, 4
    %v8758 = vsel %vm2796, %v8757, %v8756
    %v8759 = vrot.slane %v8132, 3
    %v8760 = vsel %vm2799, %v8759, %v8758
    %v8761 = vrot.slane %v8148, 2
    %v8762 = vsel %vm2802, %v8761, %v8760
    %v8763 = vrot.slane %v8164, 1
    %v8764 = vsel %vm2805, %v8763, %v8762
    %v8765 = vrot.slane %v8069, 7
    %v8766 = vsel %vm2787, %v8765, %v8053
    %v8767 = vrot.slane %v8085, 6
    %v8768 = vsel %vm2790, %v8767, %v8766
    %v8769 = vrot.slane %v8101, 5
    %v8770 = vsel %vm2793, %v8769, %v8768
    %v8771 = vrot.slane %v8117, 4
    %v8772 = vsel %vm2796, %v8771, %v8770
    %v8773 = vrot.slane %v8133, 3
    %v8774 = vsel %vm2799, %v8773, %v8772
    %v8775 = vrot.slane %v8149, 2
    %v8776 = vsel %vm2802, %v8775, %v8774
    %v8777 = vrot.slane %v8165, 1
    %v8778 = vsel %vm2805, %v8777, %v8776
    %v8779 = vrot.slane %v8070, 7
    %v8780 = vsel %vm2787, %v8779, %v8054
    %v8781 = vrot.slane %v8086, 6
    %v8782 = vsel %vm2790, %v8781, %v8780
    %v8783 = vrot.slane %v8102, 5
    %v8784 = vsel %vm2793, %v8783, %v8782
    %v8785 = vrot.slane %v8118, 4
    %v8786 = vsel %vm2796, %v8785, %v8784
    %v8787 = vrot.slane %v8134, 3
    %v8788 = vsel %vm2799, %v8787, %v8786
    %v8789 = vrot.slane %v8150, 2
    %v8790 = vsel %vm2802, %v8789, %v8788
    %v8791 = vrot.slane %v8166, 1
    %v8792 = vsel %vm2805, %v8791, %v8790
    %v8793 = vrot.slane %v8071, 7
    %v8794 = vsel %vm2787, %v8793, %v8055
    %v8795 = vrot.slane %v8087, 6
    %v8796 = vsel %vm2790, %v8795, %v8794
    %v8797 = vrot.slane %v8103, 5
    %v8798 = vsel %vm2793, %v8797, %v8796
    %v8799 = vrot.slane %v8119, 4
    %v8800 = vsel %vm2796, %v8799, %v8798
    %v8801 = vrot.slane %v8135, 3
    %v8802 = vsel %vm2799, %v8801, %v8800
    %v8803 = vrot.slane %v8151, 2
    %v8804 = vsel %vm2802, %v8803, %v8802
    %v8805 = vrot.slane %v8167, 1
    %v8806 = vsel %vm2805, %v8805, %v8804
    %v8807 = vrot.slane %v8072, 7
    %v8808 = vsel %vm2787, %v8807, %v8056
    %v8809 = vrot.slane %v8088, 6
    %v8810 = vsel %vm2790, %v8809, %v8808
    %v8811 = vrot.slane %v8104, 5
    %v8812 = vsel %vm2793, %v8811, %v8810
    %v8813 = vrot.slane %v8120, 4
    %v8814 = vsel %vm2796, %v8813, %v8812
    %v8815 = vrot.slane %v8136, 3
    %v8816 = vsel %vm2799, %v8815, %v8814
    %v8817 = vrot.slane %v8152, 2
    %v8818 = vsel %vm2802, %v8817, %v8816
    %v8819 = vrot.slane %v8168, 1
    %v8820 = vsel %vm2805, %v8819, %v8818
    %v8821 = vrot.slane %v8073, 7
    %v8822 = vsel %vm2787, %v8821, %v8057
    %v8823 = vrot.slane %v8089, 6
    %v8824 = vsel %vm2790, %v8823, %v8822
    %v8825 = vrot.slane %v8105, 5
    %v8826 = vsel %vm2793, %v8825, %v8824
    %v8827 = vrot.slane %v8121, 4
    %v8828 = vsel %vm2796, %v8827, %v8826
    %v8829 = vrot.slane %v8137, 3
    %v8830 = vsel %vm2799, %v8829, %v8828
    %v8831 = vrot.slane %v8153, 2
    %v8832 = vsel %vm2802, %v8831, %v8830
    %v8833 = vrot.slane %v8169, 1
    %v8834 = vsel %vm2805, %v8833, %v8832
    %v8835 = vrot.slane %v8074, 7
    %v8836 = vsel %vm2787, %v8835, %v8058
    %v8837 = vrot.slane %v8090, 6
    %v8838 = vsel %vm2790, %v8837, %v8836
    %v8839 = vrot.slane %v8106, 5
    %v8840 = vsel %vm2793, %v8839, %v8838
    %v8841 = vrot.slane %v8122, 4
    %v8842 = vsel %vm2796, %v8841, %v8840
    %v8843 = vrot.slane %v8138, 3
    %v8844 = vsel %vm2799, %v8843, %v8842
    %v8845 = vrot.slane %v8154, 2
    %v8846 = vsel %vm2802, %v8845, %v8844
    %v8847 = vrot.slane %v8170, 1
    %v8848 = vsel %vm2805, %v8847, %v8846
    %v8849 = vrot.slane %v8075, 7
    %v8850 = vsel %vm2787, %v8849, %v8059
    %v8851 = vrot.slane %v8091, 6
    %v8852 = vsel %vm2790, %v8851, %v8850
    %v8853 = vrot.slane %v8107, 5
    %v8854 = vsel %vm2793, %v8853, %v8852
    %v8855 = vrot.slane %v8123, 4
    %v8856 = vsel %vm2796, %v8855, %v8854
    %v8857 = vrot.slane %v8139, 3
    %v8858 = vsel %vm2799, %v8857, %v8856
    %v8859 = vrot.slane %v8155, 2
    %v8860 = vsel %vm2802, %v8859, %v8858
    %v8861 = vrot.slane %v8171, 1
    %v8862 = vsel %vm2805, %v8861, %v8860
    %v8863 = vrot.slane %v8076, 7
    %v8864 = vsel %vm2787, %v8863, %v8060
    %v8865 = vrot.slane %v8092, 6
    %v8866 = vsel %vm2790, %v8865, %v8864
    %v8867 = vrot.slane %v8108, 5
    %v8868 = vsel %vm2793, %v8867, %v8866
    %v8869 = vrot.slane %v8124, 4
    %v8870 = vsel %vm2796, %v8869, %v8868
    %v8871 = vrot.slane %v8140, 3
    %v8872 = vsel %vm2799, %v8871, %v8870
    %v8873 = vrot.slane %v8156, 2
    %v8874 = vsel %vm2802, %v8873, %v8872
    %v8875 = vrot.slane %v8172, 1
    %v8876 = vsel %vm2805, %v8875, %v8874
    %v8909 = vadd.f32 %v7821, %v8442
    %v8910 = vadd.f32 %v7822, %v8456
    %v8911 = vadd.f32 %v7823, %v8470
    %v8912 = vadd.f32 %v7824, %v8484
    %v8913 = vadd.f32 %v7825, %v8498
    %v8914 = vadd.f32 %v7826, %v8512
    %v8915 = vadd.f32 %v7827, %v8526
    %v8916 = vadd.f32 %v7828, %v8540
    %v8917 = vadd.f32 %v7829, %v8554
    %v8918 = vadd.f32 %v7830, %v8568
    %v8919 = vadd.f32 %v7831, %v8582
    %v8920 = vadd.f32 %v7832, %v8596
    %v8921 = vadd.f32 %v7833, %v8610
    %v8922 = vadd.f32 %v7834, %v8624
    %v8923 = vadd.f32 %v7835, %v8638
    %v8924 = vadd.f32 %v7836, %v8652
    %v8925 = vadd.f32 %v7837, %v8666
    %v8926 = vadd.f32 %v7838, %v8680
    %v8927 = vadd.f32 %v7839, %v8694
    %v8928 = vadd.f32 %v7840, %v8708
    %v8929 = vadd.f32 %v7841, %v8722
    %v8930 = vadd.f32 %v7842, %v8736
    %v8931 = vadd.f32 %v7843, %v8750
    %v8932 = vadd.f32 %v7844, %v8764
    %v8933 = vadd.f32 %v7845, %v8778
    %v8934 = vadd.f32 %v7846, %v8792
    %v8935 = vadd.f32 %v7847, %v8806
    %v8936 = vadd.f32 %v7848, %v8820
    %v8937 = vadd.f32 %v7849, %v8834
    %v8938 = vadd.f32 %v7850, %v8848
    %v8939 = vadd.f32 %v7851, %v8862
    %v8940 = vadd.f32 %v7852, %v8876
    %v8941 = vmax.f32 %v8909, 0.0
    %v8942 = vmax.f32 %v8910, 0.0
    %v8943 = vmax.f32 %v8911, 0.0
    %v8944 = vmax.f32 %v8912, 0.0
    %v8945 = vmax.f32 %v8913, 0.0
    %v8946 = vmax.f32 %v8914, 0.0
    %v8947 = vmax.f32 %v8915, 0.0
    %v8948 = vmax.f32 %v8916, 0.0
    %v8949 = vmax.f32 %v8917, 0.0
    %v8950 = vmax.f32 %v8918, 0.0
    %v8951 = vmax.f32 %v8919, 0.0
    %v8952 = vmax.f32 %v8920, 0.0
    %v8953 = vmax.f32 %v8921, 0.0
    %v8954 = vmax.f32 %v8922, 0.0
    %v8955 = vmax.f32 %v8923, 0.0
    %v8956 = vmax.f32 %v8924, 0.0
    %v8957 = vmax.f32 %v8925, 0.0
    %v8958 = vmax.f32 %v8926, 0.0
    %v8959 = vmax.f32 %v8927, 0.0
    %v8960 = vmax.f32 %v8928, 0.0
    %v8961 = vmax.f32 %v8929, 0.0
    %v8962 = vmax.f32 %v8930, 0.0
    %v8963 = vmax.f32 %v8931, 0.0
    %v8964 = vmax.f32 %v8932, 0.0
    %v8965 = vmax.f32 %v8933, 0.0
    %v8966 = vmax.f32 %v8934, 0.0
    %v8967 = vmax.f32 %v8935, 0.0
    %v8968 = vmax.f32 %v8936, 0.0
    %v8969 = vmax.f32 %v8937, 0.0
    %v8970 = vmax.f32 %v8938, 0.0
    %v8971 = vmax.f32 %v8939, 0.0
    %v8972 = vmax.f32 %v8940, 0.0
    %v8973 = vmax.f32 %v5645, %v8941
    %v8974 = vmax.f32 %v5646, %v8942
    %v8975 = vmax.f32 %v5647, %v8943
    %v8976 = vmax.f32 %v5648, %v8944
    %v8977 = vmax.f32 %v5649, %v8945
    %v8978 = vmax.f32 %v5650, %v8946
    %v8979 = vmax.f32 %v5651, %v8947
    %v8980 = vmax.f32 %v5652, %v8948
    %v8981 = vmax.f32 %v5653, %v8949
    %v8982 = vmax.f32 %v5654, %v8950
    %v8983 = vmax.f32 %v5655, %v8951
    %v8984 = vmax.f32 %v5656, %v8952
    %v8985 = vmax.f32 %v5657, %v8953
    %v8986 = vmax.f32 %v5658, %v8954
    %v8987 = vmax.f32 %v5659, %v8955
    %v8988 = vmax.f32 %v5660, %v8956
    %v8989 = vmax.f32 %v5661, %v8957
    %v8990 = vmax.f32 %v5662, %v8958
    %v8991 = vmax.f32 %v5663, %v8959
    %v8992 = vmax.f32 %v5664, %v8960
    %v8993 = vmax.f32 %v5665, %v8961
    %v8994 = vmax.f32 %v5666, %v8962
    %v8995 = vmax.f32 %v5667, %v8963
    %v8996 = vmax.f32 %v5668, %v8964
    %v8997 = vmax.f32 %v5669, %v8965
    %v8998 = vmax.f32 %v5670, %v8966
    %v8999 = vmax.f32 %v5671, %v8967
    %v9000 = vmax.f32 %v5672, %v8968
    %v9001 = vmax.f32 %v5673, %v8969
    %v9002 = vmax.f32 %v5674, %v8970
    %v9003 = vmax.f32 %v5675, %v8971
    %v9004 = vmax.f32 %v5676, %v8972
    %v9005 = vsel %vm327, %v8973, -inf
    %v9006 = vrot.slane %v9005, 4
    %v9007 = vmax.f32 %v9005, %v9006
    %v9008 = vrot.slane %v9007, 2
    %v9009 = vmax.f32 %v9007, %v9008
    %v9010 = vrot.slane %v9009, 1
    %v9011 = vmax.f32 %v9009, %v9010
    %v9012 = vsel %vm327, %v8974, -inf
    %v9013 = vrot.slane %v9012, 4
    %v9014 = vmax.f32 %v9012, %v9013
    %v9015 = vrot.slane %v9014, 2
    %v9016 = vmax.f32 %v9014, %v9015
    %v9017 = vrot.slane %v9016, 1
    %v9018 = vmax.f32 %v9016, %v9017
    %v9019 = vsel %vm327, %v8975, -inf
    %v9020 = vrot.slane %v9019, 4
    %v9021 = vmax.f32 %v9019, %v9020
    %v9022 = vrot.slane %v9021, 2
    %v9023 = vmax.f32 %v9021, %v9022
    %v9024 = vrot.slane %v9023, 1
    %v9025 = vmax.f32 %v9023, %v9024
    %v9026 = vsel %vm327, %v8976, -inf
    %v9027 = vrot.slane %v9026, 4
    %v9028 = vmax.f32 %v9026, %v9027
    %v9029 = vrot.slane %v9028, 2
    %v9030 = vmax.f32 %v9028, %v9029
    %v9031 = vrot.slane %v9030, 1
    %v9032 = vmax.f32 %v9030, %v9031
    %v9033 = vsel %vm327, %v8977, -inf
    %v9034 = vrot.slane %v9033, 4
    %v9035 = vmax.f32 %v9033, %v9034
    %v9036 = vrot.slane %v9035, 2
    %v9037 = vmax.f32 %v9035, %v9036
    %v9038 = vrot.slane %v9037, 1
    %v9039 = vmax.f32 %v9037, %v9038
    %v9040 = vsel %vm327, %v8978, -inf
    %v9041 = vrot.slane %v9040, 4
    %v9042 = vmax.f32 %v9040, %v9041
    %v9043 = vrot.slane %v9042, 2
    %v9044 = vmax.f32 %v9042, %v9043
    %v9045 = vrot.slane %v9044, 1
    %v9046 = vmax.f32 %v9044, %v9045
    %v9047 = vsel %vm327, %v8979, -inf
    %v9048 = vrot.slane %v9047, 4
    %v9049 = vmax.f32 %v9047, %v9048
    %v9050 = vrot.slane %v9049, 2
    %v9051 = vmax.f32 %v9049, %v9050
    %v9052 = vrot.slane %v9051, 1
    %v9053 = vmax.f32 %v9051, %v9052
    %v9054 = vsel %vm327, %v8980, -inf
    %v9055 = vrot.slane %v9054, 4
    %v9056 = vmax.f32 %v9054, %v9055
    %v9057 = vrot.slane %v9056, 2
    %v9058 = vmax.f32 %v9056, %v9057
    %v9059 = vrot.slane %v9058, 1
    %v9060 = vmax.f32 %v9058, %v9059
    %v9061 = vsel %vm327, %v8981, -inf
    %v9062 = vrot.slane %v9061, 4
    %v9063 = vmax.f32 %v9061, %v9062
    %v9064 = vrot.slane %v9063, 2
    %v9065 = vmax.f32 %v9063, %v9064
    %v9066 = vrot.slane %v9065, 1
    %v9067 = vmax.f32 %v9065, %v9066
    %v9068 = vsel %vm327, %v8982, -inf
    %v9069 = vrot.slane %v9068, 4
    %v9070 = vmax.f32 %v9068, %v9069
    %v9071 = vrot.slane %v9070, 2
    %v9072 = vmax.f32 %v9070, %v9071
    %v9073 = vrot.slane %v9072, 1
    %v9074 = vmax.f32 %v9072, %v9073
    %v9075 = vsel %vm327, %v8983, -inf
    %v9076 = vrot.slane %v9075, 4
    %v9077 = vmax.f32 %v9075, %v9076
    %v9078 = vrot.slane %v9077, 2
    %v9079 = vmax.f32 %v9077, %v9078
    %v9080 = vrot.slane %v9079, 1
    %v9081 = vmax.f32 %v9079, %v9080
    %v9082 = vsel %vm327, %v8984, -inf
    %v9083 = vrot.slane %v9082, 4
    %v9084 = vmax.f32 %v9082, %v9083
    %v9085 = vrot.slane %v9084, 2
    %v9086 = vmax.f32 %v9084, %v9085
    %v9087 = vrot.slane %v9086, 1
    %v9088 = vmax.f32 %v9086, %v9087
    %v9089 = vsel %vm327, %v8985, -inf
    %v9090 = vrot.slane %v9089, 4
    %v9091 = vmax.f32 %v9089, %v9090
    %v9092 = vrot.slane %v9091, 2
    %v9093 = vmax.f32 %v9091, %v9092
    %v9094 = vrot.slane %v9093, 1
    %v9095 = vmax.f32 %v9093, %v9094
    %v9096 = vsel %vm327, %v8986, -inf
    %v9097 = vrot.slane %v9096, 4
    %v9098 = vmax.f32 %v9096, %v9097
    %v9099 = vrot.slane %v9098, 2
    %v9100 = vmax.f32 %v9098, %v9099
    %v9101 = vrot.slane %v9100, 1
    %v9102 = vmax.f32 %v9100, %v9101
    %v9103 = vsel %vm327, %v8987, -inf
    %v9104 = vrot.slane %v9103, 4
    %v9105 = vmax.f32 %v9103, %v9104
    %v9106 = vrot.slane %v9105, 2
    %v9107 = vmax.f32 %v9105, %v9106
    %v9108 = vrot.slane %v9107, 1
    %v9109 = vmax.f32 %v9107, %v9108
    %v9110 = vsel %vm327, %v8988, -inf
    %v9111 = vrot.slane %v9110, 4
    %v9112 = vmax.f32 %v9110, %v9111
    %v9113 = vrot.slane %v9112, 2
    %v9114 = vmax.f32 %v9112, %v9113
    %v9115 = vrot.slane %v9114, 1
    %v9116 = vmax.f32 %v9114, %v9115
    %vm9117 = vcmask 1043458
    %v9118 = vsel %vm9117, %v8973, -inf
    %v9119 = vrot.slane %v9118, 4
    %v9120 = vmax.f32 %v9118, %v9119
    %v9121 = vrot.slane %v9120, 2
    %v9122 = vmax.f32 %v9120, %v9121
    %v9123 = vrot.slane %v9122, 1
    %v9124 = vmax.f32 %v9122, %v9123
    %v9125 = vsel %vm9117, %v8974, -inf
    %v9126 = vrot.slane %v9125, 4
    %v9127 = vmax.f32 %v9125, %v9126
    %v9128 = vrot.slane %v9127, 2
    %v9129 = vmax.f32 %v9127, %v9128
    %v9130 = vrot.slane %v9129, 1
    %v9131 = vmax.f32 %v9129, %v9130
    %v9132 = vsel %vm9117, %v8975, -inf
    %v9133 = vrot.slane %v9132, 4
    %v9134 = vmax.f32 %v9132, %v9133
    %v9135 = vrot.slane %v9134, 2
    %v9136 = vmax.f32 %v9134, %v9135
    %v9137 = vrot.slane %v9136, 1
    %v9138 = vmax.f32 %v9136, %v9137
    %v9139 = vsel %vm9117, %v8976, -inf
    %v9140 = vrot.slane %v9139, 4
    %v9141 = vmax.f32 %v9139, %v9140
    %v9142 = vrot.slane %v9141, 2
    %v9143 = vmax.f32 %v9141, %v9142
    %v9144 = vrot.slane %v9143, 1
    %v9145 = vmax.f32 %v9143, %v9144
    %v9146 = vsel %vm9117, %v8977, -inf
    %v9147 = vrot.slane %v9146, 4
    %v9148 = vmax.f32 %v9146, %v9147
    %v9149 = vrot.slane %v9148, 2
    %v9150 = vmax.f32 %v9148, %v9149
    %v9151 = vrot.slane %v9150, 1
    %v9152 = vmax.f32 %v9150, %v9151
    %v9153 = vsel %vm9117, %v8978, -inf
    %v9154 = vrot.slane %v9153, 4
    %v9155 = vmax.f32 %v9153, %v9154
    %v9156 = vrot.slane %v9155, 2
    %v9157 = vmax.f32 %v9155, %v9156
    %v9158 = vrot.slane %v9157, 1
    %v9159 = vmax.f32 %v9157, %v9158
    %v9160 = vsel %vm9117, %v8979, -inf
    %v9161 = vrot.slane %v9160, 4
    %v9162 = vmax.f32 %v9160, %v9161
    %v9163 = vrot.slane %v9162, 2
    %v9164 = vmax.f32 %v9162, %v9163
    %v9165 = vrot.slane %v9164, 1
    %v9166 = vmax.f32 %v9164, %v9165
    %v9167 = vsel %vm9117, %v8980, -inf
    %v9168 = vrot.slane %v9167, 4
    %v9169 = vmax.f32 %v9167, %v9168
    %v9170 = vrot.slane %v9169, 2
    %v9171 = vmax.f32 %v9169, %v9170
    %v9172 = vrot.slane %v9171, 1
    %v9173 = vmax.f32 %v9171, %v9172
    %v9174 = vsel %vm9117, %v8981, -inf
    %v9175 = vrot.slane %v9174, 4
    %v9176 = vmax.f32 %v9174, %v9175
    %v9177 = vrot.slane %v9176, 2
    %v9178 = vmax.f32 %v9176, %v9177
    %v9179 = vrot.slane %v9178, 1
    %v9180 = vmax.f32 %v9178, %v9179
    %v9181 = vsel %vm9117, %v8982, -inf
    %v9182 = vrot.slane %v9181, 4
    %v9183 = vmax.f32 %v9181, %v9182
    %v9184 = vrot.slane %v9183, 2
    %v9185 = vmax.f32 %v9183, %v9184
    %v9186 = vrot.slane %v9185, 1
    %v9187 = vmax.f32 %v9185, %v9186
    %v9188 = vsel %vm9117, %v8983, -inf
    %v9189 = vrot.slane %v9188, 4
    %v9190 = vmax.f32 %v9188, %v9189
    %v9191 = vrot.slane %v9190, 2
    %v9192 = vmax.f32 %v9190, %v9191
    %v9193 = vrot.slane %v9192, 1
    %v9194 = vmax.f32 %v9192, %v9193
    %v9195 = vsel %vm9117, %v8984, -inf
    %v9196 = vrot.slane %v9195, 4
    %v9197 = vmax.f32 %v9195, %v9196
    %v9198 = vrot.slane %v9197, 2
    %v9199 = vmax.f32 %v9197, %v9198
    %v9200 = vrot.slane %v9199, 1
    %v9201 = vmax.f32 %v9199, %v9200
    %v9202 = vsel %vm9117, %v8985, -inf
    %v9203 = vrot.slane %v9202, 4
    %v9204 = vmax.f32 %v9202, %v9203
    %v9205 = vrot.slane %v9204, 2
    %v9206 = vmax.f32 %v9204, %v9205
    %v9207 = vrot.slane %v9206, 1
    %v9208 = vmax.f32 %v9206, %v9207
    %v9209 = vsel %vm9117, %v8986, -inf
    %v9210 = vrot.slane %v9209, 4
    %v9211 = vmax.f32 %v9209, %v9210
    %v9212 = vrot.slane %v9211, 2
    %v9213 = vmax.f32 %v9211, %v9212
    %v9214 = vrot.slane %v9213, 1
    %v9215 = vmax.f32 %v9213, %v9214
    %v9216 = vsel %vm9117, %v8987, -inf
    %v9217 = vrot.slane %v9216, 4
    %v9218 = vmax.f32 %v9216, %v9217
    %v9219 = vrot.slane %v9218, 2
    %v9220 = vmax.f32 %v9218, %v9219
    %v9221 = vrot.slane %v9220, 1
    %v9222 = vmax.f32 %v9220, %v9221
    %v9223 = vsel %vm9117, %v8988, -inf
    %v9224 = vrot.slane %v9223, 4
    %v9225 = vmax.f32 %v9223, %v9224
    %v9226 = vrot.slane %v9225, 2
    %v9227 = vmax.f32 %v9225, %v9226
    %v9228 = vrot.slane %v9227, 1
    %v9229 = vmax.f32 %v9227, %v9228
    %vm9230 = vcmask 1045508
    %v9231 = vsel %vm9230, %v8973, -inf
    %v9232 = vrot.slane %v9231, 4
    %v9233 = vmax.f32 %v9231, %v9232
    %v9234 = vrot.slane %v9233, 2
    %v9235 = vmax.f32 %v9233, %v9234
    %v9236 = vrot.slane %v9235, 1
    %v9237 = vmax.f32 %v9235, %v9236
    %v9238 = vsel %vm9230, %v8974, -inf
    %v9239 = vrot.slane %v9238, 4
    %v9240 = vmax.f32 %v9238, %v9239
    %v9241 = vrot.slane %v9240, 2
    %v9242 = vmax.f32 %v9240, %v9241
    %v9243 = vrot.slane %v9242, 1
    %v9244 = vmax.f32 %v9242, %v9243
    %v9245 = vsel %vm9230, %v8975, -inf
    %v9246 = vrot.slane %v9245, 4
    %v9247 = vmax.f32 %v9245, %v9246
    %v9248 = vrot.slane %v9247, 2
    %v9249 = vmax.f32 %v9247, %v9248
    %v9250 = vrot.slane %v9249, 1
    %v9251 = vmax.f32 %v9249, %v9250
    %v9252 = vsel %vm9230, %v8976, -inf
    %v9253 = vrot.slane %v9252, 4
    %v9254 = vmax.f32 %v9252, %v9253
    %v9255 = vrot.slane %v9254, 2
    %v9256 = vmax.f32 %v9254, %v9255
    %v9257 = vrot.slane %v9256, 1
    %v9258 = vmax.f32 %v9256, %v9257
    %v9259 = vsel %vm9230, %v8977, -inf
    %v9260 = vrot.slane %v9259, 4
    %v9261 = vmax.f32 %v9259, %v9260
    %v9262 = vrot.slane %v9261, 2
    %v9263 = vmax.f32 %v9261, %v9262
    %v9264 = vrot.slane %v9263, 1
    %v9265 = vmax.f32 %v9263, %v9264
    %v9266 = vsel %vm9230, %v8978, -inf
    %v9267 = vrot.slane %v9266, 4
    %v9268 = vmax.f32 %v9266, %v9267
    %v9269 = vrot.slane %v9268, 2
    %v9270 = vmax.f32 %v9268, %v9269
    %v9271 = vrot.slane %v9270, 1
    %v9272 = vmax.f32 %v9270, %v9271
    %v9273 = vsel %vm9230, %v8979, -inf
    %v9274 = vrot.slane %v9273, 4
    %v9275 = vmax.f32 %v9273, %v9274
    %v9276 = vrot.slane %v9275, 2
    %v9277 = vmax.f32 %v9275, %v9276
    %v9278 = vrot.slane %v9277, 1
    %v9279 = vmax.f32 %v9277, %v9278
    %v9280 = vsel %vm9230, %v8980, -inf
    %v9281 = vrot.slane %v9280, 4
    %v9282 = vmax.f32 %v9280, %v9281
    %v9283 = vrot.slane %v9282, 2
    %v9284 = vmax.f32 %v9282, %v9283
    %v9285 = vrot.slane %v9284, 1
    %v9286 = vmax.f32 %v9284, %v9285
    %v9287 = vsel %vm9230, %v8981, -inf
    %v9288 = vrot.slane %v9287, 4
    %v9289 = vmax.f32 %v9287, %v9288
    %v9290 = vrot.slane %v9289, 2
    %v9291 = vmax.f32 %v9289, %v9290
    %v9292 = vrot.slane %v9291, 1
    %v9293 = vmax.f32 %v9291, %v9292
    %v9294 = vsel %vm9230, %v8982, -inf
    %v9295 = vrot.slane %v9294, 4
    %v9296 = vmax.f32 %v9294, %v9295
    %v9297 = vrot.slane %v9296, 2
    %v9298 = vmax.f32 %v9296, %v9297
    %v9299 = vrot.slane %v9298, 1
    %v9300 = vmax.f32 %v9298, %v9299
    %v9301 = vsel %vm9230, %v8983, -inf
    %v9302 = vrot.slane %v9301, 4
    %v9303 = vmax.f32 %v9301, %v9302
    %v9304 = vrot.slane %v9303, 2
    %v9305 = vmax.f32 %v9303, %v9304
    %v9306 = vrot.slane %v9305, 1
    %v9307 = vmax.f32 %v9305, %v9306
    %v9308 = vsel %vm9230, %v8984, -inf
    %v9309 = vrot.slane %v9308, 4
    %v9310 = vmax.f32 %v9308, %v9309
    %v9311 = vrot.slane %v9310, 2
    %v9312 = vmax.f32 %v9310, %v9311
    %v9313 = vrot.slane %v9312, 1
    %v9314 = vmax.f32 %v9312, %v9313
    %v9315 = vsel %vm9230, %v8985, -inf
    %v9316 = vrot.slane %v9315, 4
    %v9317 = vmax.f32 %v9315, %v9316
    %v9318 = vrot.slane %v9317, 2
    %v9319 = vmax.f32 %v9317, %v9318
    %v9320 = vrot.slane %v9319, 1
    %v9321 = vmax.f32 %v9319, %v9320
    %v9322 = vsel %vm9230, %v8986, -inf
    %v9323 = vrot.slane %v9322, 4
    %v9324 = vmax.f32 %v9322, %v9323
    %v9325 = vrot.slane %v9324, 2
    %v9326 = vmax.f32 %v9324, %v9325
    %v9327 = vrot.slane %v9326, 1
    %v9328 = vmax.f32 %v9326, %v9327
    %v9329 = vsel %vm9230, %v8987, -inf
    %v9330 = vrot.slane %v9329, 4
    %v9331 = vmax.f32 %v9329, %v9330
    %v9332 = vrot.slane %v9331, 2
    %v9333 = vmax.f32 %v9331, %v9332
    %v9334 = vrot.slane %v9333, 1
    %v9335 = vmax.f32 %v9333, %v9334
    %v9336 = vsel %vm9230, %v8988, -inf
    %v9337 = vrot.slane %v9336, 4
    %v9338 = vmax.f32 %v9336, %v9337
    %v9339 = vrot.slane %v9338, 2
    %v9340 = vmax.f32 %v9338, %v9339
    %v9341 = vrot.slane %v9340, 1
    %v9342 = vmax.f32 %v9340, %v9341
    %vm9343 = vcmask 1047558
    %v9344 = vsel %vm9343, %v8973, -inf
    %v9345 = vrot.slane %v9344, 4
    %v9346 = vmax.f32 %v9344, %v9345
    %v9347 = vrot.slane %v9346, 2
    %v9348 = vmax.f32 %v9346, %v9347
    %v9349 = vrot.slane %v9348, 1
    %v9350 = vmax.f32 %v9348, %v9349
    %v9351 = vsel %vm9343, %v8974, -inf
    %v9352 = vrot.slane %v9351, 4
    %v9353 = vmax.f32 %v9351, %v9352
    %v9354 = vrot.slane %v9353, 2
    %v9355 = vmax.f32 %v9353, %v9354
    %v9356 = vrot.slane %v9355, 1
    %v9357 = vmax.f32 %v9355, %v9356
    %v9358 = vsel %vm9343, %v8975, -inf
    %v9359 = vrot.slane %v9358, 4
    %v9360 = vmax.f32 %v9358, %v9359
    %v9361 = vrot.slane %v9360, 2
    %v9362 = vmax.f32 %v9360, %v9361
    %v9363 = vrot.slane %v9362, 1
    %v9364 = vmax.f32 %v9362, %v9363
    %v9365 = vsel %vm9343, %v8976, -inf
    %v9366 = vrot.slane %v9365, 4
    %v9367 = vmax.f32 %v9365, %v9366
    %v9368 = vrot.slane %v9367, 2
    %v9369 = vmax.f32 %v9367, %v9368
    %v9370 = vrot.slane %v9369, 1
    %v9371 = vmax.f32 %v9369, %v9370
    %v9372 = vsel %vm9343, %v8977, -inf
    %v9373 = vrot.slane %v9372, 4
    %v9374 = vmax.f32 %v9372, %v9373
    %v9375 = vrot.slane %v9374, 2
    %v9376 = vmax.f32 %v9374, %v9375
    %v9377 = vrot.slane %v9376, 1
    %v9378 = vmax.f32 %v9376, %v9377
    %v9379 = vsel %vm9343, %v8978, -inf
    %v9380 = vrot.slane %v9379, 4
    %v9381 = vmax.f32 %v9379, %v9380
    %v9382 = vrot.slane %v9381, 2
    %v9383 = vmax.f32 %v9381, %v9382
    %v9384 = vrot.slane %v9383, 1
    %v9385 = vmax.f32 %v9383, %v9384
    %v9386 = vsel %vm9343, %v8979, -inf
    %v9387 = vrot.slane %v9386, 4
    %v9388 = vmax.f32 %v9386, %v9387
    %v9389 = vrot.slane %v9388, 2
    %v9390 = vmax.f32 %v9388, %v9389
    %v9391 = vrot.slane %v9390, 1
    %v9392 = vmax.f32 %v9390, %v9391
    %v9393 = vsel %vm9343, %v8980, -inf
    %v9394 = vrot.slane %v9393, 4
    %v9395 = vmax.f32 %v9393, %v9394
    %v9396 = vrot.slane %v9395, 2
    %v9397 = vmax.f32 %v9395, %v9396
    %v9398 = vrot.slane %v9397, 1
    %v9399 = vmax.f32 %v9397, %v9398
    %v9400 = vsel %vm9343, %v8981, -inf
    %v9401 = vrot.slane %v9400, 4
    %v9402 = vmax.f32 %v9400, %v9401
    %v9403 = vrot.slane %v9402, 2
    %v9404 = vmax.f32 %v9402, %v9403
    %v9405 = vrot.slane %v9404, 1
    %v9406 = vmax.f32 %v9404, %v9405
    %v9407 = vsel %vm9343, %v8982, -inf
    %v9408 = vrot.slane %v9407, 4
    %v9409 = vmax.f32 %v9407, %v9408
    %v9410 = vrot.slane %v9409, 2
    %v9411 = vmax.f32 %v9409, %v9410
    %v9412 = vrot.slane %v9411, 1
    %v9413 = vmax.f32 %v9411, %v9412
    %v9414 = vsel %vm9343, %v8983, -inf
    %v9415 = vrot.slane %v9414, 4
    %v9416 = vmax.f32 %v9414, %v9415
    %v9417 = vrot.slane %v9416, 2
    %v9418 = vmax.f32 %v9416, %v9417
    %v9419 = vrot.slane %v9418, 1
    %v9420 = vmax.f32 %v9418, %v9419
    %v9421 = vsel %vm9343, %v8984, -inf
    %v9422 = vrot.slane %v9421, 4
    %v9423 = vmax.f32 %v9421, %v9422
    %v9424 = vrot.slane %v9423, 2
    %v9425 = vmax.f32 %v9423, %v9424
    %v9426 = vrot.slane %v9425, 1
    %v9427 = vmax.f32 %v9425, %v9426
    %v9428 = vsel %vm9343, %v8985, -inf
    %v9429 = vrot.slane %v9428, 4
    %v9430 = vmax.f32 %v9428, %v9429
    %v9431 = vrot.slane %v9430, 2
    %v9432 = vmax.f32 %v9430, %v9431
    %v9433 = vrot.slane %v9432, 1
    %v9434 = vmax.f32 %v9432, %v9433
    %v9435 = vsel %vm9343, %v8986, -inf
    %v9436 = vrot.slane %v9435, 4
    %v9437 = vmax.f32 %v9435, %v9436
    %v9438 = vrot.slane %v9437, 2
    %v9439 = vmax.f32 %v9437, %v9438
    %v9440 = vrot.slane %v9439, 1
    %v9441 = vmax.f32 %v9439, %v9440
    %v9442 = vsel %vm9343, %v8987, -inf
    %v9443 = vrot.slane %v9442, 4
    %v9444 = vmax.f32 %v9442, %v9443
    %v9445 = vrot.slane %v9444, 2
    %v9446 = vmax.f32 %v9444, %v9445
    %v9447 = vrot.slane %v9446, 1
    %v9448 = vmax.f32 %v9446, %v9447
    %v9449 = vsel %vm9343, %v8988, -inf
    %v9450 = vrot.slane %v9449, 4
    %v9451 = vmax.f32 %v9449, %v9450
    %v9452 = vrot.slane %v9451, 2
    %v9453 = vmax.f32 %v9451, %v9452
    %v9454 = vrot.slane %v9453, 1
    %v9455 = vmax.f32 %v9453, %v9454
    %v9456 = vsel %vm327, %v8989, -inf
    %v9457 = vrot.slane %v9456, 4
    %v9458 = vmax.f32 %v9456, %v9457
    %v9459 = vrot.slane %v9458, 2
    %v9460 = vmax.f32 %v9458, %v9459
    %v9461 = vrot.slane %v9460, 1
    %v9462 = vmax.f32 %v9460, %v9461
    %v9463 = vsel %vm327, %v8990, -inf
    %v9464 = vrot.slane %v9463, 4
    %v9465 = vmax.f32 %v9463, %v9464
    %v9466 = vrot.slane %v9465, 2
    %v9467 = vmax.f32 %v9465, %v9466
    %v9468 = vrot.slane %v9467, 1
    %v9469 = vmax.f32 %v9467, %v9468
    %v9470 = vsel %vm327, %v8991, -inf
    %v9471 = vrot.slane %v9470, 4
    %v9472 = vmax.f32 %v9470, %v9471
    %v9473 = vrot.slane %v9472, 2
    %v9474 = vmax.f32 %v9472, %v9473
    %v9475 = vrot.slane %v9474, 1
    %v9476 = vmax.f32 %v9474, %v9475
    %v9477 = vsel %vm327, %v8992, -inf
    %v9478 = vrot.slane %v9477, 4
    %v9479 = vmax.f32 %v9477, %v9478
    %v9480 = vrot.slane %v9479, 2
    %v9481 = vmax.f32 %v9479, %v9480
    %v9482 = vrot.slane %v9481, 1
    %v9483 = vmax.f32 %v9481, %v9482
    %v9484 = vsel %vm327, %v8993, -inf
    %v9485 = vrot.slane %v9484, 4
    %v9486 = vmax.f32 %v9484, %v9485
    %v9487 = vrot.slane %v9486, 2
    %v9488 = vmax.f32 %v9486, %v9487
    %v9489 = vrot.slane %v9488, 1
    %v9490 = vmax.f32 %v9488, %v9489
    %v9491 = vsel %vm327, %v8994, -inf
    %v9492 = vrot.slane %v9491, 4
    %v9493 = vmax.f32 %v9491, %v9492
    %v9494 = vrot.slane %v9493, 2
    %v9495 = vmax.f32 %v9493, %v9494
    %v9496 = vrot.slane %v9495, 1
    %v9497 = vmax.f32 %v9495, %v9496
    %v9498 = vsel %vm327, %v8995, -inf
    %v9499 = vrot.slane %v9498, 4
    %v9500 = vmax.f32 %v9498, %v9499
    %v9501 = vrot.slane %v9500, 2
    %v9502 = vmax.f32 %v9500, %v9501
    %v9503 = vrot.slane %v9502, 1
    %v9504 = vmax.f32 %v9502, %v9503
    %v9505 = vsel %vm327, %v8996, -inf
    %v9506 = vrot.slane %v9505, 4
    %v9507 = vmax.f32 %v9505, %v9506
    %v9508 = vrot.slane %v9507, 2
    %v9509 = vmax.f32 %v9507, %v9508
    %v9510 = vrot.slane %v9509, 1
    %v9511 = vmax.f32 %v9509, %v9510
    %v9512 = vsel %vm327, %v8997, -inf
    %v9513 = vrot.slane %v9512, 4
    %v9514 = vmax.f32 %v9512, %v9513
    %v9515 = vrot.slane %v9514, 2
    %v9516 = vmax.f32 %v9514, %v9515
    %v9517 = vrot.slane %v9516, 1
    %v9518 = vmax.f32 %v9516, %v9517
    %v9519 = vsel %vm327, %v8998, -inf
    %v9520 = vrot.slane %v9519, 4
    %v9521 = vmax.f32 %v9519, %v9520
    %v9522 = vrot.slane %v9521, 2
    %v9523 = vmax.f32 %v9521, %v9522
    %v9524 = vrot.slane %v9523, 1
    %v9525 = vmax.f32 %v9523, %v9524
    %v9526 = vsel %vm327, %v8999, -inf
    %v9527 = vrot.slane %v9526, 4
    %v9528 = vmax.f32 %v9526, %v9527
    %v9529 = vrot.slane %v9528, 2
    %v9530 = vmax.f32 %v9528, %v9529
    %v9531 = vrot.slane %v9530, 1
    %v9532 = vmax.f32 %v9530, %v9531
    %v9533 = vsel %vm327, %v9000, -inf
    %v9534 = vrot.slane %v9533, 4
    %v9535 = vmax.f32 %v9533, %v9534
    %v9536 = vrot.slane %v9535, 2
    %v9537 = vmax.f32 %v9535, %v9536
    %v9538 = vrot.slane %v9537, 1
    %v9539 = vmax.f32 %v9537, %v9538
    %v9540 = vsel %vm327, %v9001, -inf
    %v9541 = vrot.slane %v9540, 4
    %v9542 = vmax.f32 %v9540, %v9541
    %v9543 = vrot.slane %v9542, 2
    %v9544 = vmax.f32 %v9542, %v9543
    %v9545 = vrot.slane %v9544, 1
    %v9546 = vmax.f32 %v9544, %v9545
    %v9547 = vsel %vm327, %v9002, -inf
    %v9548 = vrot.slane %v9547, 4
    %v9549 = vmax.f32 %v9547, %v9548
    %v9550 = vrot.slane %v9549, 2
    %v9551 = vmax.f32 %v9549, %v9550
    %v9552 = vrot.slane %v9551, 1
    %v9553 = vmax.f32 %v9551, %v9552
    %v9554 = vsel %vm327, %v9003, -inf
    %v9555 = vrot.slane %v9554, 4
    %v9556 = vmax.f32 %v9554, %v9555
    %v9557 = vrot.slane %v9556, 2
    %v9558 = vmax.f32 %v9556, %v9557
    %v9559 = vrot.slane %v9558, 1
    %v9560 = vmax.f32 %v9558, %v9559
    %v9561 = vsel %vm327, %v9004, -inf
    %v9562 = vrot.slane %v9561, 4
    %v9563 = vmax.f32 %v9561, %v9562
    %v9564 = vrot.slane %v9563, 2
    %v9565 = vmax.f32 %v9563, %v9564
    %v9566 = vrot.slane %v9565, 1
    %v9567 = vmax.f32 %v9565, %v9566
    %v9568 = vsel %vm9117, %v8989, -inf
    %v9569 = vrot.slane %v9568, 4
    %v9570 = vmax.f32 %v9568, %v9569
    %v9571 = vrot.slane %v9570, 2
    %v9572 = vmax.f32 %v9570, %v9571
    %v9573 = vrot.slane %v9572, 1
    %v9574 = vmax.f32 %v9572, %v9573
    %v9575 = vsel %vm9117, %v8990, -inf
    %v9576 = vrot.slane %v9575, 4
    %v9577 = vmax.f32 %v9575, %v9576
    %v9578 = vrot.slane %v9577, 2
    %v9579 = vmax.f32 %v9577, %v9578
    %v9580 = vrot.slane %v9579, 1
    %v9581 = vmax.f32 %v9579, %v9580
    %v9582 = vsel %vm9117, %v8991, -inf
    %v9583 = vrot.slane %v9582, 4
    %v9584 = vmax.f32 %v9582, %v9583
    %v9585 = vrot.slane %v9584, 2
    %v9586 = vmax.f32 %v9584, %v9585
    %v9587 = vrot.slane %v9586, 1
    %v9588 = vmax.f32 %v9586, %v9587
    %v9589 = vsel %vm9117, %v8992, -inf
    %v9590 = vrot.slane %v9589, 4
    %v9591 = vmax.f32 %v9589, %v9590
    %v9592 = vrot.slane %v9591, 2
    %v9593 = vmax.f32 %v9591, %v9592
    %v9594 = vrot.slane %v9593, 1
    %v9595 = vmax.f32 %v9593, %v9594
    %v9596 = vsel %vm9117, %v8993, -inf
    %v9597 = vrot.slane %v9596, 4
    %v9598 = vmax.f32 %v9596, %v9597
    %v9599 = vrot.slane %v9598, 2
    %v9600 = vmax.f32 %v9598, %v9599
    %v9601 = vrot.slane %v9600, 1
    %v9602 = vmax.f32 %v9600, %v9601
    %v9603 = vsel %vm9117, %v8994, -inf
    %v9604 = vrot.slane %v9603, 4
    %v9605 = vmax.f32 %v9603, %v9604
    %v9606 = vrot.slane %v9605, 2
    %v9607 = vmax.f32 %v9605, %v9606
    %v9608 = vrot.slane %v9607, 1
    %v9609 = vmax.f32 %v9607, %v9608
    %v9610 = vsel %vm9117, %v8995, -inf
    %v9611 = vrot.slane %v9610, 4
    %v9612 = vmax.f32 %v9610, %v9611
    %v9613 = vrot.slane %v9612, 2
    %v9614 = vmax.f32 %v9612, %v9613
    %v9615 = vrot.slane %v9614, 1
    %v9616 = vmax.f32 %v9614, %v9615
    %v9617 = vsel %vm9117, %v8996, -inf
    %v9618 = vrot.slane %v9617, 4
    %v9619 = vmax.f32 %v9617, %v9618
    %v9620 = vrot.slane %v9619, 2
    %v9621 = vmax.f32 %v9619, %v9620
    %v9622 = vrot.slane %v9621, 1
    %v9623 = vmax.f32 %v9621, %v9622
    %v9624 = vsel %vm9117, %v8997, -inf
    %v9625 = vrot.slane %v9624, 4
    %v9626 = vmax.f32 %v9624, %v9625
    %v9627 = vrot.slane %v9626, 2
    %v9628 = vmax.f32 %v9626, %v9627
    %v9629 = vrot.slane %v9628, 1
    %v9630 = vmax.f32 %v9628, %v9629
    %v9631 = vsel %vm9117, %v8998, -inf
    %v9632 = vrot.slane %v9631, 4
    %v9633 = vmax.f32 %v9631, %v9632
    %v9634 = vrot.slane %v9633, 2
    %v9635 = vmax.f32 %v9633, %v9634
    %v9636 = vrot.slane %v9635, 1
    %v9637 = vmax.f32 %v9635, %v9636
    %v9638 = vsel %vm9117, %v8999, -inf
    %v9639 = vrot.slane %v9638, 4
    %v9640 = vmax.f32 %v9638, %v9639
    %v9641 = vrot.slane %v9640, 2
    %v9642 = vmax.f32 %v9640, %v9641
    %v9643 = vrot.slane %v9642, 1
    %v9644 = vmax.f32 %v9642, %v9643
    %v9645 = vsel %vm9117, %v9000, -inf
    %v9646 = vrot.slane %v9645, 4
    %v9647 = vmax.f32 %v9645, %v9646
    %v9648 = vrot.slane %v9647, 2
    %v9649 = vmax.f32 %v9647, %v9648
    %v9650 = vrot.slane %v9649, 1
    %v9651 = vmax.f32 %v9649, %v9650
    %v9652 = vsel %vm9117, %v9001, -inf
    %v9653 = vrot.slane %v9652, 4
    %v9654 = vmax.f32 %v9652, %v9653
    %v9655 = vrot.slane %v9654, 2
    %v9656 = vmax.f32 %v9654, %v9655
    %v9657 = vrot.slane %v9656, 1
    %v9658 = vmax.f32 %v9656, %v9657
    %v9659 = vsel %vm9117, %v9002, -inf
    %v9660 = vrot.slane %v9659, 4
    %v9661 = vmax.f32 %v9659, %v9660
    %v9662 = vrot.slane %v9661, 2
    %v9663 = vmax.f32 %v9661, %v9662
    %v9664 = vrot.slane %v9663, 1
    %v9665 = vmax.f32 %v9663, %v9664
    %v9666 = vsel %vm9117, %v9003, -inf
    %v9667 = vrot.slane %v9666, 4
    %v9668 = vmax.f32 %v9666, %v9667
    %v9669 = vrot.slane %v9668, 2
    %v9670 = vmax.f32 %v9668, %v9669
    %v9671 = vrot.slane %v9670, 1
    %v9672 = vmax.f32 %v9670, %v9671
    %v9673 = vsel %vm9117, %v9004, -inf
    %v9674 = vrot.slane %v9673, 4
    %v9675 = vmax.f32 %v9673, %v9674
    %v9676 = vrot.slane %v9675, 2
    %v9677 = vmax.f32 %v9675, %v9676
    %v9678 = vrot.slane %v9677, 1
    %v9679 = vmax.f32 %v9677, %v9678
    %v9680 = vsel %vm9230, %v8989, -inf
    %v9681 = vrot.slane %v9680, 4
    %v9682 = vmax.f32 %v9680, %v9681
    %v9683 = vrot.slane %v9682, 2
    %v9684 = vmax.f32 %v9682, %v9683
    %v9685 = vrot.slane %v9684, 1
    %v9686 = vmax.f32 %v9684, %v9685
    %v9687 = vsel %vm9230, %v8990, -inf
    %v9688 = vrot.slane %v9687, 4
    %v9689 = vmax.f32 %v9687, %v9688
    %v9690 = vrot.slane %v9689, 2
    %v9691 = vmax.f32 %v9689, %v9690
    %v9692 = vrot.slane %v9691, 1
    %v9693 = vmax.f32 %v9691, %v9692
    %v9694 = vsel %vm9230, %v8991, -inf
    %v9695 = vrot.slane %v9694, 4
    %v9696 = vmax.f32 %v9694, %v9695
    %v9697 = vrot.slane %v9696, 2
    %v9698 = vmax.f32 %v9696, %v9697
    %v9699 = vrot.slane %v9698, 1
    %v9700 = vmax.f32 %v9698, %v9699
    %v9701 = vsel %vm9230, %v8992, -inf
    %v9702 = vrot.slane %v9701, 4
    %v9703 = vmax.f32 %v9701, %v9702
    %v9704 = vrot.slane %v9703, 2
    %v9705 = vmax.f32 %v9703, %v9704
    %v9706 = vrot.slane %v9705, 1
    %v9707 = vmax.f32 %v9705, %v9706
    %v9708 = vsel %vm9230, %v8993, -inf
    %v9709 = vrot.slane %v9708, 4
    %v9710 = vmax.f32 %v9708, %v9709
    %v9711 = vrot.slane %v9710, 2
    %v9712 = vmax.f32 %v9710, %v9711
    %v9713 = vrot.slane %v9712, 1
    %v9714 = vmax.f32 %v9712, %v9713
    %v9715 = vsel %vm9230, %v8994, -inf
    %v9716 = vrot.slane %v9715, 4
    %v9717 = vmax.f32 %v9715, %v9716
    %v9718 = vrot.slane %v9717, 2
    %v9719 = vmax.f32 %v9717, %v9718
    %v9720 = vrot.slane %v9719, 1
    %v9721 = vmax.f32 %v9719, %v9720
    %v9722 = vsel %vm9230, %v8995, -inf
    %v9723 = vrot.slane %v9722, 4
    %v9724 = vmax.f32 %v9722, %v9723
    %v9725 = vrot.slane %v9724, 2
    %v9726 = vmax.f32 %v9724, %v9725
    %v9727 = vrot.slane %v9726, 1
    %v9728 = vmax.f32 %v9726, %v9727
    %v9729 = vsel %vm9230, %v8996, -inf
    %v9730 = vrot.slane %v9729, 4
    %v9731 = vmax.f32 %v9729, %v9730
    %v9732 = vrot.slane %v9731, 2
    %v9733 = vmax.f32 %v9731, %v9732
    %v9734 = vrot.slane %v9733, 1
    %v9735 = vmax.f32 %v9733, %v9734
    %v9736 = vsel %vm9230, %v8997, -inf
    %v9737 = vrot.slane %v9736, 4
    %v9738 = vmax.f32 %v9736, %v9737
    %v9739 = vrot.slane %v9738, 2
    %v9740 = vmax.f32 %v9738, %v9739
    %v9741 = vrot.slane %v9740, 1
    %v9742 = vmax.f32 %v9740, %v9741
    %v9743 = vsel %vm9230, %v8998, -inf
    %v9744 = vrot.slane %v9743, 4
    %v9745 = vmax.f32 %v9743, %v9744
    %v9746 = vrot.slane %v9745, 2
    %v9747 = vmax.f32 %v9745, %v9746
    %v9748 = vrot.slane %v9747, 1
    %v9749 = vmax.f32 %v9747, %v9748
    %v9750 = vsel %vm9230, %v8999, -inf
    %v9751 = vrot.slane %v9750, 4
    %v9752 = vmax.f32 %v9750, %v9751
    %v9753 = vrot.slane %v9752, 2
    %v9754 = vmax.f32 %v9752, %v9753
    %v9755 = vrot.slane %v9754, 1
    %v9756 = vmax.f32 %v9754, %v9755
    %v9757 = vsel %vm9230, %v9000, -inf
    %v9758 = vrot.slane %v9757, 4
    %v9759 = vmax.f32 %v9757, %v9758
    %v9760 = vrot.slane %v9759, 2
    %v9761 = vmax.f32 %v9759, %v9760
    %v9762 = vrot.slane %v9761, 1
    %v9763 = vmax.f32 %v9761, %v9762
    %v9764 = vsel %vm9230, %v9001, -inf
    %v9765 = vrot.slane %v9764, 4
    %v9766 = vmax.f32 %v9764, %v9765
    %v9767 = vrot.slane %v9766, 2
    %v9768 = vmax.f32 %v9766, %v9767
    %v9769 = vrot.slane %v9768, 1
    %v9770 = vmax.f32 %v9768, %v9769
    %v9771 = vsel %vm9230, %v9002, -inf
    %v9772 = vrot.slane %v9771, 4
    %v9773 = vmax.f32 %v9771, %v9772
    %v9774 = vrot.slane %v9773, 2
    %v9775 = vmax.f32 %v9773, %v9774
    %v9776 = vrot.slane %v9775, 1
    %v9777 = vmax.f32 %v9775, %v9776
    %v9778 = vsel %vm9230, %v9003, -inf
    %v9779 = vrot.slane %v9778, 4
    %v9780 = vmax.f32 %v9778, %v9779
    %v9781 = vrot.slane %v9780, 2
    %v9782 = vmax.f32 %v9780, %v9781
    %v9783 = vrot.slane %v9782, 1
    %v9784 = vmax.f32 %v9782, %v9783
    %v9785 = vsel %vm9230, %v9004, -inf
    %v9786 = vrot.slane %v9785, 4
    %v9787 = vmax.f32 %v9785, %v9786
    %v9788 = vrot.slane %v9787, 2
    %v9789 = vmax.f32 %v9787, %v9788
    %v9790 = vrot.slane %v9789, 1
    %v9791 = vmax.f32 %v9789, %v9790
    %v9792 = vsel %vm9343, %v8989, -inf
    %v9793 = vrot.slane %v9792, 4
    %v9794 = vmax.f32 %v9792, %v9793
    %v9795 = vrot.slane %v9794, 2
    %v9796 = vmax.f32 %v9794, %v9795
    %v9797 = vrot.slane %v9796, 1
    %v9798 = vmax.f32 %v9796, %v9797
    %v9799 = vsel %vm9343, %v8990, -inf
    %v9800 = vrot.slane %v9799, 4
    %v9801 = vmax.f32 %v9799, %v9800
    %v9802 = vrot.slane %v9801, 2
    %v9803 = vmax.f32 %v9801, %v9802
    %v9804 = vrot.slane %v9803, 1
    %v9805 = vmax.f32 %v9803, %v9804
    %v9806 = vsel %vm9343, %v8991, -inf
    %v9807 = vrot.slane %v9806, 4
    %v9808 = vmax.f32 %v9806, %v9807
    %v9809 = vrot.slane %v9808, 2
    %v9810 = vmax.f32 %v9808, %v9809
    %v9811 = vrot.slane %v9810, 1
    %v9812 = vmax.f32 %v9810, %v9811
    %v9813 = vsel %vm9343, %v8992, -inf
    %v9814 = vrot.slane %v9813, 4
    %v9815 = vmax.f32 %v9813, %v9814
    %v9816 = vrot.slane %v9815, 2
    %v9817 = vmax.f32 %v9815, %v9816
    %v9818 = vrot.slane %v9817, 1
    %v9819 = vmax.f32 %v9817, %v9818
    %v9820 = vsel %vm9343, %v8993, -inf
    %v9821 = vrot.slane %v9820, 4
    %v9822 = vmax.f32 %v9820, %v9821
    %v9823 = vrot.slane %v9822, 2
    %v9824 = vmax.f32 %v9822, %v9823
    %v9825 = vrot.slane %v9824, 1
    %v9826 = vmax.f32 %v9824, %v9825
    %v9827 = vsel %vm9343, %v8994, -inf
    %v9828 = vrot.slane %v9827, 4
    %v9829 = vmax.f32 %v9827, %v9828
    %v9830 = vrot.slane %v9829, 2
    %v9831 = vmax.f32 %v9829, %v9830
    %v9832 = vrot.slane %v9831, 1
    %v9833 = vmax.f32 %v9831, %v9832
    %v9834 = vsel %vm9343, %v8995, -inf
    %v9835 = vrot.slane %v9834, 4
    %v9836 = vmax.f32 %v9834, %v9835
    %v9837 = vrot.slane %v9836, 2
    %v9838 = vmax.f32 %v9836, %v9837
    %v9839 = vrot.slane %v9838, 1
    %v9840 = vmax.f32 %v9838, %v9839
    %v9841 = vsel %vm9343, %v8996, -inf
    %v9842 = vrot.slane %v9841, 4
    %v9843 = vmax.f32 %v9841, %v9842
    %v9844 = vrot.slane %v9843, 2
    %v9845 = vmax.f32 %v9843, %v9844
    %v9846 = vrot.slane %v9845, 1
    %v9847 = vmax.f32 %v9845, %v9846
    %v9848 = vsel %vm9343, %v8997, -inf
    %v9849 = vrot.slane %v9848, 4
    %v9850 = vmax.f32 %v9848, %v9849
    %v9851 = vrot.slane %v9850, 2
    %v9852 = vmax.f32 %v9850, %v9851
    %v9853 = vrot.slane %v9852, 1
    %v9854 = vmax.f32 %v9852, %v9853
    %v9855 = vsel %vm9343, %v8998, -inf
    %v9856 = vrot.slane %v9855, 4
    %v9857 = vmax.f32 %v9855, %v9856
    %v9858 = vrot.slane %v9857, 2
    %v9859 = vmax.f32 %v9857, %v9858
    %v9860 = vrot.slane %v9859, 1
    %v9861 = vmax.f32 %v9859, %v9860
    %v9862 = vsel %vm9343, %v8999, -inf
    %v9863 = vrot.slane %v9862, 4
    %v9864 = vmax.f32 %v9862, %v9863
    %v9865 = vrot.slane %v9864, 2
    %v9866 = vmax.f32 %v9864, %v9865
    %v9867 = vrot.slane %v9866, 1
    %v9868 = vmax.f32 %v9866, %v9867
    %v9869 = vsel %vm9343, %v9000, -inf
    %v9870 = vrot.slane %v9869, 4
    %v9871 = vmax.f32 %v9869, %v9870
    %v9872 = vrot.slane %v9871, 2
    %v9873 = vmax.f32 %v9871, %v9872
    %v9874 = vrot.slane %v9873, 1
    %v9875 = vmax.f32 %v9873, %v9874
    %v9876 = vsel %vm9343, %v9001, -inf
    %v9877 = vrot.slane %v9876, 4
    %v9878 = vmax.f32 %v9876, %v9877
    %v9879 = vrot.slane %v9878, 2
    %v9880 = vmax.f32 %v9878, %v9879
    %v9881 = vrot.slane %v9880, 1
    %v9882 = vmax.f32 %v9880, %v9881
    %v9883 = vsel %vm9343, %v9002, -inf
    %v9884 = vrot.slane %v9883, 4
    %v9885 = vmax.f32 %v9883, %v9884
    %v9886 = vrot.slane %v9885, 2
    %v9887 = vmax.f32 %v9885, %v9886
    %v9888 = vrot.slane %v9887, 1
    %v9889 = vmax.f32 %v9887, %v9888
    %v9890 = vsel %vm9343, %v9003, -inf
    %v9891 = vrot.slane %v9890, 4
    %v9892 = vmax.f32 %v9890, %v9891
    %v9893 = vrot.slane %v9892, 2
    %v9894 = vmax.f32 %v9892, %v9893
    %v9895 = vrot.slane %v9894, 1
    %v9896 = vmax.f32 %v9894, %v9895
    %v9897 = vsel %vm9343, %v9004, -inf
    %v9898 = vrot.slane %v9897, 4
    %v9899 = vmax.f32 %v9897, %v9898
    %v9900 = vrot.slane %v9899, 2
    %v9901 = vmax.f32 %v9899, %v9900
    %v9902 = vrot.slane %v9901, 1
    %v9903 = vmax.f32 %v9901, %v9902
    %vm9904 = vcmask 1040384
    %v9905 = vsel %vm9904, %v9011, %v9124
    %v9906 = vsel %vm9904, %v9018, %v9131
    %v9907 = vsel %vm9904, %v9025, %v9138
    %v9908 = vsel %vm9904, %v9032, %v9145
    %v9909 = vsel %vm9904, %v9039, %v9152
    %v9910 = vsel %vm9904, %v9046, %v9159
    %v9911 = vsel %vm9904, %v9053, %v9166
    %v9912 = vsel %vm9904, %v9060, %v9173
    %v9913 = vsel %vm9904, %v9067, %v9180
    %v9914 = vsel %vm9904, %v9074, %v9187
    %v9915 = vsel %vm9904, %v9081, %v9194
    %v9916 = vsel %vm9904, %v9088, %v9201
    %v9917 = vsel %vm9904, %v9095, %v9208
    %v9918 = vsel %vm9904, %v9102, %v9215
    %v9919 = vsel %vm9904, %v9109, %v9222
    %v9920 = vsel %vm9904, %v9116, %v9229
    %v9921 = vsel %vm327, %v9905, %v9237
    %v9922 = vsel %vm327, %v9906, %v9244
    %v9923 = vsel %vm327, %v9907, %v9251
    %v9924 = vsel %vm327, %v9908, %v9258
    %v9925 = vsel %vm327, %v9909, %v9265
    %v9926 = vsel %vm327, %v9910, %v9272
    %v9927 = vsel %vm327, %v9911, %v9279
    %v9928 = vsel %vm327, %v9912, %v9286
    %v9929 = vsel %vm327, %v9913, %v9293
    %v9930 = vsel %vm327, %v9914, %v9300
    %v9931 = vsel %vm327, %v9915, %v9307
    %v9932 = vsel %vm327, %v9916, %v9314
    %v9933 = vsel %vm327, %v9917, %v9321
    %v9934 = vsel %vm327, %v9918, %v9328
    %v9935 = vsel %vm327, %v9919, %v9335
    %v9936 = vsel %vm327, %v9920, %v9342
    %vm9937 = vcmask 1042432
    %v9938 = vsel %vm9937, %v9921, %v9350
    %v9939 = vsel %vm9937, %v9922, %v9357
    %v9940 = vsel %vm9937, %v9923, %v9364
    %v9941 = vsel %vm9937, %v9924, %v9371
    %v9942 = vsel %vm9937, %v9925, %v9378
    %v9943 = vsel %vm9937, %v9926, %v9385
    %v9944 = vsel %vm9937, %v9927, %v9392
    %v9945 = vsel %vm9937, %v9928, %v9399
    %v9946 = vsel %vm9937, %v9929, %v9406
    %v9947 = vsel %vm9937, %v9930, %v9413
    %v9948 = vsel %vm9937, %v9931, %v9420
    %v9949 = vsel %vm9937, %v9932, %v9427
    %v9950 = vsel %vm9937, %v9933, %v9434
    %v9951 = vsel %vm9937, %v9934, %v9441
    %v9952 = vsel %vm9937, %v9935, %v9448
    %v9953 = vsel %vm9937, %v9936, %v9455
    %vm9954 = vcmask 1043456
    %v9955 = vsel %vm9954, %v9938, %v9462
    %v9956 = vsel %vm9954, %v9939, %v9469
    %v9957 = vsel %vm9954, %v9940, %v9476
    %v9958 = vsel %vm9954, %v9941, %v9483
    %v9959 = vsel %vm9954, %v9942, %v9490
    %v9960 = vsel %vm9954, %v9943, %v9497
    %v9961 = vsel %vm9954, %v9944, %v9504
    %v9962 = vsel %vm9954, %v9945, %v9511
    %v9963 = vsel %vm9954, %v9946, %v9518
    %v9964 = vsel %vm9954, %v9947, %v9525
    %v9965 = vsel %vm9954, %v9948, %v9532
    %v9966 = vsel %vm9954, %v9949, %v9539
    %v9967 = vsel %vm9954, %v9950, %v9546
    %v9968 = vsel %vm9954, %v9951, %v9553
    %v9969 = vsel %vm9954, %v9952, %v9560
    %v9970 = vsel %vm9954, %v9953, %v9567
    %vm9971 = vcmask 1044480
    %v9972 = vsel %vm9971, %v9955, %v9574
    %v9973 = vsel %vm9971, %v9956, %v9581
    %v9974 = vsel %vm9971, %v9957, %v9588
    %v9975 = vsel %vm9971, %v9958, %v9595
    %v9976 = vsel %vm9971, %v9959, %v9602
    %v9977 = vsel %vm9971, %v9960, %v9609
    %v9978 = vsel %vm9971, %v9961, %v9616
    %v9979 = vsel %vm9971, %v9962, %v9623
    %v9980 = vsel %vm9971, %v9963, %v9630
    %v9981 = vsel %vm9971, %v9964, %v9637
    %v9982 = vsel %vm9971, %v9965, %v9644
    %v9983 = vsel %vm9971, %v9966, %v9651
    %v9984 = vsel %vm9971, %v9967, %v9658
    %v9985 = vsel %vm9971, %v9968, %v9665
    %v9986 = vsel %vm9971, %v9969, %v9672
    %v9987 = vsel %vm9971, %v9970, %v9679
    %v9988 = vsel %vm1527, %v9972, %v9686
    %v9989 = vsel %vm1527, %v9973, %v9693
    %v9990 = vsel %vm1527, %v9974, %v9700
    %v9991 = vsel %vm1527, %v9975, %v9707
    %v9992 = vsel %vm1527, %v9976, %v9714
    %v9993 = vsel %vm1527, %v9977, %v9721
    %v9994 = vsel %vm1527, %v9978, %v9728
    %v9995 = vsel %vm1527, %v9979, %v9735
    %v9996 = vsel %vm1527, %v9980, %v9742
    %v9997 = vsel %vm1527, %v9981, %v9749
    %v9998 = vsel %vm1527, %v9982, %v9756
    %v9999 = vsel %vm1527, %v9983, %v9763
    %v10000 = vsel %vm1527, %v9984, %v9770
    %v10001 = vsel %vm1527, %v9985, %v9777
    %v10002 = vsel %vm1527, %v9986, %v9784
    %v10003 = vsel %vm1527, %v9987, %v9791
    %v10004 = vsel %vm1037, %v9988, %v9798
    %v10005 = vsel %vm1037, %v9989, %v9805
    %v10006 = vsel %vm1037, %v9990, %v9812
    %v10007 = vsel %vm1037, %v9991, %v9819
    %v10008 = vsel %vm1037, %v9992, %v9826
    %v10009 = vsel %vm1037, %v9993, %v9833
    %v10010 = vsel %vm1037, %v9994, %v9840
    %v10011 = vsel %vm1037, %v9995, %v9847
    %v10012 = vsel %vm1037, %v9996, %v9854
    %v10013 = vsel %vm1037, %v9997, %v9861
    %v10014 = vsel %vm1037, %v9998, %v9868
    %v10015 = vsel %vm1037, %v9999, %v9875
    %v10016 = vsel %vm1037, %v10000, %v9882
    %v10017 = vsel %vm1037, %v10001, %v9889
    %v10018 = vsel %vm1037, %v10002, %v9896
    %v10019 = vsel %vm1037, %v10003, %v9903
    %v10020 = vpack.c.bf16 %v10004, %v10004
    %v10021 = vpack.c.bf16 %v10005, %v10005
    %v10022 = vpack.c.bf16 %v10006, %v10006
    %v10023 = vpack.c.bf16 %v10007, %v10007
    %v10024 = vpack.c.bf16 %v10008, %v10008
    %v10025 = vpack.c.bf16 %v10009, %v10009
    %v10026 = vpack.c.bf16 %v10010, %v10010
    %v10027 = vpack.c.bf16 %v10011, %v10011
    %v10028 = vpack.c.bf16 %v10012, %v10012
    %v10029 = vpack.c.bf16 %v10013, %v10013
    %v10030 = vpack.c.bf16 %v10014, %v10014
    %v10031 = vpack.c.bf16 %v10015, %v10015
    %v10032 = vpack.c.bf16 %v10016, %v10016
    %v10033 = vpack.c.bf16 %v10017, %v10017
    %v10034 = vpack.c.bf16 %v10018, %v10018
    %v10035 = vpack.c.bf16 %v10019, %v10019
    %v10052 = vunpack.c.l.b16 %v10020
    %v10053 = vunpack.c.l.b16 %v10021
    %v10054 = vunpack.c.l.b16 %v10022
    %v10055 = vunpack.c.l.b16 %v10023
    %v10056 = vunpack.c.l.b16 %v10024
    %v10057 = vunpack.c.l.b16 %v10025
    %v10058 = vunpack.c.l.b16 %v10026
    %v10059 = vunpack.c.l.b16 %v10027
    %v10060 = vunpack.c.l.b16 %v10028
    %v10061 = vunpack.c.l.b16 %v10029
    %v10062 = vunpack.c.l.b16 %v10030
    %v10063 = vunpack.c.l.b16 %v10031
    %v10064 = vunpack.c.l.b16 %v10032
    %v10065 = vunpack.c.l.b16 %v10033
    %v10066 = vunpack.c.l.b16 %v10034
    %v10067 = vunpack.c.l.b16 %v10035
    %v10068 = vpack.c.b16 %v10053, %v10052
    %v10069 = vpack.c.b16 %v10055, %v10054
    %v10070 = vpack.c.b16 %v10057, %v10056
    %v10071 = vpack.c.b16 %v10059, %v10058
    %v10072 = vpack.c.b16 %v10061, %v10060
    %v10073 = vpack.c.b16 %v10063, %v10062
    %v10074 = vpack.c.b16 %v10065, %v10064
    %v10075 = vpack.c.b16 %v10067, %v10066
    %10084 = vst [vmem:[%s4] sm:$0xff] %v10068
    %10085 = vst [vmem:[%s4 + $0x8] sm:$0xff] %v10069
    %10086 = vst [vmem:[%s4 + $0x10] sm:$0xff] %v10070
    %10087 = vst [vmem:[%s4 + $0x18] sm:$0xff] %v10071
    %10088 = vst [vmem:[%s4 + $0x20] sm:$0xff] %v10072
    %10089 = vst [vmem:[%s4 + $0x28] sm:$0xff] %v10073
    %10090 = vst [vmem:[%s4 + $0x30] sm:$0xff] %v10074
    %10091 = vst [vmem:[%s4 + $0x38] sm:$0xff] %v10075
    // Predicated region
    $region22: #{forward_splits.2} parent=1 // pred_check
      _
    $region23: #{forward_splits.2} parent=1 // pred_check_branch
      %10093 = sbr.rel (0) target = $region25
    $region24: #{forward_splits.2} parent=1 // pred_region
      _
    $region25: #{forward_splits.2} parent=1 // pred_fallthru
      _
    // Predicated region
    $region26: #{forward_splits.2} parent=1 // pred_check
      _
    $region27: #{forward_splits.2} parent=1 // pred_check_branch
      %10095 = sbr.rel (0) target = $region29
    $region28: #{forward_splits.2} parent=1 // pred_region
      _
    $region29: #{forward_splits.2} parent=1 // pred_fallthru
      _
    %10096 = vsyncpa [#allocation3], 1

</llo_original>
